<compile_context>
chip_gen: v7x
topology: tpu7x:2x2x1
jax: 0.10.0
libtpu: 0.0.40
codegen_flags: <defaults>
</compile_context>

<pallas_src>
import jax
import jax.numpy as jnp
from jax import lax
from jax.experimental import pallas as pl
from jax.experimental.pallas import tpu as pltpu

LN_EPS = 1e-5


def _edge_score_kernel(src_ref, dst_ref, h_ref, gw_ref, c_ref, o_ref):
    # src_ref/dst_ref: (1, T) int32 — endpoint node ids for this edge tile
    # h_ref:  (F, N)   node features, feature-major, VMEM-resident (constant block)
    # gw_ref: (2, F)   gamma*w, row 0 = src half, row 1 = dst half of the concat
    # c_ref:  (1,)     SMEM scalar: beta·w + bias
    # o_ref:  (1, T)   lane-dense per-edge scores
    F, N = h_ref.shape
    T = o_ref.shape[-1]

    hT = h_ref[...].astype(jnp.float32)          # (F, N); upcast after load (bf16 ok)
    gw = gw_ref[...].astype(jnp.float32)         # (2, F)

    # --- fused endpoint gather on the MXU via one-hot matmul (exact) ---
    node_iota = lax.broadcasted_iota(jnp.int32, (N, T), 0)
    oh_src = (node_iota == src_ref[...]).astype(jnp.float32)     # (N, T)
    oh_dst = (node_iota == dst_ref[...]).astype(jnp.float32)     # (N, T)
    x_src = jnp.dot(hT, oh_src, precision=lax.Precision.HIGHEST,
                    preferred_element_type=jnp.float32)          # (F, T) = h[src].T
    x_dst = jnp.dot(hT, oh_dst, precision=lax.Precision.HIGHEST,
                    preferred_element_type=jnp.float32)          # (F, T) = h[dst].T

    inv_d = 1.0 / (2 * F)                        # true feature width of concat(x)

    # --- LayerNorm statistics (centered, biased variance — torch semantics) ---
    mean = (jnp.sum(x_src, axis=0, keepdims=True)
            + jnp.sum(x_dst, axis=0, keepdims=True)) * inv_d     # (1, T)
    d_src = x_src - mean
    d_dst = x_dst - mean
    var = (jnp.sum(d_src * d_src, axis=0, keepdims=True)
           + jnp.sum(d_dst * d_dst, axis=0, keepdims=True)) * inv_d
    rinv = lax.rsqrt(var + LN_EPS)                               # EUP slot

    # --- folded affine + Linear:  sum((x - mean) * gamma * w)  on the MXU ---
    s3 = (jnp.dot(gw[0:1, :], d_src, precision=lax.Precision.HIGHEST,
                  preferred_element_type=jnp.float32)
          + jnp.dot(gw[1:2, :], d_dst, precision=lax.Precision.HIGHEST,
                    preferred_element_type=jnp.float32))         # (1, T)

    score = s3 * rinv + c_ref[0]                 # c = beta·w + bias (SMEM scalar)
    o_ref[...] = score.astype(o_ref.dtype)


def _pick_edge_tile(F, N, E):
    # Per-edge in-kernel f32 footprint: gathered x_src/x_dst (2F rows), two
    # one-hot operands (2N rows), plus a handful of (1, T) rows; the
    # double-buffered index/output tiles are negligible.  The ~8 MiB budget
    # stays well inside v5e's 16 MiB default scoped VMEM (v6e/v7x have more).
    bytes_per_edge = 4 * (2 * F + 2 * N + 16)
    tile = (8 * 1024 * 1024) // bytes_per_edge
    tile = max(128, min(4096, int(tile)))
    if E > 128:
        # keep >= 2 grid steps so a v7x megacore can split the edge axis
        half = (((E + 1) // 2) + 127) // 128 * 128
        tile = min(tile, half)
    return (tile // 128) * 128


def linear_predictor(h, src_idx, dst_idx, gamma, beta, w, b, *, edge_tile=None):
    """h: [N, h_feats]; src_idx/dst_idx: [E] int32. Returns scores [E]."""
    N, F = h.shape
    D = 2 * F
    E = src_idx.shape[0]

    # --- fold LayerNorm affine into the Linear layer (tiny, wrapper-side) ---
    w_vec = w.reshape(D).astype(jnp.float32)
    gw = gamma.astype(jnp.float32) * w_vec                         # (D,)
    gw2 = gw.reshape(2, F)                                         # [src half; dst half]
    c = jnp.dot(beta.astype(jnp.float32), w_vec) + b.reshape(()).astype(jnp.float32)
    c = c.reshape(1)                                               # (1,) -> SMEM

    if edge_tile is None:
        edge_tile = _pick_edge_tile(F, N, E)
    assert edge_tile % 128 == 0, "edge_tile must be a multiple of 128 lanes"
    n_tiles = pl.cdiv(E, edge_tile)
    e_pad = n_tiles * edge_tile

    # Pad only the tiny index vectors; padded edges point at node 0 (finite
    # score, sliced off below).  No big-slab jnp.pad.
    src2 = jnp.zeros((1, e_pad), jnp.int32).at[0, :E].set(src_idx.astype(jnp.int32))
    dst2 = jnp.zeros((1, e_pad), jnp.int32).at[0, :E].set(dst_idx.astype(jnp.int32))

    # Node features feature-major (features on sublanes, nodes on lanes); keep
    # original dtype (bf16 h stays bf16 — halves its HBM bytes) and upcast
    # inside the kernel after the load.
    hT = h.T                                                       # (F, N), small

    # TODO(synk): when N*F*itemsize is too large for VMEM residency, switch to a
    # manual DMA row-gather (pl.ANY + make_async_copy) instead of one-hot matmul.

    out = pl.pallas_call(
        _edge_score_kernel,
        out_shape=jax.ShapeDtypeStruct((1, e_pad), jnp.float32),
        grid_spec=pltpu.PrefetchScalarGridSpec(
            num_scalar_prefetch=0,
            grid=(n_tiles,),
            in_specs=[
                pl.BlockSpec((1, edge_tile), lambda i: (0, i)),        # src id tile
                pl.BlockSpec((1, edge_tile), lambda i: (0, i)),        # dst id tile
                pl.BlockSpec((F, N), lambda i: (0, 0)),                # h, resident
                pl.BlockSpec((2, F), lambda i: (0, 0)),                # gamma*w halves
                pl.BlockSpec(memory_space=pltpu.MemorySpace.SMEM),     # c scalar
            ],
            out_specs=pl.BlockSpec((1, edge_tile), lambda i: (0, i)),  # lane-dense
        ),
        compiler_params=pltpu.CompilerParams(
            # No-op on v5e/v6e (1 TC); lets v7x shard the edge axis across its
            # 2 TensorCores.
            # TODO(synk): verify v7x cross-core sharding; if plain "parallel"
            # does not split the axis, switch to pltpu.CORE_PARALLEL.
            dimension_semantics=("parallel",),
        ),
    )(src2, dst2, hT, gw2, c)

    return out[0, :E].astype(h.dtype)


def _reference(h, src_idx, dst_idx, gamma, beta, w, b):
    x = jnp.concatenate([h[src_idx], h[dst_idx]], axis=1).astype(jnp.float32)
    mean = jnp.mean(x, axis=-1, keepdims=True)
    var = jnp.mean((x - mean) ** 2, axis=-1, keepdims=True)
    y = (x - mean) / jnp.sqrt(var + LN_EPS) * gamma + beta
    return y @ w.reshape(-1) + b[0]


if __name__ == "__main__":
    h_feats = 64          # D = 128 -> full 128-lane vregs on the feature axis
    D = 2 * h_feats
    num_nodes = 128
    num_edges = 1200      # NOT a multiple of edge_tile: exercises cdiv + index pad

    key = jax.random.PRNGKey(0)
    k_h, k_src, k_dst, k_g, k_be, k_w, k_b = jax.random.split(key, 7)

    h = jax.random.normal(k_h, (num_nodes, h_feats), dtype=jnp.float32)
    src_idx = jax.random.randint(k_src, (num_edges,), 0, num_nodes, dtype=jnp.int32)
    dst_idx = jax.random.randint(k_dst, (num_edges,), 0, num_nodes, dtype=jnp.int32)

    # Non-trivial LayerNorm affine params to exercise the folded math.
    gamma = 1.0 + 0.1 * jax.random.normal(k_g, (D,), dtype=jnp.float32)
    beta = 0.1 * jax.random.normal(k_be, (D,), dtype=jnp.float32)
    w = jax.random.normal(k_w, (1, D), dtype=jnp.float32) * (1.0 / jnp.sqrt(D))
    b = jax.random.normal(k_b, (1,), dtype=jnp.float32) * 0.01

    run = jax.jit(linear_predictor)
    scores = run(h, src_idx, dst_idx, gamma, beta, w, b)
    scores = jax.block_until_ready(scores)

    ref = _reference(h, src_idx, dst_idx, gamma, beta, w, b)
    assert scores.shape == (num_edges,)
    # 1e-3 tolerance: MXU f32 matmuls (HIGHEST precision) introduce tiny
    # accumulation-order differences vs. the pure-VPU reference.
    assert jnp.allclose(scores, ref, atol=1e-3, rtol=1e-3), (scores, ref)

    print("KERNEL_OK")
</pallas_src>

<mosaic_0001>
module attributes {stable_mosaic.version = 11 : i64} {
  func.func @_edge_score_kernel(%arg0: i32, %arg1: memref<1x640xi32, #tpu.memory_space<vmem>>, %arg2: memref<1x640xi32, #tpu.memory_space<vmem>>, %arg3: memref<64x128xf32, #tpu.memory_space<vmem>>, %arg4: memref<2x64xf32, #tpu.memory_space<vmem>>, %arg5: memref<1xf32, #tpu.memory_space<smem>>, %arg6: memref<1x640xf32, #tpu.memory_space<vmem>>) attributes {dimension_semantics = [#tpu.dimension_semantics<parallel>], iteration_bounds = array<i64: 2>, scalar_prefetch = 0 : i64, scratch_operands = 0 : i64, tpu.core_type = #tpu.core_type<tc>, window_params = [{transform_indices = @transform_0, window_bounds = array<i64: 1, 640>}, {transform_indices = @transform_1, window_bounds = array<i64: 1, 640>}, {pipeline_mode = #tpu.pipeline_mode<synchronous>, transform_indices = @transform_2, window_bounds = array<i64: 64, 128>}, {pipeline_mode = #tpu.pipeline_mode<synchronous>, transform_indices = @transform_3, window_bounds = array<i64: 2, 64>}, {transform_indices = @transform_4, window_bounds = array<i64: 1>}, {transform_indices = @transform_5, window_bounds = array<i64: 1, 640>}]} {
    %c0 = arith.constant 0 : index
    %c0_0 = arith.constant 0 : index
    %0 = vector.load %arg3[%c0, %c0_0] : memref<64x128xf32, #tpu.memory_space<vmem>>, vector<64x128xf32>
    %c0_1 = arith.constant 0 : index
    %c0_2 = arith.constant 0 : index
    %1 = vector.load %arg4[%c0_1, %c0_2] : memref<2x64xf32, #tpu.memory_space<vmem>>, vector<2x64xf32>
    %2 = tpu.iota {dimensions = array<i32: 0>} : vector<128x640xi32>
    %c0_3 = arith.constant 0 : index
    %c0_4 = arith.constant 0 : index
    %3 = vector.load %arg1[%c0_3, %c0_4] : memref<1x640xi32, #tpu.memory_space<vmem>>, vector<1x640xi32>
    %4 = vector.broadcast %3 : vector<1x640xi32> to vector<128x640xi32>
    %5 = arith.cmpi eq, %2, %4 : vector<128x640xi32>
    %6 = arith.extui %5 : vector<128x640xi1> to vector<128x640xi32>
    %7 = arith.sitofp %6 : vector<128x640xi32> to vector<128x640xf32>
    %c0_5 = arith.constant 0 : index
    %c0_6 = arith.constant 0 : index
    %8 = vector.load %arg2[%c0_5, %c0_6] : memref<1x640xi32, #tpu.memory_space<vmem>>, vector<1x640xi32>
    %9 = vector.broadcast %8 : vector<1x640xi32> to vector<128x640xi32>
    %10 = arith.cmpi eq, %2, %9 : vector<128x640xi32>
    %11 = arith.extui %10 : vector<128x640xi1> to vector<128x640xi32>
    %12 = arith.sitofp %11 : vector<128x640xi32> to vector<128x640xf32>
    %cst = arith.constant dense<0.000000e+00> : vector<64x640xf32>
    %13 = tpu.matmul %0, %7, %cst {dimension_numbers = #tpu.dot_dimension_numbers<[1], [0], [0], [1], [0, 0, 1, 1], [], []>, precision = #tpu.contract_precision<fp32>} : vector<64x128xf32>, vector<128x640xf32>, vector<64x640xf32> -> vector<64x640xf32>
    %cst_7 = arith.constant dense<0.000000e+00> : vector<64x640xf32>
    %14 = tpu.matmul %0, %12, %cst_7 {dimension_numbers = #tpu.dot_dimension_numbers<[1], [0], [0], [1], [0, 0, 1, 1], [], []>, precision = #tpu.contract_precision<fp32>} : vector<64x128xf32>, vector<128x640xf32>, vector<64x640xf32> -> vector<64x640xf32>
    %cst_8 = arith.constant dense<0.000000e+00> : vector<640xf32>
    %15 = vector.multi_reduction <add>, %13, %cst_8 [0] : vector<64x640xf32> to vector<640xf32>
    %16 = vector.shape_cast %15 : vector<640xf32> to vector<1x640xf32>
    %cst_9 = arith.constant dense<0.000000e+00> : vector<640xf32>
    %17 = vector.multi_reduction <add>, %14, %cst_9 [0] : vector<64x640xf32> to vector<640xf32>
    %18 = vector.shape_cast %17 : vector<640xf32> to vector<1x640xf32>
    %19 = arith.addf %16, %18 : vector<1x640xf32>
    %cst_10 = arith.constant 7.812500e-03 : f32
    %20 = vector.broadcast %cst_10 : f32 to vector<1x640xf32>
    %21 = arith.mulf %19, %20 : vector<1x640xf32>
    %22 = vector.broadcast %21 : vector<1x640xf32> to vector<64x640xf32>
    %23 = arith.subf %13, %22 : vector<64x640xf32>
    %24 = vector.broadcast %21 : vector<1x640xf32> to vector<64x640xf32>
    %25 = arith.subf %14, %24 : vector<64x640xf32>
    %26 = arith.mulf %23, %23 : vector<64x640xf32>
    %cst_11 = arith.constant dense<0.000000e+00> : vector<640xf32>
    %27 = vector.multi_reduction <add>, %26, %cst_11 [0] : vector<64x640xf32> to vector<640xf32>
    %28 = vector.shape_cast %27 : vector<640xf32> to vector<1x640xf32>
    %29 = arith.mulf %25, %25 : vector<64x640xf32>
    %cst_12 = arith.constant dense<0.000000e+00> : vector<640xf32>
    %30 = vector.multi_reduction <add>, %29, %cst_12 [0] : vector<64x640xf32> to vector<640xf32>
    %31 = vector.shape_cast %30 : vector<640xf32> to vector<1x640xf32>
    %32 = arith.addf %28, %31 : vector<1x640xf32>
    %cst_13 = arith.constant 7.812500e-03 : f32
    %33 = vector.broadcast %cst_13 : f32 to vector<1x640xf32>
    %34 = arith.mulf %32, %33 : vector<1x640xf32>
    %cst_14 = arith.constant 9.99999974E-6 : f32
    %35 = vector.broadcast %cst_14 : f32 to vector<1x640xf32>
    %36 = arith.addf %34, %35 : vector<1x640xf32>
    %37 = math.rsqrt %36 : vector<1x640xf32>
    %38 = vector.extract_strided_slice %1 {offsets = [0, 0], sizes = [1, 64], strides = [1, 1]} : vector<2x64xf32> to vector<1x64xf32>
    %cst_15 = arith.constant dense<0.000000e+00> : vector<1x640xf32>
    %39 = tpu.matmul %38, %23, %cst_15 {dimension_numbers = #tpu.dot_dimension_numbers<[1], [0], [0], [1], [0, 0, 1, 1], [], []>, precision = #tpu.contract_precision<fp32>} : vector<1x64xf32>, vector<64x640xf32>, vector<1x640xf32> -> vector<1x640xf32>
    %40 = vector.extract_strided_slice %1 {offsets = [1, 0], sizes = [1, 64], strides = [1, 1]} : vector<2x64xf32> to vector<1x64xf32>
    %cst_16 = arith.constant dense<0.000000e+00> : vector<1x640xf32>
    %41 = tpu.matmul %40, %25, %cst_16 {dimension_numbers = #tpu.dot_dimension_numbers<[1], [0], [0], [1], [0, 0, 1, 1], [], []>, precision = #tpu.contract_precision<fp32>} : vector<1x64xf32>, vector<64x640xf32>, vector<1x640xf32> -> vector<1x640xf32>
    %42 = arith.addf %39, %41 : vector<1x640xf32>
    %43 = arith.mulf %42, %37 : vector<1x640xf32>
    %c0_17 = arith.constant 0 : index
    %44 = memref.load %arg5[%c0_17] : memref<1xf32, #tpu.memory_space<smem>>
    %45 = vector.broadcast %44 : f32 to vector<1x640xf32>
    %46 = arith.addf %43, %45 : vector<1x640xf32>
    %c0_18 = arith.constant 0 : index
    %c0_19 = arith.constant 0 : index
    %47 = vector.load %arg6[%c0_18, %c0_19] : memref<1x640xf32, #tpu.memory_space<vmem>>, vector<1x640xf32>
    tpu.vector_store %arg6[%c0_18, %c0_19], %46 {strides = array<i32>} : memref<1x640xf32, #tpu.memory_space<vmem>>, vector<1x640xf32>,
    return
  }
  func.func @transform_0(%arg0: i32) -> (i32, i32) {
    %c0_i32 = arith.constant 0 : i32
    %c0_i32_0 = arith.constant 0 : i32
    return %c0_i32, %arg0 : i32, i32
  }
  func.func @transform_1(%arg0: i32) -> (i32, i32) {
    %c0_i32 = arith.constant 0 : i32
    %c0_i32_0 = arith.constant 0 : i32
    return %c0_i32, %arg0 : i32, i32
  }
  func.func @transform_2(%arg0: i32) -> (i32, i32) {
    %c0_i32 = arith.constant 0 : i32
    %c0_i32_0 = arith.constant 0 : i32
    %c0_i32_1 = arith.constant 0 : i32
    return %c0_i32, %c0_i32_0 : i32, i32
  }
  func.func @transform_3(%arg0: i32) -> (i32, i32) {
    %c0_i32 = arith.constant 0 : i32
    %c0_i32_0 = arith.constant 0 : i32
    %c0_i32_1 = arith.constant 0 : i32
    return %c0_i32, %c0_i32_0 : i32, i32
  }
  func.func @transform_4(%arg0: i32) -> i32 {
    %c0_i32 = arith.constant 0 : i32
    %c0_i32_0 = arith.constant 0 : i32
    return %c0_i32 : i32
  }
  func.func @transform_5(%arg0: i32) -> (i32, i32) {
    %c0_i32 = arith.constant 0 : i32
    %c0_i32_0 = arith.constant 0 : i32
    return %c0_i32, %arg0 : i32, i32
  }
}

</mosaic_0001>

<llo_original>
// kernel: linear_predictor.1
$region0: #{linear_predictor.1}
  #allocation0 [shape = 'u32[]', space=smem, size = 0x4, offset = 0x4, fixed_abs, tag = 'smem constant byte address 0x4 - core index']
  #allocation1 [shape = 'u32[144,128]{1,0:T(1,128)}', space=vmem, size = 0x12000, scoped, tag = 'internal scratch']
  #allocation2 [shape = 'f32[1]{0:T(128)S(6)}', space=smem, size = 0x200, scoped, tag = 'scoped memory for linear_predictor.1']
  %s0 = inlined_call_operand.vmem [shape: s32[1,1280], index: 0, kind: input, shape index: {}]
  %s1 = inlined_call_operand.vmem [shape: s32[1,1280], index: 1, kind: input, shape index: {}]
  %s2 = inlined_call_operand.vmem [shape: f32[64,128], index: 2, kind: input, shape index: {}]
  %s3 = inlined_call_operand.vmem [shape: f32[2,64], index: 3, kind: input, shape index: {}]
  %s4 = inlined_call_operand.<no memory space> [shape: f32[1], index: 4, kind: input, shape index: {}]
  %s5 = inlined_call_operand.vmem [shape: f32[1,1280], index: 5, kind: output, shape index: {}]
  %s6 = sld [smem:[#allocation0]]
  $region53: #{linear_predictor.1} parent=0
    _
  %s8 = ssub.s32 1, %s6
  %s9 = scalar_select 0, %s8, %s6
  %10 = sst [smem:[#allocation2]] %s4
  loop: start=0, step=1, limit=4
  $region2: #{linear_predictor.1} parent=0 // loop_pre_header
    _
  $region3: #{linear_predictor.1} parent=0 // loop_header
    %s12 = sphi 0, %s16
    %p13 = scmp.ge.s32.totalorder %s12, 4
    %s22 = sphi 0, %s24
    %s25 = sphi 0, %s22
    %s26 = sphi 0, %s25
    %s42 = sphi 0, %s26
    %s48 = sphi 0, %s50
    %s51 = sphi 0, %s48
    %s52 = sphi 0, %s51
    %s68 = sphi 0, %s52
    %s72 = sphi 0, %s72
    %s74 = sphi 0, %s72
    %s75 = sphi 0, %s74
    %s89 = sphi 0, %s75
    %s93 = sphi 0, %s93
    %s95 = sphi 0, %s93
    %s96 = sphi 0, %s95
    %s110 = sphi 0, %s96
    %s114 = sphi 0, %s114
    %s116 = sphi 0, %s114
    %s117 = sphi 0, %s116
    %s131 = sphi 0, %s117
    %s137 = sphi 0, %s139
    %s140 = sphi 0, %s137
    %s141 = sphi 0, %s140
    %s157 = sphi 0, %s141
  $region4: #{linear_predictor.1} parent=0 // loop_header_branch
    %15 = sbr.rel (%p13) target = $region8
  $region5: #{linear_predictor.1} parent=0 // loop_body
    %s17 = ssub.s32 %s12, 1
    %s18 = ssub.s32 %s12, 2
    %s19 = sadd.s32 %s12, 1
    %s20 = ssub.s32 %s12, %s19
    %p21 = scmp.eq.s32.totalorder %s20, 0
    %s23 = sadd.s32 %s22, 1
    %s24 = scalar_select %p21, %s22, %s23
    %p27 = pneg %p21
    %p28 = scmp.eq.s32.totalorder %s12, 1
    %p29 = por %p27, %p28
    %p30 = scmp.ne.s32.totalorder %s22, %s25
    %p31 = scmp.eq.s32.totalorder %s12, 0
    %p32 = por %p30, %p31
    %p33 = scmp.ne.s32.totalorder %s22, %s25
    %p34 = scmp.eq.s32.totalorder %s17, 1
    %p35 = por %p33, %p34
    %p36 = scmp.ne.s32.totalorder %s25, %s26
    %p37 = scmp.eq.s32.totalorder %s17, 0
    %p38 = por %p36, %p37
    %p39 = scmp.ne.s32.totalorder %s25, %s26
    %p40 = scmp.eq.s32.totalorder %s18, 1
    %p41 = por %p39, %p40
    %p43 = scmp.ne.s32.totalorder %s26, %s42
    %p44 = scmp.eq.s32.totalorder %s18, 0
    %p45 = por %p43, %p44
    %s46 = ssub.s32 %s12, %s19
    %p47 = scmp.eq.s32.totalorder %s46, 0
    %s49 = sadd.s32 %s48, 1
    %s50 = scalar_select %p47, %s48, %s49
    %p53 = pneg %p47
    %p54 = scmp.eq.s32.totalorder %s12, 1
    %p55 = por %p53, %p54
    %p56 = scmp.ne.s32.totalorder %s48, %s51
    %p57 = scmp.eq.s32.totalorder %s12, 0
    %p58 = por %p56, %p57
    %p59 = scmp.ne.s32.totalorder %s48, %s51
    %p60 = scmp.eq.s32.totalorder %s17, 1
    %p61 = por %p59, %p60
    %p62 = scmp.ne.s32.totalorder %s51, %s52
    %p63 = scmp.eq.s32.totalorder %s17, 0
    %p64 = por %p62, %p63
    %p65 = scmp.ne.s32.totalorder %s51, %s52
    %p66 = scmp.eq.s32.totalorder %s18, 1
    %p67 = por %p65, %p66
    %p69 = scmp.ne.s32.totalorder %s52, %s68
    %p70 = scmp.eq.s32.totalorder %s18, 0
    %p71 = por %p69, %p70
    %s73 = sadd.s32 %s72, 1
    %p76 = scmp.eq.s32.totalorder %s12, 1
    %p77 = scmp.ne.s32.totalorder %s72, %s74
    %p78 = scmp.eq.s32.totalorder %s12, 0
    %p79 = por %p77, %p78
    %p80 = scmp.ne.s32.totalorder %s72, %s74
    %p81 = scmp.eq.s32.totalorder %s17, 1
    %p82 = por %p80, %p81
    %p83 = scmp.ne.s32.totalorder %s74, %s75
    %p84 = scmp.eq.s32.totalorder %s17, 0
    %p85 = por %p83, %p84
    %p86 = scmp.ne.s32.totalorder %s74, %s75
    %p87 = scmp.eq.s32.totalorder %s18, 1
    %p88 = por %p86, %p87
    %p90 = scmp.ne.s32.totalorder %s75, %s89
    %p91 = scmp.eq.s32.totalorder %s18, 0
    %p92 = por %p90, %p91
    %s94 = sadd.s32 %s93, 1
    %p97 = scmp.eq.s32.totalorder %s12, 1
    %p98 = scmp.ne.s32.totalorder %s93, %s95
    %p99 = scmp.eq.s32.totalorder %s12, 0
    %p100 = por %p98, %p99
    %p101 = scmp.ne.s32.totalorder %s93, %s95
    %p102 = scmp.eq.s32.totalorder %s17, 1
    %p103 = por %p101, %p102
    %p104 = scmp.ne.s32.totalorder %s95, %s96
    %p105 = scmp.eq.s32.totalorder %s17, 0
    %p106 = por %p104, %p105
    %p107 = scmp.ne.s32.totalorder %s95, %s96
    %p108 = scmp.eq.s32.totalorder %s18, 1
    %p109 = por %p107, %p108
    %p111 = scmp.ne.s32.totalorder %s96, %s110
    %p112 = scmp.eq.s32.totalorder %s18, 0
    %p113 = por %p111, %p112
    %s115 = sadd.s32 %s114, 1
    %p118 = scmp.eq.s32.totalorder %s12, 1
    %p119 = scmp.ne.s32.totalorder %s114, %s116
    %p120 = scmp.eq.s32.totalorder %s12, 0
    %p121 = por %p119, %p120
    %p122 = scmp.ne.s32.totalorder %s114, %s116
    %p123 = scmp.eq.s32.totalorder %s17, 1
    %p124 = por %p122, %p123
    %p125 = scmp.ne.s32.totalorder %s116, %s117
    %p126 = scmp.eq.s32.totalorder %s17, 0
    %p127 = por %p125, %p126
    %p128 = scmp.ne.s32.totalorder %s116, %s117
    %p129 = scmp.eq.s32.totalorder %s18, 1
    %p130 = por %p128, %p129
    %p132 = scmp.ne.s32.totalorder %s117, %s131
    %p133 = scmp.eq.s32.totalorder %s18, 0
    %p134 = por %p132, %p133
    %s135 = ssub.s32 %s12, %s19
    %p136 = scmp.eq.s32.totalorder %s135, 0
    %s138 = sadd.s32 %s137, 1
    %s139 = scalar_select %p136, %s137, %s138
    %p142 = pneg %p136
    %p143 = scmp.eq.s32.totalorder %s12, 1
    %p144 = por %p142, %p143
    %p145 = scmp.ne.s32.totalorder %s137, %s140
    %p146 = scmp.eq.s32.totalorder %s12, 0
    %p147 = por %p145, %p146
    %p148 = scmp.ne.s32.totalorder %s137, %s140
    %p149 = scmp.eq.s32.totalorder %s17, 1
    %p150 = por %p148, %p149
    %p151 = scmp.ne.s32.totalorder %s140, %s141
    %p152 = scmp.eq.s32.totalorder %s17, 0
    %p153 = por %p151, %p152
    %p154 = scmp.ne.s32.totalorder %s140, %s141
    %p155 = scmp.eq.s32.totalorder %s18, 1
    %p156 = por %p154, %p155
    %p158 = scmp.ne.s32.totalorder %s141, %s157
    %p159 = scmp.eq.s32.totalorder %s18, 0
    %p160 = por %p158, %p159
    %p161 = scmp.le.s32.totalorder 1, %s12
    %p162 = scmp.lt.s32.totalorder %s12, 3
    %p163 = pnand %p161, %p162
    %p164 = pneg %p163
    // Predicated region
    $region9: #{linear_predictor.1} parent=5 // pred_check
      _
    $region10: #{linear_predictor.1} parent=5 // pred_check_branch
      %166 = sbr.rel (%p163) target = $region12
    $region11: #{linear_predictor.1} parent=5 // pred_region
      %s167 = ssub.s32 %s12, 1
      // Predicated region
      $region13: #{linear_predictor.1} parent=11 // pred_check
        %p168 = pneg %p85
      $region14: #{linear_predictor.1} parent=11 // pred_check_branch
        %170 = sbr.rel (%p168) target = $region16
      $region15: #{linear_predictor.1} parent=11 // pred_region
        _
      $region16: #{linear_predictor.1} parent=11 // pred_fallthru
        _
      // Predicated region
      $region17: #{linear_predictor.1} parent=11 // pred_check
        %p171 = pneg %p106
      $region18: #{linear_predictor.1} parent=11 // pred_check_branch
        %173 = sbr.rel (%p171) target = $region20
      $region19: #{linear_predictor.1} parent=11 // pred_region
        _
      $region20: #{linear_predictor.1} parent=11 // pred_fallthru
        _
      // Predicated region
      $region21: #{linear_predictor.1} parent=11 // pred_check
        %p174 = pneg %p127
      $region22: #{linear_predictor.1} parent=11 // pred_check_branch
        %176 = sbr.rel (%p174) target = $region24
      $region23: #{linear_predictor.1} parent=11 // pred_region
        _
      $region24: #{linear_predictor.1} parent=11 // pred_fallthru
        _
    $region12: #{linear_predictor.1} parent=5 // pred_fallthru
      _
    %p177 = scmp.lt.s32.totalorder %s12, 2
    // Predicated region
    $region25: #{linear_predictor.1} parent=5 // pred_check
      %p178 = pneg %p177
    $region26: #{linear_predictor.1} parent=5 // pred_check_branch
      %180 = sbr.rel (%p178) target = $region28
    $region27: #{linear_predictor.1} parent=5 // pred_region
      // Predicated region
      $region29: #{linear_predictor.1} parent=27 // pred_check
        %p181 = pneg %p32
      $region30: #{linear_predictor.1} parent=27 // pred_check_branch
        %183 = sbr.rel (%p181) target = $region32
      $region31: #{linear_predictor.1} parent=27 // pred_region
        %s184 = smul.u32 5, %s12
        %p185 = scmp.lt.s32.totalorder %s184, 9
        %s186 = scalar_select %p185, %s184, 9
        %s187 = scalar_lea.vmem %s0, %s186
        %s188 = smul.u32 5, %s12
      $region32: #{linear_predictor.1} parent=27 // pred_fallthru
        _
      // Predicated region
      $region33: #{linear_predictor.1} parent=27 // pred_check
        %p189 = pneg %p58
      $region34: #{linear_predictor.1} parent=27 // pred_check_branch
        %191 = sbr.rel (%p189) target = $region36
      $region35: #{linear_predictor.1} parent=27 // pred_region
        %s192 = smul.u32 5, %s12
        %p193 = scmp.lt.s32.totalorder %s192, 9
        %s194 = scalar_select %p193, %s192, 9
        %s195 = scalar_lea.vmem %s1, %s194
        %s196 = smul.u32 5, %s12
      $region36: #{linear_predictor.1} parent=27 // pred_fallthru
        _
    $region28: #{linear_predictor.1} parent=5 // pred_fallthru
      _
    %p197 = scmp.le.s32.totalorder 1, %s12
    %p198 = scmp.lt.s32.totalorder %s12, 3
    %p199 = pnand %p197, %p198
    %p200 = pneg %p199
    // Predicated region
    $region37: #{linear_predictor.1} parent=5 // pred_check
      _
    $region38: #{linear_predictor.1} parent=5 // pred_check_branch
      %202 = sbr.rel (%p199) target = $region40
    $region39: #{linear_predictor.1} parent=5 // pred_region
      %s203 = ssub.s32 %s12, 1
      %s204 = smul.u32 5, %s17
      %p205 = scmp.lt.s32.totalorder %s204, 9
      %s206 = scalar_select %p205, %s204, 9
      %s207 = scalar_lea.vmem %s0, %s206
      %p208 = pneg %p38
      %p209 = pneg %p35
      %s210 = smul.u32 5, %s17
      %p211 = scmp.lt.s32.totalorder %s210, 9
      %s212 = scalar_select %p211, %s210, 9
      %s213 = scalar_lea.vmem %s1, %s212
      %p214 = pneg %p64
      %p215 = pneg %p61
      %p216 = pneg %p85
      %p217 = pneg %p82
      %p218 = pneg %p106
      %p219 = pneg %p103
      %p220 = pneg %p127
      %p221 = pneg %p124
      %p222 = pneg %p153
      %p223 = pneg %p150
      %s224 = smul.u32 5, %s17
      %p225 = scmp.lt.s32.totalorder %s224, 9
      %s226 = scalar_select %p225, %s224, 9
      %s227 = scalar_lea.vmem %s5, %s226
      %s228 = smul.u32 5, %s17
      %p229 = scmp.lt.s32.totalorder %s228, 9
      %s230 = scalar_select %p229, %s228, 9
      %s231 = scalar_lea.vmem %s0, %s230
      %s232 = smul.u32 5, %s17
      %s233 = smul.u32 5, %s17
      %p234 = scmp.lt.s32.totalorder %s233, 9
      %s235 = scalar_select %p234, %s233, 9
      %s236 = scalar_lea.vmem %s1, %s235
      %s237 = smul.u32 5, %s17
      %s238 = smul.u32 5, %s17
      %p239 = scmp.lt.s32.totalorder %s238, 9
      %s240 = scalar_select %p239, %s238, 9
      %s241 = scalar_lea.vmem %s5, %s240
      %s242 = smul.u32 5, %s17
      %v243 = vld [vmem:[%s2] sm:$0xff]
      %v244 = vld [vmem:[%s2 + $0x8] sm:$0xff]
      %v245 = vld [vmem:[%s2 + $0x10] sm:$0xff]
      %v246 = vld [vmem:[%s2 + $0x18] sm:$0xff]
      %v247 = vld [vmem:[%s2 + $0x20] sm:$0xff]
      %v248 = vld [vmem:[%s2 + $0x28] sm:$0xff]
      %v249 = vld [vmem:[%s2 + $0x30] sm:$0xff]
      %v250 = vld [vmem:[%s2 + $0x38] sm:$0xff]
      %v251 = vld [vmem:[%s3] sm:$0x3]
      %v252 = vlaneseq
      %v253 = vshrl.u32 %v252, 7
      %v254 = vadd.s32 %v253, 8
      %v255 = vadd.s32 %v253, 16
      %v256 = vadd.s32 %v253, 24
      %v257 = vadd.s32 %v253, 32
      %v258 = vadd.s32 %v253, 40
      %v259 = vadd.s32 %v253, 48
      %v260 = vadd.s32 %v253, 56
      %v261 = vadd.s32 %v253, 64
      %v262 = vadd.s32 %v253, 72
      %v263 = vadd.s32 %v253, 80
      %v264 = vadd.s32 %v253, 88
      %v265 = vadd.s32 %v253, 96
      %v266 = vadd.s32 %v253, 104
      %v267 = vadd.s32 %v253, 112
      %v268 = vadd.s32 %v253, 120
      %v269 = vld [vmem:[%s231] sm:$0x1f]
      %v270 = vlaneseq
      %v271 = vshrl.u32 %v270, 7
      %v272 = vsub.s32 0, %v271
      %v273 = vrot.slane %v269, %v272
      %v274 = vlaneseq
      %v275 = vshrl.u32 %v274, 7
      %v276 = vsub.s32 1, %v275
      %v277 = vrot.slane %v269, %v276
      %v278 = vlaneseq
      %v279 = vshrl.u32 %v278, 7
      %v280 = vsub.s32 2, %v279
      %v281 = vrot.slane %v269, %v280
      %v282 = vlaneseq
      %v283 = vshrl.u32 %v282, 7
      %v284 = vsub.s32 3, %v283
      %v285 = vrot.slane %v269, %v284
      %v286 = vlaneseq
      %v287 = vshrl.u32 %v286, 7
      %v288 = vsub.s32 4, %v287
      %v289 = vrot.slane %v269, %v288
      %vm290 = vcmp.eq.s32.totalorder %v253, %v273
      %vm291 = vcmp.eq.s32.totalorder %v253, %v277
      %vm292 = vcmp.eq.s32.totalorder %v253, %v281
      %vm293 = vcmp.eq.s32.totalorder %v253, %v285
      %vm294 = vcmp.eq.s32.totalorder %v253, %v289
      %vm295 = vcmp.eq.s32.totalorder %v254, %v273
      %vm296 = vcmp.eq.s32.totalorder %v254, %v277
      %vm297 = vcmp.eq.s32.totalorder %v254, %v281
      %vm298 = vcmp.eq.s32.totalorder %v254, %v285
      %vm299 = vcmp.eq.s32.totalorder %v254, %v289
      %vm300 = vcmp.eq.s32.totalorder %v255, %v273
      %vm301 = vcmp.eq.s32.totalorder %v255, %v277
      %vm302 = vcmp.eq.s32.totalorder %v255, %v281
      %vm303 = vcmp.eq.s32.totalorder %v255, %v285
      %vm304 = vcmp.eq.s32.totalorder %v255, %v289
      %vm305 = vcmp.eq.s32.totalorder %v256, %v273
      %vm306 = vcmp.eq.s32.totalorder %v256, %v277
      %vm307 = vcmp.eq.s32.totalorder %v256, %v281
      %vm308 = vcmp.eq.s32.totalorder %v256, %v285
      %vm309 = vcmp.eq.s32.totalorder %v256, %v289
      %vm310 = vcmp.eq.s32.totalorder %v257, %v273
      %vm311 = vcmp.eq.s32.totalorder %v257, %v277
      %vm312 = vcmp.eq.s32.totalorder %v257, %v281
      %vm313 = vcmp.eq.s32.totalorder %v257, %v285
      %vm314 = vcmp.eq.s32.totalorder %v257, %v289
      %vm315 = vcmp.eq.s32.totalorder %v258, %v273
      %vm316 = vcmp.eq.s32.totalorder %v258, %v277
      %vm317 = vcmp.eq.s32.totalorder %v258, %v281
      %vm318 = vcmp.eq.s32.totalorder %v258, %v285
      %vm319 = vcmp.eq.s32.totalorder %v258, %v289
      %vm320 = vcmp.eq.s32.totalorder %v259, %v273
      %vm321 = vcmp.eq.s32.totalorder %v259, %v277
      %vm322 = vcmp.eq.s32.totalorder %v259, %v281
      %vm323 = vcmp.eq.s32.totalorder %v259, %v285
      %vm324 = vcmp.eq.s32.totalorder %v259, %v289
      %vm325 = vcmp.eq.s32.totalorder %v260, %v273
      %vm326 = vcmp.eq.s32.totalorder %v260, %v277
      %vm327 = vcmp.eq.s32.totalorder %v260, %v281
      %vm328 = vcmp.eq.s32.totalorder %v260, %v285
      %vm329 = vcmp.eq.s32.totalorder %v260, %v289
      %vm330 = vcmp.eq.s32.totalorder %v261, %v273
      %vm331 = vcmp.eq.s32.totalorder %v261, %v277
      %vm332 = vcmp.eq.s32.totalorder %v261, %v281
      %vm333 = vcmp.eq.s32.totalorder %v261, %v285
      %vm334 = vcmp.eq.s32.totalorder %v261, %v289
      %vm335 = vcmp.eq.s32.totalorder %v262, %v273
      %vm336 = vcmp.eq.s32.totalorder %v262, %v277
      %vm337 = vcmp.eq.s32.totalorder %v262, %v281
      %vm338 = vcmp.eq.s32.totalorder %v262, %v285
      %vm339 = vcmp.eq.s32.totalorder %v262, %v289
      %vm340 = vcmp.eq.s32.totalorder %v263, %v273
      %vm341 = vcmp.eq.s32.totalorder %v263, %v277
      %vm342 = vcmp.eq.s32.totalorder %v263, %v281
      %vm343 = vcmp.eq.s32.totalorder %v263, %v285
      %vm344 = vcmp.eq.s32.totalorder %v263, %v289
      %vm345 = vcmp.eq.s32.totalorder %v264, %v273
      %vm346 = vcmp.eq.s32.totalorder %v264, %v277
      %vm347 = vcmp.eq.s32.totalorder %v264, %v281
      %vm348 = vcmp.eq.s32.totalorder %v264, %v285
      %vm349 = vcmp.eq.s32.totalorder %v264, %v289
      %vm350 = vcmp.eq.s32.totalorder %v265, %v273
      %vm351 = vcmp.eq.s32.totalorder %v265, %v277
      %vm352 = vcmp.eq.s32.totalorder %v265, %v281
      %vm353 = vcmp.eq.s32.totalorder %v265, %v285
      %vm354 = vcmp.eq.s32.totalorder %v265, %v289
      %vm355 = vcmp.eq.s32.totalorder %v266, %v273
      %vm356 = vcmp.eq.s32.totalorder %v266, %v277
      %vm357 = vcmp.eq.s32.totalorder %v266, %v281
      %vm358 = vcmp.eq.s32.totalorder %v266, %v285
      %vm359 = vcmp.eq.s32.totalorder %v266, %v289
      %vm360 = vcmp.eq.s32.totalorder %v267, %v273
      %vm361 = vcmp.eq.s32.totalorder %v267, %v277
      %vm362 = vcmp.eq.s32.totalorder %v267, %v281
      %vm363 = vcmp.eq.s32.totalorder %v267, %v285
      %vm364 = vcmp.eq.s32.totalorder %v267, %v289
      %vm365 = vcmp.eq.s32.totalorder %v268, %v273
      %vm366 = vcmp.eq.s32.totalorder %v268, %v277
      %vm367 = vcmp.eq.s32.totalorder %v268, %v281
      %vm368 = vcmp.eq.s32.totalorder %v268, %v285
      %vm369 = vcmp.eq.s32.totalorder %v268, %v289
      %v370 = vsel %vm290, 1, 0
      %v371 = vsel %vm291, 1, 0
      %v372 = vsel %vm292, 1, 0
      %v373 = vsel %vm293, 1, 0
      %v374 = vsel %vm294, 1, 0
      %v375 = vsel %vm295, 1, 0
      %v376 = vsel %vm296, 1, 0
      %v377 = vsel %vm297, 1, 0
      %v378 = vsel %vm298, 1, 0
      %v379 = vsel %vm299, 1, 0
      %v380 = vsel %vm300, 1, 0
      %v381 = vsel %vm301, 1, 0
      %v382 = vsel %vm302, 1, 0
      %v383 = vsel %vm303, 1, 0
      %v384 = vsel %vm304, 1, 0
      %v385 = vsel %vm305, 1, 0
      %v386 = vsel %vm306, 1, 0
      %v387 = vsel %vm307, 1, 0
      %v388 = vsel %vm308, 1, 0
      %v389 = vsel %vm309, 1, 0
      %v390 = vsel %vm310, 1, 0
      %v391 = vsel %vm311, 1, 0
      %v392 = vsel %vm312, 1, 0
      %v393 = vsel %vm313, 1, 0
      %v394 = vsel %vm314, 1, 0
      %v395 = vsel %vm315, 1, 0
      %v396 = vsel %vm316, 1, 0
      %v397 = vsel %vm317, 1, 0
      %v398 = vsel %vm318, 1, 0
      %v399 = vsel %vm319, 1, 0
      %v400 = vsel %vm320, 1, 0
      %v401 = vsel %vm321, 1, 0
      %v402 = vsel %vm322, 1, 0
      %v403 = vsel %vm323, 1, 0
      %v404 = vsel %vm324, 1, 0
      %v405 = vsel %vm325, 1, 0
      %v406 = vsel %vm326, 1, 0
      %v407 = vsel %vm327, 1, 0
      %v408 = vsel %vm328, 1, 0
      %v409 = vsel %vm329, 1, 0
      %v410 = vsel %vm330, 1, 0
      %v411 = vsel %vm331, 1, 0
      %v412 = vsel %vm332, 1, 0
      %v413 = vsel %vm333, 1, 0
      %v414 = vsel %vm334, 1, 0
      %v415 = vsel %vm335, 1, 0
      %v416 = vsel %vm336, 1, 0
      %v417 = vsel %vm337, 1, 0
      %v418 = vsel %vm338, 1, 0
      %v419 = vsel %vm339, 1, 0
      %v420 = vsel %vm340, 1, 0
      %v421 = vsel %vm341, 1, 0
      %v422 = vsel %vm342, 1, 0
      %v423 = vsel %vm343, 1, 0
      %v424 = vsel %vm344, 1, 0
      %v425 = vsel %vm345, 1, 0
      %v426 = vsel %vm346, 1, 0
      %v427 = vsel %vm347, 1, 0
      %v428 = vsel %vm348, 1, 0
      %v429 = vsel %vm349, 1, 0
      %v430 = vsel %vm350, 1, 0
      %v431 = vsel %vm351, 1, 0
      %v432 = vsel %vm352, 1, 0
      %v433 = vsel %vm353, 1, 0
      %v434 = vsel %vm354, 1, 0
      %v435 = vsel %vm355, 1, 0
      %v436 = vsel %vm356, 1, 0
      %v437 = vsel %vm357, 1, 0
      %v438 = vsel %vm358, 1, 0
      %v439 = vsel %vm359, 1, 0
      %v440 = vsel %vm360, 1, 0
      %v441 = vsel %vm361, 1, 0
      %v442 = vsel %vm362, 1, 0
      %v443 = vsel %vm363, 1, 0
      %v444 = vsel %vm364, 1, 0
      %v445 = vsel %vm365, 1, 0
      %v446 = vsel %vm366, 1, 0
      %v447 = vsel %vm367, 1, 0
      %v448 = vsel %vm368, 1, 0
      %v449 = vsel %vm369, 1, 0
      %v450 = vcvt.s32.f32 %v370
      %v451 = vcvt.s32.f32 %v371
      %v452 = vcvt.s32.f32 %v372
      %v453 = vcvt.s32.f32 %v373
      %v454 = vcvt.s32.f32 %v374
      %v455 = vcvt.s32.f32 %v375
      %v456 = vcvt.s32.f32 %v376
      %v457 = vcvt.s32.f32 %v377
      %v458 = vcvt.s32.f32 %v378
      %v459 = vcvt.s32.f32 %v379
      %v460 = vcvt.s32.f32 %v380
      %v461 = vcvt.s32.f32 %v381
      %v462 = vcvt.s32.f32 %v382
      %v463 = vcvt.s32.f32 %v383
      %v464 = vcvt.s32.f32 %v384
      %v465 = vcvt.s32.f32 %v385
      %v466 = vcvt.s32.f32 %v386
      %v467 = vcvt.s32.f32 %v387
      %v468 = vcvt.s32.f32 %v388
      %v469 = vcvt.s32.f32 %v389
      %v470 = vcvt.s32.f32 %v390
      %v471 = vcvt.s32.f32 %v391
      %v472 = vcvt.s32.f32 %v392
      %v473 = vcvt.s32.f32 %v393
      %v474 = vcvt.s32.f32 %v394
      %v475 = vcvt.s32.f32 %v395
      %v476 = vcvt.s32.f32 %v396
      %v477 = vcvt.s32.f32 %v397
      %v478 = vcvt.s32.f32 %v398
      %v479 = vcvt.s32.f32 %v399
      %v480 = vcvt.s32.f32 %v400
      %v481 = vcvt.s32.f32 %v401
      %v482 = vcvt.s32.f32 %v402
      %v483 = vcvt.s32.f32 %v403
      %v484 = vcvt.s32.f32 %v404
      %v485 = vcvt.s32.f32 %v405
      %v486 = vcvt.s32.f32 %v406
      %v487 = vcvt.s32.f32 %v407
      %v488 = vcvt.s32.f32 %v408
      %v489 = vcvt.s32.f32 %v409
      %v490 = vcvt.s32.f32 %v410
      %v491 = vcvt.s32.f32 %v411
      %v492 = vcvt.s32.f32 %v412
      %v493 = vcvt.s32.f32 %v413
      %v494 = vcvt.s32.f32 %v414
      %v495 = vcvt.s32.f32 %v415
      %v496 = vcvt.s32.f32 %v416
      %v497 = vcvt.s32.f32 %v417
      %v498 = vcvt.s32.f32 %v418
      %v499 = vcvt.s32.f32 %v419
      %v500 = vcvt.s32.f32 %v420
      %v501 = vcvt.s32.f32 %v421
      %v502 = vcvt.s32.f32 %v422
      %v503 = vcvt.s32.f32 %v423
      %v504 = vcvt.s32.f32 %v424
      %v505 = vcvt.s32.f32 %v425
      %v506 = vcvt.s32.f32 %v426
      %v507 = vcvt.s32.f32 %v427
      %v508 = vcvt.s32.f32 %v428
      %v509 = vcvt.s32.f32 %v429
      %v510 = vcvt.s32.f32 %v430
      %v511 = vcvt.s32.f32 %v431
      %v512 = vcvt.s32.f32 %v432
      %v513 = vcvt.s32.f32 %v433
      %v514 = vcvt.s32.f32 %v434
      %v515 = vcvt.s32.f32 %v435
      %v516 = vcvt.s32.f32 %v436
      %v517 = vcvt.s32.f32 %v437
      %v518 = vcvt.s32.f32 %v438
      %v519 = vcvt.s32.f32 %v439
      %v520 = vcvt.s32.f32 %v440
      %v521 = vcvt.s32.f32 %v441
      %v522 = vcvt.s32.f32 %v442
      %v523 = vcvt.s32.f32 %v443
      %v524 = vcvt.s32.f32 %v444
      %v525 = vcvt.s32.f32 %v445
      %v526 = vcvt.s32.f32 %v446
      %v527 = vcvt.s32.f32 %v447
      %v528 = vcvt.s32.f32 %v448
      %v529 = vcvt.s32.f32 %v449
      %v530 = vld [vmem:[%s236] sm:$0x1f]
      %v531 = vlaneseq
      %v532 = vshrl.u32 %v531, 7
      %v533 = vsub.s32 0, %v532
      %v534 = vrot.slane %v530, %v533
      %v535 = vlaneseq
      %v536 = vshrl.u32 %v535, 7
      %v537 = vsub.s32 1, %v536
      %v538 = vrot.slane %v530, %v537
      %v539 = vlaneseq
      %v540 = vshrl.u32 %v539, 7
      %v541 = vsub.s32 2, %v540
      %v542 = vrot.slane %v530, %v541
      %v543 = vlaneseq
      %v544 = vshrl.u32 %v543, 7
      %v545 = vsub.s32 3, %v544
      %v546 = vrot.slane %v530, %v545
      %v547 = vlaneseq
      %v548 = vshrl.u32 %v547, 7
      %v549 = vsub.s32 4, %v548
      %v550 = vrot.slane %v530, %v549
      %vm551 = vcmp.eq.s32.totalorder %v253, %v534
      %vm552 = vcmp.eq.s32.totalorder %v253, %v538
      %vm553 = vcmp.eq.s32.totalorder %v253, %v542
      %vm554 = vcmp.eq.s32.totalorder %v253, %v546
      %vm555 = vcmp.eq.s32.totalorder %v253, %v550
      %vm556 = vcmp.eq.s32.totalorder %v254, %v534
      %vm557 = vcmp.eq.s32.totalorder %v254, %v538
      %vm558 = vcmp.eq.s32.totalorder %v254, %v542
      %vm559 = vcmp.eq.s32.totalorder %v254, %v546
      %vm560 = vcmp.eq.s32.totalorder %v254, %v550
      %vm561 = vcmp.eq.s32.totalorder %v255, %v534
      %vm562 = vcmp.eq.s32.totalorder %v255, %v538
      %vm563 = vcmp.eq.s32.totalorder %v255, %v542
      %vm564 = vcmp.eq.s32.totalorder %v255, %v546
      %vm565 = vcmp.eq.s32.totalorder %v255, %v550
      %vm566 = vcmp.eq.s32.totalorder %v256, %v534
      %vm567 = vcmp.eq.s32.totalorder %v256, %v538
      %vm568 = vcmp.eq.s32.totalorder %v256, %v542
      %vm569 = vcmp.eq.s32.totalorder %v256, %v546
      %vm570 = vcmp.eq.s32.totalorder %v256, %v550
      %vm571 = vcmp.eq.s32.totalorder %v257, %v534
      %vm572 = vcmp.eq.s32.totalorder %v257, %v538
      %vm573 = vcmp.eq.s32.totalorder %v257, %v542
      %vm574 = vcmp.eq.s32.totalorder %v257, %v546
      %vm575 = vcmp.eq.s32.totalorder %v257, %v550
      %vm576 = vcmp.eq.s32.totalorder %v258, %v534
      %vm577 = vcmp.eq.s32.totalorder %v258, %v538
      %vm578 = vcmp.eq.s32.totalorder %v258, %v542
      %vm579 = vcmp.eq.s32.totalorder %v258, %v546
      %vm580 = vcmp.eq.s32.totalorder %v258, %v550
      %vm581 = vcmp.eq.s32.totalorder %v259, %v534
      %vm582 = vcmp.eq.s32.totalorder %v259, %v538
      %vm583 = vcmp.eq.s32.totalorder %v259, %v542
      %vm584 = vcmp.eq.s32.totalorder %v259, %v546
      %vm585 = vcmp.eq.s32.totalorder %v259, %v550
      %vm586 = vcmp.eq.s32.totalorder %v260, %v534
      %vm587 = vcmp.eq.s32.totalorder %v260, %v538
      %vm588 = vcmp.eq.s32.totalorder %v260, %v542
      %vm589 = vcmp.eq.s32.totalorder %v260, %v546
      %vm590 = vcmp.eq.s32.totalorder %v260, %v550
      %vm591 = vcmp.eq.s32.totalorder %v261, %v534
      %vm592 = vcmp.eq.s32.totalorder %v261, %v538
      %vm593 = vcmp.eq.s32.totalorder %v261, %v542
      %vm594 = vcmp.eq.s32.totalorder %v261, %v546
      %vm595 = vcmp.eq.s32.totalorder %v261, %v550
      %vm596 = vcmp.eq.s32.totalorder %v262, %v534
      %vm597 = vcmp.eq.s32.totalorder %v262, %v538
      %vm598 = vcmp.eq.s32.totalorder %v262, %v542
      %vm599 = vcmp.eq.s32.totalorder %v262, %v546
      %vm600 = vcmp.eq.s32.totalorder %v262, %v550
      %vm601 = vcmp.eq.s32.totalorder %v263, %v534
      %vm602 = vcmp.eq.s32.totalorder %v263, %v538
      %vm603 = vcmp.eq.s32.totalorder %v263, %v542
      %vm604 = vcmp.eq.s32.totalorder %v263, %v546
      %vm605 = vcmp.eq.s32.totalorder %v263, %v550
      %vm606 = vcmp.eq.s32.totalorder %v264, %v534
      %vm607 = vcmp.eq.s32.totalorder %v264, %v538
      %vm608 = vcmp.eq.s32.totalorder %v264, %v542
      %vm609 = vcmp.eq.s32.totalorder %v264, %v546
      %vm610 = vcmp.eq.s32.totalorder %v264, %v550
      %vm611 = vcmp.eq.s32.totalorder %v265, %v534
      %vm612 = vcmp.eq.s32.totalorder %v265, %v538
      %vm613 = vcmp.eq.s32.totalorder %v265, %v542
      %vm614 = vcmp.eq.s32.totalorder %v265, %v546
      %vm615 = vcmp.eq.s32.totalorder %v265, %v550
      %vm616 = vcmp.eq.s32.totalorder %v266, %v534
      %vm617 = vcmp.eq.s32.totalorder %v266, %v538
      %vm618 = vcmp.eq.s32.totalorder %v266, %v542
      %vm619 = vcmp.eq.s32.totalorder %v266, %v546
      %vm620 = vcmp.eq.s32.totalorder %v266, %v550
      %vm621 = vcmp.eq.s32.totalorder %v267, %v534
      %vm622 = vcmp.eq.s32.totalorder %v267, %v538
      %vm623 = vcmp.eq.s32.totalorder %v267, %v542
      %vm624 = vcmp.eq.s32.totalorder %v267, %v546
      %vm625 = vcmp.eq.s32.totalorder %v267, %v550
      %vm626 = vcmp.eq.s32.totalorder %v268, %v534
      %vm627 = vcmp.eq.s32.totalorder %v268, %v538
      %vm628 = vcmp.eq.s32.totalorder %v268, %v542
      %vm629 = vcmp.eq.s32.totalorder %v268, %v546
      %vm630 = vcmp.eq.s32.totalorder %v268, %v550
      %v631 = vsel %vm551, 1, 0
      %v632 = vsel %vm552, 1, 0
      %v633 = vsel %vm553, 1, 0
      %v634 = vsel %vm554, 1, 0
      %v635 = vsel %vm555, 1, 0
      %v636 = vsel %vm556, 1, 0
      %v637 = vsel %vm557, 1, 0
      %v638 = vsel %vm558, 1, 0
      %v639 = vsel %vm559, 1, 0
      %v640 = vsel %vm560, 1, 0
      %v641 = vsel %vm561, 1, 0
      %v642 = vsel %vm562, 1, 0
      %v643 = vsel %vm563, 1, 0
      %v644 = vsel %vm564, 1, 0
      %v645 = vsel %vm565, 1, 0
      %v646 = vsel %vm566, 1, 0
      %v647 = vsel %vm567, 1, 0
      %v648 = vsel %vm568, 1, 0
      %v649 = vsel %vm569, 1, 0
      %v650 = vsel %vm570, 1, 0
      %v651 = vsel %vm571, 1, 0
      %v652 = vsel %vm572, 1, 0
      %v653 = vsel %vm573, 1, 0
      %v654 = vsel %vm574, 1, 0
      %v655 = vsel %vm575, 1, 0
      %v656 = vsel %vm576, 1, 0
      %v657 = vsel %vm577, 1, 0
      %v658 = vsel %vm578, 1, 0
      %v659 = vsel %vm579, 1, 0
      %v660 = vsel %vm580, 1, 0
      %v661 = vsel %vm581, 1, 0
      %v662 = vsel %vm582, 1, 0
      %v663 = vsel %vm583, 1, 0
      %v664 = vsel %vm584, 1, 0
      %v665 = vsel %vm585, 1, 0
      %v666 = vsel %vm586, 1, 0
      %v667 = vsel %vm587, 1, 0
      %v668 = vsel %vm588, 1, 0
      %v669 = vsel %vm589, 1, 0
      %v670 = vsel %vm590, 1, 0
      %v671 = vsel %vm591, 1, 0
      %v672 = vsel %vm592, 1, 0
      %v673 = vsel %vm593, 1, 0
      %v674 = vsel %vm594, 1, 0
      %v675 = vsel %vm595, 1, 0
      %v676 = vsel %vm596, 1, 0
      %v677 = vsel %vm597, 1, 0
      %v678 = vsel %vm598, 1, 0
      %v679 = vsel %vm599, 1, 0
      %v680 = vsel %vm600, 1, 0
      %v681 = vsel %vm601, 1, 0
      %v682 = vsel %vm602, 1, 0
      %v683 = vsel %vm603, 1, 0
      %v684 = vsel %vm604, 1, 0
      %v685 = vsel %vm605, 1, 0
      %v686 = vsel %vm606, 1, 0
      %v687 = vsel %vm607, 1, 0
      %v688 = vsel %vm608, 1, 0
      %v689 = vsel %vm609, 1, 0
      %v690 = vsel %vm610, 1, 0
      %v691 = vsel %vm611, 1, 0
      %v692 = vsel %vm612, 1, 0
      %v693 = vsel %vm613, 1, 0
      %v694 = vsel %vm614, 1, 0
      %v695 = vsel %vm615, 1, 0
      %v696 = vsel %vm616, 1, 0
      %v697 = vsel %vm617, 1, 0
      %v698 = vsel %vm618, 1, 0
      %v699 = vsel %vm619, 1, 0
      %v700 = vsel %vm620, 1, 0
      %v701 = vsel %vm621, 1, 0
      %v702 = vsel %vm622, 1, 0
      %v703 = vsel %vm623, 1, 0
      %v704 = vsel %vm624, 1, 0
      %v705 = vsel %vm625, 1, 0
      %v706 = vsel %vm626, 1, 0
      %v707 = vsel %vm627, 1, 0
      %v708 = vsel %vm628, 1, 0
      %v709 = vsel %vm629, 1, 0
      %v710 = vsel %vm630, 1, 0
      %v711 = vcvt.s32.f32 %v631
      %v712 = vcvt.s32.f32 %v632
      %v713 = vcvt.s32.f32 %v633
      %v714 = vcvt.s32.f32 %v634
      %v715 = vcvt.s32.f32 %v635
      %v716 = vcvt.s32.f32 %v636
      %v717 = vcvt.s32.f32 %v637
      %v718 = vcvt.s32.f32 %v638
      %v719 = vcvt.s32.f32 %v639
      %v720 = vcvt.s32.f32 %v640
      %v721 = vcvt.s32.f32 %v641
      %v722 = vcvt.s32.f32 %v642
      %v723 = vcvt.s32.f32 %v643
      %v724 = vcvt.s32.f32 %v644
      %v725 = vcvt.s32.f32 %v645
      %v726 = vcvt.s32.f32 %v646
      %v727 = vcvt.s32.f32 %v647
      %v728 = vcvt.s32.f32 %v648
      %v729 = vcvt.s32.f32 %v649
      %v730 = vcvt.s32.f32 %v650
      %v731 = vcvt.s32.f32 %v651
      %v732 = vcvt.s32.f32 %v652
      %v733 = vcvt.s32.f32 %v653
      %v734 = vcvt.s32.f32 %v654
      %v735 = vcvt.s32.f32 %v655
      %v736 = vcvt.s32.f32 %v656
      %v737 = vcvt.s32.f32 %v657
      %v738 = vcvt.s32.f32 %v658
      %v739 = vcvt.s32.f32 %v659
      %v740 = vcvt.s32.f32 %v660
      %v741 = vcvt.s32.f32 %v661
      %v742 = vcvt.s32.f32 %v662
      %v743 = vcvt.s32.f32 %v663
      %v744 = vcvt.s32.f32 %v664
      %v745 = vcvt.s32.f32 %v665
      %v746 = vcvt.s32.f32 %v666
      %v747 = vcvt.s32.f32 %v667
      %v748 = vcvt.s32.f32 %v668
      %v749 = vcvt.s32.f32 %v669
      %v750 = vcvt.s32.f32 %v670
      %v751 = vcvt.s32.f32 %v671
      %v752 = vcvt.s32.f32 %v672
      %v753 = vcvt.s32.f32 %v673
      %v754 = vcvt.s32.f32 %v674
      %v755 = vcvt.s32.f32 %v675
      %v756 = vcvt.s32.f32 %v676
      %v757 = vcvt.s32.f32 %v677
      %v758 = vcvt.s32.f32 %v678
      %v759 = vcvt.s32.f32 %v679
      %v760 = vcvt.s32.f32 %v680
      %v761 = vcvt.s32.f32 %v681
      %v762 = vcvt.s32.f32 %v682
      %v763 = vcvt.s32.f32 %v683
      %v764 = vcvt.s32.f32 %v684
      %v765 = vcvt.s32.f32 %v685
      %v766 = vcvt.s32.f32 %v686
      %v767 = vcvt.s32.f32 %v687
      %v768 = vcvt.s32.f32 %v688
      %v769 = vcvt.s32.f32 %v689
      %v770 = vcvt.s32.f32 %v690
      %v771 = vcvt.s32.f32 %v691
      %v772 = vcvt.s32.f32 %v692
      %v773 = vcvt.s32.f32 %v693
      %v774 = vcvt.s32.f32 %v694
      %v775 = vcvt.s32.f32 %v695
      %v776 = vcvt.s32.f32 %v696
      %v777 = vcvt.s32.f32 %v697
      %v778 = vcvt.s32.f32 %v698
      %v779 = vcvt.s32.f32 %v699
      %v780 = vcvt.s32.f32 %v700
      %v781 = vcvt.s32.f32 %v701
      %v782 = vcvt.s32.f32 %v702
      %v783 = vcvt.s32.f32 %v703
      %v784 = vcvt.s32.f32 %v704
      %v785 = vcvt.s32.f32 %v705
      %v786 = vcvt.s32.f32 %v706
      %v787 = vcvt.s32.f32 %v707
      %v788 = vcvt.s32.f32 %v708
      %v789 = vcvt.s32.f32 %v709
      %v790 = vcvt.s32.f32 %v710
      %v791 = vand.u32 %v451, 4294901760
      %792 = vmatprep.subr.mxu0 %v791
      %v793 = vand.u32 %v450, 4294901760
      %794 = vmatpush1.msra.mxu0 %v793
      %v795 = vand.u32 %v456, 4294901760
      %796 = vmatprep.subr.mxu0 %v795
      %v797 = vand.u32 %v455, 4294901760
      %798 = vmatpush1.msra.mxu0 %v797
      %v799 = vand.u32 %v461, 4294901760
      %800 = vmatprep.subr.mxu0 %v799
      %v801 = vand.u32 %v460, 4294901760
      %802 = vmatpush1.msra.mxu0 %v801
      %v803 = vand.u32 %v466, 4294901760
      %804 = vmatprep.subr.mxu0 %v803
      %v805 = vand.u32 %v465, 4294901760
      %806 = vmatpush1.msra.mxu0 %v805
      %v807 = vand.u32 %v471, 4294901760
      %808 = vmatprep.subr.mxu0 %v807
      %v809 = vand.u32 %v470, 4294901760
      %810 = vmatpush1.msra.mxu0 %v809
      %v811 = vand.u32 %v476, 4294901760
      %812 = vmatprep.subr.mxu0 %v811
      %v813 = vand.u32 %v475, 4294901760
      %814 = vmatpush1.msra.mxu0 %v813
      %v815 = vand.u32 %v481, 4294901760
      %816 = vmatprep.subr.mxu0 %v815
      %v817 = vand.u32 %v480, 4294901760
      %818 = vmatpush1.msra.mxu0 %v817
      %v819 = vand.u32 %v486, 4294901760
      %820 = vmatprep.subr.mxu0 %v819
      %v821 = vand.u32 %v485, 4294901760
      %822 = vmatpush1.msra.mxu0 %v821
      %v823 = vand.u32 %v491, 4294901760
      %824 = vmatprep.subr.mxu0 %v823
      %v825 = vand.u32 %v490, 4294901760
      %826 = vmatpush1.msra.mxu0 %v825
      %v827 = vand.u32 %v496, 4294901760
      %828 = vmatprep.subr.mxu0 %v827
      %v829 = vand.u32 %v495, 4294901760
      %830 = vmatpush1.msra.mxu0 %v829
      %v831 = vand.u32 %v501, 4294901760
      %832 = vmatprep.subr.mxu0 %v831
      %v833 = vand.u32 %v500, 4294901760
      %834 = vmatpush1.msra.mxu0 %v833
      %v835 = vand.u32 %v506, 4294901760
      %836 = vmatprep.subr.mxu0 %v835
      %v837 = vand.u32 %v505, 4294901760
      %838 = vmatpush1.msra.mxu0 %v837
      %v839 = vand.u32 %v511, 4294901760
      %840 = vmatprep.subr.mxu0 %v839
      %v841 = vand.u32 %v510, 4294901760
      %842 = vmatpush1.msra.mxu0 %v841
      %v843 = vand.u32 %v516, 4294901760
      %844 = vmatprep.subr.mxu0 %v843
      %v845 = vand.u32 %v515, 4294901760
      %846 = vmatpush1.msra.mxu0 %v845
      %v847 = vand.u32 %v521, 4294901760
      %848 = vmatprep.subr.mxu0 %v847
      %v849 = vand.u32 %v520, 4294901760
      %850 = vmatpush1.msra.mxu0 %v849
      %v851 = vand.u32 %v526, 4294901760
      %852 = vmatprep.subr.mxu0 %v851
      %v853 = vand.u32 %v525, 4294901760
      %854 = vmatpush1.msra.mxu0 %v853
      %855 = vmatprep.subr.mxu0 0.0
      %856 = vmatpush1.msra.mxu0 0.0
      %857 = vmatprep.subr.mxu0 0.0
      %858 = vmatpush1.msra.mxu0 0.0
      %859 = vmatprep.subr.mxu0 0.0
      %860 = vmatpush1.msra.mxu0 0.0
      %861 = vmatprep.subr.mxu0 0.0
      %862 = vmatpush1.msra.mxu0 0.0
      %863 = vmatprep.subr.mxu0 0.0
      %864 = vmatpush1.msra.mxu0 0.0
      %865 = vmatprep.subr.mxu0 0.0
      %866 = vmatpush1.msra.mxu0 0.0
      %867 = vmatprep.subr.mxu0 0.0
      %868 = vmatpush1.msra.mxu0 0.0
      %869 = vmatprep.subr.mxu0 0.0
      %870 = vmatpush1.msra.mxu0 0.0
      %871 = vmatprep.subr.mxu0 0.0
      %872 = vmatpush1.msra.mxu0 0.0
      %873 = vmatprep.subr.mxu0 0.0
      %874 = vmatpush1.msra.mxu0 0.0
      %875 = vmatprep.subr.mxu0 0.0
      %876 = vmatpush1.msra.mxu0 0.0
      %877 = vmatprep.subr.mxu0 0.0
      %878 = vmatpush1.msra.mxu0 0.0
      %879 = vmatprep.subr.mxu0 0.0
      %880 = vmatpush1.msra.mxu0 0.0
      %881 = vmatprep.subr.mxu0 0.0
      %882 = vmatpush1.msra.mxu0 0.0
      %883 = vmatprep.subr.mxu0 0.0
      %884 = vmatpush1.msra.mxu0 0.0
      %885 = vmatprep.subr.mxu0 0.0
      %886 = vmatpush1.msra.mxu0 0.0
      %887 = vmatprep.mubr.f32.mxu0 0.0
      %v888 = vand.u32 %v243, 4294901760
      %v889 = vsub.f32 %v243, %v888
      %v890 = vand.u32 %v889, 4294901760
      %v891 = vsub.f32 %v889, %v890
      %v892 = vand.u32 %v891, 4294901760
      %893 = vmatmul.mubr.f32.gmra.mrb[0].mxu0 %v892
      %v894 = vpop.f32.mrb[0].mxu0
      %v895 = vadd.f32 0.0, %v894
      %v896 = vpop.f32.mrb[0].mxu0
      %v897 = vadd.f32 0.0, %v896
      %898 = vmatprep.mubr.f32.mxu0 0.0
      %v899 = vand.u32 %v244, 4294901760
      %v900 = vsub.f32 %v244, %v899
      %v901 = vand.u32 %v900, 4294901760
      %v902 = vsub.f32 %v900, %v901
      %v903 = vand.u32 %v902, 4294901760
      %904 = vmatmul.mubr.f32.gmra.mrb[0].mxu0 %v903
      %v905 = vpop.f32.mrb[0].mxu0
      %v906 = vadd.f32 0.0, %v905
      %v907 = vpop.f32.mrb[0].mxu0
      %v908 = vadd.f32 0.0, %v907
      %909 = vmatprep.mubr.f32.mxu0 0.0
      %v910 = vand.u32 %v245, 4294901760
      %v911 = vsub.f32 %v245, %v910
      %v912 = vand.u32 %v911, 4294901760
      %v913 = vsub.f32 %v911, %v912
      %v914 = vand.u32 %v913, 4294901760
      %915 = vmatmul.mubr.f32.gmra.mrb[0].mxu0 %v914
      %v916 = vpop.f32.mrb[0].mxu0
      %v917 = vadd.f32 0.0, %v916
      %v918 = vpop.f32.mrb[0].mxu0
      %v919 = vadd.f32 0.0, %v918
      %920 = vmatprep.mubr.f32.mxu0 0.0
      %v921 = vand.u32 %v246, 4294901760
      %v922 = vsub.f32 %v246, %v921
      %v923 = vand.u32 %v922, 4294901760
      %v924 = vsub.f32 %v922, %v923
      %v925 = vand.u32 %v924, 4294901760
      %926 = vmatmul.mubr.f32.gmra.mrb[0].mxu0 %v925
      %v927 = vpop.f32.mrb[0].mxu0
      %v928 = vadd.f32 0.0, %v927
      %v929 = vpop.f32.mrb[0].mxu0
      %v930 = vadd.f32 0.0, %v929
      %931 = vmatprep.mubr.f32.mxu0 0.0
      %v932 = vand.u32 %v247, 4294901760
      %v933 = vsub.f32 %v247, %v932
      %v934 = vand.u32 %v933, 4294901760
      %v935 = vsub.f32 %v933, %v934
      %v936 = vand.u32 %v935, 4294901760
      %937 = vmatmul.mubr.f32.gmra.mrb[0].mxu0 %v936
      %v938 = vpop.f32.mrb[0].mxu0
      %v939 = vadd.f32 0.0, %v938
      %v940 = vpop.f32.mrb[0].mxu0
      %v941 = vadd.f32 0.0, %v940
      %942 = vmatprep.mubr.f32.mxu0 0.0
      %v943 = vand.u32 %v248, 4294901760
      %v944 = vsub.f32 %v248, %v943
      %v945 = vand.u32 %v944, 4294901760
      %v946 = vsub.f32 %v944, %v945
      %v947 = vand.u32 %v946, 4294901760
      %948 = vmatmul.mubr.f32.gmra.mrb[0].mxu0 %v947
      %v949 = vpop.f32.mrb[0].mxu0
      %v950 = vadd.f32 0.0, %v949
      %v951 = vpop.f32.mrb[0].mxu0
      %v952 = vadd.f32 0.0, %v951
      %953 = vmatprep.mubr.f32.mxu0 0.0
      %v954 = vand.u32 %v249, 4294901760
      %v955 = vsub.f32 %v249, %v954
      %v956 = vand.u32 %v955, 4294901760
      %v957 = vsub.f32 %v955, %v956
      %v958 = vand.u32 %v957, 4294901760
      %959 = vmatmul.mubr.f32.gmra.mrb[0].mxu0 %v958
      %v960 = vpop.f32.mrb[0].mxu0
      %v961 = vadd.f32 0.0, %v960
      %v962 = vpop.f32.mrb[0].mxu0
      %v963 = vadd.f32 0.0, %v962
      %964 = vmatprep.mubr.f32.mxu0 0.0
      %v965 = vand.u32 %v250, 4294901760
      %v966 = vsub.f32 %v250, %v965
      %v967 = vand.u32 %v966, 4294901760
      %v968 = vsub.f32 %v966, %v967
      %v969 = vand.u32 %v968, 4294901760
      %970 = vmatmul.mubr.f32.gmra.mrb[0].mxu0 %v969
      %v971 = vpop.f32.mrb[0].mxu0
      %v972 = vadd.f32 0.0, %v971
      %v973 = vpop.f32.mrb[0].mxu0
      %v974 = vadd.f32 0.0, %v973
      %975 = vdwg.mxu0
      %v976 = vand.u32 %v451, 4294901760
      %v977 = vsub.f32 %v451, %v976
      %v978 = vand.u32 %v977, 4294901760
      %v979 = vsub.f32 %v977, %v978
      %v980 = vand.u32 %v979, 4294901760
      %981 = vmatprep.subr.mxu0 %v980
      %v982 = vand.u32 %v450, 4294901760
      %v983 = vsub.f32 %v450, %v982
      %v984 = vand.u32 %v983, 4294901760
      %v985 = vsub.f32 %v983, %v984
      %v986 = vand.u32 %v985, 4294901760
      %987 = vmatpush1.msra.mxu0 %v986
      %v988 = vand.u32 %v456, 4294901760
      %v989 = vsub.f32 %v456, %v988
      %v990 = vand.u32 %v989, 4294901760
      %v991 = vsub.f32 %v989, %v990
      %v992 = vand.u32 %v991, 4294901760
      %993 = vmatprep.subr.mxu0 %v992
      %v994 = vand.u32 %v455, 4294901760
      %v995 = vsub.f32 %v455, %v994
      %v996 = vand.u32 %v995, 4294901760
      %v997 = vsub.f32 %v995, %v996
      %v998 = vand.u32 %v997, 4294901760
      %999 = vmatpush1.msra.mxu0 %v998
      %v1000 = vand.u32 %v461, 4294901760
      %v1001 = vsub.f32 %v461, %v1000
      %v1002 = vand.u32 %v1001, 4294901760
      %v1003 = vsub.f32 %v1001, %v1002
      %v1004 = vand.u32 %v1003, 4294901760
      %1005 = vmatprep.subr.mxu0 %v1004
      %v1006 = vand.u32 %v460, 4294901760
      %v1007 = vsub.f32 %v460, %v1006
      %v1008 = vand.u32 %v1007, 4294901760
      %v1009 = vsub.f32 %v1007, %v1008
      %v1010 = vand.u32 %v1009, 4294901760
      %1011 = vmatpush1.msra.mxu0 %v1010
      %v1012 = vand.u32 %v466, 4294901760
      %v1013 = vsub.f32 %v466, %v1012
      %v1014 = vand.u32 %v1013, 4294901760
      %v1015 = vsub.f32 %v1013, %v1014
      %v1016 = vand.u32 %v1015, 4294901760
      %1017 = vmatprep.subr.mxu0 %v1016
      %v1018 = vand.u32 %v465, 4294901760
      %v1019 = vsub.f32 %v465, %v1018
      %v1020 = vand.u32 %v1019, 4294901760
      %v1021 = vsub.f32 %v1019, %v1020
      %v1022 = vand.u32 %v1021, 4294901760
      %1023 = vmatpush1.msra.mxu0 %v1022
      %v1024 = vand.u32 %v471, 4294901760
      %v1025 = vsub.f32 %v471, %v1024
      %v1026 = vand.u32 %v1025, 4294901760
      %v1027 = vsub.f32 %v1025, %v1026
      %v1028 = vand.u32 %v1027, 4294901760
      %1029 = vmatprep.subr.mxu0 %v1028
      %v1030 = vand.u32 %v470, 4294901760
      %v1031 = vsub.f32 %v470, %v1030
      %v1032 = vand.u32 %v1031, 4294901760
      %v1033 = vsub.f32 %v1031, %v1032
      %v1034 = vand.u32 %v1033, 4294901760
      %1035 = vmatpush1.msra.mxu0 %v1034
      %v1036 = vand.u32 %v476, 4294901760
      %v1037 = vsub.f32 %v476, %v1036
      %v1038 = vand.u32 %v1037, 4294901760
      %v1039 = vsub.f32 %v1037, %v1038
      %v1040 = vand.u32 %v1039, 4294901760
      %1041 = vmatprep.subr.mxu0 %v1040
      %v1042 = vand.u32 %v475, 4294901760
      %v1043 = vsub.f32 %v475, %v1042
      %v1044 = vand.u32 %v1043, 4294901760
      %v1045 = vsub.f32 %v1043, %v1044
      %v1046 = vand.u32 %v1045, 4294901760
      %1047 = vmatpush1.msra.mxu0 %v1046
      %v1048 = vand.u32 %v481, 4294901760
      %v1049 = vsub.f32 %v481, %v1048
      %v1050 = vand.u32 %v1049, 4294901760
      %v1051 = vsub.f32 %v1049, %v1050
      %v1052 = vand.u32 %v1051, 4294901760
      %1053 = vmatprep.subr.mxu0 %v1052
      %v1054 = vand.u32 %v480, 4294901760
      %v1055 = vsub.f32 %v480, %v1054
      %v1056 = vand.u32 %v1055, 4294901760
      %v1057 = vsub.f32 %v1055, %v1056
      %v1058 = vand.u32 %v1057, 4294901760
      %1059 = vmatpush1.msra.mxu0 %v1058
      %v1060 = vand.u32 %v486, 4294901760
      %v1061 = vsub.f32 %v486, %v1060
      %v1062 = vand.u32 %v1061, 4294901760
      %v1063 = vsub.f32 %v1061, %v1062
      %v1064 = vand.u32 %v1063, 4294901760
      %1065 = vmatprep.subr.mxu0 %v1064
      %v1066 = vand.u32 %v485, 4294901760
      %v1067 = vsub.f32 %v485, %v1066
      %v1068 = vand.u32 %v1067, 4294901760
      %v1069 = vsub.f32 %v1067, %v1068
      %v1070 = vand.u32 %v1069, 4294901760
      %1071 = vmatpush1.msra.mxu0 %v1070
      %v1072 = vand.u32 %v491, 4294901760
      %v1073 = vsub.f32 %v491, %v1072
      %v1074 = vand.u32 %v1073, 4294901760
      %v1075 = vsub.f32 %v1073, %v1074
      %v1076 = vand.u32 %v1075, 4294901760
      %1077 = vmatprep.subr.mxu0 %v1076
      %v1078 = vand.u32 %v490, 4294901760
      %v1079 = vsub.f32 %v490, %v1078
      %v1080 = vand.u32 %v1079, 4294901760
      %v1081 = vsub.f32 %v1079, %v1080
      %v1082 = vand.u32 %v1081, 4294901760
      %1083 = vmatpush1.msra.mxu0 %v1082
      %v1084 = vand.u32 %v496, 4294901760
      %v1085 = vsub.f32 %v496, %v1084
      %v1086 = vand.u32 %v1085, 4294901760
      %v1087 = vsub.f32 %v1085, %v1086
      %v1088 = vand.u32 %v1087, 4294901760
      %1089 = vmatprep.subr.mxu0 %v1088
      %v1090 = vand.u32 %v495, 4294901760
      %v1091 = vsub.f32 %v495, %v1090
      %v1092 = vand.u32 %v1091, 4294901760
      %v1093 = vsub.f32 %v1091, %v1092
      %v1094 = vand.u32 %v1093, 4294901760
      %1095 = vmatpush1.msra.mxu0 %v1094
      %v1096 = vand.u32 %v501, 4294901760
      %v1097 = vsub.f32 %v501, %v1096
      %v1098 = vand.u32 %v1097, 4294901760
      %v1099 = vsub.f32 %v1097, %v1098
      %v1100 = vand.u32 %v1099, 4294901760
      %1101 = vmatprep.subr.mxu0 %v1100
      %v1102 = vand.u32 %v500, 4294901760
      %v1103 = vsub.f32 %v500, %v1102
      %v1104 = vand.u32 %v1103, 4294901760
      %v1105 = vsub.f32 %v1103, %v1104
      %v1106 = vand.u32 %v1105, 4294901760
      %1107 = vmatpush1.msra.mxu0 %v1106
      %v1108 = vand.u32 %v506, 4294901760
      %v1109 = vsub.f32 %v506, %v1108
      %v1110 = vand.u32 %v1109, 4294901760
      %v1111 = vsub.f32 %v1109, %v1110
      %v1112 = vand.u32 %v1111, 4294901760
      %1113 = vmatprep.subr.mxu0 %v1112
      %v1114 = vand.u32 %v505, 4294901760
      %v1115 = vsub.f32 %v505, %v1114
      %v1116 = vand.u32 %v1115, 4294901760
      %v1117 = vsub.f32 %v1115, %v1116
      %v1118 = vand.u32 %v1117, 4294901760
      %1119 = vmatpush1.msra.mxu0 %v1118
      %v1120 = vand.u32 %v511, 4294901760
      %v1121 = vsub.f32 %v511, %v1120
      %v1122 = vand.u32 %v1121, 4294901760
      %v1123 = vsub.f32 %v1121, %v1122
      %v1124 = vand.u32 %v1123, 4294901760
      %1125 = vmatprep.subr.mxu0 %v1124
      %v1126 = vand.u32 %v510, 4294901760
      %v1127 = vsub.f32 %v510, %v1126
      %v1128 = vand.u32 %v1127, 4294901760
      %v1129 = vsub.f32 %v1127, %v1128
      %v1130 = vand.u32 %v1129, 4294901760
      %1131 = vmatpush1.msra.mxu0 %v1130
      %v1132 = vand.u32 %v516, 4294901760
      %v1133 = vsub.f32 %v516, %v1132
      %v1134 = vand.u32 %v1133, 4294901760
      %v1135 = vsub.f32 %v1133, %v1134
      %v1136 = vand.u32 %v1135, 4294901760
      %1137 = vmatprep.subr.mxu0 %v1136
      %v1138 = vand.u32 %v515, 4294901760
      %v1139 = vsub.f32 %v515, %v1138
      %v1140 = vand.u32 %v1139, 4294901760
      %v1141 = vsub.f32 %v1139, %v1140
      %v1142 = vand.u32 %v1141, 4294901760
      %1143 = vmatpush1.msra.mxu0 %v1142
      %v1144 = vand.u32 %v521, 4294901760
      %v1145 = vsub.f32 %v521, %v1144
      %v1146 = vand.u32 %v1145, 4294901760
      %v1147 = vsub.f32 %v1145, %v1146
      %v1148 = vand.u32 %v1147, 4294901760
      %1149 = vmatprep.subr.mxu0 %v1148
      %v1150 = vand.u32 %v520, 4294901760
      %v1151 = vsub.f32 %v520, %v1150
      %v1152 = vand.u32 %v1151, 4294901760
      %v1153 = vsub.f32 %v1151, %v1152
      %v1154 = vand.u32 %v1153, 4294901760
      %1155 = vmatpush1.msra.mxu0 %v1154
      %v1156 = vand.u32 %v526, 4294901760
      %v1157 = vsub.f32 %v526, %v1156
      %v1158 = vand.u32 %v1157, 4294901760
      %v1159 = vsub.f32 %v1157, %v1158
      %v1160 = vand.u32 %v1159, 4294901760
      %1161 = vmatprep.subr.mxu0 %v1160
      %v1162 = vand.u32 %v525, 4294901760
      %v1163 = vsub.f32 %v525, %v1162
      %v1164 = vand.u32 %v1163, 4294901760
      %v1165 = vsub.f32 %v1163, %v1164
      %v1166 = vand.u32 %v1165, 4294901760
      %1167 = vmatpush1.msra.mxu0 %v1166
      %1168 = vmatprep.subr.mxu0 0.0
      %1169 = vmatpush1.msra.mxu0 0.0
      %1170 = vmatprep.subr.mxu0 0.0
      %1171 = vmatpush1.msra.mxu0 0.0
      %1172 = vmatprep.subr.mxu0 0.0
      %1173 = vmatpush1.msra.mxu0 0.0
      %1174 = vmatprep.subr.mxu0 0.0
      %1175 = vmatpush1.msra.mxu0 0.0
      %1176 = vmatprep.subr.mxu0 0.0
      %1177 = vmatpush1.msra.mxu0 0.0
      %1178 = vmatprep.subr.mxu0 0.0
      %1179 = vmatpush1.msra.mxu0 0.0
      %1180 = vmatprep.subr.mxu0 0.0
      %1181 = vmatpush1.msra.mxu0 0.0
      %1182 = vmatprep.subr.mxu0 0.0
      %1183 = vmatpush1.msra.mxu0 0.0
      %1184 = vmatprep.subr.mxu0 0.0
      %1185 = vmatpush1.msra.mxu0 0.0
      %1186 = vmatprep.subr.mxu0 0.0
      %1187 = vmatpush1.msra.mxu0 0.0
      %1188 = vmatprep.subr.mxu0 0.0
      %1189 = vmatpush1.msra.mxu0 0.0
      %1190 = vmatprep.subr.mxu0 0.0
      %1191 = vmatpush1.msra.mxu0 0.0
      %1192 = vmatprep.subr.mxu0 0.0
      %1193 = vmatpush1.msra.mxu0 0.0
      %1194 = vmatprep.subr.mxu0 0.0
      %1195 = vmatpush1.msra.mxu0 0.0
      %1196 = vmatprep.subr.mxu0 0.0
      %1197 = vmatpush1.msra.mxu0 0.0
      %1198 = vmatprep.subr.mxu0 0.0
      %1199 = vmatpush1.msra.mxu0 0.0
      %1200 = vmatprep.mubr.f32.mxu0 0.0
      %v1201 = vand.u32 %v243, 4294901760
      %1202 = vmatmul.mubr.f32.gmra.mrb[0].mxu0 %v1201
      %v1203 = vpop.f32.mrb[0].mxu0
      %v1204 = vadd.f32 %v895, %v1203
      %v1205 = vpop.f32.mrb[0].mxu0
      %v1206 = vadd.f32 %v897, %v1205
      %1207 = vmatprep.mubr.f32.mxu0 0.0
      %v1208 = vand.u32 %v244, 4294901760
      %1209 = vmatmul.mubr.f32.gmra.mrb[0].mxu0 %v1208
      %v1210 = vpop.f32.mrb[0].mxu0
      %v1211 = vadd.f32 %v906, %v1210
      %v1212 = vpop.f32.mrb[0].mxu0
      %v1213 = vadd.f32 %v908, %v1212
      %1214 = vmatprep.mubr.f32.mxu0 0.0
      %v1215 = vand.u32 %v245, 4294901760
      %1216 = vmatmul.mubr.f32.gmra.mrb[0].mxu0 %v1215
      %v1217 = vpop.f32.mrb[0].mxu0
      %v1218 = vadd.f32 %v917, %v1217
      %v1219 = vpop.f32.mrb[0].mxu0
      %v1220 = vadd.f32 %v919, %v1219
      %1221 = vmatprep.mubr.f32.mxu0 0.0
      %v1222 = vand.u32 %v246, 4294901760
      %1223 = vmatmul.mubr.f32.gmra.mrb[0].mxu0 %v1222
      %v1224 = vpop.f32.mrb[0].mxu0
      %v1225 = vadd.f32 %v928, %v1224
      %v1226 = vpop.f32.mrb[0].mxu0
      %v1227 = vadd.f32 %v930, %v1226
      %1228 = vmatprep.mubr.f32.mxu0 0.0
      %v1229 = vand.u32 %v247, 4294901760
      %1230 = vmatmul.mubr.f32.gmra.mrb[0].mxu0 %v1229
      %v1231 = vpop.f32.mrb[0].mxu0
      %v1232 = vadd.f32 %v939, %v1231
      %v1233 = vpop.f32.mrb[0].mxu0
      %v1234 = vadd.f32 %v941, %v1233
      %1235 = vmatprep.mubr.f32.mxu0 0.0
      %v1236 = vand.u32 %v248, 4294901760
      %1237 = vmatmul.mubr.f32.gmra.mrb[0].mxu0 %v1236
      %v1238 = vpop.f32.mrb[0].mxu0
      %v1239 = vadd.f32 %v950, %v1238
      %v1240 = vpop.f32.mrb[0].mxu0
      %v1241 = vadd.f32 %v952, %v1240
      %1242 = vmatprep.mubr.f32.mxu0 0.0
      %v1243 = vand.u32 %v249, 4294901760
      %1244 = vmatmul.mubr.f32.gmra.mrb[0].mxu0 %v1243
      %v1245 = vpop.f32.mrb[0].mxu0
      %v1246 = vadd.f32 %v961, %v1245
      %v1247 = vpop.f32.mrb[0].mxu0
      %v1248 = vadd.f32 %v963, %v1247
      %1249 = vmatprep.mubr.f32.mxu0 0.0
      %v1250 = vand.u32 %v250, 4294901760
      %1251 = vmatmul.mubr.f32.gmra.mrb[0].mxu0 %v1250
      %v1252 = vpop.f32.mrb[0].mxu0
      %v1253 = vadd.f32 %v972, %v1252
      %v1254 = vpop.f32.mrb[0].mxu0
      %v1255 = vadd.f32 %v974, %v1254
      %1256 = vdwg.mxu0
      %v1257 = vand.u32 %v451, 4294901760
      %v1258 = vsub.f32 %v451, %v1257
      %1259 = vmatprep.subr.mxu0 %v1258
      %v1260 = vand.u32 %v450, 4294901760
      %v1261 = vsub.f32 %v450, %v1260
      %1262 = vmatpush1.msra.mxu0 %v1261
      %v1263 = vand.u32 %v456, 4294901760
      %v1264 = vsub.f32 %v456, %v1263
      %1265 = vmatprep.subr.mxu0 %v1264
      %v1266 = vand.u32 %v455, 4294901760
      %v1267 = vsub.f32 %v455, %v1266
      %1268 = vmatpush1.msra.mxu0 %v1267
      %v1269 = vand.u32 %v461, 4294901760
      %v1270 = vsub.f32 %v461, %v1269
      %1271 = vmatprep.subr.mxu0 %v1270
      %v1272 = vand.u32 %v460, 4294901760
      %v1273 = vsub.f32 %v460, %v1272
      %1274 = vmatpush1.msra.mxu0 %v1273
      %v1275 = vand.u32 %v466, 4294901760
      %v1276 = vsub.f32 %v466, %v1275
      %1277 = vmatprep.subr.mxu0 %v1276
      %v1278 = vand.u32 %v465, 4294901760
      %v1279 = vsub.f32 %v465, %v1278
      %1280 = vmatpush1.msra.mxu0 %v1279
      %v1281 = vand.u32 %v471, 4294901760
      %v1282 = vsub.f32 %v471, %v1281
      %1283 = vmatprep.subr.mxu0 %v1282
      %v1284 = vand.u32 %v470, 4294901760
      %v1285 = vsub.f32 %v470, %v1284
      %1286 = vmatpush1.msra.mxu0 %v1285
      %v1287 = vand.u32 %v476, 4294901760
      %v1288 = vsub.f32 %v476, %v1287
      %1289 = vmatprep.subr.mxu0 %v1288
      %v1290 = vand.u32 %v475, 4294901760
      %v1291 = vsub.f32 %v475, %v1290
      %1292 = vmatpush1.msra.mxu0 %v1291
      %v1293 = vand.u32 %v481, 4294901760
      %v1294 = vsub.f32 %v481, %v1293
      %1295 = vmatprep.subr.mxu0 %v1294
      %v1296 = vand.u32 %v480, 4294901760
      %v1297 = vsub.f32 %v480, %v1296
      %1298 = vmatpush1.msra.mxu0 %v1297
      %v1299 = vand.u32 %v486, 4294901760
      %v1300 = vsub.f32 %v486, %v1299
      %1301 = vmatprep.subr.mxu0 %v1300
      %v1302 = vand.u32 %v485, 4294901760
      %v1303 = vsub.f32 %v485, %v1302
      %1304 = vmatpush1.msra.mxu0 %v1303
      %v1305 = vand.u32 %v491, 4294901760
      %v1306 = vsub.f32 %v491, %v1305
      %1307 = vmatprep.subr.mxu0 %v1306
      %v1308 = vand.u32 %v490, 4294901760
      %v1309 = vsub.f32 %v490, %v1308
      %1310 = vmatpush1.msra.mxu0 %v1309
      %v1311 = vand.u32 %v496, 4294901760
      %v1312 = vsub.f32 %v496, %v1311
      %1313 = vmatprep.subr.mxu0 %v1312
      %v1314 = vand.u32 %v495, 4294901760
      %v1315 = vsub.f32 %v495, %v1314
      %1316 = vmatpush1.msra.mxu0 %v1315
      %v1317 = vand.u32 %v501, 4294901760
      %v1318 = vsub.f32 %v501, %v1317
      %1319 = vmatprep.subr.mxu0 %v1318
      %v1320 = vand.u32 %v500, 4294901760
      %v1321 = vsub.f32 %v500, %v1320
      %1322 = vmatpush1.msra.mxu0 %v1321
      %v1323 = vand.u32 %v506, 4294901760
      %v1324 = vsub.f32 %v506, %v1323
      %1325 = vmatprep.subr.mxu0 %v1324
      %v1326 = vand.u32 %v505, 4294901760
      %v1327 = vsub.f32 %v505, %v1326
      %1328 = vmatpush1.msra.mxu0 %v1327
      %v1329 = vand.u32 %v511, 4294901760
      %v1330 = vsub.f32 %v511, %v1329
      %1331 = vmatprep.subr.mxu0 %v1330
      %v1332 = vand.u32 %v510, 4294901760
      %v1333 = vsub.f32 %v510, %v1332
      %1334 = vmatpush1.msra.mxu0 %v1333
      %v1335 = vand.u32 %v516, 4294901760
      %v1336 = vsub.f32 %v516, %v1335
      %1337 = vmatprep.subr.mxu0 %v1336
      %v1338 = vand.u32 %v515, 4294901760
      %v1339 = vsub.f32 %v515, %v1338
      %1340 = vmatpush1.msra.mxu0 %v1339
      %v1341 = vand.u32 %v521, 4294901760
      %v1342 = vsub.f32 %v521, %v1341
      %1343 = vmatprep.subr.mxu0 %v1342
      %v1344 = vand.u32 %v520, 4294901760
      %v1345 = vsub.f32 %v520, %v1344
      %1346 = vmatpush1.msra.mxu0 %v1345
      %v1347 = vand.u32 %v526, 4294901760
      %v1348 = vsub.f32 %v526, %v1347
      %1349 = vmatprep.subr.mxu0 %v1348
      %v1350 = vand.u32 %v525, 4294901760
      %v1351 = vsub.f32 %v525, %v1350
      %1352 = vmatpush1.msra.mxu0 %v1351
      %1353 = vmatprep.subr.mxu0 0.0
      %1354 = vmatpush1.msra.mxu0 0.0
      %1355 = vmatprep.subr.mxu0 0.0
      %1356 = vmatpush1.msra.mxu0 0.0
      %1357 = vmatprep.subr.mxu0 0.0
      %1358 = vmatpush1.msra.mxu0 0.0
      %1359 = vmatprep.subr.mxu0 0.0
      %1360 = vmatpush1.msra.mxu0 0.0
      %1361 = vmatprep.subr.mxu0 0.0
      %1362 = vmatpush1.msra.mxu0 0.0
      %1363 = vmatprep.subr.mxu0 0.0
      %1364 = vmatpush1.msra.mxu0 0.0
      %1365 = vmatprep.subr.mxu0 0.0
      %1366 = vmatpush1.msra.mxu0 0.0
      %1367 = vmatprep.subr.mxu0 0.0
      %1368 = vmatpush1.msra.mxu0 0.0
      %1369 = vmatprep.subr.mxu0 0.0
      %1370 = vmatpush1.msra.mxu0 0.0
      %1371 = vmatprep.subr.mxu0 0.0
      %1372 = vmatpush1.msra.mxu0 0.0
      %1373 = vmatprep.subr.mxu0 0.0
      %1374 = vmatpush1.msra.mxu0 0.0
      %1375 = vmatprep.subr.mxu0 0.0
      %1376 = vmatpush1.msra.mxu0 0.0
      %1377 = vmatprep.subr.mxu0 0.0
      %1378 = vmatpush1.msra.mxu0 0.0
      %1379 = vmatprep.subr.mxu0 0.0
      %1380 = vmatpush1.msra.mxu0 0.0
      %1381 = vmatprep.subr.mxu0 0.0
      %1382 = vmatpush1.msra.mxu0 0.0
      %1383 = vmatprep.subr.mxu0 0.0
      %1384 = vmatpush1.msra.mxu0 0.0
      %1385 = vmatprep.mubr.f32.mxu0 0.0
      %v1386 = vand.u32 %v243, 4294901760
      %v1387 = vsub.f32 %v243, %v1386
      %1388 = vmatmul.mubr.f32.gmra.mrb[0].mxu0 %v1387
      %v1389 = vpop.f32.mrb[0].mxu0
      %v1390 = vadd.f32 %v1204, %v1389
      %v1391 = vpop.f32.mrb[0].mxu0
      %v1392 = vadd.f32 %v1206, %v1391
      %1393 = vmatprep.mubr.f32.mxu0 0.0
      %v1394 = vand.u32 %v244, 4294901760
      %v1395 = vsub.f32 %v244, %v1394
      %1396 = vmatmul.mubr.f32.gmra.mrb[0].mxu0 %v1395
      %v1397 = vpop.f32.mrb[0].mxu0
      %v1398 = vadd.f32 %v1211, %v1397
      %v1399 = vpop.f32.mrb[0].mxu0
      %v1400 = vadd.f32 %v1213, %v1399
      %1401 = vmatprep.mubr.f32.mxu0 0.0
      %v1402 = vand.u32 %v245, 4294901760
      %v1403 = vsub.f32 %v245, %v1402
      %1404 = vmatmul.mubr.f32.gmra.mrb[0].mxu0 %v1403
      %v1405 = vpop.f32.mrb[0].mxu0
      %v1406 = vadd.f32 %v1218, %v1405
      %v1407 = vpop.f32.mrb[0].mxu0
      %v1408 = vadd.f32 %v1220, %v1407
      %1409 = vmatprep.mubr.f32.mxu0 0.0
      %v1410 = vand.u32 %v246, 4294901760
      %v1411 = vsub.f32 %v246, %v1410
      %1412 = vmatmul.mubr.f32.gmra.mrb[0].mxu0 %v1411
      %v1413 = vpop.f32.mrb[0].mxu0
      %v1414 = vadd.f32 %v1225, %v1413
      %v1415 = vpop.f32.mrb[0].mxu0
      %v1416 = vadd.f32 %v1227, %v1415
      %1417 = vmatprep.mubr.f32.mxu0 0.0
      %v1418 = vand.u32 %v247, 4294901760
      %v1419 = vsub.f32 %v247, %v1418
      %1420 = vmatmul.mubr.f32.gmra.mrb[0].mxu0 %v1419
      %v1421 = vpop.f32.mrb[0].mxu0
      %v1422 = vadd.f32 %v1232, %v1421
      %v1423 = vpop.f32.mrb[0].mxu0
      %v1424 = vadd.f32 %v1234, %v1423
      %1425 = vmatprep.mubr.f32.mxu0 0.0
      %v1426 = vand.u32 %v248, 4294901760
      %v1427 = vsub.f32 %v248, %v1426
      %1428 = vmatmul.mubr.f32.gmra.mrb[0].mxu0 %v1427
      %v1429 = vpop.f32.mrb[0].mxu0
      %v1430 = vadd.f32 %v1239, %v1429
      %v1431 = vpop.f32.mrb[0].mxu0
      %v1432 = vadd.f32 %v1241, %v1431
      %1433 = vmatprep.mubr.f32.mxu0 0.0
      %v1434 = vand.u32 %v249, 4294901760
      %v1435 = vsub.f32 %v249, %v1434
      %1436 = vmatmul.mubr.f32.gmra.mrb[0].mxu0 %v1435
      %v1437 = vpop.f32.mrb[0].mxu0
      %v1438 = vadd.f32 %v1246, %v1437
      %v1439 = vpop.f32.mrb[0].mxu0
      %v1440 = vadd.f32 %v1248, %v1439
      %1441 = vmatprep.mubr.f32.mxu0 0.0
      %v1442 = vand.u32 %v250, 4294901760
      %v1443 = vsub.f32 %v250, %v1442
      %1444 = vmatmul.mubr.f32.gmra.mrb[0].mxu0 %v1443
      %v1445 = vpop.f32.mrb[0].mxu0
      %v1446 = vadd.f32 %v1253, %v1445
      %v1447 = vpop.f32.mrb[0].mxu0
      %v1448 = vadd.f32 %v1255, %v1447
      %1449 = vdwg.mxu0
      %v1450 = vand.u32 %v451, 4294901760
      %1451 = vmatprep.subr.mxu0 %v1450
      %v1452 = vand.u32 %v450, 4294901760
      %1453 = vmatpush1.msra.mxu0 %v1452
      %v1454 = vand.u32 %v456, 4294901760
      %1455 = vmatprep.subr.mxu0 %v1454
      %v1456 = vand.u32 %v455, 4294901760
      %1457 = vmatpush1.msra.mxu0 %v1456
      %v1458 = vand.u32 %v461, 4294901760
      %1459 = vmatprep.subr.mxu0 %v1458
      %v1460 = vand.u32 %v460, 4294901760
      %1461 = vmatpush1.msra.mxu0 %v1460
      %v1462 = vand.u32 %v466, 4294901760
      %1463 = vmatprep.subr.mxu0 %v1462
      %v1464 = vand.u32 %v465, 4294901760
      %1465 = vmatpush1.msra.mxu0 %v1464
      %v1466 = vand.u32 %v471, 4294901760
      %1467 = vmatprep.subr.mxu0 %v1466
      %v1468 = vand.u32 %v470, 4294901760
      %1469 = vmatpush1.msra.mxu0 %v1468
      %v1470 = vand.u32 %v476, 4294901760
      %1471 = vmatprep.subr.mxu0 %v1470
      %v1472 = vand.u32 %v475, 4294901760
      %1473 = vmatpush1.msra.mxu0 %v1472
      %v1474 = vand.u32 %v481, 4294901760
      %1475 = vmatprep.subr.mxu0 %v1474
      %v1476 = vand.u32 %v480, 4294901760
      %1477 = vmatpush1.msra.mxu0 %v1476
      %v1478 = vand.u32 %v486, 4294901760
      %1479 = vmatprep.subr.mxu0 %v1478
      %v1480 = vand.u32 %v485, 4294901760
      %1481 = vmatpush1.msra.mxu0 %v1480
      %v1482 = vand.u32 %v491, 4294901760
      %1483 = vmatprep.subr.mxu0 %v1482
      %v1484 = vand.u32 %v490, 4294901760
      %1485 = vmatpush1.msra.mxu0 %v1484
      %v1486 = vand.u32 %v496, 4294901760
      %1487 = vmatprep.subr.mxu0 %v1486
      %v1488 = vand.u32 %v495, 4294901760
      %1489 = vmatpush1.msra.mxu0 %v1488
      %v1490 = vand.u32 %v501, 4294901760
      %1491 = vmatprep.subr.mxu0 %v1490
      %v1492 = vand.u32 %v500, 4294901760
      %1493 = vmatpush1.msra.mxu0 %v1492
      %v1494 = vand.u32 %v506, 4294901760
      %1495 = vmatprep.subr.mxu0 %v1494
      %v1496 = vand.u32 %v505, 4294901760
      %1497 = vmatpush1.msra.mxu0 %v1496
      %v1498 = vand.u32 %v511, 4294901760
      %1499 = vmatprep.subr.mxu0 %v1498
      %v1500 = vand.u32 %v510, 4294901760
      %1501 = vmatpush1.msra.mxu0 %v1500
      %v1502 = vand.u32 %v516, 4294901760
      %1503 = vmatprep.subr.mxu0 %v1502
      %v1504 = vand.u32 %v515, 4294901760
      %1505 = vmatpush1.msra.mxu0 %v1504
      %v1506 = vand.u32 %v521, 4294901760
      %1507 = vmatprep.subr.mxu0 %v1506
      %v1508 = vand.u32 %v520, 4294901760
      %1509 = vmatpush1.msra.mxu0 %v1508
      %v1510 = vand.u32 %v526, 4294901760
      %1511 = vmatprep.subr.mxu0 %v1510
      %v1512 = vand.u32 %v525, 4294901760
      %1513 = vmatpush1.msra.mxu0 %v1512
      %1514 = vmatprep.subr.mxu0 0.0
      %1515 = vmatpush1.msra.mxu0 0.0
      %1516 = vmatprep.subr.mxu0 0.0
      %1517 = vmatpush1.msra.mxu0 0.0
      %1518 = vmatprep.subr.mxu0 0.0
      %1519 = vmatpush1.msra.mxu0 0.0
      %1520 = vmatprep.subr.mxu0 0.0
      %1521 = vmatpush1.msra.mxu0 0.0
      %1522 = vmatprep.subr.mxu0 0.0
      %1523 = vmatpush1.msra.mxu0 0.0
      %1524 = vmatprep.subr.mxu0 0.0
      %1525 = vmatpush1.msra.mxu0 0.0
      %1526 = vmatprep.subr.mxu0 0.0
      %1527 = vmatpush1.msra.mxu0 0.0
      %1528 = vmatprep.subr.mxu0 0.0
      %1529 = vmatpush1.msra.mxu0 0.0
      %1530 = vmatprep.subr.mxu0 0.0
      %1531 = vmatpush1.msra.mxu0 0.0
      %1532 = vmatprep.subr.mxu0 0.0
      %1533 = vmatpush1.msra.mxu0 0.0
      %1534 = vmatprep.subr.mxu0 0.0
      %1535 = vmatpush1.msra.mxu0 0.0
      %1536 = vmatprep.subr.mxu0 0.0
      %1537 = vmatpush1.msra.mxu0 0.0
      %1538 = vmatprep.subr.mxu0 0.0
      %1539 = vmatpush1.msra.mxu0 0.0
      %1540 = vmatprep.subr.mxu0 0.0
      %1541 = vmatpush1.msra.mxu0 0.0
      %1542 = vmatprep.subr.mxu0 0.0
      %1543 = vmatpush1.msra.mxu0 0.0
      %1544 = vmatprep.subr.mxu0 0.0
      %1545 = vmatpush1.msra.mxu0 0.0
      %1546 = vmatprep.mubr.f32.mxu0 0.0
      %v1547 = vand.u32 %v243, 4294901760
      %v1548 = vsub.f32 %v243, %v1547
      %v1549 = vand.u32 %v1548, 4294901760
      %1550 = vmatmul.mubr.f32.gmra.mrb[0].mxu0 %v1549
      %v1551 = vpop.f32.mrb[0].mxu0
      %v1552 = vadd.f32 %v1390, %v1551
      %v1553 = vpop.f32.mrb[0].mxu0
      %v1554 = vadd.f32 %v1392, %v1553
      %1555 = vmatprep.mubr.f32.mxu0 0.0
      %v1556 = vand.u32 %v244, 4294901760
      %v1557 = vsub.f32 %v244, %v1556
      %v1558 = vand.u32 %v1557, 4294901760
      %1559 = vmatmul.mubr.f32.gmra.mrb[0].mxu0 %v1558
      %v1560 = vpop.f32.mrb[0].mxu0
      %v1561 = vadd.f32 %v1398, %v1560
      %v1562 = vpop.f32.mrb[0].mxu0
      %v1563 = vadd.f32 %v1400, %v1562
      %1564 = vmatprep.mubr.f32.mxu0 0.0
      %v1565 = vand.u32 %v245, 4294901760
      %v1566 = vsub.f32 %v245, %v1565
      %v1567 = vand.u32 %v1566, 4294901760
      %1568 = vmatmul.mubr.f32.gmra.mrb[0].mxu0 %v1567
      %v1569 = vpop.f32.mrb[0].mxu0
      %v1570 = vadd.f32 %v1406, %v1569
      %v1571 = vpop.f32.mrb[0].mxu0
      %v1572 = vadd.f32 %v1408, %v1571
      %1573 = vmatprep.mubr.f32.mxu0 0.0
      %v1574 = vand.u32 %v246, 4294901760
      %v1575 = vsub.f32 %v246, %v1574
      %v1576 = vand.u32 %v1575, 4294901760
      %1577 = vmatmul.mubr.f32.gmra.mrb[0].mxu0 %v1576
      %v1578 = vpop.f32.mrb[0].mxu0
      %v1579 = vadd.f32 %v1414, %v1578
      %v1580 = vpop.f32.mrb[0].mxu0
      %v1581 = vadd.f32 %v1416, %v1580
      %1582 = vmatprep.mubr.f32.mxu0 0.0
      %v1583 = vand.u32 %v247, 4294901760
      %v1584 = vsub.f32 %v247, %v1583
      %v1585 = vand.u32 %v1584, 4294901760
      %1586 = vmatmul.mubr.f32.gmra.mrb[0].mxu0 %v1585
      %v1587 = vpop.f32.mrb[0].mxu0
      %v1588 = vadd.f32 %v1422, %v1587
      %v1589 = vpop.f32.mrb[0].mxu0
      %v1590 = vadd.f32 %v1424, %v1589
      %1591 = vmatprep.mubr.f32.mxu0 0.0
      %v1592 = vand.u32 %v248, 4294901760
      %v1593 = vsub.f32 %v248, %v1592
      %v1594 = vand.u32 %v1593, 4294901760
      %1595 = vmatmul.mubr.f32.gmra.mrb[0].mxu0 %v1594
      %v1596 = vpop.f32.mrb[0].mxu0
      %v1597 = vadd.f32 %v1430, %v1596
      %v1598 = vpop.f32.mrb[0].mxu0
      %v1599 = vadd.f32 %v1432, %v1598
      %1600 = vmatprep.mubr.f32.mxu0 0.0
      %v1601 = vand.u32 %v249, 4294901760
      %v1602 = vsub.f32 %v249, %v1601
      %v1603 = vand.u32 %v1602, 4294901760
      %1604 = vmatmul.mubr.f32.gmra.mrb[0].mxu0 %v1603
      %v1605 = vpop.f32.mrb[0].mxu0
      %v1606 = vadd.f32 %v1438, %v1605
      %v1607 = vpop.f32.mrb[0].mxu0
      %v1608 = vadd.f32 %v1440, %v1607
      %1609 = vmatprep.mubr.f32.mxu0 0.0
      %v1610 = vand.u32 %v250, 4294901760
      %v1611 = vsub.f32 %v250, %v1610
      %v1612 = vand.u32 %v1611, 4294901760
      %1613 = vmatmul.mubr.f32.gmra.mrb[0].mxu0 %v1612
      %v1614 = vpop.f32.mrb[0].mxu0
      %v1615 = vadd.f32 %v1446, %v1614
      %v1616 = vpop.f32.mrb[0].mxu0
      %v1617 = vadd.f32 %v1448, %v1616
      %1618 = vdwg.mxu0
      %v1619 = vand.u32 %v451, 4294901760
      %v1620 = vsub.f32 %v451, %v1619
      %v1621 = vand.u32 %v1620, 4294901760
      %1622 = vmatprep.subr.mxu0 %v1621
      %v1623 = vand.u32 %v450, 4294901760
      %v1624 = vsub.f32 %v450, %v1623
      %v1625 = vand.u32 %v1624, 4294901760
      %1626 = vmatpush1.msra.mxu0 %v1625
      %v1627 = vand.u32 %v456, 4294901760
      %v1628 = vsub.f32 %v456, %v1627
      %v1629 = vand.u32 %v1628, 4294901760
      %1630 = vmatprep.subr.mxu0 %v1629
      %v1631 = vand.u32 %v455, 4294901760
      %v1632 = vsub.f32 %v455, %v1631
      %v1633 = vand.u32 %v1632, 4294901760
      %1634 = vmatpush1.msra.mxu0 %v1633
      %v1635 = vand.u32 %v461, 4294901760
      %v1636 = vsub.f32 %v461, %v1635
      %v1637 = vand.u32 %v1636, 4294901760
      %1638 = vmatprep.subr.mxu0 %v1637
      %v1639 = vand.u32 %v460, 4294901760
      %v1640 = vsub.f32 %v460, %v1639
      %v1641 = vand.u32 %v1640, 4294901760
      %1642 = vmatpush1.msra.mxu0 %v1641
      %v1643 = vand.u32 %v466, 4294901760
      %v1644 = vsub.f32 %v466, %v1643
      %v1645 = vand.u32 %v1644, 4294901760
      %1646 = vmatprep.subr.mxu0 %v1645
      %v1647 = vand.u32 %v465, 4294901760
      %v1648 = vsub.f32 %v465, %v1647
      %v1649 = vand.u32 %v1648, 4294901760
      %1650 = vmatpush1.msra.mxu0 %v1649
      %v1651 = vand.u32 %v471, 4294901760
      %v1652 = vsub.f32 %v471, %v1651
      %v1653 = vand.u32 %v1652, 4294901760
      %1654 = vmatprep.subr.mxu0 %v1653
      %v1655 = vand.u32 %v470, 4294901760
      %v1656 = vsub.f32 %v470, %v1655
      %v1657 = vand.u32 %v1656, 4294901760
      %1658 = vmatpush1.msra.mxu0 %v1657
      %v1659 = vand.u32 %v476, 4294901760
      %v1660 = vsub.f32 %v476, %v1659
      %v1661 = vand.u32 %v1660, 4294901760
      %1662 = vmatprep.subr.mxu0 %v1661
      %v1663 = vand.u32 %v475, 4294901760
      %v1664 = vsub.f32 %v475, %v1663
      %v1665 = vand.u32 %v1664, 4294901760
      %1666 = vmatpush1.msra.mxu0 %v1665
      %v1667 = vand.u32 %v481, 4294901760
      %v1668 = vsub.f32 %v481, %v1667
      %v1669 = vand.u32 %v1668, 4294901760
      %1670 = vmatprep.subr.mxu0 %v1669
      %v1671 = vand.u32 %v480, 4294901760
      %v1672 = vsub.f32 %v480, %v1671
      %v1673 = vand.u32 %v1672, 4294901760
      %1674 = vmatpush1.msra.mxu0 %v1673
      %v1675 = vand.u32 %v486, 4294901760
      %v1676 = vsub.f32 %v486, %v1675
      %v1677 = vand.u32 %v1676, 4294901760
      %1678 = vmatprep.subr.mxu0 %v1677
      %v1679 = vand.u32 %v485, 4294901760
      %v1680 = vsub.f32 %v485, %v1679
      %v1681 = vand.u32 %v1680, 4294901760
      %1682 = vmatpush1.msra.mxu0 %v1681
      %v1683 = vand.u32 %v491, 4294901760
      %v1684 = vsub.f32 %v491, %v1683
      %v1685 = vand.u32 %v1684, 4294901760
      %1686 = vmatprep.subr.mxu0 %v1685
      %v1687 = vand.u32 %v490, 4294901760
      %v1688 = vsub.f32 %v490, %v1687
      %v1689 = vand.u32 %v1688, 4294901760
      %1690 = vmatpush1.msra.mxu0 %v1689
      %v1691 = vand.u32 %v496, 4294901760
      %v1692 = vsub.f32 %v496, %v1691
      %v1693 = vand.u32 %v1692, 4294901760
      %1694 = vmatprep.subr.mxu0 %v1693
      %v1695 = vand.u32 %v495, 4294901760
      %v1696 = vsub.f32 %v495, %v1695
      %v1697 = vand.u32 %v1696, 4294901760
      %1698 = vmatpush1.msra.mxu0 %v1697
      %v1699 = vand.u32 %v501, 4294901760
      %v1700 = vsub.f32 %v501, %v1699
      %v1701 = vand.u32 %v1700, 4294901760
      %1702 = vmatprep.subr.mxu0 %v1701
      %v1703 = vand.u32 %v500, 4294901760
      %v1704 = vsub.f32 %v500, %v1703
      %v1705 = vand.u32 %v1704, 4294901760
      %1706 = vmatpush1.msra.mxu0 %v1705
      %v1707 = vand.u32 %v506, 4294901760
      %v1708 = vsub.f32 %v506, %v1707
      %v1709 = vand.u32 %v1708, 4294901760
      %1710 = vmatprep.subr.mxu0 %v1709
      %v1711 = vand.u32 %v505, 4294901760
      %v1712 = vsub.f32 %v505, %v1711
      %v1713 = vand.u32 %v1712, 4294901760
      %1714 = vmatpush1.msra.mxu0 %v1713
      %v1715 = vand.u32 %v511, 4294901760
      %v1716 = vsub.f32 %v511, %v1715
      %v1717 = vand.u32 %v1716, 4294901760
      %1718 = vmatprep.subr.mxu0 %v1717
      %v1719 = vand.u32 %v510, 4294901760
      %v1720 = vsub.f32 %v510, %v1719
      %v1721 = vand.u32 %v1720, 4294901760
      %1722 = vmatpush1.msra.mxu0 %v1721
      %v1723 = vand.u32 %v516, 4294901760
      %v1724 = vsub.f32 %v516, %v1723
      %v1725 = vand.u32 %v1724, 4294901760
      %1726 = vmatprep.subr.mxu0 %v1725
      %v1727 = vand.u32 %v515, 4294901760
      %v1728 = vsub.f32 %v515, %v1727
      %v1729 = vand.u32 %v1728, 4294901760
      %1730 = vmatpush1.msra.mxu0 %v1729
      %v1731 = vand.u32 %v521, 4294901760
      %v1732 = vsub.f32 %v521, %v1731
      %v1733 = vand.u32 %v1732, 4294901760
      %1734 = vmatprep.subr.mxu0 %v1733
      %v1735 = vand.u32 %v520, 4294901760
      %v1736 = vsub.f32 %v520, %v1735
      %v1737 = vand.u32 %v1736, 4294901760
      %1738 = vmatpush1.msra.mxu0 %v1737
      %v1739 = vand.u32 %v526, 4294901760
      %v1740 = vsub.f32 %v526, %v1739
      %v1741 = vand.u32 %v1740, 4294901760
      %1742 = vmatprep.subr.mxu0 %v1741
      %v1743 = vand.u32 %v525, 4294901760
      %v1744 = vsub.f32 %v525, %v1743
      %v1745 = vand.u32 %v1744, 4294901760
      %1746 = vmatpush1.msra.mxu0 %v1745
      %1747 = vmatprep.subr.mxu0 0.0
      %1748 = vmatpush1.msra.mxu0 0.0
      %1749 = vmatprep.subr.mxu0 0.0
      %1750 = vmatpush1.msra.mxu0 0.0
      %1751 = vmatprep.subr.mxu0 0.0
      %1752 = vmatpush1.msra.mxu0 0.0
      %1753 = vmatprep.subr.mxu0 0.0
      %1754 = vmatpush1.msra.mxu0 0.0
      %1755 = vmatprep.subr.mxu0 0.0
      %1756 = vmatpush1.msra.mxu0 0.0
      %1757 = vmatprep.subr.mxu0 0.0
      %1758 = vmatpush1.msra.mxu0 0.0
      %1759 = vmatprep.subr.mxu0 0.0
      %1760 = vmatpush1.msra.mxu0 0.0
      %1761 = vmatprep.subr.mxu0 0.0
      %1762 = vmatpush1.msra.mxu0 0.0
      %1763 = vmatprep.subr.mxu0 0.0
      %1764 = vmatpush1.msra.mxu0 0.0
      %1765 = vmatprep.subr.mxu0 0.0
      %1766 = vmatpush1.msra.mxu0 0.0
      %1767 = vmatprep.subr.mxu0 0.0
      %1768 = vmatpush1.msra.mxu0 0.0
      %1769 = vmatprep.subr.mxu0 0.0
      %1770 = vmatpush1.msra.mxu0 0.0
      %1771 = vmatprep.subr.mxu0 0.0
      %1772 = vmatpush1.msra.mxu0 0.0
      %1773 = vmatprep.subr.mxu0 0.0
      %1774 = vmatpush1.msra.mxu0 0.0
      %1775 = vmatprep.subr.mxu0 0.0
      %1776 = vmatpush1.msra.mxu0 0.0
      %1777 = vmatprep.subr.mxu0 0.0
      %1778 = vmatpush1.msra.mxu0 0.0
      %1779 = vmatprep.mubr.f32.mxu0 0.0
      %v1780 = vand.u32 %v243, 4294901760
      %1781 = vmatmul.mubr.f32.gmra.mrb[0].mxu0 %v1780
      %v1782 = vpop.f32.mrb[0].mxu0
      %v1783 = vadd.f32 %v1552, %v1782
      %v1784 = vpop.f32.mrb[0].mxu0
      %v1785 = vadd.f32 %v1554, %v1784
      %1786 = vmatprep.mubr.f32.mxu0 0.0
      %v1787 = vand.u32 %v244, 4294901760
      %1788 = vmatmul.mubr.f32.gmra.mrb[0].mxu0 %v1787
      %v1789 = vpop.f32.mrb[0].mxu0
      %v1790 = vadd.f32 %v1561, %v1789
      %v1791 = vpop.f32.mrb[0].mxu0
      %v1792 = vadd.f32 %v1563, %v1791
      %1793 = vmatprep.mubr.f32.mxu0 0.0
      %v1794 = vand.u32 %v245, 4294901760
      %1795 = vmatmul.mubr.f32.gmra.mrb[0].mxu0 %v1794
      %v1796 = vpop.f32.mrb[0].mxu0
      %v1797 = vadd.f32 %v1570, %v1796
      %v1798 = vpop.f32.mrb[0].mxu0
      %v1799 = vadd.f32 %v1572, %v1798
      %1800 = vmatprep.mubr.f32.mxu0 0.0
      %v1801 = vand.u32 %v246, 4294901760
      %1802 = vmatmul.mubr.f32.gmra.mrb[0].mxu0 %v1801
      %v1803 = vpop.f32.mrb[0].mxu0
      %v1804 = vadd.f32 %v1579, %v1803
      %v1805 = vpop.f32.mrb[0].mxu0
      %v1806 = vadd.f32 %v1581, %v1805
      %1807 = vmatprep.mubr.f32.mxu0 0.0
      %v1808 = vand.u32 %v247, 4294901760
      %1809 = vmatmul.mubr.f32.gmra.mrb[0].mxu0 %v1808
      %v1810 = vpop.f32.mrb[0].mxu0
      %v1811 = vadd.f32 %v1588, %v1810
      %v1812 = vpop.f32.mrb[0].mxu0
      %v1813 = vadd.f32 %v1590, %v1812
      %1814 = vmatprep.mubr.f32.mxu0 0.0
      %v1815 = vand.u32 %v248, 4294901760
      %1816 = vmatmul.mubr.f32.gmra.mrb[0].mxu0 %v1815
      %v1817 = vpop.f32.mrb[0].mxu0
      %v1818 = vadd.f32 %v1597, %v1817
      %v1819 = vpop.f32.mrb[0].mxu0
      %v1820 = vadd.f32 %v1599, %v1819
      %1821 = vmatprep.mubr.f32.mxu0 0.0
      %v1822 = vand.u32 %v249, 4294901760
      %1823 = vmatmul.mubr.f32.gmra.mrb[0].mxu0 %v1822
      %v1824 = vpop.f32.mrb[0].mxu0
      %v1825 = vadd.f32 %v1606, %v1824
      %v1826 = vpop.f32.mrb[0].mxu0
      %v1827 = vadd.f32 %v1608, %v1826
      %1828 = vmatprep.mubr.f32.mxu0 0.0
      %v1829 = vand.u32 %v250, 4294901760
      %1830 = vmatmul.mubr.f32.gmra.mrb[0].mxu0 %v1829
      %v1831 = vpop.f32.mrb[0].mxu0
      %v1832 = vadd.f32 %v1615, %v1831
      %v1833 = vpop.f32.mrb[0].mxu0
      %v1834 = vadd.f32 %v1617, %v1833
      %1835 = vdwg.mxu0
      %v1836 = vand.u32 %v451, 4294901760
      %1837 = vmatprep.subr.mxu0 %v1836
      %v1838 = vand.u32 %v450, 4294901760
      %1839 = vmatpush1.msra.mxu0 %v1838
      %v1840 = vand.u32 %v456, 4294901760
      %1841 = vmatprep.subr.mxu0 %v1840
      %v1842 = vand.u32 %v455, 4294901760
      %1843 = vmatpush1.msra.mxu0 %v1842
      %v1844 = vand.u32 %v461, 4294901760
      %1845 = vmatprep.subr.mxu0 %v1844
      %v1846 = vand.u32 %v460, 4294901760
      %1847 = vmatpush1.msra.mxu0 %v1846
      %v1848 = vand.u32 %v466, 4294901760
      %1849 = vmatprep.subr.mxu0 %v1848
      %v1850 = vand.u32 %v465, 4294901760
      %1851 = vmatpush1.msra.mxu0 %v1850
      %v1852 = vand.u32 %v471, 4294901760
      %1853 = vmatprep.subr.mxu0 %v1852
      %v1854 = vand.u32 %v470, 4294901760
      %1855 = vmatpush1.msra.mxu0 %v1854
      %v1856 = vand.u32 %v476, 4294901760
      %1857 = vmatprep.subr.mxu0 %v1856
      %v1858 = vand.u32 %v475, 4294901760
      %1859 = vmatpush1.msra.mxu0 %v1858
      %v1860 = vand.u32 %v481, 4294901760
      %1861 = vmatprep.subr.mxu0 %v1860
      %v1862 = vand.u32 %v480, 4294901760
      %1863 = vmatpush1.msra.mxu0 %v1862
      %v1864 = vand.u32 %v486, 4294901760
      %1865 = vmatprep.subr.mxu0 %v1864
      %v1866 = vand.u32 %v485, 4294901760
      %1867 = vmatpush1.msra.mxu0 %v1866
      %v1868 = vand.u32 %v491, 4294901760
      %1869 = vmatprep.subr.mxu0 %v1868
      %v1870 = vand.u32 %v490, 4294901760
      %1871 = vmatpush1.msra.mxu0 %v1870
      %v1872 = vand.u32 %v496, 4294901760
      %1873 = vmatprep.subr.mxu0 %v1872
      %v1874 = vand.u32 %v495, 4294901760
      %1875 = vmatpush1.msra.mxu0 %v1874
      %v1876 = vand.u32 %v501, 4294901760
      %1877 = vmatprep.subr.mxu0 %v1876
      %v1878 = vand.u32 %v500, 4294901760
      %1879 = vmatpush1.msra.mxu0 %v1878
      %v1880 = vand.u32 %v506, 4294901760
      %1881 = vmatprep.subr.mxu0 %v1880
      %v1882 = vand.u32 %v505, 4294901760
      %1883 = vmatpush1.msra.mxu0 %v1882
      %v1884 = vand.u32 %v511, 4294901760
      %1885 = vmatprep.subr.mxu0 %v1884
      %v1886 = vand.u32 %v510, 4294901760
      %1887 = vmatpush1.msra.mxu0 %v1886
      %v1888 = vand.u32 %v516, 4294901760
      %1889 = vmatprep.subr.mxu0 %v1888
      %v1890 = vand.u32 %v515, 4294901760
      %1891 = vmatpush1.msra.mxu0 %v1890
      %v1892 = vand.u32 %v521, 4294901760
      %1893 = vmatprep.subr.mxu0 %v1892
      %v1894 = vand.u32 %v520, 4294901760
      %1895 = vmatpush1.msra.mxu0 %v1894
      %v1896 = vand.u32 %v526, 4294901760
      %1897 = vmatprep.subr.mxu0 %v1896
      %v1898 = vand.u32 %v525, 4294901760
      %1899 = vmatpush1.msra.mxu0 %v1898
      %1900 = vmatprep.subr.mxu0 0.0
      %1901 = vmatpush1.msra.mxu0 0.0
      %1902 = vmatprep.subr.mxu0 0.0
      %1903 = vmatpush1.msra.mxu0 0.0
      %1904 = vmatprep.subr.mxu0 0.0
      %1905 = vmatpush1.msra.mxu0 0.0
      %1906 = vmatprep.subr.mxu0 0.0
      %1907 = vmatpush1.msra.mxu0 0.0
      %1908 = vmatprep.subr.mxu0 0.0
      %1909 = vmatpush1.msra.mxu0 0.0
      %1910 = vmatprep.subr.mxu0 0.0
      %1911 = vmatpush1.msra.mxu0 0.0
      %1912 = vmatprep.subr.mxu0 0.0
      %1913 = vmatpush1.msra.mxu0 0.0
      %1914 = vmatprep.subr.mxu0 0.0
      %1915 = vmatpush1.msra.mxu0 0.0
      %1916 = vmatprep.subr.mxu0 0.0
      %1917 = vmatpush1.msra.mxu0 0.0
      %1918 = vmatprep.subr.mxu0 0.0
      %1919 = vmatpush1.msra.mxu0 0.0
      %1920 = vmatprep.subr.mxu0 0.0
      %1921 = vmatpush1.msra.mxu0 0.0
      %1922 = vmatprep.subr.mxu0 0.0
      %1923 = vmatpush1.msra.mxu0 0.0
      %1924 = vmatprep.subr.mxu0 0.0
      %1925 = vmatpush1.msra.mxu0 0.0
      %1926 = vmatprep.subr.mxu0 0.0
      %1927 = vmatpush1.msra.mxu0 0.0
      %1928 = vmatprep.subr.mxu0 0.0
      %1929 = vmatpush1.msra.mxu0 0.0
      %1930 = vmatprep.subr.mxu0 0.0
      %1931 = vmatpush1.msra.mxu0 0.0
      %1932 = vmatprep.mubr.f32.mxu0 0.0
      %v1933 = vand.u32 %v243, 4294901760
      %1934 = vmatmul.mubr.f32.gmra.mrb[0].mxu0 %v1933
      %v1935 = vpop.f32.mrb[0].mxu0
      %v1936 = vadd.f32 %v1783, %v1935
      %v1937 = vpop.f32.mrb[0].mxu0
      %v1938 = vadd.f32 %v1785, %v1937
      %1939 = vmatprep.mubr.f32.mxu0 0.0
      %v1940 = vand.u32 %v244, 4294901760
      %1941 = vmatmul.mubr.f32.gmra.mrb[0].mxu0 %v1940
      %v1942 = vpop.f32.mrb[0].mxu0
      %v1943 = vadd.f32 %v1790, %v1942
      %v1944 = vpop.f32.mrb[0].mxu0
      %v1945 = vadd.f32 %v1792, %v1944
      %1946 = vmatprep.mubr.f32.mxu0 0.0
      %v1947 = vand.u32 %v245, 4294901760
      %1948 = vmatmul.mubr.f32.gmra.mrb[0].mxu0 %v1947
      %v1949 = vpop.f32.mrb[0].mxu0
      %v1950 = vadd.f32 %v1797, %v1949
      %v1951 = vpop.f32.mrb[0].mxu0
      %v1952 = vadd.f32 %v1799, %v1951
      %1953 = vmatprep.mubr.f32.mxu0 0.0
      %v1954 = vand.u32 %v246, 4294901760
      %1955 = vmatmul.mubr.f32.gmra.mrb[0].mxu0 %v1954
      %v1956 = vpop.f32.mrb[0].mxu0
      %v1957 = vadd.f32 %v1804, %v1956
      %v1958 = vpop.f32.mrb[0].mxu0
      %v1959 = vadd.f32 %v1806, %v1958
      %1960 = vmatprep.mubr.f32.mxu0 0.0
      %v1961 = vand.u32 %v247, 4294901760
      %1962 = vmatmul.mubr.f32.gmra.mrb[0].mxu0 %v1961
      %v1963 = vpop.f32.mrb[0].mxu0
      %v1964 = vadd.f32 %v1811, %v1963
      %v1965 = vpop.f32.mrb[0].mxu0
      %v1966 = vadd.f32 %v1813, %v1965
      %1967 = vmatprep.mubr.f32.mxu0 0.0
      %v1968 = vand.u32 %v248, 4294901760
      %1969 = vmatmul.mubr.f32.gmra.mrb[0].mxu0 %v1968
      %v1970 = vpop.f32.mrb[0].mxu0
      %v1971 = vadd.f32 %v1818, %v1970
      %v1972 = vpop.f32.mrb[0].mxu0
      %v1973 = vadd.f32 %v1820, %v1972
      %1974 = vmatprep.mubr.f32.mxu0 0.0
      %v1975 = vand.u32 %v249, 4294901760
      %1976 = vmatmul.mubr.f32.gmra.mrb[0].mxu0 %v1975
      %v1977 = vpop.f32.mrb[0].mxu0
      %v1978 = vadd.f32 %v1825, %v1977
      %v1979 = vpop.f32.mrb[0].mxu0
      %v1980 = vadd.f32 %v1827, %v1979
      %1981 = vmatprep.mubr.f32.mxu0 0.0
      %v1982 = vand.u32 %v250, 4294901760
      %1983 = vmatmul.mubr.f32.gmra.mrb[0].mxu0 %v1982
      %v1984 = vpop.f32.mrb[0].mxu0
      %v1985 = vadd.f32 %v1832, %v1984
      %v1986 = vpop.f32.mrb[0].mxu0
      %v1987 = vadd.f32 %v1834, %v1986
      %1988 = vdwg.mxu0
      %v1989 = vand.u32 %v453, 4294901760
      %1990 = vmatprep.subr.mxu0 %v1989
      %v1991 = vand.u32 %v452, 4294901760
      %1992 = vmatpush1.msra.mxu0 %v1991
      %v1993 = vand.u32 %v458, 4294901760
      %1994 = vmatprep.subr.mxu0 %v1993
      %v1995 = vand.u32 %v457, 4294901760
      %1996 = vmatpush1.msra.mxu0 %v1995
      %v1997 = vand.u32 %v463, 4294901760
      %1998 = vmatprep.subr.mxu0 %v1997
      %v1999 = vand.u32 %v462, 4294901760
      %2000 = vmatpush1.msra.mxu0 %v1999
      %v2001 = vand.u32 %v468, 4294901760
      %2002 = vmatprep.subr.mxu0 %v2001
      %v2003 = vand.u32 %v467, 4294901760
      %2004 = vmatpush1.msra.mxu0 %v2003
      %v2005 = vand.u32 %v473, 4294901760
      %2006 = vmatprep.subr.mxu0 %v2005
      %v2007 = vand.u32 %v472, 4294901760
      %2008 = vmatpush1.msra.mxu0 %v2007
      %v2009 = vand.u32 %v478, 4294901760
      %2010 = vmatprep.subr.mxu0 %v2009
      %v2011 = vand.u32 %v477, 4294901760
      %2012 = vmatpush1.msra.mxu0 %v2011
      %v2013 = vand.u32 %v483, 4294901760
      %2014 = vmatprep.subr.mxu0 %v2013
      %v2015 = vand.u32 %v482, 4294901760
      %2016 = vmatpush1.msra.mxu0 %v2015
      %v2017 = vand.u32 %v488, 4294901760
      %2018 = vmatprep.subr.mxu0 %v2017
      %v2019 = vand.u32 %v487, 4294901760
      %2020 = vmatpush1.msra.mxu0 %v2019
      %v2021 = vand.u32 %v493, 4294901760
      %2022 = vmatprep.subr.mxu0 %v2021
      %v2023 = vand.u32 %v492, 4294901760
      %2024 = vmatpush1.msra.mxu0 %v2023
      %v2025 = vand.u32 %v498, 4294901760
      %2026 = vmatprep.subr.mxu0 %v2025
      %v2027 = vand.u32 %v497, 4294901760
      %2028 = vmatpush1.msra.mxu0 %v2027
      %v2029 = vand.u32 %v503, 4294901760
      %2030 = vmatprep.subr.mxu0 %v2029
      %v2031 = vand.u32 %v502, 4294901760
      %2032 = vmatpush1.msra.mxu0 %v2031
      %v2033 = vand.u32 %v508, 4294901760
      %2034 = vmatprep.subr.mxu0 %v2033
      %v2035 = vand.u32 %v507, 4294901760
      %2036 = vmatpush1.msra.mxu0 %v2035
      %v2037 = vand.u32 %v513, 4294901760
      %2038 = vmatprep.subr.mxu0 %v2037
      %v2039 = vand.u32 %v512, 4294901760
      %2040 = vmatpush1.msra.mxu0 %v2039
      %v2041 = vand.u32 %v518, 4294901760
      %2042 = vmatprep.subr.mxu0 %v2041
      %v2043 = vand.u32 %v517, 4294901760
      %2044 = vmatpush1.msra.mxu0 %v2043
      %v2045 = vand.u32 %v523, 4294901760
      %2046 = vmatprep.subr.mxu0 %v2045
      %v2047 = vand.u32 %v522, 4294901760
      %2048 = vmatpush1.msra.mxu0 %v2047
      %v2049 = vand.u32 %v528, 4294901760
      %2050 = vmatprep.subr.mxu0 %v2049
      %v2051 = vand.u32 %v527, 4294901760
      %2052 = vmatpush1.msra.mxu0 %v2051
      %2053 = vmatprep.subr.mxu0 0.0
      %2054 = vmatpush1.msra.mxu0 0.0
      %2055 = vmatprep.subr.mxu0 0.0
      %2056 = vmatpush1.msra.mxu0 0.0
      %2057 = vmatprep.subr.mxu0 0.0
      %2058 = vmatpush1.msra.mxu0 0.0
      %2059 = vmatprep.subr.mxu0 0.0
      %2060 = vmatpush1.msra.mxu0 0.0
      %2061 = vmatprep.subr.mxu0 0.0
      %2062 = vmatpush1.msra.mxu0 0.0
      %2063 = vmatprep.subr.mxu0 0.0
      %2064 = vmatpush1.msra.mxu0 0.0
      %2065 = vmatprep.subr.mxu0 0.0
      %2066 = vmatpush1.msra.mxu0 0.0
      %2067 = vmatprep.subr.mxu0 0.0
      %2068 = vmatpush1.msra.mxu0 0.0
      %2069 = vmatprep.subr.mxu0 0.0
      %2070 = vmatpush1.msra.mxu0 0.0
      %2071 = vmatprep.subr.mxu0 0.0
      %2072 = vmatpush1.msra.mxu0 0.0
      %2073 = vmatprep.subr.mxu0 0.0
      %2074 = vmatpush1.msra.mxu0 0.0
      %2075 = vmatprep.subr.mxu0 0.0
      %2076 = vmatpush1.msra.mxu0 0.0
      %2077 = vmatprep.subr.mxu0 0.0
      %2078 = vmatpush1.msra.mxu0 0.0
      %2079 = vmatprep.subr.mxu0 0.0
      %2080 = vmatpush1.msra.mxu0 0.0
      %2081 = vmatprep.subr.mxu0 0.0
      %2082 = vmatpush1.msra.mxu0 0.0
      %2083 = vmatprep.subr.mxu0 0.0
      %2084 = vmatpush1.msra.mxu0 0.0
      %2085 = vmatprep.mubr.f32.mxu0 0.0
      %v2086 = vand.u32 %v243, 4294901760
      %v2087 = vsub.f32 %v243, %v2086
      %v2088 = vand.u32 %v2087, 4294901760
      %v2089 = vsub.f32 %v2087, %v2088
      %v2090 = vand.u32 %v2089, 4294901760
      %2091 = vmatmul.mubr.f32.gmra.mrb[0].mxu0 %v2090
      %v2092 = vpop.f32.mrb[0].mxu0
      %v2093 = vadd.f32 0.0, %v2092
      %v2094 = vpop.f32.mrb[0].mxu0
      %v2095 = vadd.f32 0.0, %v2094
      %2096 = vmatprep.mubr.f32.mxu0 0.0
      %v2097 = vand.u32 %v244, 4294901760
      %v2098 = vsub.f32 %v244, %v2097
      %v2099 = vand.u32 %v2098, 4294901760
      %v2100 = vsub.f32 %v2098, %v2099
      %v2101 = vand.u32 %v2100, 4294901760
      %2102 = vmatmul.mubr.f32.gmra.mrb[0].mxu0 %v2101
      %v2103 = vpop.f32.mrb[0].mxu0
      %v2104 = vadd.f32 0.0, %v2103
      %v2105 = vpop.f32.mrb[0].mxu0
      %v2106 = vadd.f32 0.0, %v2105
      %2107 = vmatprep.mubr.f32.mxu0 0.0
      %v2108 = vand.u32 %v245, 4294901760
      %v2109 = vsub.f32 %v245, %v2108
      %v2110 = vand.u32 %v2109, 4294901760
      %v2111 = vsub.f32 %v2109, %v2110
      %v2112 = vand.u32 %v2111, 4294901760
      %2113 = vmatmul.mubr.f32.gmra.mrb[0].mxu0 %v2112
      %v2114 = vpop.f32.mrb[0].mxu0
      %v2115 = vadd.f32 0.0, %v2114
      %v2116 = vpop.f32.mrb[0].mxu0
      %v2117 = vadd.f32 0.0, %v2116
      %2118 = vmatprep.mubr.f32.mxu0 0.0
      %v2119 = vand.u32 %v246, 4294901760
      %v2120 = vsub.f32 %v246, %v2119
      %v2121 = vand.u32 %v2120, 4294901760
      %v2122 = vsub.f32 %v2120, %v2121
      %v2123 = vand.u32 %v2122, 4294901760
      %2124 = vmatmul.mubr.f32.gmra.mrb[0].mxu0 %v2123
      %v2125 = vpop.f32.mrb[0].mxu0
      %v2126 = vadd.f32 0.0, %v2125
      %v2127 = vpop.f32.mrb[0].mxu0
      %v2128 = vadd.f32 0.0, %v2127
      %2129 = vmatprep.mubr.f32.mxu0 0.0
      %v2130 = vand.u32 %v247, 4294901760
      %v2131 = vsub.f32 %v247, %v2130
      %v2132 = vand.u32 %v2131, 4294901760
      %v2133 = vsub.f32 %v2131, %v2132
      %v2134 = vand.u32 %v2133, 4294901760
      %2135 = vmatmul.mubr.f32.gmra.mrb[0].mxu0 %v2134
      %v2136 = vpop.f32.mrb[0].mxu0
      %v2137 = vadd.f32 0.0, %v2136
      %v2138 = vpop.f32.mrb[0].mxu0
      %v2139 = vadd.f32 0.0, %v2138
      %2140 = vmatprep.mubr.f32.mxu0 0.0
      %v2141 = vand.u32 %v248, 4294901760
      %v2142 = vsub.f32 %v248, %v2141
      %v2143 = vand.u32 %v2142, 4294901760
      %v2144 = vsub.f32 %v2142, %v2143
      %v2145 = vand.u32 %v2144, 4294901760
      %2146 = vmatmul.mubr.f32.gmra.mrb[0].mxu0 %v2145
      %v2147 = vpop.f32.mrb[0].mxu0
      %v2148 = vadd.f32 0.0, %v2147
      %v2149 = vpop.f32.mrb[0].mxu0
      %v2150 = vadd.f32 0.0, %v2149
      %2151 = vmatprep.mubr.f32.mxu0 0.0
      %v2152 = vand.u32 %v249, 4294901760
      %v2153 = vsub.f32 %v249, %v2152
      %v2154 = vand.u32 %v2153, 4294901760
      %v2155 = vsub.f32 %v2153, %v2154
      %v2156 = vand.u32 %v2155, 4294901760
      %2157 = vmatmul.mubr.f32.gmra.mrb[0].mxu0 %v2156
      %v2158 = vpop.f32.mrb[0].mxu0
      %v2159 = vadd.f32 0.0, %v2158
      %v2160 = vpop.f32.mrb[0].mxu0
      %v2161 = vadd.f32 0.0, %v2160
      %2162 = vmatprep.mubr.f32.mxu0 0.0
      %v2163 = vand.u32 %v250, 4294901760
      %v2164 = vsub.f32 %v250, %v2163
      %v2165 = vand.u32 %v2164, 4294901760
      %v2166 = vsub.f32 %v2164, %v2165
      %v2167 = vand.u32 %v2166, 4294901760
      %2168 = vmatmul.mubr.f32.gmra.mrb[0].mxu0 %v2167
      %v2169 = vpop.f32.mrb[0].mxu0
      %v2170 = vadd.f32 0.0, %v2169
      %v2171 = vpop.f32.mrb[0].mxu0
      %v2172 = vadd.f32 0.0, %v2171
      %2173 = vdwg.mxu0
      %v2174 = vand.u32 %v453, 4294901760
      %v2175 = vsub.f32 %v453, %v2174
      %v2176 = vand.u32 %v2175, 4294901760
      %v2177 = vsub.f32 %v2175, %v2176
      %v2178 = vand.u32 %v2177, 4294901760
      %2179 = vmatprep.subr.mxu0 %v2178
      %v2180 = vand.u32 %v452, 4294901760
      %v2181 = vsub.f32 %v452, %v2180
      %v2182 = vand.u32 %v2181, 4294901760
      %v2183 = vsub.f32 %v2181, %v2182
      %v2184 = vand.u32 %v2183, 4294901760
      %2185 = vmatpush1.msra.mxu0 %v2184
      %v2186 = vand.u32 %v458, 4294901760
      %v2187 = vsub.f32 %v458, %v2186
      %v2188 = vand.u32 %v2187, 4294901760
      %v2189 = vsub.f32 %v2187, %v2188
      %v2190 = vand.u32 %v2189, 4294901760
      %2191 = vmatprep.subr.mxu0 %v2190
      %v2192 = vand.u32 %v457, 4294901760
      %v2193 = vsub.f32 %v457, %v2192
      %v2194 = vand.u32 %v2193, 4294901760
      %v2195 = vsub.f32 %v2193, %v2194
      %v2196 = vand.u32 %v2195, 4294901760
      %2197 = vmatpush1.msra.mxu0 %v2196
      %v2198 = vand.u32 %v463, 4294901760
      %v2199 = vsub.f32 %v463, %v2198
      %v2200 = vand.u32 %v2199, 4294901760
      %v2201 = vsub.f32 %v2199, %v2200
      %v2202 = vand.u32 %v2201, 4294901760
      %2203 = vmatprep.subr.mxu0 %v2202
      %v2204 = vand.u32 %v462, 4294901760
      %v2205 = vsub.f32 %v462, %v2204
      %v2206 = vand.u32 %v2205, 4294901760
      %v2207 = vsub.f32 %v2205, %v2206
      %v2208 = vand.u32 %v2207, 4294901760
      %2209 = vmatpush1.msra.mxu0 %v2208
      %v2210 = vand.u32 %v468, 4294901760
      %v2211 = vsub.f32 %v468, %v2210
      %v2212 = vand.u32 %v2211, 4294901760
      %v2213 = vsub.f32 %v2211, %v2212
      %v2214 = vand.u32 %v2213, 4294901760
      %2215 = vmatprep.subr.mxu0 %v2214
      %v2216 = vand.u32 %v467, 4294901760
      %v2217 = vsub.f32 %v467, %v2216
      %v2218 = vand.u32 %v2217, 4294901760
      %v2219 = vsub.f32 %v2217, %v2218
      %v2220 = vand.u32 %v2219, 4294901760
      %2221 = vmatpush1.msra.mxu0 %v2220
      %v2222 = vand.u32 %v473, 4294901760
      %v2223 = vsub.f32 %v473, %v2222
      %v2224 = vand.u32 %v2223, 4294901760
      %v2225 = vsub.f32 %v2223, %v2224
      %v2226 = vand.u32 %v2225, 4294901760
      %2227 = vmatprep.subr.mxu0 %v2226
      %v2228 = vand.u32 %v472, 4294901760
      %v2229 = vsub.f32 %v472, %v2228
      %v2230 = vand.u32 %v2229, 4294901760
      %v2231 = vsub.f32 %v2229, %v2230
      %v2232 = vand.u32 %v2231, 4294901760
      %2233 = vmatpush1.msra.mxu0 %v2232
      %v2234 = vand.u32 %v478, 4294901760
      %v2235 = vsub.f32 %v478, %v2234
      %v2236 = vand.u32 %v2235, 4294901760
      %v2237 = vsub.f32 %v2235, %v2236
      %v2238 = vand.u32 %v2237, 4294901760
      %2239 = vmatprep.subr.mxu0 %v2238
      %v2240 = vand.u32 %v477, 4294901760
      %v2241 = vsub.f32 %v477, %v2240
      %v2242 = vand.u32 %v2241, 4294901760
      %v2243 = vsub.f32 %v2241, %v2242
      %v2244 = vand.u32 %v2243, 4294901760
      %2245 = vmatpush1.msra.mxu0 %v2244
      %v2246 = vand.u32 %v483, 4294901760
      %v2247 = vsub.f32 %v483, %v2246
      %v2248 = vand.u32 %v2247, 4294901760
      %v2249 = vsub.f32 %v2247, %v2248
      %v2250 = vand.u32 %v2249, 4294901760
      %2251 = vmatprep.subr.mxu0 %v2250
      %v2252 = vand.u32 %v482, 4294901760
      %v2253 = vsub.f32 %v482, %v2252
      %v2254 = vand.u32 %v2253, 4294901760
      %v2255 = vsub.f32 %v2253, %v2254
      %v2256 = vand.u32 %v2255, 4294901760
      %2257 = vmatpush1.msra.mxu0 %v2256
      %v2258 = vand.u32 %v488, 4294901760
      %v2259 = vsub.f32 %v488, %v2258
      %v2260 = vand.u32 %v2259, 4294901760
      %v2261 = vsub.f32 %v2259, %v2260
      %v2262 = vand.u32 %v2261, 4294901760
      %2263 = vmatprep.subr.mxu0 %v2262
      %v2264 = vand.u32 %v487, 4294901760
      %v2265 = vsub.f32 %v487, %v2264
      %v2266 = vand.u32 %v2265, 4294901760
      %v2267 = vsub.f32 %v2265, %v2266
      %v2268 = vand.u32 %v2267, 4294901760
      %2269 = vmatpush1.msra.mxu0 %v2268
      %v2270 = vand.u32 %v493, 4294901760
      %v2271 = vsub.f32 %v493, %v2270
      %v2272 = vand.u32 %v2271, 4294901760
      %v2273 = vsub.f32 %v2271, %v2272
      %v2274 = vand.u32 %v2273, 4294901760
      %2275 = vmatprep.subr.mxu0 %v2274
      %v2276 = vand.u32 %v492, 4294901760
      %v2277 = vsub.f32 %v492, %v2276
      %v2278 = vand.u32 %v2277, 4294901760
      %v2279 = vsub.f32 %v2277, %v2278
      %v2280 = vand.u32 %v2279, 4294901760
      %2281 = vmatpush1.msra.mxu0 %v2280
      %v2282 = vand.u32 %v498, 4294901760
      %v2283 = vsub.f32 %v498, %v2282
      %v2284 = vand.u32 %v2283, 4294901760
      %v2285 = vsub.f32 %v2283, %v2284
      %v2286 = vand.u32 %v2285, 4294901760
      %2287 = vmatprep.subr.mxu0 %v2286
      %v2288 = vand.u32 %v497, 4294901760
      %v2289 = vsub.f32 %v497, %v2288
      %v2290 = vand.u32 %v2289, 4294901760
      %v2291 = vsub.f32 %v2289, %v2290
      %v2292 = vand.u32 %v2291, 4294901760
      %2293 = vmatpush1.msra.mxu0 %v2292
      %v2294 = vand.u32 %v503, 4294901760
      %v2295 = vsub.f32 %v503, %v2294
      %v2296 = vand.u32 %v2295, 4294901760
      %v2297 = vsub.f32 %v2295, %v2296
      %v2298 = vand.u32 %v2297, 4294901760
      %2299 = vmatprep.subr.mxu0 %v2298
      %v2300 = vand.u32 %v502, 4294901760
      %v2301 = vsub.f32 %v502, %v2300
      %v2302 = vand.u32 %v2301, 4294901760
      %v2303 = vsub.f32 %v2301, %v2302
      %v2304 = vand.u32 %v2303, 4294901760
      %2305 = vmatpush1.msra.mxu0 %v2304
      %v2306 = vand.u32 %v508, 4294901760
      %v2307 = vsub.f32 %v508, %v2306
      %v2308 = vand.u32 %v2307, 4294901760
      %v2309 = vsub.f32 %v2307, %v2308
      %v2310 = vand.u32 %v2309, 4294901760
      %2311 = vmatprep.subr.mxu0 %v2310
      %v2312 = vand.u32 %v507, 4294901760
      %v2313 = vsub.f32 %v507, %v2312
      %v2314 = vand.u32 %v2313, 4294901760
      %v2315 = vsub.f32 %v2313, %v2314
      %v2316 = vand.u32 %v2315, 4294901760
      %2317 = vmatpush1.msra.mxu0 %v2316
      %v2318 = vand.u32 %v513, 4294901760
      %v2319 = vsub.f32 %v513, %v2318
      %v2320 = vand.u32 %v2319, 4294901760
      %v2321 = vsub.f32 %v2319, %v2320
      %v2322 = vand.u32 %v2321, 4294901760
      %2323 = vmatprep.subr.mxu0 %v2322
      %v2324 = vand.u32 %v512, 4294901760
      %v2325 = vsub.f32 %v512, %v2324
      %v2326 = vand.u32 %v2325, 4294901760
      %v2327 = vsub.f32 %v2325, %v2326
      %v2328 = vand.u32 %v2327, 4294901760
      %2329 = vmatpush1.msra.mxu0 %v2328
      %v2330 = vand.u32 %v518, 4294901760
      %v2331 = vsub.f32 %v518, %v2330
      %v2332 = vand.u32 %v2331, 4294901760
      %v2333 = vsub.f32 %v2331, %v2332
      %v2334 = vand.u32 %v2333, 4294901760
      %2335 = vmatprep.subr.mxu0 %v2334
      %v2336 = vand.u32 %v517, 4294901760
      %v2337 = vsub.f32 %v517, %v2336
      %v2338 = vand.u32 %v2337, 4294901760
      %v2339 = vsub.f32 %v2337, %v2338
      %v2340 = vand.u32 %v2339, 4294901760
      %2341 = vmatpush1.msra.mxu0 %v2340
      %v2342 = vand.u32 %v523, 4294901760
      %v2343 = vsub.f32 %v523, %v2342
      %v2344 = vand.u32 %v2343, 4294901760
      %v2345 = vsub.f32 %v2343, %v2344
      %v2346 = vand.u32 %v2345, 4294901760
      %2347 = vmatprep.subr.mxu0 %v2346
      %v2348 = vand.u32 %v522, 4294901760
      %v2349 = vsub.f32 %v522, %v2348
      %v2350 = vand.u32 %v2349, 4294901760
      %v2351 = vsub.f32 %v2349, %v2350
      %v2352 = vand.u32 %v2351, 4294901760
      %2353 = vmatpush1.msra.mxu0 %v2352
      %v2354 = vand.u32 %v528, 4294901760
      %v2355 = vsub.f32 %v528, %v2354
      %v2356 = vand.u32 %v2355, 4294901760
      %v2357 = vsub.f32 %v2355, %v2356
      %v2358 = vand.u32 %v2357, 4294901760
      %2359 = vmatprep.subr.mxu0 %v2358
      %v2360 = vand.u32 %v527, 4294901760
      %v2361 = vsub.f32 %v527, %v2360
      %v2362 = vand.u32 %v2361, 4294901760
      %v2363 = vsub.f32 %v2361, %v2362
      %v2364 = vand.u32 %v2363, 4294901760
      %2365 = vmatpush1.msra.mxu0 %v2364
      %2366 = vmatprep.subr.mxu0 0.0
      %2367 = vmatpush1.msra.mxu0 0.0
      %2368 = vmatprep.subr.mxu0 0.0
      %2369 = vmatpush1.msra.mxu0 0.0
      %2370 = vmatprep.subr.mxu0 0.0
      %2371 = vmatpush1.msra.mxu0 0.0
      %2372 = vmatprep.subr.mxu0 0.0
      %2373 = vmatpush1.msra.mxu0 0.0
      %2374 = vmatprep.subr.mxu0 0.0
      %2375 = vmatpush1.msra.mxu0 0.0
      %2376 = vmatprep.subr.mxu0 0.0
      %2377 = vmatpush1.msra.mxu0 0.0
      %2378 = vmatprep.subr.mxu0 0.0
      %2379 = vmatpush1.msra.mxu0 0.0
      %2380 = vmatprep.subr.mxu0 0.0
      %2381 = vmatpush1.msra.mxu0 0.0
      %2382 = vmatprep.subr.mxu0 0.0
      %2383 = vmatpush1.msra.mxu0 0.0
      %2384 = vmatprep.subr.mxu0 0.0
      %2385 = vmatpush1.msra.mxu0 0.0
      %2386 = vmatprep.subr.mxu0 0.0
      %2387 = vmatpush1.msra.mxu0 0.0
      %2388 = vmatprep.subr.mxu0 0.0
      %2389 = vmatpush1.msra.mxu0 0.0
      %2390 = vmatprep.subr.mxu0 0.0
      %2391 = vmatpush1.msra.mxu0 0.0
      %2392 = vmatprep.subr.mxu0 0.0
      %2393 = vmatpush1.msra.mxu0 0.0
      %2394 = vmatprep.subr.mxu0 0.0
      %2395 = vmatpush1.msra.mxu0 0.0
      %2396 = vmatprep.subr.mxu0 0.0
      %2397 = vmatpush1.msra.mxu0 0.0
      %2398 = vmatprep.mubr.f32.mxu0 0.0
      %v2399 = vand.u32 %v243, 4294901760
      %2400 = vmatmul.mubr.f32.gmra.mrb[0].mxu0 %v2399
      %v2401 = vpop.f32.mrb[0].mxu0
      %v2402 = vadd.f32 %v2093, %v2401
      %v2403 = vpop.f32.mrb[0].mxu0
      %v2404 = vadd.f32 %v2095, %v2403
      %2405 = vmatprep.mubr.f32.mxu0 0.0
      %v2406 = vand.u32 %v244, 4294901760
      %2407 = vmatmul.mubr.f32.gmra.mrb[0].mxu0 %v2406
      %v2408 = vpop.f32.mrb[0].mxu0
      %v2409 = vadd.f32 %v2104, %v2408
      %v2410 = vpop.f32.mrb[0].mxu0
      %v2411 = vadd.f32 %v2106, %v2410
      %2412 = vmatprep.mubr.f32.mxu0 0.0
      %v2413 = vand.u32 %v245, 4294901760
      %2414 = vmatmul.mubr.f32.gmra.mrb[0].mxu0 %v2413
      %v2415 = vpop.f32.mrb[0].mxu0
      %v2416 = vadd.f32 %v2115, %v2415
      %v2417 = vpop.f32.mrb[0].mxu0
      %v2418 = vadd.f32 %v2117, %v2417
      %2419 = vmatprep.mubr.f32.mxu0 0.0
      %v2420 = vand.u32 %v246, 4294901760
      %2421 = vmatmul.mubr.f32.gmra.mrb[0].mxu0 %v2420
      %v2422 = vpop.f32.mrb[0].mxu0
      %v2423 = vadd.f32 %v2126, %v2422
      %v2424 = vpop.f32.mrb[0].mxu0
      %v2425 = vadd.f32 %v2128, %v2424
      %2426 = vmatprep.mubr.f32.mxu0 0.0
      %v2427 = vand.u32 %v247, 4294901760
      %2428 = vmatmul.mubr.f32.gmra.mrb[0].mxu0 %v2427
      %v2429 = vpop.f32.mrb[0].mxu0
      %v2430 = vadd.f32 %v2137, %v2429
      %v2431 = vpop.f32.mrb[0].mxu0
      %v2432 = vadd.f32 %v2139, %v2431
      %2433 = vmatprep.mubr.f32.mxu0 0.0
      %v2434 = vand.u32 %v248, 4294901760
      %2435 = vmatmul.mubr.f32.gmra.mrb[0].mxu0 %v2434
      %v2436 = vpop.f32.mrb[0].mxu0
      %v2437 = vadd.f32 %v2148, %v2436
      %v2438 = vpop.f32.mrb[0].mxu0
      %v2439 = vadd.f32 %v2150, %v2438
      %2440 = vmatprep.mubr.f32.mxu0 0.0
      %v2441 = vand.u32 %v249, 4294901760
      %2442 = vmatmul.mubr.f32.gmra.mrb[0].mxu0 %v2441
      %v2443 = vpop.f32.mrb[0].mxu0
      %v2444 = vadd.f32 %v2159, %v2443
      %v2445 = vpop.f32.mrb[0].mxu0
      %v2446 = vadd.f32 %v2161, %v2445
      %2447 = vmatprep.mubr.f32.mxu0 0.0
      %v2448 = vand.u32 %v250, 4294901760
      %2449 = vmatmul.mubr.f32.gmra.mrb[0].mxu0 %v2448
      %v2450 = vpop.f32.mrb[0].mxu0
      %v2451 = vadd.f32 %v2170, %v2450
      %v2452 = vpop.f32.mrb[0].mxu0
      %v2453 = vadd.f32 %v2172, %v2452
      %2454 = vdwg.mxu0
      %v2455 = vand.u32 %v453, 4294901760
      %v2456 = vsub.f32 %v453, %v2455
      %2457 = vmatprep.subr.mxu0 %v2456
      %v2458 = vand.u32 %v452, 4294901760
      %v2459 = vsub.f32 %v452, %v2458
      %2460 = vmatpush1.msra.mxu0 %v2459
      %v2461 = vand.u32 %v458, 4294901760
      %v2462 = vsub.f32 %v458, %v2461
      %2463 = vmatprep.subr.mxu0 %v2462
      %v2464 = vand.u32 %v457, 4294901760
      %v2465 = vsub.f32 %v457, %v2464
      %2466 = vmatpush1.msra.mxu0 %v2465
      %v2467 = vand.u32 %v463, 4294901760
      %v2468 = vsub.f32 %v463, %v2467
      %2469 = vmatprep.subr.mxu0 %v2468
      %v2470 = vand.u32 %v462, 4294901760
      %v2471 = vsub.f32 %v462, %v2470
      %2472 = vmatpush1.msra.mxu0 %v2471
      %v2473 = vand.u32 %v468, 4294901760
      %v2474 = vsub.f32 %v468, %v2473
      %2475 = vmatprep.subr.mxu0 %v2474
      %v2476 = vand.u32 %v467, 4294901760
      %v2477 = vsub.f32 %v467, %v2476
      %2478 = vmatpush1.msra.mxu0 %v2477
      %v2479 = vand.u32 %v473, 4294901760
      %v2480 = vsub.f32 %v473, %v2479
      %2481 = vmatprep.subr.mxu0 %v2480
      %v2482 = vand.u32 %v472, 4294901760
      %v2483 = vsub.f32 %v472, %v2482
      %2484 = vmatpush1.msra.mxu0 %v2483
      %v2485 = vand.u32 %v478, 4294901760
      %v2486 = vsub.f32 %v478, %v2485
      %2487 = vmatprep.subr.mxu0 %v2486
      %v2488 = vand.u32 %v477, 4294901760
      %v2489 = vsub.f32 %v477, %v2488
      %2490 = vmatpush1.msra.mxu0 %v2489
      %v2491 = vand.u32 %v483, 4294901760
      %v2492 = vsub.f32 %v483, %v2491
      %2493 = vmatprep.subr.mxu0 %v2492
      %v2494 = vand.u32 %v482, 4294901760
      %v2495 = vsub.f32 %v482, %v2494
      %2496 = vmatpush1.msra.mxu0 %v2495
      %v2497 = vand.u32 %v488, 4294901760
      %v2498 = vsub.f32 %v488, %v2497
      %2499 = vmatprep.subr.mxu0 %v2498
      %v2500 = vand.u32 %v487, 4294901760
      %v2501 = vsub.f32 %v487, %v2500
      %2502 = vmatpush1.msra.mxu0 %v2501
      %v2503 = vand.u32 %v493, 4294901760
      %v2504 = vsub.f32 %v493, %v2503
      %2505 = vmatprep.subr.mxu0 %v2504
      %v2506 = vand.u32 %v492, 4294901760
      %v2507 = vsub.f32 %v492, %v2506
      %2508 = vmatpush1.msra.mxu0 %v2507
      %v2509 = vand.u32 %v498, 4294901760
      %v2510 = vsub.f32 %v498, %v2509
      %2511 = vmatprep.subr.mxu0 %v2510
      %v2512 = vand.u32 %v497, 4294901760
      %v2513 = vsub.f32 %v497, %v2512
      %2514 = vmatpush1.msra.mxu0 %v2513
      %v2515 = vand.u32 %v503, 4294901760
      %v2516 = vsub.f32 %v503, %v2515
      %2517 = vmatprep.subr.mxu0 %v2516
      %v2518 = vand.u32 %v502, 4294901760
      %v2519 = vsub.f32 %v502, %v2518
      %2520 = vmatpush1.msra.mxu0 %v2519
      %v2521 = vand.u32 %v508, 4294901760
      %v2522 = vsub.f32 %v508, %v2521
      %2523 = vmatprep.subr.mxu0 %v2522
      %v2524 = vand.u32 %v507, 4294901760
      %v2525 = vsub.f32 %v507, %v2524
      %2526 = vmatpush1.msra.mxu0 %v2525
      %v2527 = vand.u32 %v513, 4294901760
      %v2528 = vsub.f32 %v513, %v2527
      %2529 = vmatprep.subr.mxu0 %v2528
      %v2530 = vand.u32 %v512, 4294901760
      %v2531 = vsub.f32 %v512, %v2530
      %2532 = vmatpush1.msra.mxu0 %v2531
      %v2533 = vand.u32 %v518, 4294901760
      %v2534 = vsub.f32 %v518, %v2533
      %2535 = vmatprep.subr.mxu0 %v2534
      %v2536 = vand.u32 %v517, 4294901760
      %v2537 = vsub.f32 %v517, %v2536
      %2538 = vmatpush1.msra.mxu0 %v2537
      %v2539 = vand.u32 %v523, 4294901760
      %v2540 = vsub.f32 %v523, %v2539
      %2541 = vmatprep.subr.mxu0 %v2540
      %v2542 = vand.u32 %v522, 4294901760
      %v2543 = vsub.f32 %v522, %v2542
      %2544 = vmatpush1.msra.mxu0 %v2543
      %v2545 = vand.u32 %v528, 4294901760
      %v2546 = vsub.f32 %v528, %v2545
      %2547 = vmatprep.subr.mxu0 %v2546
      %v2548 = vand.u32 %v527, 4294901760
      %v2549 = vsub.f32 %v527, %v2548
      %2550 = vmatpush1.msra.mxu0 %v2549
      %2551 = vmatprep.subr.mxu0 0.0
      %2552 = vmatpush1.msra.mxu0 0.0
      %2553 = vmatprep.subr.mxu0 0.0
      %2554 = vmatpush1.msra.mxu0 0.0
      %2555 = vmatprep.subr.mxu0 0.0
      %2556 = vmatpush1.msra.mxu0 0.0
      %2557 = vmatprep.subr.mxu0 0.0
      %2558 = vmatpush1.msra.mxu0 0.0
      %2559 = vmatprep.subr.mxu0 0.0
      %2560 = vmatpush1.msra.mxu0 0.0
      %2561 = vmatprep.subr.mxu0 0.0
      %2562 = vmatpush1.msra.mxu0 0.0
      %2563 = vmatprep.subr.mxu0 0.0
      %2564 = vmatpush1.msra.mxu0 0.0
      %2565 = vmatprep.subr.mxu0 0.0
      %2566 = vmatpush1.msra.mxu0 0.0
      %2567 = vmatprep.subr.mxu0 0.0
      %2568 = vmatpush1.msra.mxu0 0.0
      %2569 = vmatprep.subr.mxu0 0.0
      %2570 = vmatpush1.msra.mxu0 0.0
      %2571 = vmatprep.subr.mxu0 0.0
      %2572 = vmatpush1.msra.mxu0 0.0
      %2573 = vmatprep.subr.mxu0 0.0
      %2574 = vmatpush1.msra.mxu0 0.0
      %2575 = vmatprep.subr.mxu0 0.0
      %2576 = vmatpush1.msra.mxu0 0.0
      %2577 = vmatprep.subr.mxu0 0.0
      %2578 = vmatpush1.msra.mxu0 0.0
      %2579 = vmatprep.subr.mxu0 0.0
      %2580 = vmatpush1.msra.mxu0 0.0
      %2581 = vmatprep.subr.mxu0 0.0
      %2582 = vmatpush1.msra.mxu0 0.0
      %2583 = vmatprep.mubr.f32.mxu0 0.0
      %v2584 = vand.u32 %v243, 4294901760
      %v2585 = vsub.f32 %v243, %v2584
      %2586 = vmatmul.mubr.f32.gmra.mrb[0].mxu0 %v2585
      %v2587 = vpop.f32.mrb[0].mxu0
      %v2588 = vadd.f32 %v2402, %v2587
      %v2589 = vpop.f32.mrb[0].mxu0
      %v2590 = vadd.f32 %v2404, %v2589
      %2591 = vmatprep.mubr.f32.mxu0 0.0
      %v2592 = vand.u32 %v244, 4294901760
      %v2593 = vsub.f32 %v244, %v2592
      %2594 = vmatmul.mubr.f32.gmra.mrb[0].mxu0 %v2593
      %v2595 = vpop.f32.mrb[0].mxu0
      %v2596 = vadd.f32 %v2409, %v2595
      %v2597 = vpop.f32.mrb[0].mxu0
      %v2598 = vadd.f32 %v2411, %v2597
      %2599 = vmatprep.mubr.f32.mxu0 0.0
      %v2600 = vand.u32 %v245, 4294901760
      %v2601 = vsub.f32 %v245, %v2600
      %2602 = vmatmul.mubr.f32.gmra.mrb[0].mxu0 %v2601
      %v2603 = vpop.f32.mrb[0].mxu0
      %v2604 = vadd.f32 %v2416, %v2603
      %v2605 = vpop.f32.mrb[0].mxu0
      %v2606 = vadd.f32 %v2418, %v2605
      %2607 = vmatprep.mubr.f32.mxu0 0.0
      %v2608 = vand.u32 %v246, 4294901760
      %v2609 = vsub.f32 %v246, %v2608
      %2610 = vmatmul.mubr.f32.gmra.mrb[0].mxu0 %v2609
      %v2611 = vpop.f32.mrb[0].mxu0
      %v2612 = vadd.f32 %v2423, %v2611
      %v2613 = vpop.f32.mrb[0].mxu0
      %v2614 = vadd.f32 %v2425, %v2613
      %2615 = vmatprep.mubr.f32.mxu0 0.0
      %v2616 = vand.u32 %v247, 4294901760
      %v2617 = vsub.f32 %v247, %v2616
      %2618 = vmatmul.mubr.f32.gmra.mrb[0].mxu0 %v2617
      %v2619 = vpop.f32.mrb[0].mxu0
      %v2620 = vadd.f32 %v2430, %v2619
      %v2621 = vpop.f32.mrb[0].mxu0
      %v2622 = vadd.f32 %v2432, %v2621
      %2623 = vmatprep.mubr.f32.mxu0 0.0
      %v2624 = vand.u32 %v248, 4294901760
      %v2625 = vsub.f32 %v248, %v2624
      %2626 = vmatmul.mubr.f32.gmra.mrb[0].mxu0 %v2625
      %v2627 = vpop.f32.mrb[0].mxu0
      %v2628 = vadd.f32 %v2437, %v2627
      %v2629 = vpop.f32.mrb[0].mxu0
      %v2630 = vadd.f32 %v2439, %v2629
      %2631 = vmatprep.mubr.f32.mxu0 0.0
      %v2632 = vand.u32 %v249, 4294901760
      %v2633 = vsub.f32 %v249, %v2632
      %2634 = vmatmul.mubr.f32.gmra.mrb[0].mxu0 %v2633
      %v2635 = vpop.f32.mrb[0].mxu0
      %v2636 = vadd.f32 %v2444, %v2635
      %v2637 = vpop.f32.mrb[0].mxu0
      %v2638 = vadd.f32 %v2446, %v2637
      %2639 = vmatprep.mubr.f32.mxu0 0.0
      %v2640 = vand.u32 %v250, 4294901760
      %v2641 = vsub.f32 %v250, %v2640
      %2642 = vmatmul.mubr.f32.gmra.mrb[0].mxu0 %v2641
      %v2643 = vpop.f32.mrb[0].mxu0
      %v2644 = vadd.f32 %v2451, %v2643
      %v2645 = vpop.f32.mrb[0].mxu0
      %v2646 = vadd.f32 %v2453, %v2645
      %2647 = vdwg.mxu0
      %v2648 = vand.u32 %v453, 4294901760
      %2649 = vmatprep.subr.mxu0 %v2648
      %v2650 = vand.u32 %v452, 4294901760
      %2651 = vmatpush1.msra.mxu0 %v2650
      %v2652 = vand.u32 %v458, 4294901760
      %2653 = vmatprep.subr.mxu0 %v2652
      %v2654 = vand.u32 %v457, 4294901760
      %2655 = vmatpush1.msra.mxu0 %v2654
      %v2656 = vand.u32 %v463, 4294901760
      %2657 = vmatprep.subr.mxu0 %v2656
      %v2658 = vand.u32 %v462, 4294901760
      %2659 = vmatpush1.msra.mxu0 %v2658
      %v2660 = vand.u32 %v468, 4294901760
      %2661 = vmatprep.subr.mxu0 %v2660
      %v2662 = vand.u32 %v467, 4294901760
      %2663 = vmatpush1.msra.mxu0 %v2662
      %v2664 = vand.u32 %v473, 4294901760
      %2665 = vmatprep.subr.mxu0 %v2664
      %v2666 = vand.u32 %v472, 4294901760
      %2667 = vmatpush1.msra.mxu0 %v2666
      %v2668 = vand.u32 %v478, 4294901760
      %2669 = vmatprep.subr.mxu0 %v2668
      %v2670 = vand.u32 %v477, 4294901760
      %2671 = vmatpush1.msra.mxu0 %v2670
      %v2672 = vand.u32 %v483, 4294901760
      %2673 = vmatprep.subr.mxu0 %v2672
      %v2674 = vand.u32 %v482, 4294901760
      %2675 = vmatpush1.msra.mxu0 %v2674
      %v2676 = vand.u32 %v488, 4294901760
      %2677 = vmatprep.subr.mxu0 %v2676
      %v2678 = vand.u32 %v487, 4294901760
      %2679 = vmatpush1.msra.mxu0 %v2678
      %v2680 = vand.u32 %v493, 4294901760
      %2681 = vmatprep.subr.mxu0 %v2680
      %v2682 = vand.u32 %v492, 4294901760
      %2683 = vmatpush1.msra.mxu0 %v2682
      %v2684 = vand.u32 %v498, 4294901760
      %2685 = vmatprep.subr.mxu0 %v2684
      %v2686 = vand.u32 %v497, 4294901760
      %2687 = vmatpush1.msra.mxu0 %v2686
      %v2688 = vand.u32 %v503, 4294901760
      %2689 = vmatprep.subr.mxu0 %v2688
      %v2690 = vand.u32 %v502, 4294901760
      %2691 = vmatpush1.msra.mxu0 %v2690
      %v2692 = vand.u32 %v508, 4294901760
      %2693 = vmatprep.subr.mxu0 %v2692
      %v2694 = vand.u32 %v507, 4294901760
      %2695 = vmatpush1.msra.mxu0 %v2694
      %v2696 = vand.u32 %v513, 4294901760
      %2697 = vmatprep.subr.mxu0 %v2696
      %v2698 = vand.u32 %v512, 4294901760
      %2699 = vmatpush1.msra.mxu0 %v2698
      %v2700 = vand.u32 %v518, 4294901760
      %2701 = vmatprep.subr.mxu0 %v2700
      %v2702 = vand.u32 %v517, 4294901760
      %2703 = vmatpush1.msra.mxu0 %v2702
      %v2704 = vand.u32 %v523, 4294901760
      %2705 = vmatprep.subr.mxu0 %v2704
      %v2706 = vand.u32 %v522, 4294901760
      %2707 = vmatpush1.msra.mxu0 %v2706
      %v2708 = vand.u32 %v528, 4294901760
      %2709 = vmatprep.subr.mxu0 %v2708
      %v2710 = vand.u32 %v527, 4294901760
      %2711 = vmatpush1.msra.mxu0 %v2710
      %2712 = vmatprep.subr.mxu0 0.0
      %2713 = vmatpush1.msra.mxu0 0.0
      %2714 = vmatprep.subr.mxu0 0.0
      %2715 = vmatpush1.msra.mxu0 0.0
      %2716 = vmatprep.subr.mxu0 0.0
      %2717 = vmatpush1.msra.mxu0 0.0
      %2718 = vmatprep.subr.mxu0 0.0
      %2719 = vmatpush1.msra.mxu0 0.0
      %2720 = vmatprep.subr.mxu0 0.0
      %2721 = vmatpush1.msra.mxu0 0.0
      %2722 = vmatprep.subr.mxu0 0.0
      %2723 = vmatpush1.msra.mxu0 0.0
      %2724 = vmatprep.subr.mxu0 0.0
      %2725 = vmatpush1.msra.mxu0 0.0
      %2726 = vmatprep.subr.mxu0 0.0
      %2727 = vmatpush1.msra.mxu0 0.0
      %2728 = vmatprep.subr.mxu0 0.0
      %2729 = vmatpush1.msra.mxu0 0.0
      %2730 = vmatprep.subr.mxu0 0.0
      %2731 = vmatpush1.msra.mxu0 0.0
      %2732 = vmatprep.subr.mxu0 0.0
      %2733 = vmatpush1.msra.mxu0 0.0
      %2734 = vmatprep.subr.mxu0 0.0
      %2735 = vmatpush1.msra.mxu0 0.0
      %2736 = vmatprep.subr.mxu0 0.0
      %2737 = vmatpush1.msra.mxu0 0.0
      %2738 = vmatprep.subr.mxu0 0.0
      %2739 = vmatpush1.msra.mxu0 0.0
      %2740 = vmatprep.subr.mxu0 0.0
      %2741 = vmatpush1.msra.mxu0 0.0
      %2742 = vmatprep.subr.mxu0 0.0
      %2743 = vmatpush1.msra.mxu0 0.0
      %2744 = vmatprep.mubr.f32.mxu0 0.0
      %v2745 = vand.u32 %v243, 4294901760
      %v2746 = vsub.f32 %v243, %v2745
      %v2747 = vand.u32 %v2746, 4294901760
      %2748 = vmatmul.mubr.f32.gmra.mrb[0].mxu0 %v2747
      %v2749 = vpop.f32.mrb[0].mxu0
      %v2750 = vadd.f32 %v2588, %v2749
      %v2751 = vpop.f32.mrb[0].mxu0
      %v2752 = vadd.f32 %v2590, %v2751
      %2753 = vmatprep.mubr.f32.mxu0 0.0
      %v2754 = vand.u32 %v244, 4294901760
      %v2755 = vsub.f32 %v244, %v2754
      %v2756 = vand.u32 %v2755, 4294901760
      %2757 = vmatmul.mubr.f32.gmra.mrb[0].mxu0 %v2756
      %v2758 = vpop.f32.mrb[0].mxu0
      %v2759 = vadd.f32 %v2596, %v2758
      %v2760 = vpop.f32.mrb[0].mxu0
      %v2761 = vadd.f32 %v2598, %v2760
      %2762 = vmatprep.mubr.f32.mxu0 0.0
      %v2763 = vand.u32 %v245, 4294901760
      %v2764 = vsub.f32 %v245, %v2763
      %v2765 = vand.u32 %v2764, 4294901760
      %2766 = vmatmul.mubr.f32.gmra.mrb[0].mxu0 %v2765
      %v2767 = vpop.f32.mrb[0].mxu0
      %v2768 = vadd.f32 %v2604, %v2767
      %v2769 = vpop.f32.mrb[0].mxu0
      %v2770 = vadd.f32 %v2606, %v2769
      %2771 = vmatprep.mubr.f32.mxu0 0.0
      %v2772 = vand.u32 %v246, 4294901760
      %v2773 = vsub.f32 %v246, %v2772
      %v2774 = vand.u32 %v2773, 4294901760
      %2775 = vmatmul.mubr.f32.gmra.mrb[0].mxu0 %v2774
      %v2776 = vpop.f32.mrb[0].mxu0
      %v2777 = vadd.f32 %v2612, %v2776
      %v2778 = vpop.f32.mrb[0].mxu0
      %v2779 = vadd.f32 %v2614, %v2778
      %2780 = vmatprep.mubr.f32.mxu0 0.0
      %v2781 = vand.u32 %v247, 4294901760
      %v2782 = vsub.f32 %v247, %v2781
      %v2783 = vand.u32 %v2782, 4294901760
      %2784 = vmatmul.mubr.f32.gmra.mrb[0].mxu0 %v2783
      %v2785 = vpop.f32.mrb[0].mxu0
      %v2786 = vadd.f32 %v2620, %v2785
      %v2787 = vpop.f32.mrb[0].mxu0
      %v2788 = vadd.f32 %v2622, %v2787
      %2789 = vmatprep.mubr.f32.mxu0 0.0
      %v2790 = vand.u32 %v248, 4294901760
      %v2791 = vsub.f32 %v248, %v2790
      %v2792 = vand.u32 %v2791, 4294901760
      %2793 = vmatmul.mubr.f32.gmra.mrb[0].mxu0 %v2792
      %v2794 = vpop.f32.mrb[0].mxu0
      %v2795 = vadd.f32 %v2628, %v2794
      %v2796 = vpop.f32.mrb[0].mxu0
      %v2797 = vadd.f32 %v2630, %v2796
      %2798 = vmatprep.mubr.f32.mxu0 0.0
      %v2799 = vand.u32 %v249, 4294901760
      %v2800 = vsub.f32 %v249, %v2799
      %v2801 = vand.u32 %v2800, 4294901760
      %2802 = vmatmul.mubr.f32.gmra.mrb[0].mxu0 %v2801
      %v2803 = vpop.f32.mrb[0].mxu0
      %v2804 = vadd.f32 %v2636, %v2803
      %v2805 = vpop.f32.mrb[0].mxu0
      %v2806 = vadd.f32 %v2638, %v2805
      %2807 = vmatprep.mubr.f32.mxu0 0.0
      %v2808 = vand.u32 %v250, 4294901760
      %v2809 = vsub.f32 %v250, %v2808
      %v2810 = vand.u32 %v2809, 4294901760
      %2811 = vmatmul.mubr.f32.gmra.mrb[0].mxu0 %v2810
      %v2812 = vpop.f32.mrb[0].mxu0
      %v2813 = vadd.f32 %v2644, %v2812
      %v2814 = vpop.f32.mrb[0].mxu0
      %v2815 = vadd.f32 %v2646, %v2814
      %2816 = vdwg.mxu0
      %v2817 = vand.u32 %v453, 4294901760
      %v2818 = vsub.f32 %v453, %v2817
      %v2819 = vand.u32 %v2818, 4294901760
      %2820 = vmatprep.subr.mxu0 %v2819
      %v2821 = vand.u32 %v452, 4294901760
      %v2822 = vsub.f32 %v452, %v2821
      %v2823 = vand.u32 %v2822, 4294901760
      %2824 = vmatpush1.msra.mxu0 %v2823
      %v2825 = vand.u32 %v458, 4294901760
      %v2826 = vsub.f32 %v458, %v2825
      %v2827 = vand.u32 %v2826, 4294901760
      %2828 = vmatprep.subr.mxu0 %v2827
      %v2829 = vand.u32 %v457, 4294901760
      %v2830 = vsub.f32 %v457, %v2829
      %v2831 = vand.u32 %v2830, 4294901760
      %2832 = vmatpush1.msra.mxu0 %v2831
      %v2833 = vand.u32 %v463, 4294901760
      %v2834 = vsub.f32 %v463, %v2833
      %v2835 = vand.u32 %v2834, 4294901760
      %2836 = vmatprep.subr.mxu0 %v2835
      %v2837 = vand.u32 %v462, 4294901760
      %v2838 = vsub.f32 %v462, %v2837
      %v2839 = vand.u32 %v2838, 4294901760
      %2840 = vmatpush1.msra.mxu0 %v2839
      %v2841 = vand.u32 %v468, 4294901760
      %v2842 = vsub.f32 %v468, %v2841
      %v2843 = vand.u32 %v2842, 4294901760
      %2844 = vmatprep.subr.mxu0 %v2843
      %v2845 = vand.u32 %v467, 4294901760
      %v2846 = vsub.f32 %v467, %v2845
      %v2847 = vand.u32 %v2846, 4294901760
      %2848 = vmatpush1.msra.mxu0 %v2847
      %v2849 = vand.u32 %v473, 4294901760
      %v2850 = vsub.f32 %v473, %v2849
      %v2851 = vand.u32 %v2850, 4294901760
      %2852 = vmatprep.subr.mxu0 %v2851
      %v2853 = vand.u32 %v472, 4294901760
      %v2854 = vsub.f32 %v472, %v2853
      %v2855 = vand.u32 %v2854, 4294901760
      %2856 = vmatpush1.msra.mxu0 %v2855
      %v2857 = vand.u32 %v478, 4294901760
      %v2858 = vsub.f32 %v478, %v2857
      %v2859 = vand.u32 %v2858, 4294901760
      %2860 = vmatprep.subr.mxu0 %v2859
      %v2861 = vand.u32 %v477, 4294901760
      %v2862 = vsub.f32 %v477, %v2861
      %v2863 = vand.u32 %v2862, 4294901760
      %2864 = vmatpush1.msra.mxu0 %v2863
      %v2865 = vand.u32 %v483, 4294901760
      %v2866 = vsub.f32 %v483, %v2865
      %v2867 = vand.u32 %v2866, 4294901760
      %2868 = vmatprep.subr.mxu0 %v2867
      %v2869 = vand.u32 %v482, 4294901760
      %v2870 = vsub.f32 %v482, %v2869
      %v2871 = vand.u32 %v2870, 4294901760
      %2872 = vmatpush1.msra.mxu0 %v2871
      %v2873 = vand.u32 %v488, 4294901760
      %v2874 = vsub.f32 %v488, %v2873
      %v2875 = vand.u32 %v2874, 4294901760
      %2876 = vmatprep.subr.mxu0 %v2875
      %v2877 = vand.u32 %v487, 4294901760
      %v2878 = vsub.f32 %v487, %v2877
      %v2879 = vand.u32 %v2878, 4294901760
      %2880 = vmatpush1.msra.mxu0 %v2879
      %v2881 = vand.u32 %v493, 4294901760
      %v2882 = vsub.f32 %v493, %v2881
      %v2883 = vand.u32 %v2882, 4294901760
      %2884 = vmatprep.subr.mxu0 %v2883
      %v2885 = vand.u32 %v492, 4294901760
      %v2886 = vsub.f32 %v492, %v2885
      %v2887 = vand.u32 %v2886, 4294901760
      %2888 = vmatpush1.msra.mxu0 %v2887
      %v2889 = vand.u32 %v498, 4294901760
      %v2890 = vsub.f32 %v498, %v2889
      %v2891 = vand.u32 %v2890, 4294901760
      %2892 = vmatprep.subr.mxu0 %v2891
      %v2893 = vand.u32 %v497, 4294901760
      %v2894 = vsub.f32 %v497, %v2893
      %v2895 = vand.u32 %v2894, 4294901760
      %2896 = vmatpush1.msra.mxu0 %v2895
      %v2897 = vand.u32 %v503, 4294901760
      %v2898 = vsub.f32 %v503, %v2897
      %v2899 = vand.u32 %v2898, 4294901760
      %2900 = vmatprep.subr.mxu0 %v2899
      %v2901 = vand.u32 %v502, 4294901760
      %v2902 = vsub.f32 %v502, %v2901
      %v2903 = vand.u32 %v2902, 4294901760
      %2904 = vmatpush1.msra.mxu0 %v2903
      %v2905 = vand.u32 %v508, 4294901760
      %v2906 = vsub.f32 %v508, %v2905
      %v2907 = vand.u32 %v2906, 4294901760
      %2908 = vmatprep.subr.mxu0 %v2907
      %v2909 = vand.u32 %v507, 4294901760
      %v2910 = vsub.f32 %v507, %v2909
      %v2911 = vand.u32 %v2910, 4294901760
      %2912 = vmatpush1.msra.mxu0 %v2911
      %v2913 = vand.u32 %v513, 4294901760
      %v2914 = vsub.f32 %v513, %v2913
      %v2915 = vand.u32 %v2914, 4294901760
      %2916 = vmatprep.subr.mxu0 %v2915
      %v2917 = vand.u32 %v512, 4294901760
      %v2918 = vsub.f32 %v512, %v2917
      %v2919 = vand.u32 %v2918, 4294901760
      %2920 = vmatpush1.msra.mxu0 %v2919
      %v2921 = vand.u32 %v518, 4294901760
      %v2922 = vsub.f32 %v518, %v2921
      %v2923 = vand.u32 %v2922, 4294901760
      %2924 = vmatprep.subr.mxu0 %v2923
      %v2925 = vand.u32 %v517, 4294901760
      %v2926 = vsub.f32 %v517, %v2925
      %v2927 = vand.u32 %v2926, 4294901760
      %2928 = vmatpush1.msra.mxu0 %v2927
      %v2929 = vand.u32 %v523, 4294901760
      %v2930 = vsub.f32 %v523, %v2929
      %v2931 = vand.u32 %v2930, 4294901760
      %2932 = vmatprep.subr.mxu0 %v2931
      %v2933 = vand.u32 %v522, 4294901760
      %v2934 = vsub.f32 %v522, %v2933
      %v2935 = vand.u32 %v2934, 4294901760
      %2936 = vmatpush1.msra.mxu0 %v2935
      %v2937 = vand.u32 %v528, 4294901760
      %v2938 = vsub.f32 %v528, %v2937
      %v2939 = vand.u32 %v2938, 4294901760
      %2940 = vmatprep.subr.mxu0 %v2939
      %v2941 = vand.u32 %v527, 4294901760
      %v2942 = vsub.f32 %v527, %v2941
      %v2943 = vand.u32 %v2942, 4294901760
      %2944 = vmatpush1.msra.mxu0 %v2943
      %2945 = vmatprep.subr.mxu0 0.0
      %2946 = vmatpush1.msra.mxu0 0.0
      %2947 = vmatprep.subr.mxu0 0.0
      %2948 = vmatpush1.msra.mxu0 0.0
      %2949 = vmatprep.subr.mxu0 0.0
      %2950 = vmatpush1.msra.mxu0 0.0
      %2951 = vmatprep.subr.mxu0 0.0
      %2952 = vmatpush1.msra.mxu0 0.0
      %2953 = vmatprep.subr.mxu0 0.0
      %2954 = vmatpush1.msra.mxu0 0.0
      %2955 = vmatprep.subr.mxu0 0.0
      %2956 = vmatpush1.msra.mxu0 0.0
      %2957 = vmatprep.subr.mxu0 0.0
      %2958 = vmatpush1.msra.mxu0 0.0
      %2959 = vmatprep.subr.mxu0 0.0
      %2960 = vmatpush1.msra.mxu0 0.0
      %2961 = vmatprep.subr.mxu0 0.0
      %2962 = vmatpush1.msra.mxu0 0.0
      %2963 = vmatprep.subr.mxu0 0.0
      %2964 = vmatpush1.msra.mxu0 0.0
      %2965 = vmatprep.subr.mxu0 0.0
      %2966 = vmatpush1.msra.mxu0 0.0
      %2967 = vmatprep.subr.mxu0 0.0
      %2968 = vmatpush1.msra.mxu0 0.0
      %2969 = vmatprep.subr.mxu0 0.0
      %2970 = vmatpush1.msra.mxu0 0.0
      %2971 = vmatprep.subr.mxu0 0.0
      %2972 = vmatpush1.msra.mxu0 0.0
      %2973 = vmatprep.subr.mxu0 0.0
      %2974 = vmatpush1.msra.mxu0 0.0
      %2975 = vmatprep.subr.mxu0 0.0
      %2976 = vmatpush1.msra.mxu0 0.0
      %2977 = vmatprep.mubr.f32.mxu0 0.0
      %v2978 = vand.u32 %v243, 4294901760
      %2979 = vmatmul.mubr.f32.gmra.mrb[0].mxu0 %v2978
      %v2980 = vpop.f32.mrb[0].mxu0
      %v2981 = vadd.f32 %v2750, %v2980
      %v2982 = vpop.f32.mrb[0].mxu0
      %v2983 = vadd.f32 %v2752, %v2982
      %2984 = vmatprep.mubr.f32.mxu0 0.0
      %v2985 = vand.u32 %v244, 4294901760
      %2986 = vmatmul.mubr.f32.gmra.mrb[0].mxu0 %v2985
      %v2987 = vpop.f32.mrb[0].mxu0
      %v2988 = vadd.f32 %v2759, %v2987
      %v2989 = vpop.f32.mrb[0].mxu0
      %v2990 = vadd.f32 %v2761, %v2989
      %2991 = vmatprep.mubr.f32.mxu0 0.0
      %v2992 = vand.u32 %v245, 4294901760
      %2993 = vmatmul.mubr.f32.gmra.mrb[0].mxu0 %v2992
      %v2994 = vpop.f32.mrb[0].mxu0
      %v2995 = vadd.f32 %v2768, %v2994
      %v2996 = vpop.f32.mrb[0].mxu0
      %v2997 = vadd.f32 %v2770, %v2996
      %2998 = vmatprep.mubr.f32.mxu0 0.0
      %v2999 = vand.u32 %v246, 4294901760
      %3000 = vmatmul.mubr.f32.gmra.mrb[0].mxu0 %v2999
      %v3001 = vpop.f32.mrb[0].mxu0
      %v3002 = vadd.f32 %v2777, %v3001
      %v3003 = vpop.f32.mrb[0].mxu0
      %v3004 = vadd.f32 %v2779, %v3003
      %3005 = vmatprep.mubr.f32.mxu0 0.0
      %v3006 = vand.u32 %v247, 4294901760
      %3007 = vmatmul.mubr.f32.gmra.mrb[0].mxu0 %v3006
      %v3008 = vpop.f32.mrb[0].mxu0
      %v3009 = vadd.f32 %v2786, %v3008
      %v3010 = vpop.f32.mrb[0].mxu0
      %v3011 = vadd.f32 %v2788, %v3010
      %3012 = vmatprep.mubr.f32.mxu0 0.0
      %v3013 = vand.u32 %v248, 4294901760
      %3014 = vmatmul.mubr.f32.gmra.mrb[0].mxu0 %v3013
      %v3015 = vpop.f32.mrb[0].mxu0
      %v3016 = vadd.f32 %v2795, %v3015
      %v3017 = vpop.f32.mrb[0].mxu0
      %v3018 = vadd.f32 %v2797, %v3017
      %3019 = vmatprep.mubr.f32.mxu0 0.0
      %v3020 = vand.u32 %v249, 4294901760
      %3021 = vmatmul.mubr.f32.gmra.mrb[0].mxu0 %v3020
      %v3022 = vpop.f32.mrb[0].mxu0
      %v3023 = vadd.f32 %v2804, %v3022
      %v3024 = vpop.f32.mrb[0].mxu0
      %v3025 = vadd.f32 %v2806, %v3024
      %3026 = vmatprep.mubr.f32.mxu0 0.0
      %v3027 = vand.u32 %v250, 4294901760
      %3028 = vmatmul.mubr.f32.gmra.mrb[0].mxu0 %v3027
      %v3029 = vpop.f32.mrb[0].mxu0
      %v3030 = vadd.f32 %v2813, %v3029
      %v3031 = vpop.f32.mrb[0].mxu0
      %v3032 = vadd.f32 %v2815, %v3031
      %3033 = vdwg.mxu0
      %v3034 = vand.u32 %v453, 4294901760
      %3035 = vmatprep.subr.mxu0 %v3034
      %v3036 = vand.u32 %v452, 4294901760
      %3037 = vmatpush1.msra.mxu0 %v3036
      %v3038 = vand.u32 %v458, 4294901760
      %3039 = vmatprep.subr.mxu0 %v3038
      %v3040 = vand.u32 %v457, 4294901760
      %3041 = vmatpush1.msra.mxu0 %v3040
      %v3042 = vand.u32 %v463, 4294901760
      %3043 = vmatprep.subr.mxu0 %v3042
      %v3044 = vand.u32 %v462, 4294901760
      %3045 = vmatpush1.msra.mxu0 %v3044
      %v3046 = vand.u32 %v468, 4294901760
      %3047 = vmatprep.subr.mxu0 %v3046
      %v3048 = vand.u32 %v467, 4294901760
      %3049 = vmatpush1.msra.mxu0 %v3048
      %v3050 = vand.u32 %v473, 4294901760
      %3051 = vmatprep.subr.mxu0 %v3050
      %v3052 = vand.u32 %v472, 4294901760
      %3053 = vmatpush1.msra.mxu0 %v3052
      %v3054 = vand.u32 %v478, 4294901760
      %3055 = vmatprep.subr.mxu0 %v3054
      %v3056 = vand.u32 %v477, 4294901760
      %3057 = vmatpush1.msra.mxu0 %v3056
      %v3058 = vand.u32 %v483, 4294901760
      %3059 = vmatprep.subr.mxu0 %v3058
      %v3060 = vand.u32 %v482, 4294901760
      %3061 = vmatpush1.msra.mxu0 %v3060
      %v3062 = vand.u32 %v488, 4294901760
      %3063 = vmatprep.subr.mxu0 %v3062
      %v3064 = vand.u32 %v487, 4294901760
      %3065 = vmatpush1.msra.mxu0 %v3064
      %v3066 = vand.u32 %v493, 4294901760
      %3067 = vmatprep.subr.mxu0 %v3066
      %v3068 = vand.u32 %v492, 4294901760
      %3069 = vmatpush1.msra.mxu0 %v3068
      %v3070 = vand.u32 %v498, 4294901760
      %3071 = vmatprep.subr.mxu0 %v3070
      %v3072 = vand.u32 %v497, 4294901760
      %3073 = vmatpush1.msra.mxu0 %v3072
      %v3074 = vand.u32 %v503, 4294901760
      %3075 = vmatprep.subr.mxu0 %v3074
      %v3076 = vand.u32 %v502, 4294901760
      %3077 = vmatpush1.msra.mxu0 %v3076
      %v3078 = vand.u32 %v508, 4294901760
      %3079 = vmatprep.subr.mxu0 %v3078
      %v3080 = vand.u32 %v507, 4294901760
      %3081 = vmatpush1.msra.mxu0 %v3080
      %v3082 = vand.u32 %v513, 4294901760
      %3083 = vmatprep.subr.mxu0 %v3082
      %v3084 = vand.u32 %v512, 4294901760
      %3085 = vmatpush1.msra.mxu0 %v3084
      %v3086 = vand.u32 %v518, 4294901760
      %3087 = vmatprep.subr.mxu0 %v3086
      %v3088 = vand.u32 %v517, 4294901760
      %3089 = vmatpush1.msra.mxu0 %v3088
      %v3090 = vand.u32 %v523, 4294901760
      %3091 = vmatprep.subr.mxu0 %v3090
      %v3092 = vand.u32 %v522, 4294901760
      %3093 = vmatpush1.msra.mxu0 %v3092
      %v3094 = vand.u32 %v528, 4294901760
      %3095 = vmatprep.subr.mxu0 %v3094
      %v3096 = vand.u32 %v527, 4294901760
      %3097 = vmatpush1.msra.mxu0 %v3096
      %3098 = vmatprep.subr.mxu0 0.0
      %3099 = vmatpush1.msra.mxu0 0.0
      %3100 = vmatprep.subr.mxu0 0.0
      %3101 = vmatpush1.msra.mxu0 0.0
      %3102 = vmatprep.subr.mxu0 0.0
      %3103 = vmatpush1.msra.mxu0 0.0
      %3104 = vmatprep.subr.mxu0 0.0
      %3105 = vmatpush1.msra.mxu0 0.0
      %3106 = vmatprep.subr.mxu0 0.0
      %3107 = vmatpush1.msra.mxu0 0.0
      %3108 = vmatprep.subr.mxu0 0.0
      %3109 = vmatpush1.msra.mxu0 0.0
      %3110 = vmatprep.subr.mxu0 0.0
      %3111 = vmatpush1.msra.mxu0 0.0
      %3112 = vmatprep.subr.mxu0 0.0
      %3113 = vmatpush1.msra.mxu0 0.0
      %3114 = vmatprep.subr.mxu0 0.0
      %3115 = vmatpush1.msra.mxu0 0.0
      %3116 = vmatprep.subr.mxu0 0.0
      %3117 = vmatpush1.msra.mxu0 0.0
      %3118 = vmatprep.subr.mxu0 0.0
      %3119 = vmatpush1.msra.mxu0 0.0
      %3120 = vmatprep.subr.mxu0 0.0
      %3121 = vmatpush1.msra.mxu0 0.0
      %3122 = vmatprep.subr.mxu0 0.0
      %3123 = vmatpush1.msra.mxu0 0.0
      %3124 = vmatprep.subr.mxu0 0.0
      %3125 = vmatpush1.msra.mxu0 0.0
      %3126 = vmatprep.subr.mxu0 0.0
      %3127 = vmatpush1.msra.mxu0 0.0
      %3128 = vmatprep.subr.mxu0 0.0
      %3129 = vmatpush1.msra.mxu0 0.0
      %3130 = vmatprep.mubr.f32.mxu0 0.0
      %v3131 = vand.u32 %v243, 4294901760
      %3132 = vmatmul.mubr.f32.gmra.mrb[0].mxu0 %v3131
      %v3133 = vpop.f32.mrb[0].mxu0
      %v3134 = vadd.f32 %v2981, %v3133
      %v3135 = vpop.f32.mrb[0].mxu0
      %v3136 = vadd.f32 %v2983, %v3135
      %3137 = vmatprep.mubr.f32.mxu0 0.0
      %v3138 = vand.u32 %v244, 4294901760
      %3139 = vmatmul.mubr.f32.gmra.mrb[0].mxu0 %v3138
      %v3140 = vpop.f32.mrb[0].mxu0
      %v3141 = vadd.f32 %v2988, %v3140
      %v3142 = vpop.f32.mrb[0].mxu0
      %v3143 = vadd.f32 %v2990, %v3142
      %3144 = vmatprep.mubr.f32.mxu0 0.0
      %v3145 = vand.u32 %v245, 4294901760
      %3146 = vmatmul.mubr.f32.gmra.mrb[0].mxu0 %v3145
      %v3147 = vpop.f32.mrb[0].mxu0
      %v3148 = vadd.f32 %v2995, %v3147
      %v3149 = vpop.f32.mrb[0].mxu0
      %v3150 = vadd.f32 %v2997, %v3149
      %3151 = vmatprep.mubr.f32.mxu0 0.0
      %v3152 = vand.u32 %v246, 4294901760
      %3153 = vmatmul.mubr.f32.gmra.mrb[0].mxu0 %v3152
      %v3154 = vpop.f32.mrb[0].mxu0
      %v3155 = vadd.f32 %v3002, %v3154
      %v3156 = vpop.f32.mrb[0].mxu0
      %v3157 = vadd.f32 %v3004, %v3156
      %3158 = vmatprep.mubr.f32.mxu0 0.0
      %v3159 = vand.u32 %v247, 4294901760
      %3160 = vmatmul.mubr.f32.gmra.mrb[0].mxu0 %v3159
      %v3161 = vpop.f32.mrb[0].mxu0
      %v3162 = vadd.f32 %v3009, %v3161
      %v3163 = vpop.f32.mrb[0].mxu0
      %v3164 = vadd.f32 %v3011, %v3163
      %3165 = vmatprep.mubr.f32.mxu0 0.0
      %v3166 = vand.u32 %v248, 4294901760
      %3167 = vmatmul.mubr.f32.gmra.mrb[0].mxu0 %v3166
      %v3168 = vpop.f32.mrb[0].mxu0
      %v3169 = vadd.f32 %v3016, %v3168
      %v3170 = vpop.f32.mrb[0].mxu0
      %v3171 = vadd.f32 %v3018, %v3170
      %3172 = vmatprep.mubr.f32.mxu0 0.0
      %v3173 = vand.u32 %v249, 4294901760
      %3174 = vmatmul.mubr.f32.gmra.mrb[0].mxu0 %v3173
      %v3175 = vpop.f32.mrb[0].mxu0
      %v3176 = vadd.f32 %v3023, %v3175
      %v3177 = vpop.f32.mrb[0].mxu0
      %v3178 = vadd.f32 %v3025, %v3177
      %3179 = vmatprep.mubr.f32.mxu0 0.0
      %v3180 = vand.u32 %v250, 4294901760
      %3181 = vmatmul.mubr.f32.gmra.mrb[0].mxu0 %v3180
      %v3182 = vpop.f32.mrb[0].mxu0
      %v3183 = vadd.f32 %v3030, %v3182
      %v3184 = vpop.f32.mrb[0].mxu0
      %v3185 = vadd.f32 %v3032, %v3184
      %3186 = vdwg.mxu0
      %3187 = vmatprep.subr.mxu0 0.0
      %v3188 = vand.u32 %v454, 4294901760
      %3189 = vmatpush1.msra.mxu0 %v3188
      %3190 = vmatprep.subr.mxu0 0.0
      %v3191 = vand.u32 %v459, 4294901760
      %3192 = vmatpush1.msra.mxu0 %v3191
      %3193 = vmatprep.subr.mxu0 0.0
      %v3194 = vand.u32 %v464, 4294901760
      %3195 = vmatpush1.msra.mxu0 %v3194
      %3196 = vmatprep.subr.mxu0 0.0
      %v3197 = vand.u32 %v469, 4294901760
      %3198 = vmatpush1.msra.mxu0 %v3197
      %3199 = vmatprep.subr.mxu0 0.0
      %v3200 = vand.u32 %v474, 4294901760
      %3201 = vmatpush1.msra.mxu0 %v3200
      %3202 = vmatprep.subr.mxu0 0.0
      %v3203 = vand.u32 %v479, 4294901760
      %3204 = vmatpush1.msra.mxu0 %v3203
      %3205 = vmatprep.subr.mxu0 0.0
      %v3206 = vand.u32 %v484, 4294901760
      %3207 = vmatpush1.msra.mxu0 %v3206
      %3208 = vmatprep.subr.mxu0 0.0
      %v3209 = vand.u32 %v489, 4294901760
      %3210 = vmatpush1.msra.mxu0 %v3209
      %3211 = vmatprep.subr.mxu0 0.0
      %v3212 = vand.u32 %v494, 4294901760
      %3213 = vmatpush1.msra.mxu0 %v3212
      %3214 = vmatprep.subr.mxu0 0.0
      %v3215 = vand.u32 %v499, 4294901760
      %3216 = vmatpush1.msra.mxu0 %v3215
      %3217 = vmatprep.subr.mxu0 0.0
      %v3218 = vand.u32 %v504, 4294901760
      %3219 = vmatpush1.msra.mxu0 %v3218
      %3220 = vmatprep.subr.mxu0 0.0
      %v3221 = vand.u32 %v509, 4294901760
      %3222 = vmatpush1.msra.mxu0 %v3221
      %3223 = vmatprep.subr.mxu0 0.0
      %v3224 = vand.u32 %v514, 4294901760
      %3225 = vmatpush1.msra.mxu0 %v3224
      %3226 = vmatprep.subr.mxu0 0.0
      %v3227 = vand.u32 %v519, 4294901760
      %3228 = vmatpush1.msra.mxu0 %v3227
      %3229 = vmatprep.subr.mxu0 0.0
      %v3230 = vand.u32 %v524, 4294901760
      %3231 = vmatpush1.msra.mxu0 %v3230
      %3232 = vmatprep.subr.mxu0 0.0
      %v3233 = vand.u32 %v529, 4294901760
      %3234 = vmatpush1.msra.mxu0 %v3233
      %3235 = vmatprep.subr.mxu0 0.0
      %3236 = vmatpush1.msra.mxu0 0.0
      %3237 = vmatprep.subr.mxu0 0.0
      %3238 = vmatpush1.msra.mxu0 0.0
      %3239 = vmatprep.subr.mxu0 0.0
      %3240 = vmatpush1.msra.mxu0 0.0
      %3241 = vmatprep.subr.mxu0 0.0
      %3242 = vmatpush1.msra.mxu0 0.0
      %3243 = vmatprep.subr.mxu0 0.0
      %3244 = vmatpush1.msra.mxu0 0.0
      %3245 = vmatprep.subr.mxu0 0.0
      %3246 = vmatpush1.msra.mxu0 0.0
      %3247 = vmatprep.subr.mxu0 0.0
      %3248 = vmatpush1.msra.mxu0 0.0
      %3249 = vmatprep.subr.mxu0 0.0
      %3250 = vmatpush1.msra.mxu0 0.0
      %3251 = vmatprep.subr.mxu0 0.0
      %3252 = vmatpush1.msra.mxu0 0.0
      %3253 = vmatprep.subr.mxu0 0.0
      %3254 = vmatpush1.msra.mxu0 0.0
      %3255 = vmatprep.subr.mxu0 0.0
      %3256 = vmatpush1.msra.mxu0 0.0
      %3257 = vmatprep.subr.mxu0 0.0
      %3258 = vmatpush1.msra.mxu0 0.0
      %3259 = vmatprep.subr.mxu0 0.0
      %3260 = vmatpush1.msra.mxu0 0.0
      %3261 = vmatprep.subr.mxu0 0.0
      %3262 = vmatpush1.msra.mxu0 0.0
      %3263 = vmatprep.subr.mxu0 0.0
      %3264 = vmatpush1.msra.mxu0 0.0
      %3265 = vmatprep.subr.mxu0 0.0
      %3266 = vmatpush1.msra.mxu0 0.0
      %3267 = vmatprep.mubr.f32.mxu0 0.0
      %v3268 = vand.u32 %v243, 4294901760
      %v3269 = vsub.f32 %v243, %v3268
      %v3270 = vand.u32 %v3269, 4294901760
      %v3271 = vsub.f32 %v3269, %v3270
      %v3272 = vand.u32 %v3271, 4294901760
      %3273 = vmatmul.mubr.f32.gmra.mrb[0].mxu0 %v3272
      %v3274 = vpop.f32.mrb[0].mxu0
      %v3275 = vadd.f32 0.0, %v3274
      %v3276 = vpop.f32.mrb[0].mxu0
      %3277 = vmatprep.mubr.f32.mxu0 0.0
      %v3278 = vand.u32 %v244, 4294901760
      %v3279 = vsub.f32 %v244, %v3278
      %v3280 = vand.u32 %v3279, 4294901760
      %v3281 = vsub.f32 %v3279, %v3280
      %v3282 = vand.u32 %v3281, 4294901760
      %3283 = vmatmul.mubr.f32.gmra.mrb[0].mxu0 %v3282
      %v3284 = vpop.f32.mrb[0].mxu0
      %v3285 = vadd.f32 0.0, %v3284
      %v3286 = vpop.f32.mrb[0].mxu0
      %3287 = vmatprep.mubr.f32.mxu0 0.0
      %v3288 = vand.u32 %v245, 4294901760
      %v3289 = vsub.f32 %v245, %v3288
      %v3290 = vand.u32 %v3289, 4294901760
      %v3291 = vsub.f32 %v3289, %v3290
      %v3292 = vand.u32 %v3291, 4294901760
      %3293 = vmatmul.mubr.f32.gmra.mrb[0].mxu0 %v3292
      %v3294 = vpop.f32.mrb[0].mxu0
      %v3295 = vadd.f32 0.0, %v3294
      %v3296 = vpop.f32.mrb[0].mxu0
      %3297 = vmatprep.mubr.f32.mxu0 0.0
      %v3298 = vand.u32 %v246, 4294901760
      %v3299 = vsub.f32 %v246, %v3298
      %v3300 = vand.u32 %v3299, 4294901760
      %v3301 = vsub.f32 %v3299, %v3300
      %v3302 = vand.u32 %v3301, 4294901760
      %3303 = vmatmul.mubr.f32.gmra.mrb[0].mxu0 %v3302
      %v3304 = vpop.f32.mrb[0].mxu0
      %v3305 = vadd.f32 0.0, %v3304
      %v3306 = vpop.f32.mrb[0].mxu0
      %3307 = vmatprep.mubr.f32.mxu0 0.0
      %v3308 = vand.u32 %v247, 4294901760
      %v3309 = vsub.f32 %v247, %v3308
      %v3310 = vand.u32 %v3309, 4294901760
      %v3311 = vsub.f32 %v3309, %v3310
      %v3312 = vand.u32 %v3311, 4294901760
      %3313 = vmatmul.mubr.f32.gmra.mrb[0].mxu0 %v3312
      %v3314 = vpop.f32.mrb[0].mxu0
      %v3315 = vadd.f32 0.0, %v3314
      %v3316 = vpop.f32.mrb[0].mxu0
      %3317 = vmatprep.mubr.f32.mxu0 0.0
      %v3318 = vand.u32 %v248, 4294901760
      %v3319 = vsub.f32 %v248, %v3318
      %v3320 = vand.u32 %v3319, 4294901760
      %v3321 = vsub.f32 %v3319, %v3320
      %v3322 = vand.u32 %v3321, 4294901760
      %3323 = vmatmul.mubr.f32.gmra.mrb[0].mxu0 %v3322
      %v3324 = vpop.f32.mrb[0].mxu0
      %v3325 = vadd.f32 0.0, %v3324
      %v3326 = vpop.f32.mrb[0].mxu0
      %3327 = vmatprep.mubr.f32.mxu0 0.0
      %v3328 = vand.u32 %v249, 4294901760
      %v3329 = vsub.f32 %v249, %v3328
      %v3330 = vand.u32 %v3329, 4294901760
      %v3331 = vsub.f32 %v3329, %v3330
      %v3332 = vand.u32 %v3331, 4294901760
      %3333 = vmatmul.mubr.f32.gmra.mrb[0].mxu0 %v3332
      %v3334 = vpop.f32.mrb[0].mxu0
      %v3335 = vadd.f32 0.0, %v3334
      %v3336 = vpop.f32.mrb[0].mxu0
      %3337 = vmatprep.mubr.f32.mxu0 0.0
      %v3338 = vand.u32 %v250, 4294901760
      %v3339 = vsub.f32 %v250, %v3338
      %v3340 = vand.u32 %v3339, 4294901760
      %v3341 = vsub.f32 %v3339, %v3340
      %v3342 = vand.u32 %v3341, 4294901760
      %3343 = vmatmul.mubr.f32.gmra.mrb[0].mxu0 %v3342
      %v3344 = vpop.f32.mrb[0].mxu0
      %v3345 = vadd.f32 0.0, %v3344
      %v3346 = vpop.f32.mrb[0].mxu0
      %3347 = vdwg.mxu0
      %3348 = vmatprep.subr.mxu0 0.0
      %v3349 = vand.u32 %v454, 4294901760
      %v3350 = vsub.f32 %v454, %v3349
      %v3351 = vand.u32 %v3350, 4294901760
      %v3352 = vsub.f32 %v3350, %v3351
      %v3353 = vand.u32 %v3352, 4294901760
      %3354 = vmatpush1.msra.mxu0 %v3353
      %3355 = vmatprep.subr.mxu0 0.0
      %v3356 = vand.u32 %v459, 4294901760
      %v3357 = vsub.f32 %v459, %v3356
      %v3358 = vand.u32 %v3357, 4294901760
      %v3359 = vsub.f32 %v3357, %v3358
      %v3360 = vand.u32 %v3359, 4294901760
      %3361 = vmatpush1.msra.mxu0 %v3360
      %3362 = vmatprep.subr.mxu0 0.0
      %v3363 = vand.u32 %v464, 4294901760
      %v3364 = vsub.f32 %v464, %v3363
      %v3365 = vand.u32 %v3364, 4294901760
      %v3366 = vsub.f32 %v3364, %v3365
      %v3367 = vand.u32 %v3366, 4294901760
      %3368 = vmatpush1.msra.mxu0 %v3367
      %3369 = vmatprep.subr.mxu0 0.0
      %v3370 = vand.u32 %v469, 4294901760
      %v3371 = vsub.f32 %v469, %v3370
      %v3372 = vand.u32 %v3371, 4294901760
      %v3373 = vsub.f32 %v3371, %v3372
      %v3374 = vand.u32 %v3373, 4294901760
      %3375 = vmatpush1.msra.mxu0 %v3374
      %3376 = vmatprep.subr.mxu0 0.0
      %v3377 = vand.u32 %v474, 4294901760
      %v3378 = vsub.f32 %v474, %v3377
      %v3379 = vand.u32 %v3378, 4294901760
      %v3380 = vsub.f32 %v3378, %v3379
      %v3381 = vand.u32 %v3380, 4294901760
      %3382 = vmatpush1.msra.mxu0 %v3381
      %3383 = vmatprep.subr.mxu0 0.0
      %v3384 = vand.u32 %v479, 4294901760
      %v3385 = vsub.f32 %v479, %v3384
      %v3386 = vand.u32 %v3385, 4294901760
      %v3387 = vsub.f32 %v3385, %v3386
      %v3388 = vand.u32 %v3387, 4294901760
      %3389 = vmatpush1.msra.mxu0 %v3388
      %3390 = vmatprep.subr.mxu0 0.0
      %v3391 = vand.u32 %v484, 4294901760
      %v3392 = vsub.f32 %v484, %v3391
      %v3393 = vand.u32 %v3392, 4294901760
      %v3394 = vsub.f32 %v3392, %v3393
      %v3395 = vand.u32 %v3394, 4294901760
      %3396 = vmatpush1.msra.mxu0 %v3395
      %3397 = vmatprep.subr.mxu0 0.0
      %v3398 = vand.u32 %v489, 4294901760
      %v3399 = vsub.f32 %v489, %v3398
      %v3400 = vand.u32 %v3399, 4294901760
      %v3401 = vsub.f32 %v3399, %v3400
      %v3402 = vand.u32 %v3401, 4294901760
      %3403 = vmatpush1.msra.mxu0 %v3402
      %3404 = vmatprep.subr.mxu0 0.0
      %v3405 = vand.u32 %v494, 4294901760
      %v3406 = vsub.f32 %v494, %v3405
      %v3407 = vand.u32 %v3406, 4294901760
      %v3408 = vsub.f32 %v3406, %v3407
      %v3409 = vand.u32 %v3408, 4294901760
      %3410 = vmatpush1.msra.mxu0 %v3409
      %3411 = vmatprep.subr.mxu0 0.0
      %v3412 = vand.u32 %v499, 4294901760
      %v3413 = vsub.f32 %v499, %v3412
      %v3414 = vand.u32 %v3413, 4294901760
      %v3415 = vsub.f32 %v3413, %v3414
      %v3416 = vand.u32 %v3415, 4294901760
      %3417 = vmatpush1.msra.mxu0 %v3416
      %3418 = vmatprep.subr.mxu0 0.0
      %v3419 = vand.u32 %v504, 4294901760
      %v3420 = vsub.f32 %v504, %v3419
      %v3421 = vand.u32 %v3420, 4294901760
      %v3422 = vsub.f32 %v3420, %v3421
      %v3423 = vand.u32 %v3422, 4294901760
      %3424 = vmatpush1.msra.mxu0 %v3423
      %3425 = vmatprep.subr.mxu0 0.0
      %v3426 = vand.u32 %v509, 4294901760
      %v3427 = vsub.f32 %v509, %v3426
      %v3428 = vand.u32 %v3427, 4294901760
      %v3429 = vsub.f32 %v3427, %v3428
      %v3430 = vand.u32 %v3429, 4294901760
      %3431 = vmatpush1.msra.mxu0 %v3430
      %3432 = vmatprep.subr.mxu0 0.0
      %v3433 = vand.u32 %v514, 4294901760
      %v3434 = vsub.f32 %v514, %v3433
      %v3435 = vand.u32 %v3434, 4294901760
      %v3436 = vsub.f32 %v3434, %v3435
      %v3437 = vand.u32 %v3436, 4294901760
      %3438 = vmatpush1.msra.mxu0 %v3437
      %3439 = vmatprep.subr.mxu0 0.0
      %v3440 = vand.u32 %v519, 4294901760
      %v3441 = vsub.f32 %v519, %v3440
      %v3442 = vand.u32 %v3441, 4294901760
      %v3443 = vsub.f32 %v3441, %v3442
      %v3444 = vand.u32 %v3443, 4294901760
      %3445 = vmatpush1.msra.mxu0 %v3444
      %3446 = vmatprep.subr.mxu0 0.0
      %v3447 = vand.u32 %v524, 4294901760
      %v3448 = vsub.f32 %v524, %v3447
      %v3449 = vand.u32 %v3448, 4294901760
      %v3450 = vsub.f32 %v3448, %v3449
      %v3451 = vand.u32 %v3450, 4294901760
      %3452 = vmatpush1.msra.mxu0 %v3451
      %3453 = vmatprep.subr.mxu0 0.0
      %v3454 = vand.u32 %v529, 4294901760
      %v3455 = vsub.f32 %v529, %v3454
      %v3456 = vand.u32 %v3455, 4294901760
      %v3457 = vsub.f32 %v3455, %v3456
      %v3458 = vand.u32 %v3457, 4294901760
      %3459 = vmatpush1.msra.mxu0 %v3458
      %3460 = vmatprep.subr.mxu0 0.0
      %3461 = vmatpush1.msra.mxu0 0.0
      %3462 = vmatprep.subr.mxu0 0.0
      %3463 = vmatpush1.msra.mxu0 0.0
      %3464 = vmatprep.subr.mxu0 0.0
      %3465 = vmatpush1.msra.mxu0 0.0
      %3466 = vmatprep.subr.mxu0 0.0
      %3467 = vmatpush1.msra.mxu0 0.0
      %3468 = vmatprep.subr.mxu0 0.0
      %3469 = vmatpush1.msra.mxu0 0.0
      %3470 = vmatprep.subr.mxu0 0.0
      %3471 = vmatpush1.msra.mxu0 0.0
      %3472 = vmatprep.subr.mxu0 0.0
      %3473 = vmatpush1.msra.mxu0 0.0
      %3474 = vmatprep.subr.mxu0 0.0
      %3475 = vmatpush1.msra.mxu0 0.0
      %3476 = vmatprep.subr.mxu0 0.0
      %3477 = vmatpush1.msra.mxu0 0.0
      %3478 = vmatprep.subr.mxu0 0.0
      %3479 = vmatpush1.msra.mxu0 0.0
      %3480 = vmatprep.subr.mxu0 0.0
      %3481 = vmatpush1.msra.mxu0 0.0
      %3482 = vmatprep.subr.mxu0 0.0
      %3483 = vmatpush1.msra.mxu0 0.0
      %3484 = vmatprep.subr.mxu0 0.0
      %3485 = vmatpush1.msra.mxu0 0.0
      %3486 = vmatprep.subr.mxu0 0.0
      %3487 = vmatpush1.msra.mxu0 0.0
      %3488 = vmatprep.subr.mxu0 0.0
      %3489 = vmatpush1.msra.mxu0 0.0
      %3490 = vmatprep.subr.mxu0 0.0
      %3491 = vmatpush1.msra.mxu0 0.0
      %3492 = vmatprep.mubr.f32.mxu0 0.0
      %v3493 = vand.u32 %v243, 4294901760
      %3494 = vmatmul.mubr.f32.gmra.mrb[0].mxu0 %v3493
      %v3495 = vpop.f32.mrb[0].mxu0
      %v3496 = vadd.f32 %v3275, %v3495
      %v3497 = vpop.f32.mrb[0].mxu0
      %3498 = vmatprep.mubr.f32.mxu0 0.0
      %v3499 = vand.u32 %v244, 4294901760
      %3500 = vmatmul.mubr.f32.gmra.mrb[0].mxu0 %v3499
      %v3501 = vpop.f32.mrb[0].mxu0
      %v3502 = vadd.f32 %v3285, %v3501
      %v3503 = vpop.f32.mrb[0].mxu0
      %3504 = vmatprep.mubr.f32.mxu0 0.0
      %v3505 = vand.u32 %v245, 4294901760
      %3506 = vmatmul.mubr.f32.gmra.mrb[0].mxu0 %v3505
      %v3507 = vpop.f32.mrb[0].mxu0
      %v3508 = vadd.f32 %v3295, %v3507
      %v3509 = vpop.f32.mrb[0].mxu0
      %3510 = vmatprep.mubr.f32.mxu0 0.0
      %v3511 = vand.u32 %v246, 4294901760
      %3512 = vmatmul.mubr.f32.gmra.mrb[0].mxu0 %v3511
      %v3513 = vpop.f32.mrb[0].mxu0
      %v3514 = vadd.f32 %v3305, %v3513
      %v3515 = vpop.f32.mrb[0].mxu0
      %3516 = vmatprep.mubr.f32.mxu0 0.0
      %v3517 = vand.u32 %v247, 4294901760
      %3518 = vmatmul.mubr.f32.gmra.mrb[0].mxu0 %v3517
      %v3519 = vpop.f32.mrb[0].mxu0
      %v3520 = vadd.f32 %v3315, %v3519
      %v3521 = vpop.f32.mrb[0].mxu0
      %3522 = vmatprep.mubr.f32.mxu0 0.0
      %v3523 = vand.u32 %v248, 4294901760
      %3524 = vmatmul.mubr.f32.gmra.mrb[0].mxu0 %v3523
      %v3525 = vpop.f32.mrb[0].mxu0
      %v3526 = vadd.f32 %v3325, %v3525
      %v3527 = vpop.f32.mrb[0].mxu0
      %3528 = vmatprep.mubr.f32.mxu0 0.0
      %v3529 = vand.u32 %v249, 4294901760
      %3530 = vmatmul.mubr.f32.gmra.mrb[0].mxu0 %v3529
      %v3531 = vpop.f32.mrb[0].mxu0
      %v3532 = vadd.f32 %v3335, %v3531
      %v3533 = vpop.f32.mrb[0].mxu0
      %3534 = vmatprep.mubr.f32.mxu0 0.0
      %v3535 = vand.u32 %v250, 4294901760
      %3536 = vmatmul.mubr.f32.gmra.mrb[0].mxu0 %v3535
      %v3537 = vpop.f32.mrb[0].mxu0
      %v3538 = vadd.f32 %v3345, %v3537
      %v3539 = vpop.f32.mrb[0].mxu0
      %3540 = vdwg.mxu0
      %3541 = vmatprep.subr.mxu0 0.0
      %v3542 = vand.u32 %v454, 4294901760
      %v3543 = vsub.f32 %v454, %v3542
      %3544 = vmatpush1.msra.mxu0 %v3543
      %3545 = vmatprep.subr.mxu0 0.0
      %v3546 = vand.u32 %v459, 4294901760
      %v3547 = vsub.f32 %v459, %v3546
      %3548 = vmatpush1.msra.mxu0 %v3547
      %3549 = vmatprep.subr.mxu0 0.0
      %v3550 = vand.u32 %v464, 4294901760
      %v3551 = vsub.f32 %v464, %v3550
      %3552 = vmatpush1.msra.mxu0 %v3551
      %3553 = vmatprep.subr.mxu0 0.0
      %v3554 = vand.u32 %v469, 4294901760
      %v3555 = vsub.f32 %v469, %v3554
      %3556 = vmatpush1.msra.mxu0 %v3555
      %3557 = vmatprep.subr.mxu0 0.0
      %v3558 = vand.u32 %v474, 4294901760
      %v3559 = vsub.f32 %v474, %v3558
      %3560 = vmatpush1.msra.mxu0 %v3559
      %3561 = vmatprep.subr.mxu0 0.0
      %v3562 = vand.u32 %v479, 4294901760
      %v3563 = vsub.f32 %v479, %v3562
      %3564 = vmatpush1.msra.mxu0 %v3563
      %3565 = vmatprep.subr.mxu0 0.0
      %v3566 = vand.u32 %v484, 4294901760
      %v3567 = vsub.f32 %v484, %v3566
      %3568 = vmatpush1.msra.mxu0 %v3567
      %3569 = vmatprep.subr.mxu0 0.0
      %v3570 = vand.u32 %v489, 4294901760
      %v3571 = vsub.f32 %v489, %v3570
      %3572 = vmatpush1.msra.mxu0 %v3571
      %3573 = vmatprep.subr.mxu0 0.0
      %v3574 = vand.u32 %v494, 4294901760
      %v3575 = vsub.f32 %v494, %v3574
      %3576 = vmatpush1.msra.mxu0 %v3575
      %3577 = vmatprep.subr.mxu0 0.0
      %v3578 = vand.u32 %v499, 4294901760
      %v3579 = vsub.f32 %v499, %v3578
      %3580 = vmatpush1.msra.mxu0 %v3579
      %3581 = vmatprep.subr.mxu0 0.0
      %v3582 = vand.u32 %v504, 4294901760
      %v3583 = vsub.f32 %v504, %v3582
      %3584 = vmatpush1.msra.mxu0 %v3583
      %3585 = vmatprep.subr.mxu0 0.0
      %v3586 = vand.u32 %v509, 4294901760
      %v3587 = vsub.f32 %v509, %v3586
      %3588 = vmatpush1.msra.mxu0 %v3587
      %3589 = vmatprep.subr.mxu0 0.0
      %v3590 = vand.u32 %v514, 4294901760
      %v3591 = vsub.f32 %v514, %v3590
      %3592 = vmatpush1.msra.mxu0 %v3591
      %3593 = vmatprep.subr.mxu0 0.0
      %v3594 = vand.u32 %v519, 4294901760
      %v3595 = vsub.f32 %v519, %v3594
      %3596 = vmatpush1.msra.mxu0 %v3595
      %3597 = vmatprep.subr.mxu0 0.0
      %v3598 = vand.u32 %v524, 4294901760
      %v3599 = vsub.f32 %v524, %v3598
      %3600 = vmatpush1.msra.mxu0 %v3599
      %3601 = vmatprep.subr.mxu0 0.0
      %v3602 = vand.u32 %v529, 4294901760
      %v3603 = vsub.f32 %v529, %v3602
      %3604 = vmatpush1.msra.mxu0 %v3603
      %3605 = vmatprep.subr.mxu0 0.0
      %3606 = vmatpush1.msra.mxu0 0.0
      %3607 = vmatprep.subr.mxu0 0.0
      %3608 = vmatpush1.msra.mxu0 0.0
      %3609 = vmatprep.subr.mxu0 0.0
      %3610 = vmatpush1.msra.mxu0 0.0
      %3611 = vmatprep.subr.mxu0 0.0
      %3612 = vmatpush1.msra.mxu0 0.0
      %3613 = vmatprep.subr.mxu0 0.0
      %3614 = vmatpush1.msra.mxu0 0.0
      %3615 = vmatprep.subr.mxu0 0.0
      %3616 = vmatpush1.msra.mxu0 0.0
      %3617 = vmatprep.subr.mxu0 0.0
      %3618 = vmatpush1.msra.mxu0 0.0
      %3619 = vmatprep.subr.mxu0 0.0
      %3620 = vmatpush1.msra.mxu0 0.0
      %3621 = vmatprep.subr.mxu0 0.0
      %3622 = vmatpush1.msra.mxu0 0.0
      %3623 = vmatprep.subr.mxu0 0.0
      %3624 = vmatpush1.msra.mxu0 0.0
      %3625 = vmatprep.subr.mxu0 0.0
      %3626 = vmatpush1.msra.mxu0 0.0
      %3627 = vmatprep.subr.mxu0 0.0
      %3628 = vmatpush1.msra.mxu0 0.0
      %3629 = vmatprep.subr.mxu0 0.0
      %3630 = vmatpush1.msra.mxu0 0.0
      %3631 = vmatprep.subr.mxu0 0.0
      %3632 = vmatpush1.msra.mxu0 0.0
      %3633 = vmatprep.subr.mxu0 0.0
      %3634 = vmatpush1.msra.mxu0 0.0
      %3635 = vmatprep.subr.mxu0 0.0
      %3636 = vmatpush1.msra.mxu0 0.0
      %3637 = vmatprep.mubr.f32.mxu0 0.0
      %v3638 = vand.u32 %v243, 4294901760
      %v3639 = vsub.f32 %v243, %v3638
      %3640 = vmatmul.mubr.f32.gmra.mrb[0].mxu0 %v3639
      %v3641 = vpop.f32.mrb[0].mxu0
      %v3642 = vadd.f32 %v3496, %v3641
      %v3643 = vpop.f32.mrb[0].mxu0
      %3644 = vmatprep.mubr.f32.mxu0 0.0
      %v3645 = vand.u32 %v244, 4294901760
      %v3646 = vsub.f32 %v244, %v3645
      %3647 = vmatmul.mubr.f32.gmra.mrb[0].mxu0 %v3646
      %v3648 = vpop.f32.mrb[0].mxu0
      %v3649 = vadd.f32 %v3502, %v3648
      %v3650 = vpop.f32.mrb[0].mxu0
      %3651 = vmatprep.mubr.f32.mxu0 0.0
      %v3652 = vand.u32 %v245, 4294901760
      %v3653 = vsub.f32 %v245, %v3652
      %3654 = vmatmul.mubr.f32.gmra.mrb[0].mxu0 %v3653
      %v3655 = vpop.f32.mrb[0].mxu0
      %v3656 = vadd.f32 %v3508, %v3655
      %v3657 = vpop.f32.mrb[0].mxu0
      %3658 = vmatprep.mubr.f32.mxu0 0.0
      %v3659 = vand.u32 %v246, 4294901760
      %v3660 = vsub.f32 %v246, %v3659
      %3661 = vmatmul.mubr.f32.gmra.mrb[0].mxu0 %v3660
      %v3662 = vpop.f32.mrb[0].mxu0
      %v3663 = vadd.f32 %v3514, %v3662
      %v3664 = vpop.f32.mrb[0].mxu0
      %3665 = vmatprep.mubr.f32.mxu0 0.0
      %v3666 = vand.u32 %v247, 4294901760
      %v3667 = vsub.f32 %v247, %v3666
      %3668 = vmatmul.mubr.f32.gmra.mrb[0].mxu0 %v3667
      %v3669 = vpop.f32.mrb[0].mxu0
      %v3670 = vadd.f32 %v3520, %v3669
      %v3671 = vpop.f32.mrb[0].mxu0
      %3672 = vmatprep.mubr.f32.mxu0 0.0
      %v3673 = vand.u32 %v248, 4294901760
      %v3674 = vsub.f32 %v248, %v3673
      %3675 = vmatmul.mubr.f32.gmra.mrb[0].mxu0 %v3674
      %v3676 = vpop.f32.mrb[0].mxu0
      %v3677 = vadd.f32 %v3526, %v3676
      %v3678 = vpop.f32.mrb[0].mxu0
      %3679 = vmatprep.mubr.f32.mxu0 0.0
      %v3680 = vand.u32 %v249, 4294901760
      %v3681 = vsub.f32 %v249, %v3680
      %3682 = vmatmul.mubr.f32.gmra.mrb[0].mxu0 %v3681
      %v3683 = vpop.f32.mrb[0].mxu0
      %v3684 = vadd.f32 %v3532, %v3683
      %v3685 = vpop.f32.mrb[0].mxu0
      %3686 = vmatprep.mubr.f32.mxu0 0.0
      %v3687 = vand.u32 %v250, 4294901760
      %v3688 = vsub.f32 %v250, %v3687
      %3689 = vmatmul.mubr.f32.gmra.mrb[0].mxu0 %v3688
      %v3690 = vpop.f32.mrb[0].mxu0
      %v3691 = vadd.f32 %v3538, %v3690
      %v3692 = vpop.f32.mrb[0].mxu0
      %3693 = vdwg.mxu0
      %3694 = vmatprep.subr.mxu0 0.0
      %v3695 = vand.u32 %v454, 4294901760
      %3696 = vmatpush1.msra.mxu0 %v3695
      %3697 = vmatprep.subr.mxu0 0.0
      %v3698 = vand.u32 %v459, 4294901760
      %3699 = vmatpush1.msra.mxu0 %v3698
      %3700 = vmatprep.subr.mxu0 0.0
      %v3701 = vand.u32 %v464, 4294901760
      %3702 = vmatpush1.msra.mxu0 %v3701
      %3703 = vmatprep.subr.mxu0 0.0
      %v3704 = vand.u32 %v469, 4294901760
      %3705 = vmatpush1.msra.mxu0 %v3704
      %3706 = vmatprep.subr.mxu0 0.0
      %v3707 = vand.u32 %v474, 4294901760
      %3708 = vmatpush1.msra.mxu0 %v3707
      %3709 = vmatprep.subr.mxu0 0.0
      %v3710 = vand.u32 %v479, 4294901760
      %3711 = vmatpush1.msra.mxu0 %v3710
      %3712 = vmatprep.subr.mxu0 0.0
      %v3713 = vand.u32 %v484, 4294901760
      %3714 = vmatpush1.msra.mxu0 %v3713
      %3715 = vmatprep.subr.mxu0 0.0
      %v3716 = vand.u32 %v489, 4294901760
      %3717 = vmatpush1.msra.mxu0 %v3716
      %3718 = vmatprep.subr.mxu0 0.0
      %v3719 = vand.u32 %v494, 4294901760
      %3720 = vmatpush1.msra.mxu0 %v3719
      %3721 = vmatprep.subr.mxu0 0.0
      %v3722 = vand.u32 %v499, 4294901760
      %3723 = vmatpush1.msra.mxu0 %v3722
      %3724 = vmatprep.subr.mxu0 0.0
      %v3725 = vand.u32 %v504, 4294901760
      %3726 = vmatpush1.msra.mxu0 %v3725
      %3727 = vmatprep.subr.mxu0 0.0
      %v3728 = vand.u32 %v509, 4294901760
      %3729 = vmatpush1.msra.mxu0 %v3728
      %3730 = vmatprep.subr.mxu0 0.0
      %v3731 = vand.u32 %v514, 4294901760
      %3732 = vmatpush1.msra.mxu0 %v3731
      %3733 = vmatprep.subr.mxu0 0.0
      %v3734 = vand.u32 %v519, 4294901760
      %3735 = vmatpush1.msra.mxu0 %v3734
      %3736 = vmatprep.subr.mxu0 0.0
      %v3737 = vand.u32 %v524, 4294901760
      %3738 = vmatpush1.msra.mxu0 %v3737
      %3739 = vmatprep.subr.mxu0 0.0
      %v3740 = vand.u32 %v529, 4294901760
      %3741 = vmatpush1.msra.mxu0 %v3740
      %3742 = vmatprep.subr.mxu0 0.0
      %3743 = vmatpush1.msra.mxu0 0.0
      %3744 = vmatprep.subr.mxu0 0.0
      %3745 = vmatpush1.msra.mxu0 0.0
      %3746 = vmatprep.subr.mxu0 0.0
      %3747 = vmatpush1.msra.mxu0 0.0
      %3748 = vmatprep.subr.mxu0 0.0
      %3749 = vmatpush1.msra.mxu0 0.0
      %3750 = vmatprep.subr.mxu0 0.0
      %3751 = vmatpush1.msra.mxu0 0.0
      %3752 = vmatprep.subr.mxu0 0.0
      %3753 = vmatpush1.msra.mxu0 0.0
      %3754 = vmatprep.subr.mxu0 0.0
      %3755 = vmatpush1.msra.mxu0 0.0
      %3756 = vmatprep.subr.mxu0 0.0
      %3757 = vmatpush1.msra.mxu0 0.0
      %3758 = vmatprep.subr.mxu0 0.0
      %3759 = vmatpush1.msra.mxu0 0.0
      %3760 = vmatprep.subr.mxu0 0.0
      %3761 = vmatpush1.msra.mxu0 0.0
      %3762 = vmatprep.subr.mxu0 0.0
      %3763 = vmatpush1.msra.mxu0 0.0
      %3764 = vmatprep.subr.mxu0 0.0
      %3765 = vmatpush1.msra.mxu0 0.0
      %3766 = vmatprep.subr.mxu0 0.0
      %3767 = vmatpush1.msra.mxu0 0.0
      %3768 = vmatprep.subr.mxu0 0.0
      %3769 = vmatpush1.msra.mxu0 0.0
      %3770 = vmatprep.subr.mxu0 0.0
      %3771 = vmatpush1.msra.mxu0 0.0
      %3772 = vmatprep.subr.mxu0 0.0
      %3773 = vmatpush1.msra.mxu0 0.0
      %3774 = vmatprep.mubr.f32.mxu0 0.0
      %v3775 = vand.u32 %v243, 4294901760
      %v3776 = vsub.f32 %v243, %v3775
      %v3777 = vand.u32 %v3776, 4294901760
      %3778 = vmatmul.mubr.f32.gmra.mrb[0].mxu0 %v3777
      %v3779 = vpop.f32.mrb[0].mxu0
      %v3780 = vadd.f32 %v3642, %v3779
      %v3781 = vpop.f32.mrb[0].mxu0
      %3782 = vmatprep.mubr.f32.mxu0 0.0
      %v3783 = vand.u32 %v244, 4294901760
      %v3784 = vsub.f32 %v244, %v3783
      %v3785 = vand.u32 %v3784, 4294901760
      %3786 = vmatmul.mubr.f32.gmra.mrb[0].mxu0 %v3785
      %v3787 = vpop.f32.mrb[0].mxu0
      %v3788 = vadd.f32 %v3649, %v3787
      %v3789 = vpop.f32.mrb[0].mxu0
      %3790 = vmatprep.mubr.f32.mxu0 0.0
      %v3791 = vand.u32 %v245, 4294901760
      %v3792 = vsub.f32 %v245, %v3791
      %v3793 = vand.u32 %v3792, 4294901760
      %3794 = vmatmul.mubr.f32.gmra.mrb[0].mxu0 %v3793
      %v3795 = vpop.f32.mrb[0].mxu0
      %v3796 = vadd.f32 %v3656, %v3795
      %v3797 = vpop.f32.mrb[0].mxu0
      %3798 = vmatprep.mubr.f32.mxu0 0.0
      %v3799 = vand.u32 %v246, 4294901760
      %v3800 = vsub.f32 %v246, %v3799
      %v3801 = vand.u32 %v3800, 4294901760
      %3802 = vmatmul.mubr.f32.gmra.mrb[0].mxu0 %v3801
      %v3803 = vpop.f32.mrb[0].mxu0
      %v3804 = vadd.f32 %v3663, %v3803
      %v3805 = vpop.f32.mrb[0].mxu0
      %3806 = vmatprep.mubr.f32.mxu0 0.0
      %v3807 = vand.u32 %v247, 4294901760
      %v3808 = vsub.f32 %v247, %v3807
      %v3809 = vand.u32 %v3808, 4294901760
      %3810 = vmatmul.mubr.f32.gmra.mrb[0].mxu0 %v3809
      %v3811 = vpop.f32.mrb[0].mxu0
      %v3812 = vadd.f32 %v3670, %v3811
      %v3813 = vpop.f32.mrb[0].mxu0
      %3814 = vmatprep.mubr.f32.mxu0 0.0
      %v3815 = vand.u32 %v248, 4294901760
      %v3816 = vsub.f32 %v248, %v3815
      %v3817 = vand.u32 %v3816, 4294901760
      %3818 = vmatmul.mubr.f32.gmra.mrb[0].mxu0 %v3817
      %v3819 = vpop.f32.mrb[0].mxu0
      %v3820 = vadd.f32 %v3677, %v3819
      %v3821 = vpop.f32.mrb[0].mxu0
      %3822 = vmatprep.mubr.f32.mxu0 0.0
      %v3823 = vand.u32 %v249, 4294901760
      %v3824 = vsub.f32 %v249, %v3823
      %v3825 = vand.u32 %v3824, 4294901760
      %3826 = vmatmul.mubr.f32.gmra.mrb[0].mxu0 %v3825
      %v3827 = vpop.f32.mrb[0].mxu0
      %v3828 = vadd.f32 %v3684, %v3827
      %v3829 = vpop.f32.mrb[0].mxu0
      %3830 = vmatprep.mubr.f32.mxu0 0.0
      %v3831 = vand.u32 %v250, 4294901760
      %v3832 = vsub.f32 %v250, %v3831
      %v3833 = vand.u32 %v3832, 4294901760
      %3834 = vmatmul.mubr.f32.gmra.mrb[0].mxu0 %v3833
      %v3835 = vpop.f32.mrb[0].mxu0
      %v3836 = vadd.f32 %v3691, %v3835
      %v3837 = vpop.f32.mrb[0].mxu0
      %3838 = vdwg.mxu0
      %3839 = vmatprep.subr.mxu0 0.0
      %v3840 = vand.u32 %v454, 4294901760
      %v3841 = vsub.f32 %v454, %v3840
      %v3842 = vand.u32 %v3841, 4294901760
      %3843 = vmatpush1.msra.mxu0 %v3842
      %3844 = vmatprep.subr.mxu0 0.0
      %v3845 = vand.u32 %v459, 4294901760
      %v3846 = vsub.f32 %v459, %v3845
      %v3847 = vand.u32 %v3846, 4294901760
      %3848 = vmatpush1.msra.mxu0 %v3847
      %3849 = vmatprep.subr.mxu0 0.0
      %v3850 = vand.u32 %v464, 4294901760
      %v3851 = vsub.f32 %v464, %v3850
      %v3852 = vand.u32 %v3851, 4294901760
      %3853 = vmatpush1.msra.mxu0 %v3852
      %3854 = vmatprep.subr.mxu0 0.0
      %v3855 = vand.u32 %v469, 4294901760
      %v3856 = vsub.f32 %v469, %v3855
      %v3857 = vand.u32 %v3856, 4294901760
      %3858 = vmatpush1.msra.mxu0 %v3857
      %3859 = vmatprep.subr.mxu0 0.0
      %v3860 = vand.u32 %v474, 4294901760
      %v3861 = vsub.f32 %v474, %v3860
      %v3862 = vand.u32 %v3861, 4294901760
      %3863 = vmatpush1.msra.mxu0 %v3862
      %3864 = vmatprep.subr.mxu0 0.0
      %v3865 = vand.u32 %v479, 4294901760
      %v3866 = vsub.f32 %v479, %v3865
      %v3867 = vand.u32 %v3866, 4294901760
      %3868 = vmatpush1.msra.mxu0 %v3867
      %3869 = vmatprep.subr.mxu0 0.0
      %v3870 = vand.u32 %v484, 4294901760
      %v3871 = vsub.f32 %v484, %v3870
      %v3872 = vand.u32 %v3871, 4294901760
      %3873 = vmatpush1.msra.mxu0 %v3872
      %3874 = vmatprep.subr.mxu0 0.0
      %v3875 = vand.u32 %v489, 4294901760
      %v3876 = vsub.f32 %v489, %v3875
      %v3877 = vand.u32 %v3876, 4294901760
      %3878 = vmatpush1.msra.mxu0 %v3877
      %3879 = vmatprep.subr.mxu0 0.0
      %v3880 = vand.u32 %v494, 4294901760
      %v3881 = vsub.f32 %v494, %v3880
      %v3882 = vand.u32 %v3881, 4294901760
      %3883 = vmatpush1.msra.mxu0 %v3882
      %3884 = vmatprep.subr.mxu0 0.0
      %v3885 = vand.u32 %v499, 4294901760
      %v3886 = vsub.f32 %v499, %v3885
      %v3887 = vand.u32 %v3886, 4294901760
      %3888 = vmatpush1.msra.mxu0 %v3887
      %3889 = vmatprep.subr.mxu0 0.0
      %v3890 = vand.u32 %v504, 4294901760
      %v3891 = vsub.f32 %v504, %v3890
      %v3892 = vand.u32 %v3891, 4294901760
      %3893 = vmatpush1.msra.mxu0 %v3892
      %3894 = vmatprep.subr.mxu0 0.0
      %v3895 = vand.u32 %v509, 4294901760
      %v3896 = vsub.f32 %v509, %v3895
      %v3897 = vand.u32 %v3896, 4294901760
      %3898 = vmatpush1.msra.mxu0 %v3897
      %3899 = vmatprep.subr.mxu0 0.0
      %v3900 = vand.u32 %v514, 4294901760
      %v3901 = vsub.f32 %v514, %v3900
      %v3902 = vand.u32 %v3901, 4294901760
      %3903 = vmatpush1.msra.mxu0 %v3902
      %3904 = vmatprep.subr.mxu0 0.0
      %v3905 = vand.u32 %v519, 4294901760
      %v3906 = vsub.f32 %v519, %v3905
      %v3907 = vand.u32 %v3906, 4294901760
      %3908 = vmatpush1.msra.mxu0 %v3907
      %3909 = vmatprep.subr.mxu0 0.0
      %v3910 = vand.u32 %v524, 4294901760
      %v3911 = vsub.f32 %v524, %v3910
      %v3912 = vand.u32 %v3911, 4294901760
      %3913 = vmatpush1.msra.mxu0 %v3912
      %3914 = vmatprep.subr.mxu0 0.0
      %v3915 = vand.u32 %v529, 4294901760
      %v3916 = vsub.f32 %v529, %v3915
      %v3917 = vand.u32 %v3916, 4294901760
      %3918 = vmatpush1.msra.mxu0 %v3917
      %3919 = vmatprep.subr.mxu0 0.0
      %3920 = vmatpush1.msra.mxu0 0.0
      %3921 = vmatprep.subr.mxu0 0.0
      %3922 = vmatpush1.msra.mxu0 0.0
      %3923 = vmatprep.subr.mxu0 0.0
      %3924 = vmatpush1.msra.mxu0 0.0
      %3925 = vmatprep.subr.mxu0 0.0
      %3926 = vmatpush1.msra.mxu0 0.0
      %3927 = vmatprep.subr.mxu0 0.0
      %3928 = vmatpush1.msra.mxu0 0.0
      %3929 = vmatprep.subr.mxu0 0.0
      %3930 = vmatpush1.msra.mxu0 0.0
      %3931 = vmatprep.subr.mxu0 0.0
      %3932 = vmatpush1.msra.mxu0 0.0
      %3933 = vmatprep.subr.mxu0 0.0
      %3934 = vmatpush1.msra.mxu0 0.0
      %3935 = vmatprep.subr.mxu0 0.0
      %3936 = vmatpush1.msra.mxu0 0.0
      %3937 = vmatprep.subr.mxu0 0.0
      %3938 = vmatpush1.msra.mxu0 0.0
      %3939 = vmatprep.subr.mxu0 0.0
      %3940 = vmatpush1.msra.mxu0 0.0
      %3941 = vmatprep.subr.mxu0 0.0
      %3942 = vmatpush1.msra.mxu0 0.0
      %3943 = vmatprep.subr.mxu0 0.0
      %3944 = vmatpush1.msra.mxu0 0.0
      %3945 = vmatprep.subr.mxu0 0.0
      %3946 = vmatpush1.msra.mxu0 0.0
      %3947 = vmatprep.subr.mxu0 0.0
      %3948 = vmatpush1.msra.mxu0 0.0
      %3949 = vmatprep.subr.mxu0 0.0
      %3950 = vmatpush1.msra.mxu0 0.0
      %3951 = vmatprep.mubr.f32.mxu0 0.0
      %v3952 = vand.u32 %v243, 4294901760
      %3953 = vmatmul.mubr.f32.gmra.mrb[0].mxu0 %v3952
      %v3954 = vpop.f32.mrb[0].mxu0
      %v3955 = vadd.f32 %v3780, %v3954
      %v3956 = vpop.f32.mrb[0].mxu0
      %3957 = vmatprep.mubr.f32.mxu0 0.0
      %v3958 = vand.u32 %v244, 4294901760
      %3959 = vmatmul.mubr.f32.gmra.mrb[0].mxu0 %v3958
      %v3960 = vpop.f32.mrb[0].mxu0
      %v3961 = vadd.f32 %v3788, %v3960
      %v3962 = vpop.f32.mrb[0].mxu0
      %3963 = vmatprep.mubr.f32.mxu0 0.0
      %v3964 = vand.u32 %v245, 4294901760
      %3965 = vmatmul.mubr.f32.gmra.mrb[0].mxu0 %v3964
      %v3966 = vpop.f32.mrb[0].mxu0
      %v3967 = vadd.f32 %v3796, %v3966
      %v3968 = vpop.f32.mrb[0].mxu0
      %3969 = vmatprep.mubr.f32.mxu0 0.0
      %v3970 = vand.u32 %v246, 4294901760
      %3971 = vmatmul.mubr.f32.gmra.mrb[0].mxu0 %v3970
      %v3972 = vpop.f32.mrb[0].mxu0
      %v3973 = vadd.f32 %v3804, %v3972
      %v3974 = vpop.f32.mrb[0].mxu0
      %3975 = vmatprep.mubr.f32.mxu0 0.0
      %v3976 = vand.u32 %v247, 4294901760
      %3977 = vmatmul.mubr.f32.gmra.mrb[0].mxu0 %v3976
      %v3978 = vpop.f32.mrb[0].mxu0
      %v3979 = vadd.f32 %v3812, %v3978
      %v3980 = vpop.f32.mrb[0].mxu0
      %3981 = vmatprep.mubr.f32.mxu0 0.0
      %v3982 = vand.u32 %v248, 4294901760
      %3983 = vmatmul.mubr.f32.gmra.mrb[0].mxu0 %v3982
      %v3984 = vpop.f32.mrb[0].mxu0
      %v3985 = vadd.f32 %v3820, %v3984
      %v3986 = vpop.f32.mrb[0].mxu0
      %3987 = vmatprep.mubr.f32.mxu0 0.0
      %v3988 = vand.u32 %v249, 4294901760
      %3989 = vmatmul.mubr.f32.gmra.mrb[0].mxu0 %v3988
      %v3990 = vpop.f32.mrb[0].mxu0
      %v3991 = vadd.f32 %v3828, %v3990
      %v3992 = vpop.f32.mrb[0].mxu0
      %3993 = vmatprep.mubr.f32.mxu0 0.0
      %v3994 = vand.u32 %v250, 4294901760
      %3995 = vmatmul.mubr.f32.gmra.mrb[0].mxu0 %v3994
      %v3996 = vpop.f32.mrb[0].mxu0
      %v3997 = vadd.f32 %v3836, %v3996
      %v3998 = vpop.f32.mrb[0].mxu0
      %3999 = vdwg.mxu0
      %4000 = vmatprep.subr.mxu0 0.0
      %v4001 = vand.u32 %v454, 4294901760
      %4002 = vmatpush1.msra.mxu0 %v4001
      %4003 = vmatprep.subr.mxu0 0.0
      %v4004 = vand.u32 %v459, 4294901760
      %4005 = vmatpush1.msra.mxu0 %v4004
      %4006 = vmatprep.subr.mxu0 0.0
      %v4007 = vand.u32 %v464, 4294901760
      %4008 = vmatpush1.msra.mxu0 %v4007
      %4009 = vmatprep.subr.mxu0 0.0
      %v4010 = vand.u32 %v469, 4294901760
      %4011 = vmatpush1.msra.mxu0 %v4010
      %4012 = vmatprep.subr.mxu0 0.0
      %v4013 = vand.u32 %v474, 4294901760
      %4014 = vmatpush1.msra.mxu0 %v4013
      %4015 = vmatprep.subr.mxu0 0.0
      %v4016 = vand.u32 %v479, 4294901760
      %4017 = vmatpush1.msra.mxu0 %v4016
      %4018 = vmatprep.subr.mxu0 0.0
      %v4019 = vand.u32 %v484, 4294901760
      %4020 = vmatpush1.msra.mxu0 %v4019
      %4021 = vmatprep.subr.mxu0 0.0
      %v4022 = vand.u32 %v489, 4294901760
      %4023 = vmatpush1.msra.mxu0 %v4022
      %4024 = vmatprep.subr.mxu0 0.0
      %v4025 = vand.u32 %v494, 4294901760
      %4026 = vmatpush1.msra.mxu0 %v4025
      %4027 = vmatprep.subr.mxu0 0.0
      %v4028 = vand.u32 %v499, 4294901760
      %4029 = vmatpush1.msra.mxu0 %v4028
      %4030 = vmatprep.subr.mxu0 0.0
      %v4031 = vand.u32 %v504, 4294901760
      %4032 = vmatpush1.msra.mxu0 %v4031
      %4033 = vmatprep.subr.mxu0 0.0
      %v4034 = vand.u32 %v509, 4294901760
      %4035 = vmatpush1.msra.mxu0 %v4034
      %4036 = vmatprep.subr.mxu0 0.0
      %v4037 = vand.u32 %v514, 4294901760
      %4038 = vmatpush1.msra.mxu0 %v4037
      %4039 = vmatprep.subr.mxu0 0.0
      %v4040 = vand.u32 %v519, 4294901760
      %4041 = vmatpush1.msra.mxu0 %v4040
      %4042 = vmatprep.subr.mxu0 0.0
      %v4043 = vand.u32 %v524, 4294901760
      %4044 = vmatpush1.msra.mxu0 %v4043
      %4045 = vmatprep.subr.mxu0 0.0
      %v4046 = vand.u32 %v529, 4294901760
      %4047 = vmatpush1.msra.mxu0 %v4046
      %4048 = vmatprep.subr.mxu0 0.0
      %4049 = vmatpush1.msra.mxu0 0.0
      %4050 = vmatprep.subr.mxu0 0.0
      %4051 = vmatpush1.msra.mxu0 0.0
      %4052 = vmatprep.subr.mxu0 0.0
      %4053 = vmatpush1.msra.mxu0 0.0
      %4054 = vmatprep.subr.mxu0 0.0
      %4055 = vmatpush1.msra.mxu0 0.0
      %4056 = vmatprep.subr.mxu0 0.0
      %4057 = vmatpush1.msra.mxu0 0.0
      %4058 = vmatprep.subr.mxu0 0.0
      %4059 = vmatpush1.msra.mxu0 0.0
      %4060 = vmatprep.subr.mxu0 0.0
      %4061 = vmatpush1.msra.mxu0 0.0
      %4062 = vmatprep.subr.mxu0 0.0
      %4063 = vmatpush1.msra.mxu0 0.0
      %4064 = vmatprep.subr.mxu0 0.0
      %4065 = vmatpush1.msra.mxu0 0.0
      %4066 = vmatprep.subr.mxu0 0.0
      %4067 = vmatpush1.msra.mxu0 0.0
      %4068 = vmatprep.subr.mxu0 0.0
      %4069 = vmatpush1.msra.mxu0 0.0
      %4070 = vmatprep.subr.mxu0 0.0
      %4071 = vmatpush1.msra.mxu0 0.0
      %4072 = vmatprep.subr.mxu0 0.0
      %4073 = vmatpush1.msra.mxu0 0.0
      %4074 = vmatprep.subr.mxu0 0.0
      %4075 = vmatpush1.msra.mxu0 0.0
      %4076 = vmatprep.subr.mxu0 0.0
      %4077 = vmatpush1.msra.mxu0 0.0
      %4078 = vmatprep.subr.mxu0 0.0
      %4079 = vmatpush1.msra.mxu0 0.0
      %4080 = vmatprep.mubr.f32.mxu0 0.0
      %v4081 = vand.u32 %v243, 4294901760
      %4082 = vmatmul.mubr.f32.gmra.mrb[0].mxu0 %v4081
      %v4083 = vpop.f32.mrb[0].mxu0
      %v4084 = vadd.f32 %v3955, %v4083
      %v4085 = vpop.f32.mrb[0].mxu0
      %4086 = vmatprep.mubr.f32.mxu0 0.0
      %v4087 = vand.u32 %v244, 4294901760
      %4088 = vmatmul.mubr.f32.gmra.mrb[0].mxu0 %v4087
      %v4089 = vpop.f32.mrb[0].mxu0
      %v4090 = vadd.f32 %v3961, %v4089
      %v4091 = vpop.f32.mrb[0].mxu0
      %4092 = vmatprep.mubr.f32.mxu0 0.0
      %v4093 = vand.u32 %v245, 4294901760
      %4094 = vmatmul.mubr.f32.gmra.mrb[0].mxu0 %v4093
      %v4095 = vpop.f32.mrb[0].mxu0
      %v4096 = vadd.f32 %v3967, %v4095
      %v4097 = vpop.f32.mrb[0].mxu0
      %4098 = vmatprep.mubr.f32.mxu0 0.0
      %v4099 = vand.u32 %v246, 4294901760
      %4100 = vmatmul.mubr.f32.gmra.mrb[0].mxu0 %v4099
      %v4101 = vpop.f32.mrb[0].mxu0
      %v4102 = vadd.f32 %v3973, %v4101
      %v4103 = vpop.f32.mrb[0].mxu0
      %4104 = vmatprep.mubr.f32.mxu0 0.0
      %v4105 = vand.u32 %v247, 4294901760
      %4106 = vmatmul.mubr.f32.gmra.mrb[0].mxu0 %v4105
      %v4107 = vpop.f32.mrb[0].mxu0
      %v4108 = vadd.f32 %v3979, %v4107
      %v4109 = vpop.f32.mrb[0].mxu0
      %4110 = vmatprep.mubr.f32.mxu0 0.0
      %v4111 = vand.u32 %v248, 4294901760
      %4112 = vmatmul.mubr.f32.gmra.mrb[0].mxu0 %v4111
      %v4113 = vpop.f32.mrb[0].mxu0
      %v4114 = vadd.f32 %v3985, %v4113
      %v4115 = vpop.f32.mrb[0].mxu0
      %4116 = vmatprep.mubr.f32.mxu0 0.0
      %v4117 = vand.u32 %v249, 4294901760
      %4118 = vmatmul.mubr.f32.gmra.mrb[0].mxu0 %v4117
      %v4119 = vpop.f32.mrb[0].mxu0
      %v4120 = vadd.f32 %v3991, %v4119
      %v4121 = vpop.f32.mrb[0].mxu0
      %4122 = vmatprep.mubr.f32.mxu0 0.0
      %v4123 = vand.u32 %v250, 4294901760
      %4124 = vmatmul.mubr.f32.gmra.mrb[0].mxu0 %v4123
      %v4125 = vpop.f32.mrb[0].mxu0
      %v4126 = vadd.f32 %v3997, %v4125
      %v4127 = vpop.f32.mrb[0].mxu0
      %4128 = vdwg.mxu0
      %v4129 = vand.u32 %v712, 4294901760
      %4130 = vmatprep.subr.mxu0 %v4129
      %v4131 = vand.u32 %v711, 4294901760
      %4132 = vmatpush1.msra.mxu0 %v4131
      %v4133 = vand.u32 %v717, 4294901760
      %4134 = vmatprep.subr.mxu0 %v4133
      %v4135 = vand.u32 %v716, 4294901760
      %4136 = vmatpush1.msra.mxu0 %v4135
      %v4137 = vand.u32 %v722, 4294901760
      %4138 = vmatprep.subr.mxu0 %v4137
      %v4139 = vand.u32 %v721, 4294901760
      %4140 = vmatpush1.msra.mxu0 %v4139
      %v4141 = vand.u32 %v727, 4294901760
      %4142 = vmatprep.subr.mxu0 %v4141
      %v4143 = vand.u32 %v726, 4294901760
      %4144 = vmatpush1.msra.mxu0 %v4143
      %v4145 = vand.u32 %v732, 4294901760
      %4146 = vmatprep.subr.mxu0 %v4145
      %v4147 = vand.u32 %v731, 4294901760
      %4148 = vmatpush1.msra.mxu0 %v4147
      %v4149 = vand.u32 %v737, 4294901760
      %4150 = vmatprep.subr.mxu0 %v4149
      %v4151 = vand.u32 %v736, 4294901760
      %4152 = vmatpush1.msra.mxu0 %v4151
      %v4153 = vand.u32 %v742, 4294901760
      %4154 = vmatprep.subr.mxu0 %v4153
      %v4155 = vand.u32 %v741, 4294901760
      %4156 = vmatpush1.msra.mxu0 %v4155
      %v4157 = vand.u32 %v747, 4294901760
      %4158 = vmatprep.subr.mxu0 %v4157
      %v4159 = vand.u32 %v746, 4294901760
      %4160 = vmatpush1.msra.mxu0 %v4159
      %v4161 = vand.u32 %v752, 4294901760
      %4162 = vmatprep.subr.mxu0 %v4161
      %v4163 = vand.u32 %v751, 4294901760
      %4164 = vmatpush1.msra.mxu0 %v4163
      %v4165 = vand.u32 %v757, 4294901760
      %4166 = vmatprep.subr.mxu0 %v4165
      %v4167 = vand.u32 %v756, 4294901760
      %4168 = vmatpush1.msra.mxu0 %v4167
      %v4169 = vand.u32 %v762, 4294901760
      %4170 = vmatprep.subr.mxu0 %v4169
      %v4171 = vand.u32 %v761, 4294901760
      %4172 = vmatpush1.msra.mxu0 %v4171
      %v4173 = vand.u32 %v767, 4294901760
      %4174 = vmatprep.subr.mxu0 %v4173
      %v4175 = vand.u32 %v766, 4294901760
      %4176 = vmatpush1.msra.mxu0 %v4175
      %v4177 = vand.u32 %v772, 4294901760
      %4178 = vmatprep.subr.mxu0 %v4177
      %v4179 = vand.u32 %v771, 4294901760
      %4180 = vmatpush1.msra.mxu0 %v4179
      %v4181 = vand.u32 %v777, 4294901760
      %4182 = vmatprep.subr.mxu0 %v4181
      %v4183 = vand.u32 %v776, 4294901760
      %4184 = vmatpush1.msra.mxu0 %v4183
      %v4185 = vand.u32 %v782, 4294901760
      %4186 = vmatprep.subr.mxu0 %v4185
      %v4187 = vand.u32 %v781, 4294901760
      %4188 = vmatpush1.msra.mxu0 %v4187
      %v4189 = vand.u32 %v787, 4294901760
      %4190 = vmatprep.subr.mxu0 %v4189
      %v4191 = vand.u32 %v786, 4294901760
      %4192 = vmatpush1.msra.mxu0 %v4191
      %4193 = vmatprep.subr.mxu0 0.0
      %4194 = vmatpush1.msra.mxu0 0.0
      %4195 = vmatprep.subr.mxu0 0.0
      %4196 = vmatpush1.msra.mxu0 0.0
      %4197 = vmatprep.subr.mxu0 0.0
      %4198 = vmatpush1.msra.mxu0 0.0
      %4199 = vmatprep.subr.mxu0 0.0
      %4200 = vmatpush1.msra.mxu0 0.0
      %4201 = vmatprep.subr.mxu0 0.0
      %4202 = vmatpush1.msra.mxu0 0.0
      %4203 = vmatprep.subr.mxu0 0.0
      %4204 = vmatpush1.msra.mxu0 0.0
      %4205 = vmatprep.subr.mxu0 0.0
      %4206 = vmatpush1.msra.mxu0 0.0
      %4207 = vmatprep.subr.mxu0 0.0
      %4208 = vmatpush1.msra.mxu0 0.0
      %4209 = vmatprep.subr.mxu0 0.0
      %4210 = vmatpush1.msra.mxu0 0.0
      %4211 = vmatprep.subr.mxu0 0.0
      %4212 = vmatpush1.msra.mxu0 0.0
      %4213 = vmatprep.subr.mxu0 0.0
      %4214 = vmatpush1.msra.mxu0 0.0
      %4215 = vmatprep.subr.mxu0 0.0
      %4216 = vmatpush1.msra.mxu0 0.0
      %4217 = vmatprep.subr.mxu0 0.0
      %4218 = vmatpush1.msra.mxu0 0.0
      %4219 = vmatprep.subr.mxu0 0.0
      %4220 = vmatpush1.msra.mxu0 0.0
      %4221 = vmatprep.subr.mxu0 0.0
      %4222 = vmatpush1.msra.mxu0 0.0
      %4223 = vmatprep.subr.mxu0 0.0
      %4224 = vmatpush1.msra.mxu0 0.0
      %4225 = vmatprep.mubr.f32.mxu0 0.0
      %v4226 = vand.u32 %v243, 4294901760
      %v4227 = vsub.f32 %v243, %v4226
      %v4228 = vand.u32 %v4227, 4294901760
      %v4229 = vsub.f32 %v4227, %v4228
      %v4230 = vand.u32 %v4229, 4294901760
      %4231 = vmatmul.mubr.f32.gmra.mrb[0].mxu0 %v4230
      %v4232 = vpop.f32.mrb[0].mxu0
      %v4233 = vadd.f32 0.0, %v4232
      %v4234 = vpop.f32.mrb[0].mxu0
      %v4235 = vadd.f32 0.0, %v4234
      %4236 = vmatprep.mubr.f32.mxu0 0.0
      %v4237 = vand.u32 %v244, 4294901760
      %v4238 = vsub.f32 %v244, %v4237
      %v4239 = vand.u32 %v4238, 4294901760
      %v4240 = vsub.f32 %v4238, %v4239
      %v4241 = vand.u32 %v4240, 4294901760
      %4242 = vmatmul.mubr.f32.gmra.mrb[0].mxu0 %v4241
      %v4243 = vpop.f32.mrb[0].mxu0
      %v4244 = vadd.f32 0.0, %v4243
      %v4245 = vpop.f32.mrb[0].mxu0
      %v4246 = vadd.f32 0.0, %v4245
      %4247 = vmatprep.mubr.f32.mxu0 0.0
      %v4248 = vand.u32 %v245, 4294901760
      %v4249 = vsub.f32 %v245, %v4248
      %v4250 = vand.u32 %v4249, 4294901760
      %v4251 = vsub.f32 %v4249, %v4250
      %v4252 = vand.u32 %v4251, 4294901760
      %4253 = vmatmul.mubr.f32.gmra.mrb[0].mxu0 %v4252
      %v4254 = vpop.f32.mrb[0].mxu0
      %v4255 = vadd.f32 0.0, %v4254
      %v4256 = vpop.f32.mrb[0].mxu0
      %v4257 = vadd.f32 0.0, %v4256
      %4258 = vmatprep.mubr.f32.mxu0 0.0
      %v4259 = vand.u32 %v246, 4294901760
      %v4260 = vsub.f32 %v246, %v4259
      %v4261 = vand.u32 %v4260, 4294901760
      %v4262 = vsub.f32 %v4260, %v4261
      %v4263 = vand.u32 %v4262, 4294901760
      %4264 = vmatmul.mubr.f32.gmra.mrb[0].mxu0 %v4263
      %v4265 = vpop.f32.mrb[0].mxu0
      %v4266 = vadd.f32 0.0, %v4265
      %v4267 = vpop.f32.mrb[0].mxu0
      %v4268 = vadd.f32 0.0, %v4267
      %4269 = vmatprep.mubr.f32.mxu0 0.0
      %v4270 = vand.u32 %v247, 4294901760
      %v4271 = vsub.f32 %v247, %v4270
      %v4272 = vand.u32 %v4271, 4294901760
      %v4273 = vsub.f32 %v4271, %v4272
      %v4274 = vand.u32 %v4273, 4294901760
      %4275 = vmatmul.mubr.f32.gmra.mrb[0].mxu0 %v4274
      %v4276 = vpop.f32.mrb[0].mxu0
      %v4277 = vadd.f32 0.0, %v4276
      %v4278 = vpop.f32.mrb[0].mxu0
      %v4279 = vadd.f32 0.0, %v4278
      %4280 = vmatprep.mubr.f32.mxu0 0.0
      %v4281 = vand.u32 %v248, 4294901760
      %v4282 = vsub.f32 %v248, %v4281
      %v4283 = vand.u32 %v4282, 4294901760
      %v4284 = vsub.f32 %v4282, %v4283
      %v4285 = vand.u32 %v4284, 4294901760
      %4286 = vmatmul.mubr.f32.gmra.mrb[0].mxu0 %v4285
      %v4287 = vpop.f32.mrb[0].mxu0
      %v4288 = vadd.f32 0.0, %v4287
      %v4289 = vpop.f32.mrb[0].mxu0
      %v4290 = vadd.f32 0.0, %v4289
      %4291 = vmatprep.mubr.f32.mxu0 0.0
      %v4292 = vand.u32 %v249, 4294901760
      %v4293 = vsub.f32 %v249, %v4292
      %v4294 = vand.u32 %v4293, 4294901760
      %v4295 = vsub.f32 %v4293, %v4294
      %v4296 = vand.u32 %v4295, 4294901760
      %4297 = vmatmul.mubr.f32.gmra.mrb[0].mxu0 %v4296
      %v4298 = vpop.f32.mrb[0].mxu0
      %v4299 = vadd.f32 0.0, %v4298
      %v4300 = vpop.f32.mrb[0].mxu0
      %v4301 = vadd.f32 0.0, %v4300
      %4302 = vmatprep.mubr.f32.mxu0 0.0
      %v4303 = vand.u32 %v250, 4294901760
      %v4304 = vsub.f32 %v250, %v4303
      %v4305 = vand.u32 %v4304, 4294901760
      %v4306 = vsub.f32 %v4304, %v4305
      %v4307 = vand.u32 %v4306, 4294901760
      %4308 = vmatmul.mubr.f32.gmra.mrb[0].mxu0 %v4307
      %v4309 = vpop.f32.mrb[0].mxu0
      %v4310 = vadd.f32 0.0, %v4309
      %v4311 = vpop.f32.mrb[0].mxu0
      %v4312 = vadd.f32 0.0, %v4311
      %4313 = vdwg.mxu0
      %v4314 = vand.u32 %v712, 4294901760
      %v4315 = vsub.f32 %v712, %v4314
      %v4316 = vand.u32 %v4315, 4294901760
      %v4317 = vsub.f32 %v4315, %v4316
      %v4318 = vand.u32 %v4317, 4294901760
      %4319 = vmatprep.subr.mxu0 %v4318
      %v4320 = vand.u32 %v711, 4294901760
      %v4321 = vsub.f32 %v711, %v4320
      %v4322 = vand.u32 %v4321, 4294901760
      %v4323 = vsub.f32 %v4321, %v4322
      %v4324 = vand.u32 %v4323, 4294901760
      %4325 = vmatpush1.msra.mxu0 %v4324
      %v4326 = vand.u32 %v717, 4294901760
      %v4327 = vsub.f32 %v717, %v4326
      %v4328 = vand.u32 %v4327, 4294901760
      %v4329 = vsub.f32 %v4327, %v4328
      %v4330 = vand.u32 %v4329, 4294901760
      %4331 = vmatprep.subr.mxu0 %v4330
      %v4332 = vand.u32 %v716, 4294901760
      %v4333 = vsub.f32 %v716, %v4332
      %v4334 = vand.u32 %v4333, 4294901760
      %v4335 = vsub.f32 %v4333, %v4334
      %v4336 = vand.u32 %v4335, 4294901760
      %4337 = vmatpush1.msra.mxu0 %v4336
      %v4338 = vand.u32 %v722, 4294901760
      %v4339 = vsub.f32 %v722, %v4338
      %v4340 = vand.u32 %v4339, 4294901760
      %v4341 = vsub.f32 %v4339, %v4340
      %v4342 = vand.u32 %v4341, 4294901760
      %4343 = vmatprep.subr.mxu0 %v4342
      %v4344 = vand.u32 %v721, 4294901760
      %v4345 = vsub.f32 %v721, %v4344
      %v4346 = vand.u32 %v4345, 4294901760
      %v4347 = vsub.f32 %v4345, %v4346
      %v4348 = vand.u32 %v4347, 4294901760
      %4349 = vmatpush1.msra.mxu0 %v4348
      %v4350 = vand.u32 %v727, 4294901760
      %v4351 = vsub.f32 %v727, %v4350
      %v4352 = vand.u32 %v4351, 4294901760
      %v4353 = vsub.f32 %v4351, %v4352
      %v4354 = vand.u32 %v4353, 4294901760
      %4355 = vmatprep.subr.mxu0 %v4354
      %v4356 = vand.u32 %v726, 4294901760
      %v4357 = vsub.f32 %v726, %v4356
      %v4358 = vand.u32 %v4357, 4294901760
      %v4359 = vsub.f32 %v4357, %v4358
      %v4360 = vand.u32 %v4359, 4294901760
      %4361 = vmatpush1.msra.mxu0 %v4360
      %v4362 = vand.u32 %v732, 4294901760
      %v4363 = vsub.f32 %v732, %v4362
      %v4364 = vand.u32 %v4363, 4294901760
      %v4365 = vsub.f32 %v4363, %v4364
      %v4366 = vand.u32 %v4365, 4294901760
      %4367 = vmatprep.subr.mxu0 %v4366
      %v4368 = vand.u32 %v731, 4294901760
      %v4369 = vsub.f32 %v731, %v4368
      %v4370 = vand.u32 %v4369, 4294901760
      %v4371 = vsub.f32 %v4369, %v4370
      %v4372 = vand.u32 %v4371, 4294901760
      %4373 = vmatpush1.msra.mxu0 %v4372
      %v4374 = vand.u32 %v737, 4294901760
      %v4375 = vsub.f32 %v737, %v4374
      %v4376 = vand.u32 %v4375, 4294901760
      %v4377 = vsub.f32 %v4375, %v4376
      %v4378 = vand.u32 %v4377, 4294901760
      %4379 = vmatprep.subr.mxu0 %v4378
      %v4380 = vand.u32 %v736, 4294901760
      %v4381 = vsub.f32 %v736, %v4380
      %v4382 = vand.u32 %v4381, 4294901760
      %v4383 = vsub.f32 %v4381, %v4382
      %v4384 = vand.u32 %v4383, 4294901760
      %4385 = vmatpush1.msra.mxu0 %v4384
      %v4386 = vand.u32 %v742, 4294901760
      %v4387 = vsub.f32 %v742, %v4386
      %v4388 = vand.u32 %v4387, 4294901760
      %v4389 = vsub.f32 %v4387, %v4388
      %v4390 = vand.u32 %v4389, 4294901760
      %4391 = vmatprep.subr.mxu0 %v4390
      %v4392 = vand.u32 %v741, 4294901760
      %v4393 = vsub.f32 %v741, %v4392
      %v4394 = vand.u32 %v4393, 4294901760
      %v4395 = vsub.f32 %v4393, %v4394
      %v4396 = vand.u32 %v4395, 4294901760
      %4397 = vmatpush1.msra.mxu0 %v4396
      %v4398 = vand.u32 %v747, 4294901760
      %v4399 = vsub.f32 %v747, %v4398
      %v4400 = vand.u32 %v4399, 4294901760
      %v4401 = vsub.f32 %v4399, %v4400
      %v4402 = vand.u32 %v4401, 4294901760
      %4403 = vmatprep.subr.mxu0 %v4402
      %v4404 = vand.u32 %v746, 4294901760
      %v4405 = vsub.f32 %v746, %v4404
      %v4406 = vand.u32 %v4405, 4294901760
      %v4407 = vsub.f32 %v4405, %v4406
      %v4408 = vand.u32 %v4407, 4294901760
      %4409 = vmatpush1.msra.mxu0 %v4408
      %v4410 = vand.u32 %v752, 4294901760
      %v4411 = vsub.f32 %v752, %v4410
      %v4412 = vand.u32 %v4411, 4294901760
      %v4413 = vsub.f32 %v4411, %v4412
      %v4414 = vand.u32 %v4413, 4294901760
      %4415 = vmatprep.subr.mxu0 %v4414
      %v4416 = vand.u32 %v751, 4294901760
      %v4417 = vsub.f32 %v751, %v4416
      %v4418 = vand.u32 %v4417, 4294901760
      %v4419 = vsub.f32 %v4417, %v4418
      %v4420 = vand.u32 %v4419, 4294901760
      %4421 = vmatpush1.msra.mxu0 %v4420
      %v4422 = vand.u32 %v757, 4294901760
      %v4423 = vsub.f32 %v757, %v4422
      %v4424 = vand.u32 %v4423, 4294901760
      %v4425 = vsub.f32 %v4423, %v4424
      %v4426 = vand.u32 %v4425, 4294901760
      %4427 = vmatprep.subr.mxu0 %v4426
      %v4428 = vand.u32 %v756, 4294901760
      %v4429 = vsub.f32 %v756, %v4428
      %v4430 = vand.u32 %v4429, 4294901760
      %v4431 = vsub.f32 %v4429, %v4430
      %v4432 = vand.u32 %v4431, 4294901760
      %4433 = vmatpush1.msra.mxu0 %v4432
      %v4434 = vand.u32 %v762, 4294901760
      %v4435 = vsub.f32 %v762, %v4434
      %v4436 = vand.u32 %v4435, 4294901760
      %v4437 = vsub.f32 %v4435, %v4436
      %v4438 = vand.u32 %v4437, 4294901760
      %4439 = vmatprep.subr.mxu0 %v4438
      %v4440 = vand.u32 %v761, 4294901760
      %v4441 = vsub.f32 %v761, %v4440
      %v4442 = vand.u32 %v4441, 4294901760
      %v4443 = vsub.f32 %v4441, %v4442
      %v4444 = vand.u32 %v4443, 4294901760
      %4445 = vmatpush1.msra.mxu0 %v4444
      %v4446 = vand.u32 %v767, 4294901760
      %v4447 = vsub.f32 %v767, %v4446
      %v4448 = vand.u32 %v4447, 4294901760
      %v4449 = vsub.f32 %v4447, %v4448
      %v4450 = vand.u32 %v4449, 4294901760
      %4451 = vmatprep.subr.mxu0 %v4450
      %v4452 = vand.u32 %v766, 4294901760
      %v4453 = vsub.f32 %v766, %v4452
      %v4454 = vand.u32 %v4453, 4294901760
      %v4455 = vsub.f32 %v4453, %v4454
      %v4456 = vand.u32 %v4455, 4294901760
      %4457 = vmatpush1.msra.mxu0 %v4456
      %v4458 = vand.u32 %v772, 4294901760
      %v4459 = vsub.f32 %v772, %v4458
      %v4460 = vand.u32 %v4459, 4294901760
      %v4461 = vsub.f32 %v4459, %v4460
      %v4462 = vand.u32 %v4461, 4294901760
      %4463 = vmatprep.subr.mxu0 %v4462
      %v4464 = vand.u32 %v771, 4294901760
      %v4465 = vsub.f32 %v771, %v4464
      %v4466 = vand.u32 %v4465, 4294901760
      %v4467 = vsub.f32 %v4465, %v4466
      %v4468 = vand.u32 %v4467, 4294901760
      %4469 = vmatpush1.msra.mxu0 %v4468
      %v4470 = vand.u32 %v777, 4294901760
      %v4471 = vsub.f32 %v777, %v4470
      %v4472 = vand.u32 %v4471, 4294901760
      %v4473 = vsub.f32 %v4471, %v4472
      %v4474 = vand.u32 %v4473, 4294901760
      %4475 = vmatprep.subr.mxu0 %v4474
      %v4476 = vand.u32 %v776, 4294901760
      %v4477 = vsub.f32 %v776, %v4476
      %v4478 = vand.u32 %v4477, 4294901760
      %v4479 = vsub.f32 %v4477, %v4478
      %v4480 = vand.u32 %v4479, 4294901760
      %4481 = vmatpush1.msra.mxu0 %v4480
      %v4482 = vand.u32 %v782, 4294901760
      %v4483 = vsub.f32 %v782, %v4482
      %v4484 = vand.u32 %v4483, 4294901760
      %v4485 = vsub.f32 %v4483, %v4484
      %v4486 = vand.u32 %v4485, 4294901760
      %4487 = vmatprep.subr.mxu0 %v4486
      %v4488 = vand.u32 %v781, 4294901760
      %v4489 = vsub.f32 %v781, %v4488
      %v4490 = vand.u32 %v4489, 4294901760
      %v4491 = vsub.f32 %v4489, %v4490
      %v4492 = vand.u32 %v4491, 4294901760
      %4493 = vmatpush1.msra.mxu0 %v4492
      %v4494 = vand.u32 %v787, 4294901760
      %v4495 = vsub.f32 %v787, %v4494
      %v4496 = vand.u32 %v4495, 4294901760
      %v4497 = vsub.f32 %v4495, %v4496
      %v4498 = vand.u32 %v4497, 4294901760
      %4499 = vmatprep.subr.mxu0 %v4498
      %v4500 = vand.u32 %v786, 4294901760
      %v4501 = vsub.f32 %v786, %v4500
      %v4502 = vand.u32 %v4501, 4294901760
      %v4503 = vsub.f32 %v4501, %v4502
      %v4504 = vand.u32 %v4503, 4294901760
      %4505 = vmatpush1.msra.mxu0 %v4504
      %4506 = vmatprep.subr.mxu0 0.0
      %4507 = vmatpush1.msra.mxu0 0.0
      %4508 = vmatprep.subr.mxu0 0.0
      %4509 = vmatpush1.msra.mxu0 0.0
      %4510 = vmatprep.subr.mxu0 0.0
      %4511 = vmatpush1.msra.mxu0 0.0
      %4512 = vmatprep.subr.mxu0 0.0
      %4513 = vmatpush1.msra.mxu0 0.0
      %4514 = vmatprep.subr.mxu0 0.0
      %4515 = vmatpush1.msra.mxu0 0.0
      %4516 = vmatprep.subr.mxu0 0.0
      %4517 = vmatpush1.msra.mxu0 0.0
      %4518 = vmatprep.subr.mxu0 0.0
      %4519 = vmatpush1.msra.mxu0 0.0
      %4520 = vmatprep.subr.mxu0 0.0
      %4521 = vmatpush1.msra.mxu0 0.0
      %4522 = vmatprep.subr.mxu0 0.0
      %4523 = vmatpush1.msra.mxu0 0.0
      %4524 = vmatprep.subr.mxu0 0.0
      %4525 = vmatpush1.msra.mxu0 0.0
      %4526 = vmatprep.subr.mxu0 0.0
      %4527 = vmatpush1.msra.mxu0 0.0
      %4528 = vmatprep.subr.mxu0 0.0
      %4529 = vmatpush1.msra.mxu0 0.0
      %4530 = vmatprep.subr.mxu0 0.0
      %4531 = vmatpush1.msra.mxu0 0.0
      %4532 = vmatprep.subr.mxu0 0.0
      %4533 = vmatpush1.msra.mxu0 0.0
      %4534 = vmatprep.subr.mxu0 0.0
      %4535 = vmatpush1.msra.mxu0 0.0
      %4536 = vmatprep.subr.mxu0 0.0
      %4537 = vmatpush1.msra.mxu0 0.0
      %4538 = vmatprep.mubr.f32.mxu0 0.0
      %v4539 = vand.u32 %v243, 4294901760
      %4540 = vmatmul.mubr.f32.gmra.mrb[0].mxu0 %v4539
      %v4541 = vpop.f32.mrb[0].mxu0
      %v4542 = vadd.f32 %v4233, %v4541
      %v4543 = vpop.f32.mrb[0].mxu0
      %v4544 = vadd.f32 %v4235, %v4543
      %4545 = vmatprep.mubr.f32.mxu0 0.0
      %v4546 = vand.u32 %v244, 4294901760
      %4547 = vmatmul.mubr.f32.gmra.mrb[0].mxu0 %v4546
      %v4548 = vpop.f32.mrb[0].mxu0
      %v4549 = vadd.f32 %v4244, %v4548
      %v4550 = vpop.f32.mrb[0].mxu0
      %v4551 = vadd.f32 %v4246, %v4550
      %4552 = vmatprep.mubr.f32.mxu0 0.0
      %v4553 = vand.u32 %v245, 4294901760
      %4554 = vmatmul.mubr.f32.gmra.mrb[0].mxu0 %v4553
      %v4555 = vpop.f32.mrb[0].mxu0
      %v4556 = vadd.f32 %v4255, %v4555
      %v4557 = vpop.f32.mrb[0].mxu0
      %v4558 = vadd.f32 %v4257, %v4557
      %4559 = vmatprep.mubr.f32.mxu0 0.0
      %v4560 = vand.u32 %v246, 4294901760
      %4561 = vmatmul.mubr.f32.gmra.mrb[0].mxu0 %v4560
      %v4562 = vpop.f32.mrb[0].mxu0
      %v4563 = vadd.f32 %v4266, %v4562
      %v4564 = vpop.f32.mrb[0].mxu0
      %v4565 = vadd.f32 %v4268, %v4564
      %4566 = vmatprep.mubr.f32.mxu0 0.0
      %v4567 = vand.u32 %v247, 4294901760
      %4568 = vmatmul.mubr.f32.gmra.mrb[0].mxu0 %v4567
      %v4569 = vpop.f32.mrb[0].mxu0
      %v4570 = vadd.f32 %v4277, %v4569
      %v4571 = vpop.f32.mrb[0].mxu0
      %v4572 = vadd.f32 %v4279, %v4571
      %4573 = vmatprep.mubr.f32.mxu0 0.0
      %v4574 = vand.u32 %v248, 4294901760
      %4575 = vmatmul.mubr.f32.gmra.mrb[0].mxu0 %v4574
      %v4576 = vpop.f32.mrb[0].mxu0
      %v4577 = vadd.f32 %v4288, %v4576
      %v4578 = vpop.f32.mrb[0].mxu0
      %v4579 = vadd.f32 %v4290, %v4578
      %4580 = vmatprep.mubr.f32.mxu0 0.0
      %v4581 = vand.u32 %v249, 4294901760
      %4582 = vmatmul.mubr.f32.gmra.mrb[0].mxu0 %v4581
      %v4583 = vpop.f32.mrb[0].mxu0
      %v4584 = vadd.f32 %v4299, %v4583
      %v4585 = vpop.f32.mrb[0].mxu0
      %v4586 = vadd.f32 %v4301, %v4585
      %4587 = vmatprep.mubr.f32.mxu0 0.0
      %v4588 = vand.u32 %v250, 4294901760
      %4589 = vmatmul.mubr.f32.gmra.mrb[0].mxu0 %v4588
      %v4590 = vpop.f32.mrb[0].mxu0
      %v4591 = vadd.f32 %v4310, %v4590
      %v4592 = vpop.f32.mrb[0].mxu0
      %v4593 = vadd.f32 %v4312, %v4592
      %4594 = vdwg.mxu0
      %v4595 = vand.u32 %v712, 4294901760
      %v4596 = vsub.f32 %v712, %v4595
      %4597 = vmatprep.subr.mxu0 %v4596
      %v4598 = vand.u32 %v711, 4294901760
      %v4599 = vsub.f32 %v711, %v4598
      %4600 = vmatpush1.msra.mxu0 %v4599
      %v4601 = vand.u32 %v717, 4294901760
      %v4602 = vsub.f32 %v717, %v4601
      %4603 = vmatprep.subr.mxu0 %v4602
      %v4604 = vand.u32 %v716, 4294901760
      %v4605 = vsub.f32 %v716, %v4604
      %4606 = vmatpush1.msra.mxu0 %v4605
      %v4607 = vand.u32 %v722, 4294901760
      %v4608 = vsub.f32 %v722, %v4607
      %4609 = vmatprep.subr.mxu0 %v4608
      %v4610 = vand.u32 %v721, 4294901760
      %v4611 = vsub.f32 %v721, %v4610
      %4612 = vmatpush1.msra.mxu0 %v4611
      %v4613 = vand.u32 %v727, 4294901760
      %v4614 = vsub.f32 %v727, %v4613
      %4615 = vmatprep.subr.mxu0 %v4614
      %v4616 = vand.u32 %v726, 4294901760
      %v4617 = vsub.f32 %v726, %v4616
      %4618 = vmatpush1.msra.mxu0 %v4617
      %v4619 = vand.u32 %v732, 4294901760
      %v4620 = vsub.f32 %v732, %v4619
      %4621 = vmatprep.subr.mxu0 %v4620
      %v4622 = vand.u32 %v731, 4294901760
      %v4623 = vsub.f32 %v731, %v4622
      %4624 = vmatpush1.msra.mxu0 %v4623
      %v4625 = vand.u32 %v737, 4294901760
      %v4626 = vsub.f32 %v737, %v4625
      %4627 = vmatprep.subr.mxu0 %v4626
      %v4628 = vand.u32 %v736, 4294901760
      %v4629 = vsub.f32 %v736, %v4628
      %4630 = vmatpush1.msra.mxu0 %v4629
      %v4631 = vand.u32 %v742, 4294901760
      %v4632 = vsub.f32 %v742, %v4631
      %4633 = vmatprep.subr.mxu0 %v4632
      %v4634 = vand.u32 %v741, 4294901760
      %v4635 = vsub.f32 %v741, %v4634
      %4636 = vmatpush1.msra.mxu0 %v4635
      %v4637 = vand.u32 %v747, 4294901760
      %v4638 = vsub.f32 %v747, %v4637
      %4639 = vmatprep.subr.mxu0 %v4638
      %v4640 = vand.u32 %v746, 4294901760
      %v4641 = vsub.f32 %v746, %v4640
      %4642 = vmatpush1.msra.mxu0 %v4641
      %v4643 = vand.u32 %v752, 4294901760
      %v4644 = vsub.f32 %v752, %v4643
      %4645 = vmatprep.subr.mxu0 %v4644
      %v4646 = vand.u32 %v751, 4294901760
      %v4647 = vsub.f32 %v751, %v4646
      %4648 = vmatpush1.msra.mxu0 %v4647
      %v4649 = vand.u32 %v757, 4294901760
      %v4650 = vsub.f32 %v757, %v4649
      %4651 = vmatprep.subr.mxu0 %v4650
      %v4652 = vand.u32 %v756, 4294901760
      %v4653 = vsub.f32 %v756, %v4652
      %4654 = vmatpush1.msra.mxu0 %v4653
      %v4655 = vand.u32 %v762, 4294901760
      %v4656 = vsub.f32 %v762, %v4655
      %4657 = vmatprep.subr.mxu0 %v4656
      %v4658 = vand.u32 %v761, 4294901760
      %v4659 = vsub.f32 %v761, %v4658
      %4660 = vmatpush1.msra.mxu0 %v4659
      %v4661 = vand.u32 %v767, 4294901760
      %v4662 = vsub.f32 %v767, %v4661
      %4663 = vmatprep.subr.mxu0 %v4662
      %v4664 = vand.u32 %v766, 4294901760
      %v4665 = vsub.f32 %v766, %v4664
      %4666 = vmatpush1.msra.mxu0 %v4665
      %v4667 = vand.u32 %v772, 4294901760
      %v4668 = vsub.f32 %v772, %v4667
      %4669 = vmatprep.subr.mxu0 %v4668
      %v4670 = vand.u32 %v771, 4294901760
      %v4671 = vsub.f32 %v771, %v4670
      %4672 = vmatpush1.msra.mxu0 %v4671
      %v4673 = vand.u32 %v777, 4294901760
      %v4674 = vsub.f32 %v777, %v4673
      %4675 = vmatprep.subr.mxu0 %v4674
      %v4676 = vand.u32 %v776, 4294901760
      %v4677 = vsub.f32 %v776, %v4676
      %4678 = vmatpush1.msra.mxu0 %v4677
      %v4679 = vand.u32 %v782, 4294901760
      %v4680 = vsub.f32 %v782, %v4679
      %4681 = vmatprep.subr.mxu0 %v4680
      %v4682 = vand.u32 %v781, 4294901760
      %v4683 = vsub.f32 %v781, %v4682
      %4684 = vmatpush1.msra.mxu0 %v4683
      %v4685 = vand.u32 %v787, 4294901760
      %v4686 = vsub.f32 %v787, %v4685
      %4687 = vmatprep.subr.mxu0 %v4686
      %v4688 = vand.u32 %v786, 4294901760
      %v4689 = vsub.f32 %v786, %v4688
      %4690 = vmatpush1.msra.mxu0 %v4689
      %4691 = vmatprep.subr.mxu0 0.0
      %4692 = vmatpush1.msra.mxu0 0.0
      %4693 = vmatprep.subr.mxu0 0.0
      %4694 = vmatpush1.msra.mxu0 0.0
      %4695 = vmatprep.subr.mxu0 0.0
      %4696 = vmatpush1.msra.mxu0 0.0
      %4697 = vmatprep.subr.mxu0 0.0
      %4698 = vmatpush1.msra.mxu0 0.0
      %4699 = vmatprep.subr.mxu0 0.0
      %4700 = vmatpush1.msra.mxu0 0.0
      %4701 = vmatprep.subr.mxu0 0.0
      %4702 = vmatpush1.msra.mxu0 0.0
      %4703 = vmatprep.subr.mxu0 0.0
      %4704 = vmatpush1.msra.mxu0 0.0
      %4705 = vmatprep.subr.mxu0 0.0
      %4706 = vmatpush1.msra.mxu0 0.0
      %4707 = vmatprep.subr.mxu0 0.0
      %4708 = vmatpush1.msra.mxu0 0.0
      %4709 = vmatprep.subr.mxu0 0.0
      %4710 = vmatpush1.msra.mxu0 0.0
      %4711 = vmatprep.subr.mxu0 0.0
      %4712 = vmatpush1.msra.mxu0 0.0
      %4713 = vmatprep.subr.mxu0 0.0
      %4714 = vmatpush1.msra.mxu0 0.0
      %4715 = vmatprep.subr.mxu0 0.0
      %4716 = vmatpush1.msra.mxu0 0.0
      %4717 = vmatprep.subr.mxu0 0.0
      %4718 = vmatpush1.msra.mxu0 0.0
      %4719 = vmatprep.subr.mxu0 0.0
      %4720 = vmatpush1.msra.mxu0 0.0
      %4721 = vmatprep.subr.mxu0 0.0
      %4722 = vmatpush1.msra.mxu0 0.0
      %4723 = vmatprep.mubr.f32.mxu0 0.0
      %v4724 = vand.u32 %v243, 4294901760
      %v4725 = vsub.f32 %v243, %v4724
      %4726 = vmatmul.mubr.f32.gmra.mrb[0].mxu0 %v4725
      %v4727 = vpop.f32.mrb[0].mxu0
      %v4728 = vadd.f32 %v4542, %v4727
      %v4729 = vpop.f32.mrb[0].mxu0
      %v4730 = vadd.f32 %v4544, %v4729
      %4731 = vmatprep.mubr.f32.mxu0 0.0
      %v4732 = vand.u32 %v244, 4294901760
      %v4733 = vsub.f32 %v244, %v4732
      %4734 = vmatmul.mubr.f32.gmra.mrb[0].mxu0 %v4733
      %v4735 = vpop.f32.mrb[0].mxu0
      %v4736 = vadd.f32 %v4549, %v4735
      %v4737 = vpop.f32.mrb[0].mxu0
      %v4738 = vadd.f32 %v4551, %v4737
      %4739 = vmatprep.mubr.f32.mxu0 0.0
      %v4740 = vand.u32 %v245, 4294901760
      %v4741 = vsub.f32 %v245, %v4740
      %4742 = vmatmul.mubr.f32.gmra.mrb[0].mxu0 %v4741
      %v4743 = vpop.f32.mrb[0].mxu0
      %v4744 = vadd.f32 %v4556, %v4743
      %v4745 = vpop.f32.mrb[0].mxu0
      %v4746 = vadd.f32 %v4558, %v4745
      %4747 = vmatprep.mubr.f32.mxu0 0.0
      %v4748 = vand.u32 %v246, 4294901760
      %v4749 = vsub.f32 %v246, %v4748
      %4750 = vmatmul.mubr.f32.gmra.mrb[0].mxu0 %v4749
      %v4751 = vpop.f32.mrb[0].mxu0
      %v4752 = vadd.f32 %v4563, %v4751
      %v4753 = vpop.f32.mrb[0].mxu0
      %v4754 = vadd.f32 %v4565, %v4753
      %4755 = vmatprep.mubr.f32.mxu0 0.0
      %v4756 = vand.u32 %v247, 4294901760
      %v4757 = vsub.f32 %v247, %v4756
      %4758 = vmatmul.mubr.f32.gmra.mrb[0].mxu0 %v4757
      %v4759 = vpop.f32.mrb[0].mxu0
      %v4760 = vadd.f32 %v4570, %v4759
      %v4761 = vpop.f32.mrb[0].mxu0
      %v4762 = vadd.f32 %v4572, %v4761
      %4763 = vmatprep.mubr.f32.mxu0 0.0
      %v4764 = vand.u32 %v248, 4294901760
      %v4765 = vsub.f32 %v248, %v4764
      %4766 = vmatmul.mubr.f32.gmra.mrb[0].mxu0 %v4765
      %v4767 = vpop.f32.mrb[0].mxu0
      %v4768 = vadd.f32 %v4577, %v4767
      %v4769 = vpop.f32.mrb[0].mxu0
      %v4770 = vadd.f32 %v4579, %v4769
      %4771 = vmatprep.mubr.f32.mxu0 0.0
      %v4772 = vand.u32 %v249, 4294901760
      %v4773 = vsub.f32 %v249, %v4772
      %4774 = vmatmul.mubr.f32.gmra.mrb[0].mxu0 %v4773
      %v4775 = vpop.f32.mrb[0].mxu0
      %v4776 = vadd.f32 %v4584, %v4775
      %v4777 = vpop.f32.mrb[0].mxu0
      %v4778 = vadd.f32 %v4586, %v4777
      %4779 = vmatprep.mubr.f32.mxu0 0.0
      %v4780 = vand.u32 %v250, 4294901760
      %v4781 = vsub.f32 %v250, %v4780
      %4782 = vmatmul.mubr.f32.gmra.mrb[0].mxu0 %v4781
      %v4783 = vpop.f32.mrb[0].mxu0
      %v4784 = vadd.f32 %v4591, %v4783
      %v4785 = vpop.f32.mrb[0].mxu0
      %v4786 = vadd.f32 %v4593, %v4785
      %4787 = vdwg.mxu0
      %v4788 = vand.u32 %v712, 4294901760
      %4789 = vmatprep.subr.mxu0 %v4788
      %v4790 = vand.u32 %v711, 4294901760
      %4791 = vmatpush1.msra.mxu0 %v4790
      %v4792 = vand.u32 %v717, 4294901760
      %4793 = vmatprep.subr.mxu0 %v4792
      %v4794 = vand.u32 %v716, 4294901760
      %4795 = vmatpush1.msra.mxu0 %v4794
      %v4796 = vand.u32 %v722, 4294901760
      %4797 = vmatprep.subr.mxu0 %v4796
      %v4798 = vand.u32 %v721, 4294901760
      %4799 = vmatpush1.msra.mxu0 %v4798
      %v4800 = vand.u32 %v727, 4294901760
      %4801 = vmatprep.subr.mxu0 %v4800
      %v4802 = vand.u32 %v726, 4294901760
      %4803 = vmatpush1.msra.mxu0 %v4802
      %v4804 = vand.u32 %v732, 4294901760
      %4805 = vmatprep.subr.mxu0 %v4804
      %v4806 = vand.u32 %v731, 4294901760
      %4807 = vmatpush1.msra.mxu0 %v4806
      %v4808 = vand.u32 %v737, 4294901760
      %4809 = vmatprep.subr.mxu0 %v4808
      %v4810 = vand.u32 %v736, 4294901760
      %4811 = vmatpush1.msra.mxu0 %v4810
      %v4812 = vand.u32 %v742, 4294901760
      %4813 = vmatprep.subr.mxu0 %v4812
      %v4814 = vand.u32 %v741, 4294901760
      %4815 = vmatpush1.msra.mxu0 %v4814
      %v4816 = vand.u32 %v747, 4294901760
      %4817 = vmatprep.subr.mxu0 %v4816
      %v4818 = vand.u32 %v746, 4294901760
      %4819 = vmatpush1.msra.mxu0 %v4818
      %v4820 = vand.u32 %v752, 4294901760
      %4821 = vmatprep.subr.mxu0 %v4820
      %v4822 = vand.u32 %v751, 4294901760
      %4823 = vmatpush1.msra.mxu0 %v4822
      %v4824 = vand.u32 %v757, 4294901760
      %4825 = vmatprep.subr.mxu0 %v4824
      %v4826 = vand.u32 %v756, 4294901760
      %4827 = vmatpush1.msra.mxu0 %v4826
      %v4828 = vand.u32 %v762, 4294901760
      %4829 = vmatprep.subr.mxu0 %v4828
      %v4830 = vand.u32 %v761, 4294901760
      %4831 = vmatpush1.msra.mxu0 %v4830
      %v4832 = vand.u32 %v767, 4294901760
      %4833 = vmatprep.subr.mxu0 %v4832
      %v4834 = vand.u32 %v766, 4294901760
      %4835 = vmatpush1.msra.mxu0 %v4834
      %v4836 = vand.u32 %v772, 4294901760
      %4837 = vmatprep.subr.mxu0 %v4836
      %v4838 = vand.u32 %v771, 4294901760
      %4839 = vmatpush1.msra.mxu0 %v4838
      %v4840 = vand.u32 %v777, 4294901760
      %4841 = vmatprep.subr.mxu0 %v4840
      %v4842 = vand.u32 %v776, 4294901760
      %4843 = vmatpush1.msra.mxu0 %v4842
      %v4844 = vand.u32 %v782, 4294901760
      %4845 = vmatprep.subr.mxu0 %v4844
      %v4846 = vand.u32 %v781, 4294901760
      %4847 = vmatpush1.msra.mxu0 %v4846
      %v4848 = vand.u32 %v787, 4294901760
      %4849 = vmatprep.subr.mxu0 %v4848
      %v4850 = vand.u32 %v786, 4294901760
      %4851 = vmatpush1.msra.mxu0 %v4850
      %4852 = vmatprep.subr.mxu0 0.0
      %4853 = vmatpush1.msra.mxu0 0.0
      %4854 = vmatprep.subr.mxu0 0.0
      %4855 = vmatpush1.msra.mxu0 0.0
      %4856 = vmatprep.subr.mxu0 0.0
      %4857 = vmatpush1.msra.mxu0 0.0
      %4858 = vmatprep.subr.mxu0 0.0
      %4859 = vmatpush1.msra.mxu0 0.0
      %4860 = vmatprep.subr.mxu0 0.0
      %4861 = vmatpush1.msra.mxu0 0.0
      %4862 = vmatprep.subr.mxu0 0.0
      %4863 = vmatpush1.msra.mxu0 0.0
      %4864 = vmatprep.subr.mxu0 0.0
      %4865 = vmatpush1.msra.mxu0 0.0
      %4866 = vmatprep.subr.mxu0 0.0
      %4867 = vmatpush1.msra.mxu0 0.0
      %4868 = vmatprep.subr.mxu0 0.0
      %4869 = vmatpush1.msra.mxu0 0.0
      %4870 = vmatprep.subr.mxu0 0.0
      %4871 = vmatpush1.msra.mxu0 0.0
      %4872 = vmatprep.subr.mxu0 0.0
      %4873 = vmatpush1.msra.mxu0 0.0
      %4874 = vmatprep.subr.mxu0 0.0
      %4875 = vmatpush1.msra.mxu0 0.0
      %4876 = vmatprep.subr.mxu0 0.0
      %4877 = vmatpush1.msra.mxu0 0.0
      %4878 = vmatprep.subr.mxu0 0.0
      %4879 = vmatpush1.msra.mxu0 0.0
      %4880 = vmatprep.subr.mxu0 0.0
      %4881 = vmatpush1.msra.mxu0 0.0
      %4882 = vmatprep.subr.mxu0 0.0
      %4883 = vmatpush1.msra.mxu0 0.0
      %4884 = vmatprep.mubr.f32.mxu0 0.0
      %v4885 = vand.u32 %v243, 4294901760
      %v4886 = vsub.f32 %v243, %v4885
      %v4887 = vand.u32 %v4886, 4294901760
      %4888 = vmatmul.mubr.f32.gmra.mrb[0].mxu0 %v4887
      %v4889 = vpop.f32.mrb[0].mxu0
      %v4890 = vadd.f32 %v4728, %v4889
      %v4891 = vpop.f32.mrb[0].mxu0
      %v4892 = vadd.f32 %v4730, %v4891
      %4893 = vmatprep.mubr.f32.mxu0 0.0
      %v4894 = vand.u32 %v244, 4294901760
      %v4895 = vsub.f32 %v244, %v4894
      %v4896 = vand.u32 %v4895, 4294901760
      %4897 = vmatmul.mubr.f32.gmra.mrb[0].mxu0 %v4896
      %v4898 = vpop.f32.mrb[0].mxu0
      %v4899 = vadd.f32 %v4736, %v4898
      %v4900 = vpop.f32.mrb[0].mxu0
      %v4901 = vadd.f32 %v4738, %v4900
      %4902 = vmatprep.mubr.f32.mxu0 0.0
      %v4903 = vand.u32 %v245, 4294901760
      %v4904 = vsub.f32 %v245, %v4903
      %v4905 = vand.u32 %v4904, 4294901760
      %4906 = vmatmul.mubr.f32.gmra.mrb[0].mxu0 %v4905
      %v4907 = vpop.f32.mrb[0].mxu0
      %v4908 = vadd.f32 %v4744, %v4907
      %v4909 = vpop.f32.mrb[0].mxu0
      %v4910 = vadd.f32 %v4746, %v4909
      %4911 = vmatprep.mubr.f32.mxu0 0.0
      %v4912 = vand.u32 %v246, 4294901760
      %v4913 = vsub.f32 %v246, %v4912
      %v4914 = vand.u32 %v4913, 4294901760
      %4915 = vmatmul.mubr.f32.gmra.mrb[0].mxu0 %v4914
      %v4916 = vpop.f32.mrb[0].mxu0
      %v4917 = vadd.f32 %v4752, %v4916
      %v4918 = vpop.f32.mrb[0].mxu0
      %v4919 = vadd.f32 %v4754, %v4918
      %4920 = vmatprep.mubr.f32.mxu0 0.0
      %v4921 = vand.u32 %v247, 4294901760
      %v4922 = vsub.f32 %v247, %v4921
      %v4923 = vand.u32 %v4922, 4294901760
      %4924 = vmatmul.mubr.f32.gmra.mrb[0].mxu0 %v4923
      %v4925 = vpop.f32.mrb[0].mxu0
      %v4926 = vadd.f32 %v4760, %v4925
      %v4927 = vpop.f32.mrb[0].mxu0
      %v4928 = vadd.f32 %v4762, %v4927
      %4929 = vmatprep.mubr.f32.mxu0 0.0
      %v4930 = vand.u32 %v248, 4294901760
      %v4931 = vsub.f32 %v248, %v4930
      %v4932 = vand.u32 %v4931, 4294901760
      %4933 = vmatmul.mubr.f32.gmra.mrb[0].mxu0 %v4932
      %v4934 = vpop.f32.mrb[0].mxu0
      %v4935 = vadd.f32 %v4768, %v4934
      %v4936 = vpop.f32.mrb[0].mxu0
      %v4937 = vadd.f32 %v4770, %v4936
      %4938 = vmatprep.mubr.f32.mxu0 0.0
      %v4939 = vand.u32 %v249, 4294901760
      %v4940 = vsub.f32 %v249, %v4939
      %v4941 = vand.u32 %v4940, 4294901760
      %4942 = vmatmul.mubr.f32.gmra.mrb[0].mxu0 %v4941
      %v4943 = vpop.f32.mrb[0].mxu0
      %v4944 = vadd.f32 %v4776, %v4943
      %v4945 = vpop.f32.mrb[0].mxu0
      %v4946 = vadd.f32 %v4778, %v4945
      %4947 = vmatprep.mubr.f32.mxu0 0.0
      %v4948 = vand.u32 %v250, 4294901760
      %v4949 = vsub.f32 %v250, %v4948
      %v4950 = vand.u32 %v4949, 4294901760
      %4951 = vmatmul.mubr.f32.gmra.mrb[0].mxu0 %v4950
      %v4952 = vpop.f32.mrb[0].mxu0
      %v4953 = vadd.f32 %v4784, %v4952
      %v4954 = vpop.f32.mrb[0].mxu0
      %v4955 = vadd.f32 %v4786, %v4954
      %4956 = vdwg.mxu0
      %v4957 = vand.u32 %v712, 4294901760
      %v4958 = vsub.f32 %v712, %v4957
      %v4959 = vand.u32 %v4958, 4294901760
      %4960 = vmatprep.subr.mxu0 %v4959
      %v4961 = vand.u32 %v711, 4294901760
      %v4962 = vsub.f32 %v711, %v4961
      %v4963 = vand.u32 %v4962, 4294901760
      %4964 = vmatpush1.msra.mxu0 %v4963
      %v4965 = vand.u32 %v717, 4294901760
      %v4966 = vsub.f32 %v717, %v4965
      %v4967 = vand.u32 %v4966, 4294901760
      %4968 = vmatprep.subr.mxu0 %v4967
      %v4969 = vand.u32 %v716, 4294901760
      %v4970 = vsub.f32 %v716, %v4969
      %v4971 = vand.u32 %v4970, 4294901760
      %4972 = vmatpush1.msra.mxu0 %v4971
      %v4973 = vand.u32 %v722, 4294901760
      %v4974 = vsub.f32 %v722, %v4973
      %v4975 = vand.u32 %v4974, 4294901760
      %4976 = vmatprep.subr.mxu0 %v4975
      %v4977 = vand.u32 %v721, 4294901760
      %v4978 = vsub.f32 %v721, %v4977
      %v4979 = vand.u32 %v4978, 4294901760
      %4980 = vmatpush1.msra.mxu0 %v4979
      %v4981 = vand.u32 %v727, 4294901760
      %v4982 = vsub.f32 %v727, %v4981
      %v4983 = vand.u32 %v4982, 4294901760
      %4984 = vmatprep.subr.mxu0 %v4983
      %v4985 = vand.u32 %v726, 4294901760
      %v4986 = vsub.f32 %v726, %v4985
      %v4987 = vand.u32 %v4986, 4294901760
      %4988 = vmatpush1.msra.mxu0 %v4987
      %v4989 = vand.u32 %v732, 4294901760
      %v4990 = vsub.f32 %v732, %v4989
      %v4991 = vand.u32 %v4990, 4294901760
      %4992 = vmatprep.subr.mxu0 %v4991
      %v4993 = vand.u32 %v731, 4294901760
      %v4994 = vsub.f32 %v731, %v4993
      %v4995 = vand.u32 %v4994, 4294901760
      %4996 = vmatpush1.msra.mxu0 %v4995
      %v4997 = vand.u32 %v737, 4294901760
      %v4998 = vsub.f32 %v737, %v4997
      %v4999 = vand.u32 %v4998, 4294901760
      %5000 = vmatprep.subr.mxu0 %v4999
      %v5001 = vand.u32 %v736, 4294901760
      %v5002 = vsub.f32 %v736, %v5001
      %v5003 = vand.u32 %v5002, 4294901760
      %5004 = vmatpush1.msra.mxu0 %v5003
      %v5005 = vand.u32 %v742, 4294901760
      %v5006 = vsub.f32 %v742, %v5005
      %v5007 = vand.u32 %v5006, 4294901760
      %5008 = vmatprep.subr.mxu0 %v5007
      %v5009 = vand.u32 %v741, 4294901760
      %v5010 = vsub.f32 %v741, %v5009
      %v5011 = vand.u32 %v5010, 4294901760
      %5012 = vmatpush1.msra.mxu0 %v5011
      %v5013 = vand.u32 %v747, 4294901760
      %v5014 = vsub.f32 %v747, %v5013
      %v5015 = vand.u32 %v5014, 4294901760
      %5016 = vmatprep.subr.mxu0 %v5015
      %v5017 = vand.u32 %v746, 4294901760
      %v5018 = vsub.f32 %v746, %v5017
      %v5019 = vand.u32 %v5018, 4294901760
      %5020 = vmatpush1.msra.mxu0 %v5019
      %v5021 = vand.u32 %v752, 4294901760
      %v5022 = vsub.f32 %v752, %v5021
      %v5023 = vand.u32 %v5022, 4294901760
      %5024 = vmatprep.subr.mxu0 %v5023
      %v5025 = vand.u32 %v751, 4294901760
      %v5026 = vsub.f32 %v751, %v5025
      %v5027 = vand.u32 %v5026, 4294901760
      %5028 = vmatpush1.msra.mxu0 %v5027
      %v5029 = vand.u32 %v757, 4294901760
      %v5030 = vsub.f32 %v757, %v5029
      %v5031 = vand.u32 %v5030, 4294901760
      %5032 = vmatprep.subr.mxu0 %v5031
      %v5033 = vand.u32 %v756, 4294901760
      %v5034 = vsub.f32 %v756, %v5033
      %v5035 = vand.u32 %v5034, 4294901760
      %5036 = vmatpush1.msra.mxu0 %v5035
      %v5037 = vand.u32 %v762, 4294901760
      %v5038 = vsub.f32 %v762, %v5037
      %v5039 = vand.u32 %v5038, 4294901760
      %5040 = vmatprep.subr.mxu0 %v5039
      %v5041 = vand.u32 %v761, 4294901760
      %v5042 = vsub.f32 %v761, %v5041
      %v5043 = vand.u32 %v5042, 4294901760
      %5044 = vmatpush1.msra.mxu0 %v5043
      %v5045 = vand.u32 %v767, 4294901760
      %v5046 = vsub.f32 %v767, %v5045
      %v5047 = vand.u32 %v5046, 4294901760
      %5048 = vmatprep.subr.mxu0 %v5047
      %v5049 = vand.u32 %v766, 4294901760
      %v5050 = vsub.f32 %v766, %v5049
      %v5051 = vand.u32 %v5050, 4294901760
      %5052 = vmatpush1.msra.mxu0 %v5051
      %v5053 = vand.u32 %v772, 4294901760
      %v5054 = vsub.f32 %v772, %v5053
      %v5055 = vand.u32 %v5054, 4294901760
      %5056 = vmatprep.subr.mxu0 %v5055
      %v5057 = vand.u32 %v771, 4294901760
      %v5058 = vsub.f32 %v771, %v5057
      %v5059 = vand.u32 %v5058, 4294901760
      %5060 = vmatpush1.msra.mxu0 %v5059
      %v5061 = vand.u32 %v777, 4294901760
      %v5062 = vsub.f32 %v777, %v5061
      %v5063 = vand.u32 %v5062, 4294901760
      %5064 = vmatprep.subr.mxu0 %v5063
      %v5065 = vand.u32 %v776, 4294901760
      %v5066 = vsub.f32 %v776, %v5065
      %v5067 = vand.u32 %v5066, 4294901760
      %5068 = vmatpush1.msra.mxu0 %v5067
      %v5069 = vand.u32 %v782, 4294901760
      %v5070 = vsub.f32 %v782, %v5069
      %v5071 = vand.u32 %v5070, 4294901760
      %5072 = vmatprep.subr.mxu0 %v5071
      %v5073 = vand.u32 %v781, 4294901760
      %v5074 = vsub.f32 %v781, %v5073
      %v5075 = vand.u32 %v5074, 4294901760
      %5076 = vmatpush1.msra.mxu0 %v5075
      %v5077 = vand.u32 %v787, 4294901760
      %v5078 = vsub.f32 %v787, %v5077
      %v5079 = vand.u32 %v5078, 4294901760
      %5080 = vmatprep.subr.mxu0 %v5079
      %v5081 = vand.u32 %v786, 4294901760
      %v5082 = vsub.f32 %v786, %v5081
      %v5083 = vand.u32 %v5082, 4294901760
      %5084 = vmatpush1.msra.mxu0 %v5083
      %5085 = vmatprep.subr.mxu0 0.0
      %5086 = vmatpush1.msra.mxu0 0.0
      %5087 = vmatprep.subr.mxu0 0.0
      %5088 = vmatpush1.msra.mxu0 0.0
      %5089 = vmatprep.subr.mxu0 0.0
      %5090 = vmatpush1.msra.mxu0 0.0
      %5091 = vmatprep.subr.mxu0 0.0
      %5092 = vmatpush1.msra.mxu0 0.0
      %5093 = vmatprep.subr.mxu0 0.0
      %5094 = vmatpush1.msra.mxu0 0.0
      %5095 = vmatprep.subr.mxu0 0.0
      %5096 = vmatpush1.msra.mxu0 0.0
      %5097 = vmatprep.subr.mxu0 0.0
      %5098 = vmatpush1.msra.mxu0 0.0
      %5099 = vmatprep.subr.mxu0 0.0
      %5100 = vmatpush1.msra.mxu0 0.0
      %5101 = vmatprep.subr.mxu0 0.0
      %5102 = vmatpush1.msra.mxu0 0.0
      %5103 = vmatprep.subr.mxu0 0.0
      %5104 = vmatpush1.msra.mxu0 0.0
      %5105 = vmatprep.subr.mxu0 0.0
      %5106 = vmatpush1.msra.mxu0 0.0
      %5107 = vmatprep.subr.mxu0 0.0
      %5108 = vmatpush1.msra.mxu0 0.0
      %5109 = vmatprep.subr.mxu0 0.0
      %5110 = vmatpush1.msra.mxu0 0.0
      %5111 = vmatprep.subr.mxu0 0.0
      %5112 = vmatpush1.msra.mxu0 0.0
      %5113 = vmatprep.subr.mxu0 0.0
      %5114 = vmatpush1.msra.mxu0 0.0
      %5115 = vmatprep.subr.mxu0 0.0
      %5116 = vmatpush1.msra.mxu0 0.0
      %5117 = vmatprep.mubr.f32.mxu0 0.0
      %v5118 = vand.u32 %v243, 4294901760
      %5119 = vmatmul.mubr.f32.gmra.mrb[0].mxu0 %v5118
      %v5120 = vpop.f32.mrb[0].mxu0
      %v5121 = vadd.f32 %v4890, %v5120
      %v5122 = vpop.f32.mrb[0].mxu0
      %v5123 = vadd.f32 %v4892, %v5122
      %5124 = vmatprep.mubr.f32.mxu0 0.0
      %v5125 = vand.u32 %v244, 4294901760
      %5126 = vmatmul.mubr.f32.gmra.mrb[0].mxu0 %v5125
      %v5127 = vpop.f32.mrb[0].mxu0
      %v5128 = vadd.f32 %v4899, %v5127
      %v5129 = vpop.f32.mrb[0].mxu0
      %v5130 = vadd.f32 %v4901, %v5129
      %5131 = vmatprep.mubr.f32.mxu0 0.0
      %v5132 = vand.u32 %v245, 4294901760
      %5133 = vmatmul.mubr.f32.gmra.mrb[0].mxu0 %v5132
      %v5134 = vpop.f32.mrb[0].mxu0
      %v5135 = vadd.f32 %v4908, %v5134
      %v5136 = vpop.f32.mrb[0].mxu0
      %v5137 = vadd.f32 %v4910, %v5136
      %5138 = vmatprep.mubr.f32.mxu0 0.0
      %v5139 = vand.u32 %v246, 4294901760
      %5140 = vmatmul.mubr.f32.gmra.mrb[0].mxu0 %v5139
      %v5141 = vpop.f32.mrb[0].mxu0
      %v5142 = vadd.f32 %v4917, %v5141
      %v5143 = vpop.f32.mrb[0].mxu0
      %v5144 = vadd.f32 %v4919, %v5143
      %5145 = vmatprep.mubr.f32.mxu0 0.0
      %v5146 = vand.u32 %v247, 4294901760
      %5147 = vmatmul.mubr.f32.gmra.mrb[0].mxu0 %v5146
      %v5148 = vpop.f32.mrb[0].mxu0
      %v5149 = vadd.f32 %v4926, %v5148
      %v5150 = vpop.f32.mrb[0].mxu0
      %v5151 = vadd.f32 %v4928, %v5150
      %5152 = vmatprep.mubr.f32.mxu0 0.0
      %v5153 = vand.u32 %v248, 4294901760
      %5154 = vmatmul.mubr.f32.gmra.mrb[0].mxu0 %v5153
      %v5155 = vpop.f32.mrb[0].mxu0
      %v5156 = vadd.f32 %v4935, %v5155
      %v5157 = vpop.f32.mrb[0].mxu0
      %v5158 = vadd.f32 %v4937, %v5157
      %5159 = vmatprep.mubr.f32.mxu0 0.0
      %v5160 = vand.u32 %v249, 4294901760
      %5161 = vmatmul.mubr.f32.gmra.mrb[0].mxu0 %v5160
      %v5162 = vpop.f32.mrb[0].mxu0
      %v5163 = vadd.f32 %v4944, %v5162
      %v5164 = vpop.f32.mrb[0].mxu0
      %v5165 = vadd.f32 %v4946, %v5164
      %5166 = vmatprep.mubr.f32.mxu0 0.0
      %v5167 = vand.u32 %v250, 4294901760
      %5168 = vmatmul.mubr.f32.gmra.mrb[0].mxu0 %v5167
      %v5169 = vpop.f32.mrb[0].mxu0
      %v5170 = vadd.f32 %v4953, %v5169
      %v5171 = vpop.f32.mrb[0].mxu0
      %v5172 = vadd.f32 %v4955, %v5171
      %5173 = vdwg.mxu0
      %v5174 = vand.u32 %v712, 4294901760
      %5175 = vmatprep.subr.mxu0 %v5174
      %v5176 = vand.u32 %v711, 4294901760
      %5177 = vmatpush1.msra.mxu0 %v5176
      %v5178 = vand.u32 %v717, 4294901760
      %5179 = vmatprep.subr.mxu0 %v5178
      %v5180 = vand.u32 %v716, 4294901760
      %5181 = vmatpush1.msra.mxu0 %v5180
      %v5182 = vand.u32 %v722, 4294901760
      %5183 = vmatprep.subr.mxu0 %v5182
      %v5184 = vand.u32 %v721, 4294901760
      %5185 = vmatpush1.msra.mxu0 %v5184
      %v5186 = vand.u32 %v727, 4294901760
      %5187 = vmatprep.subr.mxu0 %v5186
      %v5188 = vand.u32 %v726, 4294901760
      %5189 = vmatpush1.msra.mxu0 %v5188
      %v5190 = vand.u32 %v732, 4294901760
      %5191 = vmatprep.subr.mxu0 %v5190
      %v5192 = vand.u32 %v731, 4294901760
      %5193 = vmatpush1.msra.mxu0 %v5192
      %v5194 = vand.u32 %v737, 4294901760
      %5195 = vmatprep.subr.mxu0 %v5194
      %v5196 = vand.u32 %v736, 4294901760
      %5197 = vmatpush1.msra.mxu0 %v5196
      %v5198 = vand.u32 %v742, 4294901760
      %5199 = vmatprep.subr.mxu0 %v5198
      %v5200 = vand.u32 %v741, 4294901760
      %5201 = vmatpush1.msra.mxu0 %v5200
      %v5202 = vand.u32 %v747, 4294901760
      %5203 = vmatprep.subr.mxu0 %v5202
      %v5204 = vand.u32 %v746, 4294901760
      %5205 = vmatpush1.msra.mxu0 %v5204
      %v5206 = vand.u32 %v752, 4294901760
      %5207 = vmatprep.subr.mxu0 %v5206
      %v5208 = vand.u32 %v751, 4294901760
      %5209 = vmatpush1.msra.mxu0 %v5208
      %v5210 = vand.u32 %v757, 4294901760
      %5211 = vmatprep.subr.mxu0 %v5210
      %v5212 = vand.u32 %v756, 4294901760
      %5213 = vmatpush1.msra.mxu0 %v5212
      %v5214 = vand.u32 %v762, 4294901760
      %5215 = vmatprep.subr.mxu0 %v5214
      %v5216 = vand.u32 %v761, 4294901760
      %5217 = vmatpush1.msra.mxu0 %v5216
      %v5218 = vand.u32 %v767, 4294901760
      %5219 = vmatprep.subr.mxu0 %v5218
      %v5220 = vand.u32 %v766, 4294901760
      %5221 = vmatpush1.msra.mxu0 %v5220
      %v5222 = vand.u32 %v772, 4294901760
      %5223 = vmatprep.subr.mxu0 %v5222
      %v5224 = vand.u32 %v771, 4294901760
      %5225 = vmatpush1.msra.mxu0 %v5224
      %v5226 = vand.u32 %v777, 4294901760
      %5227 = vmatprep.subr.mxu0 %v5226
      %v5228 = vand.u32 %v776, 4294901760
      %5229 = vmatpush1.msra.mxu0 %v5228
      %v5230 = vand.u32 %v782, 4294901760
      %5231 = vmatprep.subr.mxu0 %v5230
      %v5232 = vand.u32 %v781, 4294901760
      %5233 = vmatpush1.msra.mxu0 %v5232
      %v5234 = vand.u32 %v787, 4294901760
      %5235 = vmatprep.subr.mxu0 %v5234
      %v5236 = vand.u32 %v786, 4294901760
      %5237 = vmatpush1.msra.mxu0 %v5236
      %5238 = vmatprep.subr.mxu0 0.0
      %5239 = vmatpush1.msra.mxu0 0.0
      %5240 = vmatprep.subr.mxu0 0.0
      %5241 = vmatpush1.msra.mxu0 0.0
      %5242 = vmatprep.subr.mxu0 0.0
      %5243 = vmatpush1.msra.mxu0 0.0
      %5244 = vmatprep.subr.mxu0 0.0
      %5245 = vmatpush1.msra.mxu0 0.0
      %5246 = vmatprep.subr.mxu0 0.0
      %5247 = vmatpush1.msra.mxu0 0.0
      %5248 = vmatprep.subr.mxu0 0.0
      %5249 = vmatpush1.msra.mxu0 0.0
      %5250 = vmatprep.subr.mxu0 0.0
      %5251 = vmatpush1.msra.mxu0 0.0
      %5252 = vmatprep.subr.mxu0 0.0
      %5253 = vmatpush1.msra.mxu0 0.0
      %5254 = vmatprep.subr.mxu0 0.0
      %5255 = vmatpush1.msra.mxu0 0.0
      %5256 = vmatprep.subr.mxu0 0.0
      %5257 = vmatpush1.msra.mxu0 0.0
      %5258 = vmatprep.subr.mxu0 0.0
      %5259 = vmatpush1.msra.mxu0 0.0
      %5260 = vmatprep.subr.mxu0 0.0
      %5261 = vmatpush1.msra.mxu0 0.0
      %5262 = vmatprep.subr.mxu0 0.0
      %5263 = vmatpush1.msra.mxu0 0.0
      %5264 = vmatprep.subr.mxu0 0.0
      %5265 = vmatpush1.msra.mxu0 0.0
      %5266 = vmatprep.subr.mxu0 0.0
      %5267 = vmatpush1.msra.mxu0 0.0
      %5268 = vmatprep.subr.mxu0 0.0
      %5269 = vmatpush1.msra.mxu0 0.0
      %5270 = vmatprep.mubr.f32.mxu0 0.0
      %v5271 = vand.u32 %v243, 4294901760
      %5272 = vmatmul.mubr.f32.gmra.mrb[0].mxu0 %v5271
      %v5273 = vpop.f32.mrb[0].mxu0
      %v5274 = vadd.f32 %v5121, %v5273
      %v5275 = vpop.f32.mrb[0].mxu0
      %v5276 = vadd.f32 %v5123, %v5275
      %5277 = vmatprep.mubr.f32.mxu0 0.0
      %v5278 = vand.u32 %v244, 4294901760
      %5279 = vmatmul.mubr.f32.gmra.mrb[0].mxu0 %v5278
      %v5280 = vpop.f32.mrb[0].mxu0
      %v5281 = vadd.f32 %v5128, %v5280
      %v5282 = vpop.f32.mrb[0].mxu0
      %v5283 = vadd.f32 %v5130, %v5282
      %5284 = vmatprep.mubr.f32.mxu0 0.0
      %v5285 = vand.u32 %v245, 4294901760
      %5286 = vmatmul.mubr.f32.gmra.mrb[0].mxu0 %v5285
      %v5287 = vpop.f32.mrb[0].mxu0
      %v5288 = vadd.f32 %v5135, %v5287
      %v5289 = vpop.f32.mrb[0].mxu0
      %v5290 = vadd.f32 %v5137, %v5289
      %5291 = vmatprep.mubr.f32.mxu0 0.0
      %v5292 = vand.u32 %v246, 4294901760
      %5293 = vmatmul.mubr.f32.gmra.mrb[0].mxu0 %v5292
      %v5294 = vpop.f32.mrb[0].mxu0
      %v5295 = vadd.f32 %v5142, %v5294
      %v5296 = vpop.f32.mrb[0].mxu0
      %v5297 = vadd.f32 %v5144, %v5296
      %5298 = vmatprep.mubr.f32.mxu0 0.0
      %v5299 = vand.u32 %v247, 4294901760
      %5300 = vmatmul.mubr.f32.gmra.mrb[0].mxu0 %v5299
      %v5301 = vpop.f32.mrb[0].mxu0
      %v5302 = vadd.f32 %v5149, %v5301
      %v5303 = vpop.f32.mrb[0].mxu0
      %v5304 = vadd.f32 %v5151, %v5303
      %5305 = vmatprep.mubr.f32.mxu0 0.0
      %v5306 = vand.u32 %v248, 4294901760
      %5307 = vmatmul.mubr.f32.gmra.mrb[0].mxu0 %v5306
      %v5308 = vpop.f32.mrb[0].mxu0
      %v5309 = vadd.f32 %v5156, %v5308
      %v5310 = vpop.f32.mrb[0].mxu0
      %v5311 = vadd.f32 %v5158, %v5310
      %5312 = vmatprep.mubr.f32.mxu0 0.0
      %v5313 = vand.u32 %v249, 4294901760
      %5314 = vmatmul.mubr.f32.gmra.mrb[0].mxu0 %v5313
      %v5315 = vpop.f32.mrb[0].mxu0
      %v5316 = vadd.f32 %v5163, %v5315
      %v5317 = vpop.f32.mrb[0].mxu0
      %v5318 = vadd.f32 %v5165, %v5317
      %5319 = vmatprep.mubr.f32.mxu0 0.0
      %v5320 = vand.u32 %v250, 4294901760
      %5321 = vmatmul.mubr.f32.gmra.mrb[0].mxu0 %v5320
      %v5322 = vpop.f32.mrb[0].mxu0
      %v5323 = vadd.f32 %v5170, %v5322
      %v5324 = vpop.f32.mrb[0].mxu0
      %v5325 = vadd.f32 %v5172, %v5324
      %5326 = vdwg.mxu0
      %v5327 = vand.u32 %v714, 4294901760
      %5328 = vmatprep.subr.mxu0 %v5327
      %v5329 = vand.u32 %v713, 4294901760
      %5330 = vmatpush1.msra.mxu0 %v5329
      %v5331 = vand.u32 %v719, 4294901760
      %5332 = vmatprep.subr.mxu0 %v5331
      %v5333 = vand.u32 %v718, 4294901760
      %5334 = vmatpush1.msra.mxu0 %v5333
      %v5335 = vand.u32 %v724, 4294901760
      %5336 = vmatprep.subr.mxu0 %v5335
      %v5337 = vand.u32 %v723, 4294901760
      %5338 = vmatpush1.msra.mxu0 %v5337
      %v5339 = vand.u32 %v729, 4294901760
      %5340 = vmatprep.subr.mxu0 %v5339
      %v5341 = vand.u32 %v728, 4294901760
      %5342 = vmatpush1.msra.mxu0 %v5341
      %v5343 = vand.u32 %v734, 4294901760
      %5344 = vmatprep.subr.mxu0 %v5343
      %v5345 = vand.u32 %v733, 4294901760
      %5346 = vmatpush1.msra.mxu0 %v5345
      %v5347 = vand.u32 %v739, 4294901760
      %5348 = vmatprep.subr.mxu0 %v5347
      %v5349 = vand.u32 %v738, 4294901760
      %5350 = vmatpush1.msra.mxu0 %v5349
      %v5351 = vand.u32 %v744, 4294901760
      %5352 = vmatprep.subr.mxu0 %v5351
      %v5353 = vand.u32 %v743, 4294901760
      %5354 = vmatpush1.msra.mxu0 %v5353
      %v5355 = vand.u32 %v749, 4294901760
      %5356 = vmatprep.subr.mxu0 %v5355
      %v5357 = vand.u32 %v748, 4294901760
      %5358 = vmatpush1.msra.mxu0 %v5357
      %v5359 = vand.u32 %v754, 4294901760
      %5360 = vmatprep.subr.mxu0 %v5359
      %v5361 = vand.u32 %v753, 4294901760
      %5362 = vmatpush1.msra.mxu0 %v5361
      %v5363 = vand.u32 %v759, 4294901760
      %5364 = vmatprep.subr.mxu0 %v5363
      %v5365 = vand.u32 %v758, 4294901760
      %5366 = vmatpush1.msra.mxu0 %v5365
      %v5367 = vand.u32 %v764, 4294901760
      %5368 = vmatprep.subr.mxu0 %v5367
      %v5369 = vand.u32 %v763, 4294901760
      %5370 = vmatpush1.msra.mxu0 %v5369
      %v5371 = vand.u32 %v769, 4294901760
      %5372 = vmatprep.subr.mxu0 %v5371
      %v5373 = vand.u32 %v768, 4294901760
      %5374 = vmatpush1.msra.mxu0 %v5373
      %v5375 = vand.u32 %v774, 4294901760
      %5376 = vmatprep.subr.mxu0 %v5375
      %v5377 = vand.u32 %v773, 4294901760
      %5378 = vmatpush1.msra.mxu0 %v5377
      %v5379 = vand.u32 %v779, 4294901760
      %5380 = vmatprep.subr.mxu0 %v5379
      %v5381 = vand.u32 %v778, 4294901760
      %5382 = vmatpush1.msra.mxu0 %v5381
      %v5383 = vand.u32 %v784, 4294901760
      %5384 = vmatprep.subr.mxu0 %v5383
      %v5385 = vand.u32 %v783, 4294901760
      %5386 = vmatpush1.msra.mxu0 %v5385
      %v5387 = vand.u32 %v789, 4294901760
      %5388 = vmatprep.subr.mxu0 %v5387
      %v5389 = vand.u32 %v788, 4294901760
      %5390 = vmatpush1.msra.mxu0 %v5389
      %5391 = vmatprep.subr.mxu0 0.0
      %5392 = vmatpush1.msra.mxu0 0.0
      %5393 = vmatprep.subr.mxu0 0.0
      %5394 = vmatpush1.msra.mxu0 0.0
      %5395 = vmatprep.subr.mxu0 0.0
      %5396 = vmatpush1.msra.mxu0 0.0
      %5397 = vmatprep.subr.mxu0 0.0
      %5398 = vmatpush1.msra.mxu0 0.0
      %5399 = vmatprep.subr.mxu0 0.0
      %5400 = vmatpush1.msra.mxu0 0.0
      %5401 = vmatprep.subr.mxu0 0.0
      %5402 = vmatpush1.msra.mxu0 0.0
      %5403 = vmatprep.subr.mxu0 0.0
      %5404 = vmatpush1.msra.mxu0 0.0
      %5405 = vmatprep.subr.mxu0 0.0
      %5406 = vmatpush1.msra.mxu0 0.0
      %5407 = vmatprep.subr.mxu0 0.0
      %5408 = vmatpush1.msra.mxu0 0.0
      %5409 = vmatprep.subr.mxu0 0.0
      %5410 = vmatpush1.msra.mxu0 0.0
      %5411 = vmatprep.subr.mxu0 0.0
      %5412 = vmatpush1.msra.mxu0 0.0
      %5413 = vmatprep.subr.mxu0 0.0
      %5414 = vmatpush1.msra.mxu0 0.0
      %5415 = vmatprep.subr.mxu0 0.0
      %5416 = vmatpush1.msra.mxu0 0.0
      %5417 = vmatprep.subr.mxu0 0.0
      %5418 = vmatpush1.msra.mxu0 0.0
      %5419 = vmatprep.subr.mxu0 0.0
      %5420 = vmatpush1.msra.mxu0 0.0
      %5421 = vmatprep.subr.mxu0 0.0
      %5422 = vmatpush1.msra.mxu0 0.0
      %5423 = vmatprep.mubr.f32.mxu0 0.0
      %v5424 = vand.u32 %v243, 4294901760
      %v5425 = vsub.f32 %v243, %v5424
      %v5426 = vand.u32 %v5425, 4294901760
      %v5427 = vsub.f32 %v5425, %v5426
      %v5428 = vand.u32 %v5427, 4294901760
      %5429 = vmatmul.mubr.f32.gmra.mrb[0].mxu0 %v5428
      %v5430 = vpop.f32.mrb[0].mxu0
      %v5431 = vadd.f32 0.0, %v5430
      %v5432 = vpop.f32.mrb[0].mxu0
      %v5433 = vadd.f32 0.0, %v5432
      %5434 = vmatprep.mubr.f32.mxu0 0.0
      %v5435 = vand.u32 %v244, 4294901760
      %v5436 = vsub.f32 %v244, %v5435
      %v5437 = vand.u32 %v5436, 4294901760
      %v5438 = vsub.f32 %v5436, %v5437
      %v5439 = vand.u32 %v5438, 4294901760
      %5440 = vmatmul.mubr.f32.gmra.mrb[0].mxu0 %v5439
      %v5441 = vpop.f32.mrb[0].mxu0
      %v5442 = vadd.f32 0.0, %v5441
      %v5443 = vpop.f32.mrb[0].mxu0
      %v5444 = vadd.f32 0.0, %v5443
      %5445 = vmatprep.mubr.f32.mxu0 0.0
      %v5446 = vand.u32 %v245, 4294901760
      %v5447 = vsub.f32 %v245, %v5446
      %v5448 = vand.u32 %v5447, 4294901760
      %v5449 = vsub.f32 %v5447, %v5448
      %v5450 = vand.u32 %v5449, 4294901760
      %5451 = vmatmul.mubr.f32.gmra.mrb[0].mxu0 %v5450
      %v5452 = vpop.f32.mrb[0].mxu0
      %v5453 = vadd.f32 0.0, %v5452
      %v5454 = vpop.f32.mrb[0].mxu0
      %v5455 = vadd.f32 0.0, %v5454
      %5456 = vmatprep.mubr.f32.mxu0 0.0
      %v5457 = vand.u32 %v246, 4294901760
      %v5458 = vsub.f32 %v246, %v5457
      %v5459 = vand.u32 %v5458, 4294901760
      %v5460 = vsub.f32 %v5458, %v5459
      %v5461 = vand.u32 %v5460, 4294901760
      %5462 = vmatmul.mubr.f32.gmra.mrb[0].mxu0 %v5461
      %v5463 = vpop.f32.mrb[0].mxu0
      %v5464 = vadd.f32 0.0, %v5463
      %v5465 = vpop.f32.mrb[0].mxu0
      %v5466 = vadd.f32 0.0, %v5465
      %5467 = vmatprep.mubr.f32.mxu0 0.0
      %v5468 = vand.u32 %v247, 4294901760
      %v5469 = vsub.f32 %v247, %v5468
      %v5470 = vand.u32 %v5469, 4294901760
      %v5471 = vsub.f32 %v5469, %v5470
      %v5472 = vand.u32 %v5471, 4294901760
      %5473 = vmatmul.mubr.f32.gmra.mrb[0].mxu0 %v5472
      %v5474 = vpop.f32.mrb[0].mxu0
      %v5475 = vadd.f32 0.0, %v5474
      %v5476 = vpop.f32.mrb[0].mxu0
      %v5477 = vadd.f32 0.0, %v5476
      %5478 = vmatprep.mubr.f32.mxu0 0.0
      %v5479 = vand.u32 %v248, 4294901760
      %v5480 = vsub.f32 %v248, %v5479
      %v5481 = vand.u32 %v5480, 4294901760
      %v5482 = vsub.f32 %v5480, %v5481
      %v5483 = vand.u32 %v5482, 4294901760
      %5484 = vmatmul.mubr.f32.gmra.mrb[0].mxu0 %v5483
      %v5485 = vpop.f32.mrb[0].mxu0
      %v5486 = vadd.f32 0.0, %v5485
      %v5487 = vpop.f32.mrb[0].mxu0
      %v5488 = vadd.f32 0.0, %v5487
      %5489 = vmatprep.mubr.f32.mxu0 0.0
      %v5490 = vand.u32 %v249, 4294901760
      %v5491 = vsub.f32 %v249, %v5490
      %v5492 = vand.u32 %v5491, 4294901760
      %v5493 = vsub.f32 %v5491, %v5492
      %v5494 = vand.u32 %v5493, 4294901760
      %5495 = vmatmul.mubr.f32.gmra.mrb[0].mxu0 %v5494
      %v5496 = vpop.f32.mrb[0].mxu0
      %v5497 = vadd.f32 0.0, %v5496
      %v5498 = vpop.f32.mrb[0].mxu0
      %v5499 = vadd.f32 0.0, %v5498
      %5500 = vmatprep.mubr.f32.mxu0 0.0
      %v5501 = vand.u32 %v250, 4294901760
      %v5502 = vsub.f32 %v250, %v5501
      %v5503 = vand.u32 %v5502, 4294901760
      %v5504 = vsub.f32 %v5502, %v5503
      %v5505 = vand.u32 %v5504, 4294901760
      %5506 = vmatmul.mubr.f32.gmra.mrb[0].mxu0 %v5505
      %v5507 = vpop.f32.mrb[0].mxu0
      %v5508 = vadd.f32 0.0, %v5507
      %v5509 = vpop.f32.mrb[0].mxu0
      %v5510 = vadd.f32 0.0, %v5509
      %5511 = vdwg.mxu0
      %v5512 = vand.u32 %v714, 4294901760
      %v5513 = vsub.f32 %v714, %v5512
      %v5514 = vand.u32 %v5513, 4294901760
      %v5515 = vsub.f32 %v5513, %v5514
      %v5516 = vand.u32 %v5515, 4294901760
      %5517 = vmatprep.subr.mxu0 %v5516
      %v5518 = vand.u32 %v713, 4294901760
      %v5519 = vsub.f32 %v713, %v5518
      %v5520 = vand.u32 %v5519, 4294901760
      %v5521 = vsub.f32 %v5519, %v5520
      %v5522 = vand.u32 %v5521, 4294901760
      %5523 = vmatpush1.msra.mxu0 %v5522
      %v5524 = vand.u32 %v719, 4294901760
      %v5525 = vsub.f32 %v719, %v5524
      %v5526 = vand.u32 %v5525, 4294901760
      %v5527 = vsub.f32 %v5525, %v5526
      %v5528 = vand.u32 %v5527, 4294901760
      %5529 = vmatprep.subr.mxu0 %v5528
      %v5530 = vand.u32 %v718, 4294901760
      %v5531 = vsub.f32 %v718, %v5530
      %v5532 = vand.u32 %v5531, 4294901760
      %v5533 = vsub.f32 %v5531, %v5532
      %v5534 = vand.u32 %v5533, 4294901760
      %5535 = vmatpush1.msra.mxu0 %v5534
      %v5536 = vand.u32 %v724, 4294901760
      %v5537 = vsub.f32 %v724, %v5536
      %v5538 = vand.u32 %v5537, 4294901760
      %v5539 = vsub.f32 %v5537, %v5538
      %v5540 = vand.u32 %v5539, 4294901760
      %5541 = vmatprep.subr.mxu0 %v5540
      %v5542 = vand.u32 %v723, 4294901760
      %v5543 = vsub.f32 %v723, %v5542
      %v5544 = vand.u32 %v5543, 4294901760
      %v5545 = vsub.f32 %v5543, %v5544
      %v5546 = vand.u32 %v5545, 4294901760
      %5547 = vmatpush1.msra.mxu0 %v5546
      %v5548 = vand.u32 %v729, 4294901760
      %v5549 = vsub.f32 %v729, %v5548
      %v5550 = vand.u32 %v5549, 4294901760
      %v5551 = vsub.f32 %v5549, %v5550
      %v5552 = vand.u32 %v5551, 4294901760
      %5553 = vmatprep.subr.mxu0 %v5552
      %v5554 = vand.u32 %v728, 4294901760
      %v5555 = vsub.f32 %v728, %v5554
      %v5556 = vand.u32 %v5555, 4294901760
      %v5557 = vsub.f32 %v5555, %v5556
      %v5558 = vand.u32 %v5557, 4294901760
      %5559 = vmatpush1.msra.mxu0 %v5558
      %v5560 = vand.u32 %v734, 4294901760
      %v5561 = vsub.f32 %v734, %v5560
      %v5562 = vand.u32 %v5561, 4294901760
      %v5563 = vsub.f32 %v5561, %v5562
      %v5564 = vand.u32 %v5563, 4294901760
      %5565 = vmatprep.subr.mxu0 %v5564
      %v5566 = vand.u32 %v733, 4294901760
      %v5567 = vsub.f32 %v733, %v5566
      %v5568 = vand.u32 %v5567, 4294901760
      %v5569 = vsub.f32 %v5567, %v5568
      %v5570 = vand.u32 %v5569, 4294901760
      %5571 = vmatpush1.msra.mxu0 %v5570
      %v5572 = vand.u32 %v739, 4294901760
      %v5573 = vsub.f32 %v739, %v5572
      %v5574 = vand.u32 %v5573, 4294901760
      %v5575 = vsub.f32 %v5573, %v5574
      %v5576 = vand.u32 %v5575, 4294901760
      %5577 = vmatprep.subr.mxu0 %v5576
      %v5578 = vand.u32 %v738, 4294901760
      %v5579 = vsub.f32 %v738, %v5578
      %v5580 = vand.u32 %v5579, 4294901760
      %v5581 = vsub.f32 %v5579, %v5580
      %v5582 = vand.u32 %v5581, 4294901760
      %5583 = vmatpush1.msra.mxu0 %v5582
      %v5584 = vand.u32 %v744, 4294901760
      %v5585 = vsub.f32 %v744, %v5584
      %v5586 = vand.u32 %v5585, 4294901760
      %v5587 = vsub.f32 %v5585, %v5586
      %v5588 = vand.u32 %v5587, 4294901760
      %5589 = vmatprep.subr.mxu0 %v5588
      %v5590 = vand.u32 %v743, 4294901760
      %v5591 = vsub.f32 %v743, %v5590
      %v5592 = vand.u32 %v5591, 4294901760
      %v5593 = vsub.f32 %v5591, %v5592
      %v5594 = vand.u32 %v5593, 4294901760
      %5595 = vmatpush1.msra.mxu0 %v5594
      %v5596 = vand.u32 %v749, 4294901760
      %v5597 = vsub.f32 %v749, %v5596
      %v5598 = vand.u32 %v5597, 4294901760
      %v5599 = vsub.f32 %v5597, %v5598
      %v5600 = vand.u32 %v5599, 4294901760
      %5601 = vmatprep.subr.mxu0 %v5600
      %v5602 = vand.u32 %v748, 4294901760
      %v5603 = vsub.f32 %v748, %v5602
      %v5604 = vand.u32 %v5603, 4294901760
      %v5605 = vsub.f32 %v5603, %v5604
      %v5606 = vand.u32 %v5605, 4294901760
      %5607 = vmatpush1.msra.mxu0 %v5606
      %v5608 = vand.u32 %v754, 4294901760
      %v5609 = vsub.f32 %v754, %v5608
      %v5610 = vand.u32 %v5609, 4294901760
      %v5611 = vsub.f32 %v5609, %v5610
      %v5612 = vand.u32 %v5611, 4294901760
      %5613 = vmatprep.subr.mxu0 %v5612
      %v5614 = vand.u32 %v753, 4294901760
      %v5615 = vsub.f32 %v753, %v5614
      %v5616 = vand.u32 %v5615, 4294901760
      %v5617 = vsub.f32 %v5615, %v5616
      %v5618 = vand.u32 %v5617, 4294901760
      %5619 = vmatpush1.msra.mxu0 %v5618
      %v5620 = vand.u32 %v759, 4294901760
      %v5621 = vsub.f32 %v759, %v5620
      %v5622 = vand.u32 %v5621, 4294901760
      %v5623 = vsub.f32 %v5621, %v5622
      %v5624 = vand.u32 %v5623, 4294901760
      %5625 = vmatprep.subr.mxu0 %v5624
      %v5626 = vand.u32 %v758, 4294901760
      %v5627 = vsub.f32 %v758, %v5626
      %v5628 = vand.u32 %v5627, 4294901760
      %v5629 = vsub.f32 %v5627, %v5628
      %v5630 = vand.u32 %v5629, 4294901760
      %5631 = vmatpush1.msra.mxu0 %v5630
      %v5632 = vand.u32 %v764, 4294901760
      %v5633 = vsub.f32 %v764, %v5632
      %v5634 = vand.u32 %v5633, 4294901760
      %v5635 = vsub.f32 %v5633, %v5634
      %v5636 = vand.u32 %v5635, 4294901760
      %5637 = vmatprep.subr.mxu0 %v5636
      %v5638 = vand.u32 %v763, 4294901760
      %v5639 = vsub.f32 %v763, %v5638
      %v5640 = vand.u32 %v5639, 4294901760
      %v5641 = vsub.f32 %v5639, %v5640
      %v5642 = vand.u32 %v5641, 4294901760
      %5643 = vmatpush1.msra.mxu0 %v5642
      %v5644 = vand.u32 %v769, 4294901760
      %v5645 = vsub.f32 %v769, %v5644
      %v5646 = vand.u32 %v5645, 4294901760
      %v5647 = vsub.f32 %v5645, %v5646
      %v5648 = vand.u32 %v5647, 4294901760
      %5649 = vmatprep.subr.mxu0 %v5648
      %v5650 = vand.u32 %v768, 4294901760
      %v5651 = vsub.f32 %v768, %v5650
      %v5652 = vand.u32 %v5651, 4294901760
      %v5653 = vsub.f32 %v5651, %v5652
      %v5654 = vand.u32 %v5653, 4294901760
      %5655 = vmatpush1.msra.mxu0 %v5654
      %v5656 = vand.u32 %v774, 4294901760
      %v5657 = vsub.f32 %v774, %v5656
      %v5658 = vand.u32 %v5657, 4294901760
      %v5659 = vsub.f32 %v5657, %v5658
      %v5660 = vand.u32 %v5659, 4294901760
      %5661 = vmatprep.subr.mxu0 %v5660
      %v5662 = vand.u32 %v773, 4294901760
      %v5663 = vsub.f32 %v773, %v5662
      %v5664 = vand.u32 %v5663, 4294901760
      %v5665 = vsub.f32 %v5663, %v5664
      %v5666 = vand.u32 %v5665, 4294901760
      %5667 = vmatpush1.msra.mxu0 %v5666
      %v5668 = vand.u32 %v779, 4294901760
      %v5669 = vsub.f32 %v779, %v5668
      %v5670 = vand.u32 %v5669, 4294901760
      %v5671 = vsub.f32 %v5669, %v5670
      %v5672 = vand.u32 %v5671, 4294901760
      %5673 = vmatprep.subr.mxu0 %v5672
      %v5674 = vand.u32 %v778, 4294901760
      %v5675 = vsub.f32 %v778, %v5674
      %v5676 = vand.u32 %v5675, 4294901760
      %v5677 = vsub.f32 %v5675, %v5676
      %v5678 = vand.u32 %v5677, 4294901760
      %5679 = vmatpush1.msra.mxu0 %v5678
      %v5680 = vand.u32 %v784, 4294901760
      %v5681 = vsub.f32 %v784, %v5680
      %v5682 = vand.u32 %v5681, 4294901760
      %v5683 = vsub.f32 %v5681, %v5682
      %v5684 = vand.u32 %v5683, 4294901760
      %5685 = vmatprep.subr.mxu0 %v5684
      %v5686 = vand.u32 %v783, 4294901760
      %v5687 = vsub.f32 %v783, %v5686
      %v5688 = vand.u32 %v5687, 4294901760
      %v5689 = vsub.f32 %v5687, %v5688
      %v5690 = vand.u32 %v5689, 4294901760
      %5691 = vmatpush1.msra.mxu0 %v5690
      %v5692 = vand.u32 %v789, 4294901760
      %v5693 = vsub.f32 %v789, %v5692
      %v5694 = vand.u32 %v5693, 4294901760
      %v5695 = vsub.f32 %v5693, %v5694
      %v5696 = vand.u32 %v5695, 4294901760
      %5697 = vmatprep.subr.mxu0 %v5696
      %v5698 = vand.u32 %v788, 4294901760
      %v5699 = vsub.f32 %v788, %v5698
      %v5700 = vand.u32 %v5699, 4294901760
      %v5701 = vsub.f32 %v5699, %v5700
      %v5702 = vand.u32 %v5701, 4294901760
      %5703 = vmatpush1.msra.mxu0 %v5702
      %5704 = vmatprep.subr.mxu0 0.0
      %5705 = vmatpush1.msra.mxu0 0.0
      %5706 = vmatprep.subr.mxu0 0.0
      %5707 = vmatpush1.msra.mxu0 0.0
      %5708 = vmatprep.subr.mxu0 0.0
      %5709 = vmatpush1.msra.mxu0 0.0
      %5710 = vmatprep.subr.mxu0 0.0
      %5711 = vmatpush1.msra.mxu0 0.0
      %5712 = vmatprep.subr.mxu0 0.0
      %5713 = vmatpush1.msra.mxu0 0.0
      %5714 = vmatprep.subr.mxu0 0.0
      %5715 = vmatpush1.msra.mxu0 0.0
      %5716 = vmatprep.subr.mxu0 0.0
      %5717 = vmatpush1.msra.mxu0 0.0
      %5718 = vmatprep.subr.mxu0 0.0
      %5719 = vmatpush1.msra.mxu0 0.0
      %5720 = vmatprep.subr.mxu0 0.0
      %5721 = vmatpush1.msra.mxu0 0.0
      %5722 = vmatprep.subr.mxu0 0.0
      %5723 = vmatpush1.msra.mxu0 0.0
      %5724 = vmatprep.subr.mxu0 0.0
      %5725 = vmatpush1.msra.mxu0 0.0
      %5726 = vmatprep.subr.mxu0 0.0
      %5727 = vmatpush1.msra.mxu0 0.0
      %5728 = vmatprep.subr.mxu0 0.0
      %5729 = vmatpush1.msra.mxu0 0.0
      %5730 = vmatprep.subr.mxu0 0.0
      %5731 = vmatpush1.msra.mxu0 0.0
      %5732 = vmatprep.subr.mxu0 0.0
      %5733 = vmatpush1.msra.mxu0 0.0
      %5734 = vmatprep.subr.mxu0 0.0
      %5735 = vmatpush1.msra.mxu0 0.0
      %5736 = vmatprep.mubr.f32.mxu0 0.0
      %v5737 = vand.u32 %v243, 4294901760
      %5738 = vmatmul.mubr.f32.gmra.mrb[0].mxu0 %v5737
      %v5739 = vpop.f32.mrb[0].mxu0
      %v5740 = vadd.f32 %v5431, %v5739
      %v5741 = vpop.f32.mrb[0].mxu0
      %v5742 = vadd.f32 %v5433, %v5741
      %5743 = vmatprep.mubr.f32.mxu0 0.0
      %v5744 = vand.u32 %v244, 4294901760
      %5745 = vmatmul.mubr.f32.gmra.mrb[0].mxu0 %v5744
      %v5746 = vpop.f32.mrb[0].mxu0
      %v5747 = vadd.f32 %v5442, %v5746
      %v5748 = vpop.f32.mrb[0].mxu0
      %v5749 = vadd.f32 %v5444, %v5748
      %5750 = vmatprep.mubr.f32.mxu0 0.0
      %v5751 = vand.u32 %v245, 4294901760
      %5752 = vmatmul.mubr.f32.gmra.mrb[0].mxu0 %v5751
      %v5753 = vpop.f32.mrb[0].mxu0
      %v5754 = vadd.f32 %v5453, %v5753
      %v5755 = vpop.f32.mrb[0].mxu0
      %v5756 = vadd.f32 %v5455, %v5755
      %5757 = vmatprep.mubr.f32.mxu0 0.0
      %v5758 = vand.u32 %v246, 4294901760
      %5759 = vmatmul.mubr.f32.gmra.mrb[0].mxu0 %v5758
      %v5760 = vpop.f32.mrb[0].mxu0
      %v5761 = vadd.f32 %v5464, %v5760
      %v5762 = vpop.f32.mrb[0].mxu0
      %v5763 = vadd.f32 %v5466, %v5762
      %5764 = vmatprep.mubr.f32.mxu0 0.0
      %v5765 = vand.u32 %v247, 4294901760
      %5766 = vmatmul.mubr.f32.gmra.mrb[0].mxu0 %v5765
      %v5767 = vpop.f32.mrb[0].mxu0
      %v5768 = vadd.f32 %v5475, %v5767
      %v5769 = vpop.f32.mrb[0].mxu0
      %v5770 = vadd.f32 %v5477, %v5769
      %5771 = vmatprep.mubr.f32.mxu0 0.0
      %v5772 = vand.u32 %v248, 4294901760
      %5773 = vmatmul.mubr.f32.gmra.mrb[0].mxu0 %v5772
      %v5774 = vpop.f32.mrb[0].mxu0
      %v5775 = vadd.f32 %v5486, %v5774
      %v5776 = vpop.f32.mrb[0].mxu0
      %v5777 = vadd.f32 %v5488, %v5776
      %5778 = vmatprep.mubr.f32.mxu0 0.0
      %v5779 = vand.u32 %v249, 4294901760
      %5780 = vmatmul.mubr.f32.gmra.mrb[0].mxu0 %v5779
      %v5781 = vpop.f32.mrb[0].mxu0
      %v5782 = vadd.f32 %v5497, %v5781
      %v5783 = vpop.f32.mrb[0].mxu0
      %v5784 = vadd.f32 %v5499, %v5783
      %5785 = vmatprep.mubr.f32.mxu0 0.0
      %v5786 = vand.u32 %v250, 4294901760
      %5787 = vmatmul.mubr.f32.gmra.mrb[0].mxu0 %v5786
      %v5788 = vpop.f32.mrb[0].mxu0
      %v5789 = vadd.f32 %v5508, %v5788
      %v5790 = vpop.f32.mrb[0].mxu0
      %v5791 = vadd.f32 %v5510, %v5790
      %5792 = vdwg.mxu0
      %v5793 = vand.u32 %v714, 4294901760
      %v5794 = vsub.f32 %v714, %v5793
      %5795 = vmatprep.subr.mxu0 %v5794
      %v5796 = vand.u32 %v713, 4294901760
      %v5797 = vsub.f32 %v713, %v5796
      %5798 = vmatpush1.msra.mxu0 %v5797
      %v5799 = vand.u32 %v719, 4294901760
      %v5800 = vsub.f32 %v719, %v5799
      %5801 = vmatprep.subr.mxu0 %v5800
      %v5802 = vand.u32 %v718, 4294901760
      %v5803 = vsub.f32 %v718, %v5802
      %5804 = vmatpush1.msra.mxu0 %v5803
      %v5805 = vand.u32 %v724, 4294901760
      %v5806 = vsub.f32 %v724, %v5805
      %5807 = vmatprep.subr.mxu0 %v5806
      %v5808 = vand.u32 %v723, 4294901760
      %v5809 = vsub.f32 %v723, %v5808
      %5810 = vmatpush1.msra.mxu0 %v5809
      %v5811 = vand.u32 %v729, 4294901760
      %v5812 = vsub.f32 %v729, %v5811
      %5813 = vmatprep.subr.mxu0 %v5812
      %v5814 = vand.u32 %v728, 4294901760
      %v5815 = vsub.f32 %v728, %v5814
      %5816 = vmatpush1.msra.mxu0 %v5815
      %v5817 = vand.u32 %v734, 4294901760
      %v5818 = vsub.f32 %v734, %v5817
      %5819 = vmatprep.subr.mxu0 %v5818
      %v5820 = vand.u32 %v733, 4294901760
      %v5821 = vsub.f32 %v733, %v5820
      %5822 = vmatpush1.msra.mxu0 %v5821
      %v5823 = vand.u32 %v739, 4294901760
      %v5824 = vsub.f32 %v739, %v5823
      %5825 = vmatprep.subr.mxu0 %v5824
      %v5826 = vand.u32 %v738, 4294901760
      %v5827 = vsub.f32 %v738, %v5826
      %5828 = vmatpush1.msra.mxu0 %v5827
      %v5829 = vand.u32 %v744, 4294901760
      %v5830 = vsub.f32 %v744, %v5829
      %5831 = vmatprep.subr.mxu0 %v5830
      %v5832 = vand.u32 %v743, 4294901760
      %v5833 = vsub.f32 %v743, %v5832
      %5834 = vmatpush1.msra.mxu0 %v5833
      %v5835 = vand.u32 %v749, 4294901760
      %v5836 = vsub.f32 %v749, %v5835
      %5837 = vmatprep.subr.mxu0 %v5836
      %v5838 = vand.u32 %v748, 4294901760
      %v5839 = vsub.f32 %v748, %v5838
      %5840 = vmatpush1.msra.mxu0 %v5839
      %v5841 = vand.u32 %v754, 4294901760
      %v5842 = vsub.f32 %v754, %v5841
      %5843 = vmatprep.subr.mxu0 %v5842
      %v5844 = vand.u32 %v753, 4294901760
      %v5845 = vsub.f32 %v753, %v5844
      %5846 = vmatpush1.msra.mxu0 %v5845
      %v5847 = vand.u32 %v759, 4294901760
      %v5848 = vsub.f32 %v759, %v5847
      %5849 = vmatprep.subr.mxu0 %v5848
      %v5850 = vand.u32 %v758, 4294901760
      %v5851 = vsub.f32 %v758, %v5850
      %5852 = vmatpush1.msra.mxu0 %v5851
      %v5853 = vand.u32 %v764, 4294901760
      %v5854 = vsub.f32 %v764, %v5853
      %5855 = vmatprep.subr.mxu0 %v5854
      %v5856 = vand.u32 %v763, 4294901760
      %v5857 = vsub.f32 %v763, %v5856
      %5858 = vmatpush1.msra.mxu0 %v5857
      %v5859 = vand.u32 %v769, 4294901760
      %v5860 = vsub.f32 %v769, %v5859
      %5861 = vmatprep.subr.mxu0 %v5860
      %v5862 = vand.u32 %v768, 4294901760
      %v5863 = vsub.f32 %v768, %v5862
      %5864 = vmatpush1.msra.mxu0 %v5863
      %v5865 = vand.u32 %v774, 4294901760
      %v5866 = vsub.f32 %v774, %v5865
      %5867 = vmatprep.subr.mxu0 %v5866
      %v5868 = vand.u32 %v773, 4294901760
      %v5869 = vsub.f32 %v773, %v5868
      %5870 = vmatpush1.msra.mxu0 %v5869
      %v5871 = vand.u32 %v779, 4294901760
      %v5872 = vsub.f32 %v779, %v5871
      %5873 = vmatprep.subr.mxu0 %v5872
      %v5874 = vand.u32 %v778, 4294901760
      %v5875 = vsub.f32 %v778, %v5874
      %5876 = vmatpush1.msra.mxu0 %v5875
      %v5877 = vand.u32 %v784, 4294901760
      %v5878 = vsub.f32 %v784, %v5877
      %5879 = vmatprep.subr.mxu0 %v5878
      %v5880 = vand.u32 %v783, 4294901760
      %v5881 = vsub.f32 %v783, %v5880
      %5882 = vmatpush1.msra.mxu0 %v5881
      %v5883 = vand.u32 %v789, 4294901760
      %v5884 = vsub.f32 %v789, %v5883
      %5885 = vmatprep.subr.mxu0 %v5884
      %v5886 = vand.u32 %v788, 4294901760
      %v5887 = vsub.f32 %v788, %v5886
      %5888 = vmatpush1.msra.mxu0 %v5887
      %5889 = vmatprep.subr.mxu0 0.0
      %5890 = vmatpush1.msra.mxu0 0.0
      %5891 = vmatprep.subr.mxu0 0.0
      %5892 = vmatpush1.msra.mxu0 0.0
      %5893 = vmatprep.subr.mxu0 0.0
      %5894 = vmatpush1.msra.mxu0 0.0
      %5895 = vmatprep.subr.mxu0 0.0
      %5896 = vmatpush1.msra.mxu0 0.0
      %5897 = vmatprep.subr.mxu0 0.0
      %5898 = vmatpush1.msra.mxu0 0.0
      %5899 = vmatprep.subr.mxu0 0.0
      %5900 = vmatpush1.msra.mxu0 0.0
      %5901 = vmatprep.subr.mxu0 0.0
      %5902 = vmatpush1.msra.mxu0 0.0
      %5903 = vmatprep.subr.mxu0 0.0
      %5904 = vmatpush1.msra.mxu0 0.0
      %5905 = vmatprep.subr.mxu0 0.0
      %5906 = vmatpush1.msra.mxu0 0.0
      %5907 = vmatprep.subr.mxu0 0.0
      %5908 = vmatpush1.msra.mxu0 0.0
      %5909 = vmatprep.subr.mxu0 0.0
      %5910 = vmatpush1.msra.mxu0 0.0
      %5911 = vmatprep.subr.mxu0 0.0
      %5912 = vmatpush1.msra.mxu0 0.0
      %5913 = vmatprep.subr.mxu0 0.0
      %5914 = vmatpush1.msra.mxu0 0.0
      %5915 = vmatprep.subr.mxu0 0.0
      %5916 = vmatpush1.msra.mxu0 0.0
      %5917 = vmatprep.subr.mxu0 0.0
      %5918 = vmatpush1.msra.mxu0 0.0
      %5919 = vmatprep.subr.mxu0 0.0
      %5920 = vmatpush1.msra.mxu0 0.0
      %5921 = vmatprep.mubr.f32.mxu0 0.0
      %v5922 = vand.u32 %v243, 4294901760
      %v5923 = vsub.f32 %v243, %v5922
      %5924 = vmatmul.mubr.f32.gmra.mrb[0].mxu0 %v5923
      %v5925 = vpop.f32.mrb[0].mxu0
      %v5926 = vadd.f32 %v5740, %v5925
      %v5927 = vpop.f32.mrb[0].mxu0
      %v5928 = vadd.f32 %v5742, %v5927
      %5929 = vmatprep.mubr.f32.mxu0 0.0
      %v5930 = vand.u32 %v244, 4294901760
      %v5931 = vsub.f32 %v244, %v5930
      %5932 = vmatmul.mubr.f32.gmra.mrb[0].mxu0 %v5931
      %v5933 = vpop.f32.mrb[0].mxu0
      %v5934 = vadd.f32 %v5747, %v5933
      %v5935 = vpop.f32.mrb[0].mxu0
      %v5936 = vadd.f32 %v5749, %v5935
      %5937 = vmatprep.mubr.f32.mxu0 0.0
      %v5938 = vand.u32 %v245, 4294901760
      %v5939 = vsub.f32 %v245, %v5938
      %5940 = vmatmul.mubr.f32.gmra.mrb[0].mxu0 %v5939
      %v5941 = vpop.f32.mrb[0].mxu0
      %v5942 = vadd.f32 %v5754, %v5941
      %v5943 = vpop.f32.mrb[0].mxu0
      %v5944 = vadd.f32 %v5756, %v5943
      %5945 = vmatprep.mubr.f32.mxu0 0.0
      %v5946 = vand.u32 %v246, 4294901760
      %v5947 = vsub.f32 %v246, %v5946
      %5948 = vmatmul.mubr.f32.gmra.mrb[0].mxu0 %v5947
      %v5949 = vpop.f32.mrb[0].mxu0
      %v5950 = vadd.f32 %v5761, %v5949
      %v5951 = vpop.f32.mrb[0].mxu0
      %v5952 = vadd.f32 %v5763, %v5951
      %5953 = vmatprep.mubr.f32.mxu0 0.0
      %v5954 = vand.u32 %v247, 4294901760
      %v5955 = vsub.f32 %v247, %v5954
      %5956 = vmatmul.mubr.f32.gmra.mrb[0].mxu0 %v5955
      %v5957 = vpop.f32.mrb[0].mxu0
      %v5958 = vadd.f32 %v5768, %v5957
      %v5959 = vpop.f32.mrb[0].mxu0
      %v5960 = vadd.f32 %v5770, %v5959
      %5961 = vmatprep.mubr.f32.mxu0 0.0
      %v5962 = vand.u32 %v248, 4294901760
      %v5963 = vsub.f32 %v248, %v5962
      %5964 = vmatmul.mubr.f32.gmra.mrb[0].mxu0 %v5963
      %v5965 = vpop.f32.mrb[0].mxu0
      %v5966 = vadd.f32 %v5775, %v5965
      %v5967 = vpop.f32.mrb[0].mxu0
      %v5968 = vadd.f32 %v5777, %v5967
      %5969 = vmatprep.mubr.f32.mxu0 0.0
      %v5970 = vand.u32 %v249, 4294901760
      %v5971 = vsub.f32 %v249, %v5970
      %5972 = vmatmul.mubr.f32.gmra.mrb[0].mxu0 %v5971
      %v5973 = vpop.f32.mrb[0].mxu0
      %v5974 = vadd.f32 %v5782, %v5973
      %v5975 = vpop.f32.mrb[0].mxu0
      %v5976 = vadd.f32 %v5784, %v5975
      %5977 = vmatprep.mubr.f32.mxu0 0.0
      %v5978 = vand.u32 %v250, 4294901760
      %v5979 = vsub.f32 %v250, %v5978
      %5980 = vmatmul.mubr.f32.gmra.mrb[0].mxu0 %v5979
      %v5981 = vpop.f32.mrb[0].mxu0
      %v5982 = vadd.f32 %v5789, %v5981
      %v5983 = vpop.f32.mrb[0].mxu0
      %v5984 = vadd.f32 %v5791, %v5983
      %5985 = vdwg.mxu0
      %v5986 = vand.u32 %v714, 4294901760
      %5987 = vmatprep.subr.mxu0 %v5986
      %v5988 = vand.u32 %v713, 4294901760
      %5989 = vmatpush1.msra.mxu0 %v5988
      %v5990 = vand.u32 %v719, 4294901760
      %5991 = vmatprep.subr.mxu0 %v5990
      %v5992 = vand.u32 %v718, 4294901760
      %5993 = vmatpush1.msra.mxu0 %v5992
      %v5994 = vand.u32 %v724, 4294901760
      %5995 = vmatprep.subr.mxu0 %v5994
      %v5996 = vand.u32 %v723, 4294901760
      %5997 = vmatpush1.msra.mxu0 %v5996
      %v5998 = vand.u32 %v729, 4294901760
      %5999 = vmatprep.subr.mxu0 %v5998
      %v6000 = vand.u32 %v728, 4294901760
      %6001 = vmatpush1.msra.mxu0 %v6000
      %v6002 = vand.u32 %v734, 4294901760
      %6003 = vmatprep.subr.mxu0 %v6002
      %v6004 = vand.u32 %v733, 4294901760
      %6005 = vmatpush1.msra.mxu0 %v6004
      %v6006 = vand.u32 %v739, 4294901760
      %6007 = vmatprep.subr.mxu0 %v6006
      %v6008 = vand.u32 %v738, 4294901760
      %6009 = vmatpush1.msra.mxu0 %v6008
      %v6010 = vand.u32 %v744, 4294901760
      %6011 = vmatprep.subr.mxu0 %v6010
      %v6012 = vand.u32 %v743, 4294901760
      %6013 = vmatpush1.msra.mxu0 %v6012
      %v6014 = vand.u32 %v749, 4294901760
      %6015 = vmatprep.subr.mxu0 %v6014
      %v6016 = vand.u32 %v748, 4294901760
      %6017 = vmatpush1.msra.mxu0 %v6016
      %v6018 = vand.u32 %v754, 4294901760
      %6019 = vmatprep.subr.mxu0 %v6018
      %v6020 = vand.u32 %v753, 4294901760
      %6021 = vmatpush1.msra.mxu0 %v6020
      %v6022 = vand.u32 %v759, 4294901760
      %6023 = vmatprep.subr.mxu0 %v6022
      %v6024 = vand.u32 %v758, 4294901760
      %6025 = vmatpush1.msra.mxu0 %v6024
      %v6026 = vand.u32 %v764, 4294901760
      %6027 = vmatprep.subr.mxu0 %v6026
      %v6028 = vand.u32 %v763, 4294901760
      %6029 = vmatpush1.msra.mxu0 %v6028
      %v6030 = vand.u32 %v769, 4294901760
      %6031 = vmatprep.subr.mxu0 %v6030
      %v6032 = vand.u32 %v768, 4294901760
      %6033 = vmatpush1.msra.mxu0 %v6032
      %v6034 = vand.u32 %v774, 4294901760
      %6035 = vmatprep.subr.mxu0 %v6034
      %v6036 = vand.u32 %v773, 4294901760
      %6037 = vmatpush1.msra.mxu0 %v6036
      %v6038 = vand.u32 %v779, 4294901760
      %6039 = vmatprep.subr.mxu0 %v6038
      %v6040 = vand.u32 %v778, 4294901760
      %6041 = vmatpush1.msra.mxu0 %v6040
      %v6042 = vand.u32 %v784, 4294901760
      %6043 = vmatprep.subr.mxu0 %v6042
      %v6044 = vand.u32 %v783, 4294901760
      %6045 = vmatpush1.msra.mxu0 %v6044
      %v6046 = vand.u32 %v789, 4294901760
      %6047 = vmatprep.subr.mxu0 %v6046
      %v6048 = vand.u32 %v788, 4294901760
      %6049 = vmatpush1.msra.mxu0 %v6048
      %6050 = vmatprep.subr.mxu0 0.0
      %6051 = vmatpush1.msra.mxu0 0.0
      %6052 = vmatprep.subr.mxu0 0.0
      %6053 = vmatpush1.msra.mxu0 0.0
      %6054 = vmatprep.subr.mxu0 0.0
      %6055 = vmatpush1.msra.mxu0 0.0
      %6056 = vmatprep.subr.mxu0 0.0
      %6057 = vmatpush1.msra.mxu0 0.0
      %6058 = vmatprep.subr.mxu0 0.0
      %6059 = vmatpush1.msra.mxu0 0.0
      %6060 = vmatprep.subr.mxu0 0.0
      %6061 = vmatpush1.msra.mxu0 0.0
      %6062 = vmatprep.subr.mxu0 0.0
      %6063 = vmatpush1.msra.mxu0 0.0
      %6064 = vmatprep.subr.mxu0 0.0
      %6065 = vmatpush1.msra.mxu0 0.0
      %6066 = vmatprep.subr.mxu0 0.0
      %6067 = vmatpush1.msra.mxu0 0.0
      %6068 = vmatprep.subr.mxu0 0.0
      %6069 = vmatpush1.msra.mxu0 0.0
      %6070 = vmatprep.subr.mxu0 0.0
      %6071 = vmatpush1.msra.mxu0 0.0
      %6072 = vmatprep.subr.mxu0 0.0
      %6073 = vmatpush1.msra.mxu0 0.0
      %6074 = vmatprep.subr.mxu0 0.0
      %6075 = vmatpush1.msra.mxu0 0.0
      %6076 = vmatprep.subr.mxu0 0.0
      %6077 = vmatpush1.msra.mxu0 0.0
      %6078 = vmatprep.subr.mxu0 0.0
      %6079 = vmatpush1.msra.mxu0 0.0
      %6080 = vmatprep.subr.mxu0 0.0
      %6081 = vmatpush1.msra.mxu0 0.0
      %6082 = vmatprep.mubr.f32.mxu0 0.0
      %v6083 = vand.u32 %v243, 4294901760
      %v6084 = vsub.f32 %v243, %v6083
      %v6085 = vand.u32 %v6084, 4294901760
      %6086 = vmatmul.mubr.f32.gmra.mrb[0].mxu0 %v6085
      %v6087 = vpop.f32.mrb[0].mxu0
      %v6088 = vadd.f32 %v5926, %v6087
      %v6089 = vpop.f32.mrb[0].mxu0
      %v6090 = vadd.f32 %v5928, %v6089
      %6091 = vmatprep.mubr.f32.mxu0 0.0
      %v6092 = vand.u32 %v244, 4294901760
      %v6093 = vsub.f32 %v244, %v6092
      %v6094 = vand.u32 %v6093, 4294901760
      %6095 = vmatmul.mubr.f32.gmra.mrb[0].mxu0 %v6094
      %v6096 = vpop.f32.mrb[0].mxu0
      %v6097 = vadd.f32 %v5934, %v6096
      %v6098 = vpop.f32.mrb[0].mxu0
      %v6099 = vadd.f32 %v5936, %v6098
      %6100 = vmatprep.mubr.f32.mxu0 0.0
      %v6101 = vand.u32 %v245, 4294901760
      %v6102 = vsub.f32 %v245, %v6101
      %v6103 = vand.u32 %v6102, 4294901760
      %6104 = vmatmul.mubr.f32.gmra.mrb[0].mxu0 %v6103
      %v6105 = vpop.f32.mrb[0].mxu0
      %v6106 = vadd.f32 %v5942, %v6105
      %v6107 = vpop.f32.mrb[0].mxu0
      %v6108 = vadd.f32 %v5944, %v6107
      %6109 = vmatprep.mubr.f32.mxu0 0.0
      %v6110 = vand.u32 %v246, 4294901760
      %v6111 = vsub.f32 %v246, %v6110
      %v6112 = vand.u32 %v6111, 4294901760
      %6113 = vmatmul.mubr.f32.gmra.mrb[0].mxu0 %v6112
      %v6114 = vpop.f32.mrb[0].mxu0
      %v6115 = vadd.f32 %v5950, %v6114
      %v6116 = vpop.f32.mrb[0].mxu0
      %v6117 = vadd.f32 %v5952, %v6116
      %6118 = vmatprep.mubr.f32.mxu0 0.0
      %v6119 = vand.u32 %v247, 4294901760
      %v6120 = vsub.f32 %v247, %v6119
      %v6121 = vand.u32 %v6120, 4294901760
      %6122 = vmatmul.mubr.f32.gmra.mrb[0].mxu0 %v6121
      %v6123 = vpop.f32.mrb[0].mxu0
      %v6124 = vadd.f32 %v5958, %v6123
      %v6125 = vpop.f32.mrb[0].mxu0
      %v6126 = vadd.f32 %v5960, %v6125
      %6127 = vmatprep.mubr.f32.mxu0 0.0
      %v6128 = vand.u32 %v248, 4294901760
      %v6129 = vsub.f32 %v248, %v6128
      %v6130 = vand.u32 %v6129, 4294901760
      %6131 = vmatmul.mubr.f32.gmra.mrb[0].mxu0 %v6130
      %v6132 = vpop.f32.mrb[0].mxu0
      %v6133 = vadd.f32 %v5966, %v6132
      %v6134 = vpop.f32.mrb[0].mxu0
      %v6135 = vadd.f32 %v5968, %v6134
      %6136 = vmatprep.mubr.f32.mxu0 0.0
      %v6137 = vand.u32 %v249, 4294901760
      %v6138 = vsub.f32 %v249, %v6137
      %v6139 = vand.u32 %v6138, 4294901760
      %6140 = vmatmul.mubr.f32.gmra.mrb[0].mxu0 %v6139
      %v6141 = vpop.f32.mrb[0].mxu0
      %v6142 = vadd.f32 %v5974, %v6141
      %v6143 = vpop.f32.mrb[0].mxu0
      %v6144 = vadd.f32 %v5976, %v6143
      %6145 = vmatprep.mubr.f32.mxu0 0.0
      %v6146 = vand.u32 %v250, 4294901760
      %v6147 = vsub.f32 %v250, %v6146
      %v6148 = vand.u32 %v6147, 4294901760
      %6149 = vmatmul.mubr.f32.gmra.mrb[0].mxu0 %v6148
      %v6150 = vpop.f32.mrb[0].mxu0
      %v6151 = vadd.f32 %v5982, %v6150
      %v6152 = vpop.f32.mrb[0].mxu0
      %v6153 = vadd.f32 %v5984, %v6152
      %6154 = vdwg.mxu0
      %v6155 = vand.u32 %v714, 4294901760
      %v6156 = vsub.f32 %v714, %v6155
      %v6157 = vand.u32 %v6156, 4294901760
      %6158 = vmatprep.subr.mxu0 %v6157
      %v6159 = vand.u32 %v713, 4294901760
      %v6160 = vsub.f32 %v713, %v6159
      %v6161 = vand.u32 %v6160, 4294901760
      %6162 = vmatpush1.msra.mxu0 %v6161
      %v6163 = vand.u32 %v719, 4294901760
      %v6164 = vsub.f32 %v719, %v6163
      %v6165 = vand.u32 %v6164, 4294901760
      %6166 = vmatprep.subr.mxu0 %v6165
      %v6167 = vand.u32 %v718, 4294901760
      %v6168 = vsub.f32 %v718, %v6167
      %v6169 = vand.u32 %v6168, 4294901760
      %6170 = vmatpush1.msra.mxu0 %v6169
      %v6171 = vand.u32 %v724, 4294901760
      %v6172 = vsub.f32 %v724, %v6171
      %v6173 = vand.u32 %v6172, 4294901760
      %6174 = vmatprep.subr.mxu0 %v6173
      %v6175 = vand.u32 %v723, 4294901760
      %v6176 = vsub.f32 %v723, %v6175
      %v6177 = vand.u32 %v6176, 4294901760
      %6178 = vmatpush1.msra.mxu0 %v6177
      %v6179 = vand.u32 %v729, 4294901760
      %v6180 = vsub.f32 %v729, %v6179
      %v6181 = vand.u32 %v6180, 4294901760
      %6182 = vmatprep.subr.mxu0 %v6181
      %v6183 = vand.u32 %v728, 4294901760
      %v6184 = vsub.f32 %v728, %v6183
      %v6185 = vand.u32 %v6184, 4294901760
      %6186 = vmatpush1.msra.mxu0 %v6185
      %v6187 = vand.u32 %v734, 4294901760
      %v6188 = vsub.f32 %v734, %v6187
      %v6189 = vand.u32 %v6188, 4294901760
      %6190 = vmatprep.subr.mxu0 %v6189
      %v6191 = vand.u32 %v733, 4294901760
      %v6192 = vsub.f32 %v733, %v6191
      %v6193 = vand.u32 %v6192, 4294901760
      %6194 = vmatpush1.msra.mxu0 %v6193
      %v6195 = vand.u32 %v739, 4294901760
      %v6196 = vsub.f32 %v739, %v6195
      %v6197 = vand.u32 %v6196, 4294901760
      %6198 = vmatprep.subr.mxu0 %v6197
      %v6199 = vand.u32 %v738, 4294901760
      %v6200 = vsub.f32 %v738, %v6199
      %v6201 = vand.u32 %v6200, 4294901760
      %6202 = vmatpush1.msra.mxu0 %v6201
      %v6203 = vand.u32 %v744, 4294901760
      %v6204 = vsub.f32 %v744, %v6203
      %v6205 = vand.u32 %v6204, 4294901760
      %6206 = vmatprep.subr.mxu0 %v6205
      %v6207 = vand.u32 %v743, 4294901760
      %v6208 = vsub.f32 %v743, %v6207
      %v6209 = vand.u32 %v6208, 4294901760
      %6210 = vmatpush1.msra.mxu0 %v6209
      %v6211 = vand.u32 %v749, 4294901760
      %v6212 = vsub.f32 %v749, %v6211
      %v6213 = vand.u32 %v6212, 4294901760
      %6214 = vmatprep.subr.mxu0 %v6213
      %v6215 = vand.u32 %v748, 4294901760
      %v6216 = vsub.f32 %v748, %v6215
      %v6217 = vand.u32 %v6216, 4294901760
      %6218 = vmatpush1.msra.mxu0 %v6217
      %v6219 = vand.u32 %v754, 4294901760
      %v6220 = vsub.f32 %v754, %v6219
      %v6221 = vand.u32 %v6220, 4294901760
      %6222 = vmatprep.subr.mxu0 %v6221
      %v6223 = vand.u32 %v753, 4294901760
      %v6224 = vsub.f32 %v753, %v6223
      %v6225 = vand.u32 %v6224, 4294901760
      %6226 = vmatpush1.msra.mxu0 %v6225
      %v6227 = vand.u32 %v759, 4294901760
      %v6228 = vsub.f32 %v759, %v6227
      %v6229 = vand.u32 %v6228, 4294901760
      %6230 = vmatprep.subr.mxu0 %v6229
      %v6231 = vand.u32 %v758, 4294901760
      %v6232 = vsub.f32 %v758, %v6231
      %v6233 = vand.u32 %v6232, 4294901760
      %6234 = vmatpush1.msra.mxu0 %v6233
      %v6235 = vand.u32 %v764, 4294901760
      %v6236 = vsub.f32 %v764, %v6235
      %v6237 = vand.u32 %v6236, 4294901760
      %6238 = vmatprep.subr.mxu0 %v6237
      %v6239 = vand.u32 %v763, 4294901760
      %v6240 = vsub.f32 %v763, %v6239
      %v6241 = vand.u32 %v6240, 4294901760
      %6242 = vmatpush1.msra.mxu0 %v6241
      %v6243 = vand.u32 %v769, 4294901760
      %v6244 = vsub.f32 %v769, %v6243
      %v6245 = vand.u32 %v6244, 4294901760
      %6246 = vmatprep.subr.mxu0 %v6245
      %v6247 = vand.u32 %v768, 4294901760
      %v6248 = vsub.f32 %v768, %v6247
      %v6249 = vand.u32 %v6248, 4294901760
      %6250 = vmatpush1.msra.mxu0 %v6249
      %v6251 = vand.u32 %v774, 4294901760
      %v6252 = vsub.f32 %v774, %v6251
      %v6253 = vand.u32 %v6252, 4294901760
      %6254 = vmatprep.subr.mxu0 %v6253
      %v6255 = vand.u32 %v773, 4294901760
      %v6256 = vsub.f32 %v773, %v6255
      %v6257 = vand.u32 %v6256, 4294901760
      %6258 = vmatpush1.msra.mxu0 %v6257
      %v6259 = vand.u32 %v779, 4294901760
      %v6260 = vsub.f32 %v779, %v6259
      %v6261 = vand.u32 %v6260, 4294901760
      %6262 = vmatprep.subr.mxu0 %v6261
      %v6263 = vand.u32 %v778, 4294901760
      %v6264 = vsub.f32 %v778, %v6263
      %v6265 = vand.u32 %v6264, 4294901760
      %6266 = vmatpush1.msra.mxu0 %v6265
      %v6267 = vand.u32 %v784, 4294901760
      %v6268 = vsub.f32 %v784, %v6267
      %v6269 = vand.u32 %v6268, 4294901760
      %6270 = vmatprep.subr.mxu0 %v6269
      %v6271 = vand.u32 %v783, 4294901760
      %v6272 = vsub.f32 %v783, %v6271
      %v6273 = vand.u32 %v6272, 4294901760
      %6274 = vmatpush1.msra.mxu0 %v6273
      %v6275 = vand.u32 %v789, 4294901760
      %v6276 = vsub.f32 %v789, %v6275
      %v6277 = vand.u32 %v6276, 4294901760
      %6278 = vmatprep.subr.mxu0 %v6277
      %v6279 = vand.u32 %v788, 4294901760
      %v6280 = vsub.f32 %v788, %v6279
      %v6281 = vand.u32 %v6280, 4294901760
      %6282 = vmatpush1.msra.mxu0 %v6281
      %6283 = vmatprep.subr.mxu0 0.0
      %6284 = vmatpush1.msra.mxu0 0.0
      %6285 = vmatprep.subr.mxu0 0.0
      %6286 = vmatpush1.msra.mxu0 0.0
      %6287 = vmatprep.subr.mxu0 0.0
      %6288 = vmatpush1.msra.mxu0 0.0
      %6289 = vmatprep.subr.mxu0 0.0
      %6290 = vmatpush1.msra.mxu0 0.0
      %6291 = vmatprep.subr.mxu0 0.0
      %6292 = vmatpush1.msra.mxu0 0.0
      %6293 = vmatprep.subr.mxu0 0.0
      %6294 = vmatpush1.msra.mxu0 0.0
      %6295 = vmatprep.subr.mxu0 0.0
      %6296 = vmatpush1.msra.mxu0 0.0
      %6297 = vmatprep.subr.mxu0 0.0
      %6298 = vmatpush1.msra.mxu0 0.0
      %6299 = vmatprep.subr.mxu0 0.0
      %6300 = vmatpush1.msra.mxu0 0.0
      %6301 = vmatprep.subr.mxu0 0.0
      %6302 = vmatpush1.msra.mxu0 0.0
      %6303 = vmatprep.subr.mxu0 0.0
      %6304 = vmatpush1.msra.mxu0 0.0
      %6305 = vmatprep.subr.mxu0 0.0
      %6306 = vmatpush1.msra.mxu0 0.0
      %6307 = vmatprep.subr.mxu0 0.0
      %6308 = vmatpush1.msra.mxu0 0.0
      %6309 = vmatprep.subr.mxu0 0.0
      %6310 = vmatpush1.msra.mxu0 0.0
      %6311 = vmatprep.subr.mxu0 0.0
      %6312 = vmatpush1.msra.mxu0 0.0
      %6313 = vmatprep.subr.mxu0 0.0
      %6314 = vmatpush1.msra.mxu0 0.0
      %6315 = vmatprep.mubr.f32.mxu0 0.0
      %v6316 = vand.u32 %v243, 4294901760
      %6317 = vmatmul.mubr.f32.gmra.mrb[0].mxu0 %v6316
      %v6318 = vpop.f32.mrb[0].mxu0
      %v6319 = vadd.f32 %v6088, %v6318
      %v6320 = vpop.f32.mrb[0].mxu0
      %v6321 = vadd.f32 %v6090, %v6320
      %6322 = vmatprep.mubr.f32.mxu0 0.0
      %v6323 = vand.u32 %v244, 4294901760
      %6324 = vmatmul.mubr.f32.gmra.mrb[0].mxu0 %v6323
      %v6325 = vpop.f32.mrb[0].mxu0
      %v6326 = vadd.f32 %v6097, %v6325
      %v6327 = vpop.f32.mrb[0].mxu0
      %v6328 = vadd.f32 %v6099, %v6327
      %6329 = vmatprep.mubr.f32.mxu0 0.0
      %v6330 = vand.u32 %v245, 4294901760
      %6331 = vmatmul.mubr.f32.gmra.mrb[0].mxu0 %v6330
      %v6332 = vpop.f32.mrb[0].mxu0
      %v6333 = vadd.f32 %v6106, %v6332
      %v6334 = vpop.f32.mrb[0].mxu0
      %v6335 = vadd.f32 %v6108, %v6334
      %6336 = vmatprep.mubr.f32.mxu0 0.0
      %v6337 = vand.u32 %v246, 4294901760
      %6338 = vmatmul.mubr.f32.gmra.mrb[0].mxu0 %v6337
      %v6339 = vpop.f32.mrb[0].mxu0
      %v6340 = vadd.f32 %v6115, %v6339
      %v6341 = vpop.f32.mrb[0].mxu0
      %v6342 = vadd.f32 %v6117, %v6341
      %6343 = vmatprep.mubr.f32.mxu0 0.0
      %v6344 = vand.u32 %v247, 4294901760
      %6345 = vmatmul.mubr.f32.gmra.mrb[0].mxu0 %v6344
      %v6346 = vpop.f32.mrb[0].mxu0
      %v6347 = vadd.f32 %v6124, %v6346
      %v6348 = vpop.f32.mrb[0].mxu0
      %v6349 = vadd.f32 %v6126, %v6348
      %6350 = vmatprep.mubr.f32.mxu0 0.0
      %v6351 = vand.u32 %v248, 4294901760
      %6352 = vmatmul.mubr.f32.gmra.mrb[0].mxu0 %v6351
      %v6353 = vpop.f32.mrb[0].mxu0
      %v6354 = vadd.f32 %v6133, %v6353
      %v6355 = vpop.f32.mrb[0].mxu0
      %v6356 = vadd.f32 %v6135, %v6355
      %6357 = vmatprep.mubr.f32.mxu0 0.0
      %v6358 = vand.u32 %v249, 4294901760
      %6359 = vmatmul.mubr.f32.gmra.mrb[0].mxu0 %v6358
      %v6360 = vpop.f32.mrb[0].mxu0
      %v6361 = vadd.f32 %v6142, %v6360
      %v6362 = vpop.f32.mrb[0].mxu0
      %v6363 = vadd.f32 %v6144, %v6362
      %6364 = vmatprep.mubr.f32.mxu0 0.0
      %v6365 = vand.u32 %v250, 4294901760
      %6366 = vmatmul.mubr.f32.gmra.mrb[0].mxu0 %v6365
      %v6367 = vpop.f32.mrb[0].mxu0
      %v6368 = vadd.f32 %v6151, %v6367
      %v6369 = vpop.f32.mrb[0].mxu0
      %v6370 = vadd.f32 %v6153, %v6369
      %6371 = vdwg.mxu0
      %v6372 = vand.u32 %v714, 4294901760
      %6373 = vmatprep.subr.mxu0 %v6372
      %v6374 = vand.u32 %v713, 4294901760
      %6375 = vmatpush1.msra.mxu0 %v6374
      %v6376 = vand.u32 %v719, 4294901760
      %6377 = vmatprep.subr.mxu0 %v6376
      %v6378 = vand.u32 %v718, 4294901760
      %6379 = vmatpush1.msra.mxu0 %v6378
      %v6380 = vand.u32 %v724, 4294901760
      %6381 = vmatprep.subr.mxu0 %v6380
      %v6382 = vand.u32 %v723, 4294901760
      %6383 = vmatpush1.msra.mxu0 %v6382
      %v6384 = vand.u32 %v729, 4294901760
      %6385 = vmatprep.subr.mxu0 %v6384
      %v6386 = vand.u32 %v728, 4294901760
      %6387 = vmatpush1.msra.mxu0 %v6386
      %v6388 = vand.u32 %v734, 4294901760
      %6389 = vmatprep.subr.mxu0 %v6388
      %v6390 = vand.u32 %v733, 4294901760
      %6391 = vmatpush1.msra.mxu0 %v6390
      %v6392 = vand.u32 %v739, 4294901760
      %6393 = vmatprep.subr.mxu0 %v6392
      %v6394 = vand.u32 %v738, 4294901760
      %6395 = vmatpush1.msra.mxu0 %v6394
      %v6396 = vand.u32 %v744, 4294901760
      %6397 = vmatprep.subr.mxu0 %v6396
      %v6398 = vand.u32 %v743, 4294901760
      %6399 = vmatpush1.msra.mxu0 %v6398
      %v6400 = vand.u32 %v749, 4294901760
      %6401 = vmatprep.subr.mxu0 %v6400
      %v6402 = vand.u32 %v748, 4294901760
      %6403 = vmatpush1.msra.mxu0 %v6402
      %v6404 = vand.u32 %v754, 4294901760
      %6405 = vmatprep.subr.mxu0 %v6404
      %v6406 = vand.u32 %v753, 4294901760
      %6407 = vmatpush1.msra.mxu0 %v6406
      %v6408 = vand.u32 %v759, 4294901760
      %6409 = vmatprep.subr.mxu0 %v6408
      %v6410 = vand.u32 %v758, 4294901760
      %6411 = vmatpush1.msra.mxu0 %v6410
      %v6412 = vand.u32 %v764, 4294901760
      %6413 = vmatprep.subr.mxu0 %v6412
      %v6414 = vand.u32 %v763, 4294901760
      %6415 = vmatpush1.msra.mxu0 %v6414
      %v6416 = vand.u32 %v769, 4294901760
      %6417 = vmatprep.subr.mxu0 %v6416
      %v6418 = vand.u32 %v768, 4294901760
      %6419 = vmatpush1.msra.mxu0 %v6418
      %v6420 = vand.u32 %v774, 4294901760
      %6421 = vmatprep.subr.mxu0 %v6420
      %v6422 = vand.u32 %v773, 4294901760
      %6423 = vmatpush1.msra.mxu0 %v6422
      %v6424 = vand.u32 %v779, 4294901760
      %6425 = vmatprep.subr.mxu0 %v6424
      %v6426 = vand.u32 %v778, 4294901760
      %6427 = vmatpush1.msra.mxu0 %v6426
      %v6428 = vand.u32 %v784, 4294901760
      %6429 = vmatprep.subr.mxu0 %v6428
      %v6430 = vand.u32 %v783, 4294901760
      %6431 = vmatpush1.msra.mxu0 %v6430
      %v6432 = vand.u32 %v789, 4294901760
      %6433 = vmatprep.subr.mxu0 %v6432
      %v6434 = vand.u32 %v788, 4294901760
      %6435 = vmatpush1.msra.mxu0 %v6434
      %6436 = vmatprep.subr.mxu0 0.0
      %6437 = vmatpush1.msra.mxu0 0.0
      %6438 = vmatprep.subr.mxu0 0.0
      %6439 = vmatpush1.msra.mxu0 0.0
      %6440 = vmatprep.subr.mxu0 0.0
      %6441 = vmatpush1.msra.mxu0 0.0
      %6442 = vmatprep.subr.mxu0 0.0
      %6443 = vmatpush1.msra.mxu0 0.0
      %6444 = vmatprep.subr.mxu0 0.0
      %6445 = vmatpush1.msra.mxu0 0.0
      %6446 = vmatprep.subr.mxu0 0.0
      %6447 = vmatpush1.msra.mxu0 0.0
      %6448 = vmatprep.subr.mxu0 0.0
      %6449 = vmatpush1.msra.mxu0 0.0
      %6450 = vmatprep.subr.mxu0 0.0
      %6451 = vmatpush1.msra.mxu0 0.0
      %6452 = vmatprep.subr.mxu0 0.0
      %6453 = vmatpush1.msra.mxu0 0.0
      %6454 = vmatprep.subr.mxu0 0.0
      %6455 = vmatpush1.msra.mxu0 0.0
      %6456 = vmatprep.subr.mxu0 0.0
      %6457 = vmatpush1.msra.mxu0 0.0
      %6458 = vmatprep.subr.mxu0 0.0
      %6459 = vmatpush1.msra.mxu0 0.0
      %6460 = vmatprep.subr.mxu0 0.0
      %6461 = vmatpush1.msra.mxu0 0.0
      %6462 = vmatprep.subr.mxu0 0.0
      %6463 = vmatpush1.msra.mxu0 0.0
      %6464 = vmatprep.subr.mxu0 0.0
      %6465 = vmatpush1.msra.mxu0 0.0
      %6466 = vmatprep.subr.mxu0 0.0
      %6467 = vmatpush1.msra.mxu0 0.0
      %6468 = vmatprep.mubr.f32.mxu0 0.0
      %v6469 = vand.u32 %v243, 4294901760
      %6470 = vmatmul.mubr.f32.gmra.mrb[0].mxu0 %v6469
      %v6471 = vpop.f32.mrb[0].mxu0
      %v6472 = vadd.f32 %v6319, %v6471
      %v6473 = vpop.f32.mrb[0].mxu0
      %v6474 = vadd.f32 %v6321, %v6473
      %6475 = vmatprep.mubr.f32.mxu0 0.0
      %v6476 = vand.u32 %v244, 4294901760
      %6477 = vmatmul.mubr.f32.gmra.mrb[0].mxu0 %v6476
      %v6478 = vpop.f32.mrb[0].mxu0
      %v6479 = vadd.f32 %v6326, %v6478
      %v6480 = vpop.f32.mrb[0].mxu0
      %v6481 = vadd.f32 %v6328, %v6480
      %6482 = vmatprep.mubr.f32.mxu0 0.0
      %v6483 = vand.u32 %v245, 4294901760
      %6484 = vmatmul.mubr.f32.gmra.mrb[0].mxu0 %v6483
      %v6485 = vpop.f32.mrb[0].mxu0
      %v6486 = vadd.f32 %v6333, %v6485
      %v6487 = vpop.f32.mrb[0].mxu0
      %v6488 = vadd.f32 %v6335, %v6487
      %6489 = vmatprep.mubr.f32.mxu0 0.0
      %v6490 = vand.u32 %v246, 4294901760
      %6491 = vmatmul.mubr.f32.gmra.mrb[0].mxu0 %v6490
      %v6492 = vpop.f32.mrb[0].mxu0
      %v6493 = vadd.f32 %v6340, %v6492
      %v6494 = vpop.f32.mrb[0].mxu0
      %v6495 = vadd.f32 %v6342, %v6494
      %6496 = vmatprep.mubr.f32.mxu0 0.0
      %v6497 = vand.u32 %v247, 4294901760
      %6498 = vmatmul.mubr.f32.gmra.mrb[0].mxu0 %v6497
      %v6499 = vpop.f32.mrb[0].mxu0
      %v6500 = vadd.f32 %v6347, %v6499
      %v6501 = vpop.f32.mrb[0].mxu0
      %v6502 = vadd.f32 %v6349, %v6501
      %6503 = vmatprep.mubr.f32.mxu0 0.0
      %v6504 = vand.u32 %v248, 4294901760
      %6505 = vmatmul.mubr.f32.gmra.mrb[0].mxu0 %v6504
      %v6506 = vpop.f32.mrb[0].mxu0
      %v6507 = vadd.f32 %v6354, %v6506
      %v6508 = vpop.f32.mrb[0].mxu0
      %v6509 = vadd.f32 %v6356, %v6508
      %6510 = vmatprep.mubr.f32.mxu0 0.0
      %v6511 = vand.u32 %v249, 4294901760
      %6512 = vmatmul.mubr.f32.gmra.mrb[0].mxu0 %v6511
      %v6513 = vpop.f32.mrb[0].mxu0
      %v6514 = vadd.f32 %v6361, %v6513
      %v6515 = vpop.f32.mrb[0].mxu0
      %v6516 = vadd.f32 %v6363, %v6515
      %6517 = vmatprep.mubr.f32.mxu0 0.0
      %v6518 = vand.u32 %v250, 4294901760
      %6519 = vmatmul.mubr.f32.gmra.mrb[0].mxu0 %v6518
      %v6520 = vpop.f32.mrb[0].mxu0
      %v6521 = vadd.f32 %v6368, %v6520
      %v6522 = vpop.f32.mrb[0].mxu0
      %v6523 = vadd.f32 %v6370, %v6522
      %6524 = vdwg.mxu0
      %6525 = vmatprep.subr.mxu0 0.0
      %v6526 = vand.u32 %v715, 4294901760
      %6527 = vmatpush1.msra.mxu0 %v6526
      %6528 = vmatprep.subr.mxu0 0.0
      %v6529 = vand.u32 %v720, 4294901760
      %6530 = vmatpush1.msra.mxu0 %v6529
      %6531 = vmatprep.subr.mxu0 0.0
      %v6532 = vand.u32 %v725, 4294901760
      %6533 = vmatpush1.msra.mxu0 %v6532
      %6534 = vmatprep.subr.mxu0 0.0
      %v6535 = vand.u32 %v730, 4294901760
      %6536 = vmatpush1.msra.mxu0 %v6535
      %6537 = vmatprep.subr.mxu0 0.0
      %v6538 = vand.u32 %v735, 4294901760
      %6539 = vmatpush1.msra.mxu0 %v6538
      %6540 = vmatprep.subr.mxu0 0.0
      %v6541 = vand.u32 %v740, 4294901760
      %6542 = vmatpush1.msra.mxu0 %v6541
      %6543 = vmatprep.subr.mxu0 0.0
      %v6544 = vand.u32 %v745, 4294901760
      %6545 = vmatpush1.msra.mxu0 %v6544
      %6546 = vmatprep.subr.mxu0 0.0
      %v6547 = vand.u32 %v750, 4294901760
      %6548 = vmatpush1.msra.mxu0 %v6547
      %6549 = vmatprep.subr.mxu0 0.0
      %v6550 = vand.u32 %v755, 4294901760
      %6551 = vmatpush1.msra.mxu0 %v6550
      %6552 = vmatprep.subr.mxu0 0.0
      %v6553 = vand.u32 %v760, 4294901760
      %6554 = vmatpush1.msra.mxu0 %v6553
      %6555 = vmatprep.subr.mxu0 0.0
      %v6556 = vand.u32 %v765, 4294901760
      %6557 = vmatpush1.msra.mxu0 %v6556
      %6558 = vmatprep.subr.mxu0 0.0
      %v6559 = vand.u32 %v770, 4294901760
      %6560 = vmatpush1.msra.mxu0 %v6559
      %6561 = vmatprep.subr.mxu0 0.0
      %v6562 = vand.u32 %v775, 4294901760
      %6563 = vmatpush1.msra.mxu0 %v6562
      %6564 = vmatprep.subr.mxu0 0.0
      %v6565 = vand.u32 %v780, 4294901760
      %6566 = vmatpush1.msra.mxu0 %v6565
      %6567 = vmatprep.subr.mxu0 0.0
      %v6568 = vand.u32 %v785, 4294901760
      %6569 = vmatpush1.msra.mxu0 %v6568
      %6570 = vmatprep.subr.mxu0 0.0
      %v6571 = vand.u32 %v790, 4294901760
      %6572 = vmatpush1.msra.mxu0 %v6571
      %6573 = vmatprep.subr.mxu0 0.0
      %6574 = vmatpush1.msra.mxu0 0.0
      %6575 = vmatprep.subr.mxu0 0.0
      %6576 = vmatpush1.msra.mxu0 0.0
      %6577 = vmatprep.subr.mxu0 0.0
      %6578 = vmatpush1.msra.mxu0 0.0
      %6579 = vmatprep.subr.mxu0 0.0
      %6580 = vmatpush1.msra.mxu0 0.0
      %6581 = vmatprep.subr.mxu0 0.0
      %6582 = vmatpush1.msra.mxu0 0.0
      %6583 = vmatprep.subr.mxu0 0.0
      %6584 = vmatpush1.msra.mxu0 0.0
      %6585 = vmatprep.subr.mxu0 0.0
      %6586 = vmatpush1.msra.mxu0 0.0
      %6587 = vmatprep.subr.mxu0 0.0
      %6588 = vmatpush1.msra.mxu0 0.0
      %6589 = vmatprep.subr.mxu0 0.0
      %6590 = vmatpush1.msra.mxu0 0.0
      %6591 = vmatprep.subr.mxu0 0.0
      %6592 = vmatpush1.msra.mxu0 0.0
      %6593 = vmatprep.subr.mxu0 0.0
      %6594 = vmatpush1.msra.mxu0 0.0
      %6595 = vmatprep.subr.mxu0 0.0
      %6596 = vmatpush1.msra.mxu0 0.0
      %6597 = vmatprep.subr.mxu0 0.0
      %6598 = vmatpush1.msra.mxu0 0.0
      %6599 = vmatprep.subr.mxu0 0.0
      %6600 = vmatpush1.msra.mxu0 0.0
      %6601 = vmatprep.subr.mxu0 0.0
      %6602 = vmatpush1.msra.mxu0 0.0
      %6603 = vmatprep.subr.mxu0 0.0
      %6604 = vmatpush1.msra.mxu0 0.0
      %6605 = vmatprep.mubr.f32.mxu0 0.0
      %v6606 = vand.u32 %v243, 4294901760
      %v6607 = vsub.f32 %v243, %v6606
      %v6608 = vand.u32 %v6607, 4294901760
      %v6609 = vsub.f32 %v6607, %v6608
      %v6610 = vand.u32 %v6609, 4294901760
      %6611 = vmatmul.mubr.f32.gmra.mrb[0].mxu0 %v6610
      %v6612 = vpop.f32.mrb[0].mxu0
      %v6613 = vadd.f32 0.0, %v6612
      %v6614 = vpop.f32.mrb[0].mxu0
      %6615 = vmatprep.mubr.f32.mxu0 0.0
      %v6616 = vand.u32 %v244, 4294901760
      %v6617 = vsub.f32 %v244, %v6616
      %v6618 = vand.u32 %v6617, 4294901760
      %v6619 = vsub.f32 %v6617, %v6618
      %v6620 = vand.u32 %v6619, 4294901760
      %6621 = vmatmul.mubr.f32.gmra.mrb[0].mxu0 %v6620
      %v6622 = vpop.f32.mrb[0].mxu0
      %v6623 = vadd.f32 0.0, %v6622
      %v6624 = vpop.f32.mrb[0].mxu0
      %6625 = vmatprep.mubr.f32.mxu0 0.0
      %v6626 = vand.u32 %v245, 4294901760
      %v6627 = vsub.f32 %v245, %v6626
      %v6628 = vand.u32 %v6627, 4294901760
      %v6629 = vsub.f32 %v6627, %v6628
      %v6630 = vand.u32 %v6629, 4294901760
      %6631 = vmatmul.mubr.f32.gmra.mrb[0].mxu0 %v6630
      %v6632 = vpop.f32.mrb[0].mxu0
      %v6633 = vadd.f32 0.0, %v6632
      %v6634 = vpop.f32.mrb[0].mxu0
      %6635 = vmatprep.mubr.f32.mxu0 0.0
      %v6636 = vand.u32 %v246, 4294901760
      %v6637 = vsub.f32 %v246, %v6636
      %v6638 = vand.u32 %v6637, 4294901760
      %v6639 = vsub.f32 %v6637, %v6638
      %v6640 = vand.u32 %v6639, 4294901760
      %6641 = vmatmul.mubr.f32.gmra.mrb[0].mxu0 %v6640
      %v6642 = vpop.f32.mrb[0].mxu0
      %v6643 = vadd.f32 0.0, %v6642
      %v6644 = vpop.f32.mrb[0].mxu0
      %6645 = vmatprep.mubr.f32.mxu0 0.0
      %v6646 = vand.u32 %v247, 4294901760
      %v6647 = vsub.f32 %v247, %v6646
      %v6648 = vand.u32 %v6647, 4294901760
      %v6649 = vsub.f32 %v6647, %v6648
      %v6650 = vand.u32 %v6649, 4294901760
      %6651 = vmatmul.mubr.f32.gmra.mrb[0].mxu0 %v6650
      %v6652 = vpop.f32.mrb[0].mxu0
      %v6653 = vadd.f32 0.0, %v6652
      %v6654 = vpop.f32.mrb[0].mxu0
      %6655 = vmatprep.mubr.f32.mxu0 0.0
      %v6656 = vand.u32 %v248, 4294901760
      %v6657 = vsub.f32 %v248, %v6656
      %v6658 = vand.u32 %v6657, 4294901760
      %v6659 = vsub.f32 %v6657, %v6658
      %v6660 = vand.u32 %v6659, 4294901760
      %6661 = vmatmul.mubr.f32.gmra.mrb[0].mxu0 %v6660
      %v6662 = vpop.f32.mrb[0].mxu0
      %v6663 = vadd.f32 0.0, %v6662
      %v6664 = vpop.f32.mrb[0].mxu0
      %6665 = vmatprep.mubr.f32.mxu0 0.0
      %v6666 = vand.u32 %v249, 4294901760
      %v6667 = vsub.f32 %v249, %v6666
      %v6668 = vand.u32 %v6667, 4294901760
      %v6669 = vsub.f32 %v6667, %v6668
      %v6670 = vand.u32 %v6669, 4294901760
      %6671 = vmatmul.mubr.f32.gmra.mrb[0].mxu0 %v6670
      %v6672 = vpop.f32.mrb[0].mxu0
      %v6673 = vadd.f32 0.0, %v6672
      %v6674 = vpop.f32.mrb[0].mxu0
      %6675 = vmatprep.mubr.f32.mxu0 0.0
      %v6676 = vand.u32 %v250, 4294901760
      %v6677 = vsub.f32 %v250, %v6676
      %v6678 = vand.u32 %v6677, 4294901760
      %v6679 = vsub.f32 %v6677, %v6678
      %v6680 = vand.u32 %v6679, 4294901760
      %6681 = vmatmul.mubr.f32.gmra.mrb[0].mxu0 %v6680
      %v6682 = vpop.f32.mrb[0].mxu0
      %v6683 = vadd.f32 0.0, %v6682
      %v6684 = vpop.f32.mrb[0].mxu0
      %6685 = vdwg.mxu0
      %6686 = vmatprep.subr.mxu0 0.0
      %v6687 = vand.u32 %v715, 4294901760
      %v6688 = vsub.f32 %v715, %v6687
      %v6689 = vand.u32 %v6688, 4294901760
      %v6690 = vsub.f32 %v6688, %v6689
      %v6691 = vand.u32 %v6690, 4294901760
      %6692 = vmatpush1.msra.mxu0 %v6691
      %6693 = vmatprep.subr.mxu0 0.0
      %v6694 = vand.u32 %v720, 4294901760
      %v6695 = vsub.f32 %v720, %v6694
      %v6696 = vand.u32 %v6695, 4294901760
      %v6697 = vsub.f32 %v6695, %v6696
      %v6698 = vand.u32 %v6697, 4294901760
      %6699 = vmatpush1.msra.mxu0 %v6698
      %6700 = vmatprep.subr.mxu0 0.0
      %v6701 = vand.u32 %v725, 4294901760
      %v6702 = vsub.f32 %v725, %v6701
      %v6703 = vand.u32 %v6702, 4294901760
      %v6704 = vsub.f32 %v6702, %v6703
      %v6705 = vand.u32 %v6704, 4294901760
      %6706 = vmatpush1.msra.mxu0 %v6705
      %6707 = vmatprep.subr.mxu0 0.0
      %v6708 = vand.u32 %v730, 4294901760
      %v6709 = vsub.f32 %v730, %v6708
      %v6710 = vand.u32 %v6709, 4294901760
      %v6711 = vsub.f32 %v6709, %v6710
      %v6712 = vand.u32 %v6711, 4294901760
      %6713 = vmatpush1.msra.mxu0 %v6712
      %6714 = vmatprep.subr.mxu0 0.0
      %v6715 = vand.u32 %v735, 4294901760
      %v6716 = vsub.f32 %v735, %v6715
      %v6717 = vand.u32 %v6716, 4294901760
      %v6718 = vsub.f32 %v6716, %v6717
      %v6719 = vand.u32 %v6718, 4294901760
      %6720 = vmatpush1.msra.mxu0 %v6719
      %6721 = vmatprep.subr.mxu0 0.0
      %v6722 = vand.u32 %v740, 4294901760
      %v6723 = vsub.f32 %v740, %v6722
      %v6724 = vand.u32 %v6723, 4294901760
      %v6725 = vsub.f32 %v6723, %v6724
      %v6726 = vand.u32 %v6725, 4294901760
      %6727 = vmatpush1.msra.mxu0 %v6726
      %6728 = vmatprep.subr.mxu0 0.0
      %v6729 = vand.u32 %v745, 4294901760
      %v6730 = vsub.f32 %v745, %v6729
      %v6731 = vand.u32 %v6730, 4294901760
      %v6732 = vsub.f32 %v6730, %v6731
      %v6733 = vand.u32 %v6732, 4294901760
      %6734 = vmatpush1.msra.mxu0 %v6733
      %6735 = vmatprep.subr.mxu0 0.0
      %v6736 = vand.u32 %v750, 4294901760
      %v6737 = vsub.f32 %v750, %v6736
      %v6738 = vand.u32 %v6737, 4294901760
      %v6739 = vsub.f32 %v6737, %v6738
      %v6740 = vand.u32 %v6739, 4294901760
      %6741 = vmatpush1.msra.mxu0 %v6740
      %6742 = vmatprep.subr.mxu0 0.0
      %v6743 = vand.u32 %v755, 4294901760
      %v6744 = vsub.f32 %v755, %v6743
      %v6745 = vand.u32 %v6744, 4294901760
      %v6746 = vsub.f32 %v6744, %v6745
      %v6747 = vand.u32 %v6746, 4294901760
      %6748 = vmatpush1.msra.mxu0 %v6747
      %6749 = vmatprep.subr.mxu0 0.0
      %v6750 = vand.u32 %v760, 4294901760
      %v6751 = vsub.f32 %v760, %v6750
      %v6752 = vand.u32 %v6751, 4294901760
      %v6753 = vsub.f32 %v6751, %v6752
      %v6754 = vand.u32 %v6753, 4294901760
      %6755 = vmatpush1.msra.mxu0 %v6754
      %6756 = vmatprep.subr.mxu0 0.0
      %v6757 = vand.u32 %v765, 4294901760
      %v6758 = vsub.f32 %v765, %v6757
      %v6759 = vand.u32 %v6758, 4294901760
      %v6760 = vsub.f32 %v6758, %v6759
      %v6761 = vand.u32 %v6760, 4294901760
      %6762 = vmatpush1.msra.mxu0 %v6761
      %6763 = vmatprep.subr.mxu0 0.0
      %v6764 = vand.u32 %v770, 4294901760
      %v6765 = vsub.f32 %v770, %v6764
      %v6766 = vand.u32 %v6765, 4294901760
      %v6767 = vsub.f32 %v6765, %v6766
      %v6768 = vand.u32 %v6767, 4294901760
      %6769 = vmatpush1.msra.mxu0 %v6768
      %6770 = vmatprep.subr.mxu0 0.0
      %v6771 = vand.u32 %v775, 4294901760
      %v6772 = vsub.f32 %v775, %v6771
      %v6773 = vand.u32 %v6772, 4294901760
      %v6774 = vsub.f32 %v6772, %v6773
      %v6775 = vand.u32 %v6774, 4294901760
      %6776 = vmatpush1.msra.mxu0 %v6775
      %6777 = vmatprep.subr.mxu0 0.0
      %v6778 = vand.u32 %v780, 4294901760
      %v6779 = vsub.f32 %v780, %v6778
      %v6780 = vand.u32 %v6779, 4294901760
      %v6781 = vsub.f32 %v6779, %v6780
      %v6782 = vand.u32 %v6781, 4294901760
      %6783 = vmatpush1.msra.mxu0 %v6782
      %6784 = vmatprep.subr.mxu0 0.0
      %v6785 = vand.u32 %v785, 4294901760
      %v6786 = vsub.f32 %v785, %v6785
      %v6787 = vand.u32 %v6786, 4294901760
      %v6788 = vsub.f32 %v6786, %v6787
      %v6789 = vand.u32 %v6788, 4294901760
      %6790 = vmatpush1.msra.mxu0 %v6789
      %6791 = vmatprep.subr.mxu0 0.0
      %v6792 = vand.u32 %v790, 4294901760
      %v6793 = vsub.f32 %v790, %v6792
      %v6794 = vand.u32 %v6793, 4294901760
      %v6795 = vsub.f32 %v6793, %v6794
      %v6796 = vand.u32 %v6795, 4294901760
      %6797 = vmatpush1.msra.mxu0 %v6796
      %6798 = vmatprep.subr.mxu0 0.0
      %6799 = vmatpush1.msra.mxu0 0.0
      %6800 = vmatprep.subr.mxu0 0.0
      %6801 = vmatpush1.msra.mxu0 0.0
      %6802 = vmatprep.subr.mxu0 0.0
      %6803 = vmatpush1.msra.mxu0 0.0
      %6804 = vmatprep.subr.mxu0 0.0
      %6805 = vmatpush1.msra.mxu0 0.0
      %6806 = vmatprep.subr.mxu0 0.0
      %6807 = vmatpush1.msra.mxu0 0.0
      %6808 = vmatprep.subr.mxu0 0.0
      %6809 = vmatpush1.msra.mxu0 0.0
      %6810 = vmatprep.subr.mxu0 0.0
      %6811 = vmatpush1.msra.mxu0 0.0
      %6812 = vmatprep.subr.mxu0 0.0
      %6813 = vmatpush1.msra.mxu0 0.0
      %6814 = vmatprep.subr.mxu0 0.0
      %6815 = vmatpush1.msra.mxu0 0.0
      %6816 = vmatprep.subr.mxu0 0.0
      %6817 = vmatpush1.msra.mxu0 0.0
      %6818 = vmatprep.subr.mxu0 0.0
      %6819 = vmatpush1.msra.mxu0 0.0
      %6820 = vmatprep.subr.mxu0 0.0
      %6821 = vmatpush1.msra.mxu0 0.0
      %6822 = vmatprep.subr.mxu0 0.0
      %6823 = vmatpush1.msra.mxu0 0.0
      %6824 = vmatprep.subr.mxu0 0.0
      %6825 = vmatpush1.msra.mxu0 0.0
      %6826 = vmatprep.subr.mxu0 0.0
      %6827 = vmatpush1.msra.mxu0 0.0
      %6828 = vmatprep.subr.mxu0 0.0
      %6829 = vmatpush1.msra.mxu0 0.0
      %6830 = vmatprep.mubr.f32.mxu0 0.0
      %v6831 = vand.u32 %v243, 4294901760
      %6832 = vmatmul.mubr.f32.gmra.mrb[0].mxu0 %v6831
      %v6833 = vpop.f32.mrb[0].mxu0
      %v6834 = vadd.f32 %v6613, %v6833
      %v6835 = vpop.f32.mrb[0].mxu0
      %6836 = vmatprep.mubr.f32.mxu0 0.0
      %v6837 = vand.u32 %v244, 4294901760
      %6838 = vmatmul.mubr.f32.gmra.mrb[0].mxu0 %v6837
      %v6839 = vpop.f32.mrb[0].mxu0
      %v6840 = vadd.f32 %v6623, %v6839
      %v6841 = vpop.f32.mrb[0].mxu0
      %6842 = vmatprep.mubr.f32.mxu0 0.0
      %v6843 = vand.u32 %v245, 4294901760
      %6844 = vmatmul.mubr.f32.gmra.mrb[0].mxu0 %v6843
      %v6845 = vpop.f32.mrb[0].mxu0
      %v6846 = vadd.f32 %v6633, %v6845
      %v6847 = vpop.f32.mrb[0].mxu0
      %6848 = vmatprep.mubr.f32.mxu0 0.0
      %v6849 = vand.u32 %v246, 4294901760
      %6850 = vmatmul.mubr.f32.gmra.mrb[0].mxu0 %v6849
      %v6851 = vpop.f32.mrb[0].mxu0
      %v6852 = vadd.f32 %v6643, %v6851
      %v6853 = vpop.f32.mrb[0].mxu0
      %6854 = vmatprep.mubr.f32.mxu0 0.0
      %v6855 = vand.u32 %v247, 4294901760
      %6856 = vmatmul.mubr.f32.gmra.mrb[0].mxu0 %v6855
      %v6857 = vpop.f32.mrb[0].mxu0
      %v6858 = vadd.f32 %v6653, %v6857
      %v6859 = vpop.f32.mrb[0].mxu0
      %6860 = vmatprep.mubr.f32.mxu0 0.0
      %v6861 = vand.u32 %v248, 4294901760
      %6862 = vmatmul.mubr.f32.gmra.mrb[0].mxu0 %v6861
      %v6863 = vpop.f32.mrb[0].mxu0
      %v6864 = vadd.f32 %v6663, %v6863
      %v6865 = vpop.f32.mrb[0].mxu0
      %6866 = vmatprep.mubr.f32.mxu0 0.0
      %v6867 = vand.u32 %v249, 4294901760
      %6868 = vmatmul.mubr.f32.gmra.mrb[0].mxu0 %v6867
      %v6869 = vpop.f32.mrb[0].mxu0
      %v6870 = vadd.f32 %v6673, %v6869
      %v6871 = vpop.f32.mrb[0].mxu0
      %6872 = vmatprep.mubr.f32.mxu0 0.0
      %v6873 = vand.u32 %v250, 4294901760
      %6874 = vmatmul.mubr.f32.gmra.mrb[0].mxu0 %v6873
      %v6875 = vpop.f32.mrb[0].mxu0
      %v6876 = vadd.f32 %v6683, %v6875
      %v6877 = vpop.f32.mrb[0].mxu0
      %6878 = vdwg.mxu0
      %6879 = vmatprep.subr.mxu0 0.0
      %v6880 = vand.u32 %v715, 4294901760
      %v6881 = vsub.f32 %v715, %v6880
      %6882 = vmatpush1.msra.mxu0 %v6881
      %6883 = vmatprep.subr.mxu0 0.0
      %v6884 = vand.u32 %v720, 4294901760
      %v6885 = vsub.f32 %v720, %v6884
      %6886 = vmatpush1.msra.mxu0 %v6885
      %6887 = vmatprep.subr.mxu0 0.0
      %v6888 = vand.u32 %v725, 4294901760
      %v6889 = vsub.f32 %v725, %v6888
      %6890 = vmatpush1.msra.mxu0 %v6889
      %6891 = vmatprep.subr.mxu0 0.0
      %v6892 = vand.u32 %v730, 4294901760
      %v6893 = vsub.f32 %v730, %v6892
      %6894 = vmatpush1.msra.mxu0 %v6893
      %6895 = vmatprep.subr.mxu0 0.0
      %v6896 = vand.u32 %v735, 4294901760
      %v6897 = vsub.f32 %v735, %v6896
      %6898 = vmatpush1.msra.mxu0 %v6897
      %6899 = vmatprep.subr.mxu0 0.0
      %v6900 = vand.u32 %v740, 4294901760
      %v6901 = vsub.f32 %v740, %v6900
      %6902 = vmatpush1.msra.mxu0 %v6901
      %6903 = vmatprep.subr.mxu0 0.0
      %v6904 = vand.u32 %v745, 4294901760
      %v6905 = vsub.f32 %v745, %v6904
      %6906 = vmatpush1.msra.mxu0 %v6905
      %6907 = vmatprep.subr.mxu0 0.0
      %v6908 = vand.u32 %v750, 4294901760
      %v6909 = vsub.f32 %v750, %v6908
      %6910 = vmatpush1.msra.mxu0 %v6909
      %6911 = vmatprep.subr.mxu0 0.0
      %v6912 = vand.u32 %v755, 4294901760
      %v6913 = vsub.f32 %v755, %v6912
      %6914 = vmatpush1.msra.mxu0 %v6913
      %6915 = vmatprep.subr.mxu0 0.0
      %v6916 = vand.u32 %v760, 4294901760
      %v6917 = vsub.f32 %v760, %v6916
      %6918 = vmatpush1.msra.mxu0 %v6917
      %6919 = vmatprep.subr.mxu0 0.0
      %v6920 = vand.u32 %v765, 4294901760
      %v6921 = vsub.f32 %v765, %v6920
      %6922 = vmatpush1.msra.mxu0 %v6921
      %6923 = vmatprep.subr.mxu0 0.0
      %v6924 = vand.u32 %v770, 4294901760
      %v6925 = vsub.f32 %v770, %v6924
      %6926 = vmatpush1.msra.mxu0 %v6925
      %6927 = vmatprep.subr.mxu0 0.0
      %v6928 = vand.u32 %v775, 4294901760
      %v6929 = vsub.f32 %v775, %v6928
      %6930 = vmatpush1.msra.mxu0 %v6929
      %6931 = vmatprep.subr.mxu0 0.0
      %v6932 = vand.u32 %v780, 4294901760
      %v6933 = vsub.f32 %v780, %v6932
      %6934 = vmatpush1.msra.mxu0 %v6933
      %6935 = vmatprep.subr.mxu0 0.0
      %v6936 = vand.u32 %v785, 4294901760
      %v6937 = vsub.f32 %v785, %v6936
      %6938 = vmatpush1.msra.mxu0 %v6937
      %6939 = vmatprep.subr.mxu0 0.0
      %v6940 = vand.u32 %v790, 4294901760
      %v6941 = vsub.f32 %v790, %v6940
      %6942 = vmatpush1.msra.mxu0 %v6941
      %6943 = vmatprep.subr.mxu0 0.0
      %6944 = vmatpush1.msra.mxu0 0.0
      %6945 = vmatprep.subr.mxu0 0.0
      %6946 = vmatpush1.msra.mxu0 0.0
      %6947 = vmatprep.subr.mxu0 0.0
      %6948 = vmatpush1.msra.mxu0 0.0
      %6949 = vmatprep.subr.mxu0 0.0
      %6950 = vmatpush1.msra.mxu0 0.0
      %6951 = vmatprep.subr.mxu0 0.0
      %6952 = vmatpush1.msra.mxu0 0.0
      %6953 = vmatprep.subr.mxu0 0.0
      %6954 = vmatpush1.msra.mxu0 0.0
      %6955 = vmatprep.subr.mxu0 0.0
      %6956 = vmatpush1.msra.mxu0 0.0
      %6957 = vmatprep.subr.mxu0 0.0
      %6958 = vmatpush1.msra.mxu0 0.0
      %6959 = vmatprep.subr.mxu0 0.0
      %6960 = vmatpush1.msra.mxu0 0.0
      %6961 = vmatprep.subr.mxu0 0.0
      %6962 = vmatpush1.msra.mxu0 0.0
      %6963 = vmatprep.subr.mxu0 0.0
      %6964 = vmatpush1.msra.mxu0 0.0
      %6965 = vmatprep.subr.mxu0 0.0
      %6966 = vmatpush1.msra.mxu0 0.0
      %6967 = vmatprep.subr.mxu0 0.0
      %6968 = vmatpush1.msra.mxu0 0.0
      %6969 = vmatprep.subr.mxu0 0.0
      %6970 = vmatpush1.msra.mxu0 0.0
      %6971 = vmatprep.subr.mxu0 0.0
      %6972 = vmatpush1.msra.mxu0 0.0
      %6973 = vmatprep.subr.mxu0 0.0
      %6974 = vmatpush1.msra.mxu0 0.0
      %6975 = vmatprep.mubr.f32.mxu0 0.0
      %v6976 = vand.u32 %v243, 4294901760
      %v6977 = vsub.f32 %v243, %v6976
      %6978 = vmatmul.mubr.f32.gmra.mrb[0].mxu0 %v6977
      %v6979 = vpop.f32.mrb[0].mxu0
      %v6980 = vadd.f32 %v6834, %v6979
      %v6981 = vpop.f32.mrb[0].mxu0
      %6982 = vmatprep.mubr.f32.mxu0 0.0
      %v6983 = vand.u32 %v244, 4294901760
      %v6984 = vsub.f32 %v244, %v6983
      %6985 = vmatmul.mubr.f32.gmra.mrb[0].mxu0 %v6984
      %v6986 = vpop.f32.mrb[0].mxu0
      %v6987 = vadd.f32 %v6840, %v6986
      %v6988 = vpop.f32.mrb[0].mxu0
      %6989 = vmatprep.mubr.f32.mxu0 0.0
      %v6990 = vand.u32 %v245, 4294901760
      %v6991 = vsub.f32 %v245, %v6990
      %6992 = vmatmul.mubr.f32.gmra.mrb[0].mxu0 %v6991
      %v6993 = vpop.f32.mrb[0].mxu0
      %v6994 = vadd.f32 %v6846, %v6993
      %v6995 = vpop.f32.mrb[0].mxu0
      %6996 = vmatprep.mubr.f32.mxu0 0.0
      %v6997 = vand.u32 %v246, 4294901760
      %v6998 = vsub.f32 %v246, %v6997
      %6999 = vmatmul.mubr.f32.gmra.mrb[0].mxu0 %v6998
      %v7000 = vpop.f32.mrb[0].mxu0
      %v7001 = vadd.f32 %v6852, %v7000
      %v7002 = vpop.f32.mrb[0].mxu0
      %7003 = vmatprep.mubr.f32.mxu0 0.0
      %v7004 = vand.u32 %v247, 4294901760
      %v7005 = vsub.f32 %v247, %v7004
      %7006 = vmatmul.mubr.f32.gmra.mrb[0].mxu0 %v7005
      %v7007 = vpop.f32.mrb[0].mxu0
      %v7008 = vadd.f32 %v6858, %v7007
      %v7009 = vpop.f32.mrb[0].mxu0
      %7010 = vmatprep.mubr.f32.mxu0 0.0
      %v7011 = vand.u32 %v248, 4294901760
      %v7012 = vsub.f32 %v248, %v7011
      %7013 = vmatmul.mubr.f32.gmra.mrb[0].mxu0 %v7012
      %v7014 = vpop.f32.mrb[0].mxu0
      %v7015 = vadd.f32 %v6864, %v7014
      %v7016 = vpop.f32.mrb[0].mxu0
      %7017 = vmatprep.mubr.f32.mxu0 0.0
      %v7018 = vand.u32 %v249, 4294901760
      %v7019 = vsub.f32 %v249, %v7018
      %7020 = vmatmul.mubr.f32.gmra.mrb[0].mxu0 %v7019
      %v7021 = vpop.f32.mrb[0].mxu0
      %v7022 = vadd.f32 %v6870, %v7021
      %v7023 = vpop.f32.mrb[0].mxu0
      %7024 = vmatprep.mubr.f32.mxu0 0.0
      %v7025 = vand.u32 %v250, 4294901760
      %v7026 = vsub.f32 %v250, %v7025
      %7027 = vmatmul.mubr.f32.gmra.mrb[0].mxu0 %v7026
      %v7028 = vpop.f32.mrb[0].mxu0
      %v7029 = vadd.f32 %v6876, %v7028
      %v7030 = vpop.f32.mrb[0].mxu0
      %7031 = vdwg.mxu0
      %7032 = vmatprep.subr.mxu0 0.0
      %v7033 = vand.u32 %v715, 4294901760
      %7034 = vmatpush1.msra.mxu0 %v7033
      %7035 = vmatprep.subr.mxu0 0.0
      %v7036 = vand.u32 %v720, 4294901760
      %7037 = vmatpush1.msra.mxu0 %v7036
      %7038 = vmatprep.subr.mxu0 0.0
      %v7039 = vand.u32 %v725, 4294901760
      %7040 = vmatpush1.msra.mxu0 %v7039
      %7041 = vmatprep.subr.mxu0 0.0
      %v7042 = vand.u32 %v730, 4294901760
      %7043 = vmatpush1.msra.mxu0 %v7042
      %7044 = vmatprep.subr.mxu0 0.0
      %v7045 = vand.u32 %v735, 4294901760
      %7046 = vmatpush1.msra.mxu0 %v7045
      %7047 = vmatprep.subr.mxu0 0.0
      %v7048 = vand.u32 %v740, 4294901760
      %7049 = vmatpush1.msra.mxu0 %v7048
      %7050 = vmatprep.subr.mxu0 0.0
      %v7051 = vand.u32 %v745, 4294901760
      %7052 = vmatpush1.msra.mxu0 %v7051
      %7053 = vmatprep.subr.mxu0 0.0
      %v7054 = vand.u32 %v750, 4294901760
      %7055 = vmatpush1.msra.mxu0 %v7054
      %7056 = vmatprep.subr.mxu0 0.0
      %v7057 = vand.u32 %v755, 4294901760
      %7058 = vmatpush1.msra.mxu0 %v7057
      %7059 = vmatprep.subr.mxu0 0.0
      %v7060 = vand.u32 %v760, 4294901760
      %7061 = vmatpush1.msra.mxu0 %v7060
      %7062 = vmatprep.subr.mxu0 0.0
      %v7063 = vand.u32 %v765, 4294901760
      %7064 = vmatpush1.msra.mxu0 %v7063
      %7065 = vmatprep.subr.mxu0 0.0
      %v7066 = vand.u32 %v770, 4294901760
      %7067 = vmatpush1.msra.mxu0 %v7066
      %7068 = vmatprep.subr.mxu0 0.0
      %v7069 = vand.u32 %v775, 4294901760
      %7070 = vmatpush1.msra.mxu0 %v7069
      %7071 = vmatprep.subr.mxu0 0.0
      %v7072 = vand.u32 %v780, 4294901760
      %7073 = vmatpush1.msra.mxu0 %v7072
      %7074 = vmatprep.subr.mxu0 0.0
      %v7075 = vand.u32 %v785, 4294901760
      %7076 = vmatpush1.msra.mxu0 %v7075
      %7077 = vmatprep.subr.mxu0 0.0
      %v7078 = vand.u32 %v790, 4294901760
      %7079 = vmatpush1.msra.mxu0 %v7078
      %7080 = vmatprep.subr.mxu0 0.0
      %7081 = vmatpush1.msra.mxu0 0.0
      %7082 = vmatprep.subr.mxu0 0.0
      %7083 = vmatpush1.msra.mxu0 0.0
      %7084 = vmatprep.subr.mxu0 0.0
      %7085 = vmatpush1.msra.mxu0 0.0
      %7086 = vmatprep.subr.mxu0 0.0
      %7087 = vmatpush1.msra.mxu0 0.0
      %7088 = vmatprep.subr.mxu0 0.0
      %7089 = vmatpush1.msra.mxu0 0.0
      %7090 = vmatprep.subr.mxu0 0.0
      %7091 = vmatpush1.msra.mxu0 0.0
      %7092 = vmatprep.subr.mxu0 0.0
      %7093 = vmatpush1.msra.mxu0 0.0
      %7094 = vmatprep.subr.mxu0 0.0
      %7095 = vmatpush1.msra.mxu0 0.0
      %7096 = vmatprep.subr.mxu0 0.0
      %7097 = vmatpush1.msra.mxu0 0.0
      %7098 = vmatprep.subr.mxu0 0.0
      %7099 = vmatpush1.msra.mxu0 0.0
      %7100 = vmatprep.subr.mxu0 0.0
      %7101 = vmatpush1.msra.mxu0 0.0
      %7102 = vmatprep.subr.mxu0 0.0
      %7103 = vmatpush1.msra.mxu0 0.0
      %7104 = vmatprep.subr.mxu0 0.0
      %7105 = vmatpush1.msra.mxu0 0.0
      %7106 = vmatprep.subr.mxu0 0.0
      %7107 = vmatpush1.msra.mxu0 0.0
      %7108 = vmatprep.subr.mxu0 0.0
      %7109 = vmatpush1.msra.mxu0 0.0
      %7110 = vmatprep.subr.mxu0 0.0
      %7111 = vmatpush1.msra.mxu0 0.0
      %7112 = vmatprep.mubr.f32.mxu0 0.0
      %v7113 = vand.u32 %v243, 4294901760
      %v7114 = vsub.f32 %v243, %v7113
      %v7115 = vand.u32 %v7114, 4294901760
      %7116 = vmatmul.mubr.f32.gmra.mrb[0].mxu0 %v7115
      %v7117 = vpop.f32.mrb[0].mxu0
      %v7118 = vadd.f32 %v6980, %v7117
      %v7119 = vpop.f32.mrb[0].mxu0
      %7120 = vmatprep.mubr.f32.mxu0 0.0
      %v7121 = vand.u32 %v244, 4294901760
      %v7122 = vsub.f32 %v244, %v7121
      %v7123 = vand.u32 %v7122, 4294901760
      %7124 = vmatmul.mubr.f32.gmra.mrb[0].mxu0 %v7123
      %v7125 = vpop.f32.mrb[0].mxu0
      %v7126 = vadd.f32 %v6987, %v7125
      %v7127 = vpop.f32.mrb[0].mxu0
      %7128 = vmatprep.mubr.f32.mxu0 0.0
      %v7129 = vand.u32 %v245, 4294901760
      %v7130 = vsub.f32 %v245, %v7129
      %v7131 = vand.u32 %v7130, 4294901760
      %7132 = vmatmul.mubr.f32.gmra.mrb[0].mxu0 %v7131
      %v7133 = vpop.f32.mrb[0].mxu0
      %v7134 = vadd.f32 %v6994, %v7133
      %v7135 = vpop.f32.mrb[0].mxu0
      %7136 = vmatprep.mubr.f32.mxu0 0.0
      %v7137 = vand.u32 %v246, 4294901760
      %v7138 = vsub.f32 %v246, %v7137
      %v7139 = vand.u32 %v7138, 4294901760
      %7140 = vmatmul.mubr.f32.gmra.mrb[0].mxu0 %v7139
      %v7141 = vpop.f32.mrb[0].mxu0
      %v7142 = vadd.f32 %v7001, %v7141
      %v7143 = vpop.f32.mrb[0].mxu0
      %7144 = vmatprep.mubr.f32.mxu0 0.0
      %v7145 = vand.u32 %v247, 4294901760
      %v7146 = vsub.f32 %v247, %v7145
      %v7147 = vand.u32 %v7146, 4294901760
      %7148 = vmatmul.mubr.f32.gmra.mrb[0].mxu0 %v7147
      %v7149 = vpop.f32.mrb[0].mxu0
      %v7150 = vadd.f32 %v7008, %v7149
      %v7151 = vpop.f32.mrb[0].mxu0
      %7152 = vmatprep.mubr.f32.mxu0 0.0
      %v7153 = vand.u32 %v248, 4294901760
      %v7154 = vsub.f32 %v248, %v7153
      %v7155 = vand.u32 %v7154, 4294901760
      %7156 = vmatmul.mubr.f32.gmra.mrb[0].mxu0 %v7155
      %v7157 = vpop.f32.mrb[0].mxu0
      %v7158 = vadd.f32 %v7015, %v7157
      %v7159 = vpop.f32.mrb[0].mxu0
      %7160 = vmatprep.mubr.f32.mxu0 0.0
      %v7161 = vand.u32 %v249, 4294901760
      %v7162 = vsub.f32 %v249, %v7161
      %v7163 = vand.u32 %v7162, 4294901760
      %7164 = vmatmul.mubr.f32.gmra.mrb[0].mxu0 %v7163
      %v7165 = vpop.f32.mrb[0].mxu0
      %v7166 = vadd.f32 %v7022, %v7165
      %v7167 = vpop.f32.mrb[0].mxu0
      %7168 = vmatprep.mubr.f32.mxu0 0.0
      %v7169 = vand.u32 %v250, 4294901760
      %v7170 = vsub.f32 %v250, %v7169
      %v7171 = vand.u32 %v7170, 4294901760
      %7172 = vmatmul.mubr.f32.gmra.mrb[0].mxu0 %v7171
      %v7173 = vpop.f32.mrb[0].mxu0
      %v7174 = vadd.f32 %v7029, %v7173
      %v7175 = vpop.f32.mrb[0].mxu0
      %7176 = vdwg.mxu0
      %7177 = vmatprep.subr.mxu0 0.0
      %v7178 = vand.u32 %v715, 4294901760
      %v7179 = vsub.f32 %v715, %v7178
      %v7180 = vand.u32 %v7179, 4294901760
      %7181 = vmatpush1.msra.mxu0 %v7180
      %7182 = vmatprep.subr.mxu0 0.0
      %v7183 = vand.u32 %v720, 4294901760
      %v7184 = vsub.f32 %v720, %v7183
      %v7185 = vand.u32 %v7184, 4294901760
      %7186 = vmatpush1.msra.mxu0 %v7185
      %7187 = vmatprep.subr.mxu0 0.0
      %v7188 = vand.u32 %v725, 4294901760
      %v7189 = vsub.f32 %v725, %v7188
      %v7190 = vand.u32 %v7189, 4294901760
      %7191 = vmatpush1.msra.mxu0 %v7190
      %7192 = vmatprep.subr.mxu0 0.0
      %v7193 = vand.u32 %v730, 4294901760
      %v7194 = vsub.f32 %v730, %v7193
      %v7195 = vand.u32 %v7194, 4294901760
      %7196 = vmatpush1.msra.mxu0 %v7195
      %7197 = vmatprep.subr.mxu0 0.0
      %v7198 = vand.u32 %v735, 4294901760
      %v7199 = vsub.f32 %v735, %v7198
      %v7200 = vand.u32 %v7199, 4294901760
      %7201 = vmatpush1.msra.mxu0 %v7200
      %7202 = vmatprep.subr.mxu0 0.0
      %v7203 = vand.u32 %v740, 4294901760
      %v7204 = vsub.f32 %v740, %v7203
      %v7205 = vand.u32 %v7204, 4294901760
      %7206 = vmatpush1.msra.mxu0 %v7205
      %7207 = vmatprep.subr.mxu0 0.0
      %v7208 = vand.u32 %v745, 4294901760
      %v7209 = vsub.f32 %v745, %v7208
      %v7210 = vand.u32 %v7209, 4294901760
      %7211 = vmatpush1.msra.mxu0 %v7210
      %7212 = vmatprep.subr.mxu0 0.0
      %v7213 = vand.u32 %v750, 4294901760
      %v7214 = vsub.f32 %v750, %v7213
      %v7215 = vand.u32 %v7214, 4294901760
      %7216 = vmatpush1.msra.mxu0 %v7215
      %7217 = vmatprep.subr.mxu0 0.0
      %v7218 = vand.u32 %v755, 4294901760
      %v7219 = vsub.f32 %v755, %v7218
      %v7220 = vand.u32 %v7219, 4294901760
      %7221 = vmatpush1.msra.mxu0 %v7220
      %7222 = vmatprep.subr.mxu0 0.0
      %v7223 = vand.u32 %v760, 4294901760
      %v7224 = vsub.f32 %v760, %v7223
      %v7225 = vand.u32 %v7224, 4294901760
      %7226 = vmatpush1.msra.mxu0 %v7225
      %7227 = vmatprep.subr.mxu0 0.0
      %v7228 = vand.u32 %v765, 4294901760
      %v7229 = vsub.f32 %v765, %v7228
      %v7230 = vand.u32 %v7229, 4294901760
      %7231 = vmatpush1.msra.mxu0 %v7230
      %7232 = vmatprep.subr.mxu0 0.0
      %v7233 = vand.u32 %v770, 4294901760
      %v7234 = vsub.f32 %v770, %v7233
      %v7235 = vand.u32 %v7234, 4294901760
      %7236 = vmatpush1.msra.mxu0 %v7235
      %7237 = vmatprep.subr.mxu0 0.0
      %v7238 = vand.u32 %v775, 4294901760
      %v7239 = vsub.f32 %v775, %v7238
      %v7240 = vand.u32 %v7239, 4294901760
      %7241 = vmatpush1.msra.mxu0 %v7240
      %7242 = vmatprep.subr.mxu0 0.0
      %v7243 = vand.u32 %v780, 4294901760
      %v7244 = vsub.f32 %v780, %v7243
      %v7245 = vand.u32 %v7244, 4294901760
      %7246 = vmatpush1.msra.mxu0 %v7245
      %7247 = vmatprep.subr.mxu0 0.0
      %v7248 = vand.u32 %v785, 4294901760
      %v7249 = vsub.f32 %v785, %v7248
      %v7250 = vand.u32 %v7249, 4294901760
      %7251 = vmatpush1.msra.mxu0 %v7250
      %7252 = vmatprep.subr.mxu0 0.0
      %v7253 = vand.u32 %v790, 4294901760
      %v7254 = vsub.f32 %v790, %v7253
      %v7255 = vand.u32 %v7254, 4294901760
      %7256 = vmatpush1.msra.mxu0 %v7255
      %7257 = vmatprep.subr.mxu0 0.0
      %7258 = vmatpush1.msra.mxu0 0.0
      %7259 = vmatprep.subr.mxu0 0.0
      %7260 = vmatpush1.msra.mxu0 0.0
      %7261 = vmatprep.subr.mxu0 0.0
      %7262 = vmatpush1.msra.mxu0 0.0
      %7263 = vmatprep.subr.mxu0 0.0
      %7264 = vmatpush1.msra.mxu0 0.0
      %7265 = vmatprep.subr.mxu0 0.0
      %7266 = vmatpush1.msra.mxu0 0.0
      %7267 = vmatprep.subr.mxu0 0.0
      %7268 = vmatpush1.msra.mxu0 0.0
      %7269 = vmatprep.subr.mxu0 0.0
      %7270 = vmatpush1.msra.mxu0 0.0
      %7271 = vmatprep.subr.mxu0 0.0
      %7272 = vmatpush1.msra.mxu0 0.0
      %7273 = vmatprep.subr.mxu0 0.0
      %7274 = vmatpush1.msra.mxu0 0.0
      %7275 = vmatprep.subr.mxu0 0.0
      %7276 = vmatpush1.msra.mxu0 0.0
      %7277 = vmatprep.subr.mxu0 0.0
      %7278 = vmatpush1.msra.mxu0 0.0
      %7279 = vmatprep.subr.mxu0 0.0
      %7280 = vmatpush1.msra.mxu0 0.0
      %7281 = vmatprep.subr.mxu0 0.0
      %7282 = vmatpush1.msra.mxu0 0.0
      %7283 = vmatprep.subr.mxu0 0.0
      %7284 = vmatpush1.msra.mxu0 0.0
      %7285 = vmatprep.subr.mxu0 0.0
      %7286 = vmatpush1.msra.mxu0 0.0
      %7287 = vmatprep.subr.mxu0 0.0
      %7288 = vmatpush1.msra.mxu0 0.0
      %7289 = vmatprep.mubr.f32.mxu0 0.0
      %v7290 = vand.u32 %v243, 4294901760
      %7291 = vmatmul.mubr.f32.gmra.mrb[0].mxu0 %v7290
      %v7292 = vpop.f32.mrb[0].mxu0
      %v7293 = vadd.f32 %v7118, %v7292
      %v7294 = vpop.f32.mrb[0].mxu0
      %7295 = vmatprep.mubr.f32.mxu0 0.0
      %v7296 = vand.u32 %v244, 4294901760
      %7297 = vmatmul.mubr.f32.gmra.mrb[0].mxu0 %v7296
      %v7298 = vpop.f32.mrb[0].mxu0
      %v7299 = vadd.f32 %v7126, %v7298
      %v7300 = vpop.f32.mrb[0].mxu0
      %7301 = vmatprep.mubr.f32.mxu0 0.0
      %v7302 = vand.u32 %v245, 4294901760
      %7303 = vmatmul.mubr.f32.gmra.mrb[0].mxu0 %v7302
      %v7304 = vpop.f32.mrb[0].mxu0
      %v7305 = vadd.f32 %v7134, %v7304
      %v7306 = vpop.f32.mrb[0].mxu0
      %7307 = vmatprep.mubr.f32.mxu0 0.0
      %v7308 = vand.u32 %v246, 4294901760
      %7309 = vmatmul.mubr.f32.gmra.mrb[0].mxu0 %v7308
      %v7310 = vpop.f32.mrb[0].mxu0
      %v7311 = vadd.f32 %v7142, %v7310
      %v7312 = vpop.f32.mrb[0].mxu0
      %7313 = vmatprep.mubr.f32.mxu0 0.0
      %v7314 = vand.u32 %v247, 4294901760
      %7315 = vmatmul.mubr.f32.gmra.mrb[0].mxu0 %v7314
      %v7316 = vpop.f32.mrb[0].mxu0
      %v7317 = vadd.f32 %v7150, %v7316
      %v7318 = vpop.f32.mrb[0].mxu0
      %7319 = vmatprep.mubr.f32.mxu0 0.0
      %v7320 = vand.u32 %v248, 4294901760
      %7321 = vmatmul.mubr.f32.gmra.mrb[0].mxu0 %v7320
      %v7322 = vpop.f32.mrb[0].mxu0
      %v7323 = vadd.f32 %v7158, %v7322
      %v7324 = vpop.f32.mrb[0].mxu0
      %7325 = vmatprep.mubr.f32.mxu0 0.0
      %v7326 = vand.u32 %v249, 4294901760
      %7327 = vmatmul.mubr.f32.gmra.mrb[0].mxu0 %v7326
      %v7328 = vpop.f32.mrb[0].mxu0
      %v7329 = vadd.f32 %v7166, %v7328
      %v7330 = vpop.f32.mrb[0].mxu0
      %7331 = vmatprep.mubr.f32.mxu0 0.0
      %v7332 = vand.u32 %v250, 4294901760
      %7333 = vmatmul.mubr.f32.gmra.mrb[0].mxu0 %v7332
      %v7334 = vpop.f32.mrb[0].mxu0
      %v7335 = vadd.f32 %v7174, %v7334
      %v7336 = vpop.f32.mrb[0].mxu0
      %7337 = vdwg.mxu0
      %7338 = vmatprep.subr.mxu0 0.0
      %v7339 = vand.u32 %v715, 4294901760
      %7340 = vmatpush1.msra.mxu0 %v7339
      %7341 = vmatprep.subr.mxu0 0.0
      %v7342 = vand.u32 %v720, 4294901760
      %7343 = vmatpush1.msra.mxu0 %v7342
      %7344 = vmatprep.subr.mxu0 0.0
      %v7345 = vand.u32 %v725, 4294901760
      %7346 = vmatpush1.msra.mxu0 %v7345
      %7347 = vmatprep.subr.mxu0 0.0
      %v7348 = vand.u32 %v730, 4294901760
      %7349 = vmatpush1.msra.mxu0 %v7348
      %7350 = vmatprep.subr.mxu0 0.0
      %v7351 = vand.u32 %v735, 4294901760
      %7352 = vmatpush1.msra.mxu0 %v7351
      %7353 = vmatprep.subr.mxu0 0.0
      %v7354 = vand.u32 %v740, 4294901760
      %7355 = vmatpush1.msra.mxu0 %v7354
      %7356 = vmatprep.subr.mxu0 0.0
      %v7357 = vand.u32 %v745, 4294901760
      %7358 = vmatpush1.msra.mxu0 %v7357
      %7359 = vmatprep.subr.mxu0 0.0
      %v7360 = vand.u32 %v750, 4294901760
      %7361 = vmatpush1.msra.mxu0 %v7360
      %7362 = vmatprep.subr.mxu0 0.0
      %v7363 = vand.u32 %v755, 4294901760
      %7364 = vmatpush1.msra.mxu0 %v7363
      %7365 = vmatprep.subr.mxu0 0.0
      %v7366 = vand.u32 %v760, 4294901760
      %7367 = vmatpush1.msra.mxu0 %v7366
      %7368 = vmatprep.subr.mxu0 0.0
      %v7369 = vand.u32 %v765, 4294901760
      %7370 = vmatpush1.msra.mxu0 %v7369
      %7371 = vmatprep.subr.mxu0 0.0
      %v7372 = vand.u32 %v770, 4294901760
      %7373 = vmatpush1.msra.mxu0 %v7372
      %7374 = vmatprep.subr.mxu0 0.0
      %v7375 = vand.u32 %v775, 4294901760
      %7376 = vmatpush1.msra.mxu0 %v7375
      %7377 = vmatprep.subr.mxu0 0.0
      %v7378 = vand.u32 %v780, 4294901760
      %7379 = vmatpush1.msra.mxu0 %v7378
      %7380 = vmatprep.subr.mxu0 0.0
      %v7381 = vand.u32 %v785, 4294901760
      %7382 = vmatpush1.msra.mxu0 %v7381
      %7383 = vmatprep.subr.mxu0 0.0
      %v7384 = vand.u32 %v790, 4294901760
      %7385 = vmatpush1.msra.mxu0 %v7384
      %7386 = vmatprep.subr.mxu0 0.0
      %7387 = vmatpush1.msra.mxu0 0.0
      %7388 = vmatprep.subr.mxu0 0.0
      %7389 = vmatpush1.msra.mxu0 0.0
      %7390 = vmatprep.subr.mxu0 0.0
      %7391 = vmatpush1.msra.mxu0 0.0
      %7392 = vmatprep.subr.mxu0 0.0
      %7393 = vmatpush1.msra.mxu0 0.0
      %7394 = vmatprep.subr.mxu0 0.0
      %7395 = vmatpush1.msra.mxu0 0.0
      %7396 = vmatprep.subr.mxu0 0.0
      %7397 = vmatpush1.msra.mxu0 0.0
      %7398 = vmatprep.subr.mxu0 0.0
      %7399 = vmatpush1.msra.mxu0 0.0
      %7400 = vmatprep.subr.mxu0 0.0
      %7401 = vmatpush1.msra.mxu0 0.0
      %7402 = vmatprep.subr.mxu0 0.0
      %7403 = vmatpush1.msra.mxu0 0.0
      %7404 = vmatprep.subr.mxu0 0.0
      %7405 = vmatpush1.msra.mxu0 0.0
      %7406 = vmatprep.subr.mxu0 0.0
      %7407 = vmatpush1.msra.mxu0 0.0
      %7408 = vmatprep.subr.mxu0 0.0
      %7409 = vmatpush1.msra.mxu0 0.0
      %7410 = vmatprep.subr.mxu0 0.0
      %7411 = vmatpush1.msra.mxu0 0.0
      %7412 = vmatprep.subr.mxu0 0.0
      %7413 = vmatpush1.msra.mxu0 0.0
      %7414 = vmatprep.subr.mxu0 0.0
      %7415 = vmatpush1.msra.mxu0 0.0
      %7416 = vmatprep.subr.mxu0 0.0
      %7417 = vmatpush1.msra.mxu0 0.0
      %7418 = vmatprep.mubr.f32.mxu0 0.0
      %v7419 = vand.u32 %v243, 4294901760
      %7420 = vmatmul.mubr.f32.gmra.mrb[0].mxu0 %v7419
      %v7421 = vpop.f32.mrb[0].mxu0
      %v7422 = vadd.f32 %v7293, %v7421
      %v7423 = vpop.f32.mrb[0].mxu0
      %7424 = vmatprep.mubr.f32.mxu0 0.0
      %v7425 = vand.u32 %v244, 4294901760
      %7426 = vmatmul.mubr.f32.gmra.mrb[0].mxu0 %v7425
      %v7427 = vpop.f32.mrb[0].mxu0
      %v7428 = vadd.f32 %v7299, %v7427
      %v7429 = vpop.f32.mrb[0].mxu0
      %7430 = vmatprep.mubr.f32.mxu0 0.0
      %v7431 = vand.u32 %v245, 4294901760
      %7432 = vmatmul.mubr.f32.gmra.mrb[0].mxu0 %v7431
      %v7433 = vpop.f32.mrb[0].mxu0
      %v7434 = vadd.f32 %v7305, %v7433
      %v7435 = vpop.f32.mrb[0].mxu0
      %7436 = vmatprep.mubr.f32.mxu0 0.0
      %v7437 = vand.u32 %v246, 4294901760
      %7438 = vmatmul.mubr.f32.gmra.mrb[0].mxu0 %v7437
      %v7439 = vpop.f32.mrb[0].mxu0
      %v7440 = vadd.f32 %v7311, %v7439
      %v7441 = vpop.f32.mrb[0].mxu0
      %7442 = vmatprep.mubr.f32.mxu0 0.0
      %v7443 = vand.u32 %v247, 4294901760
      %7444 = vmatmul.mubr.f32.gmra.mrb[0].mxu0 %v7443
      %v7445 = vpop.f32.mrb[0].mxu0
      %v7446 = vadd.f32 %v7317, %v7445
      %v7447 = vpop.f32.mrb[0].mxu0
      %7448 = vmatprep.mubr.f32.mxu0 0.0
      %v7449 = vand.u32 %v248, 4294901760
      %7450 = vmatmul.mubr.f32.gmra.mrb[0].mxu0 %v7449
      %v7451 = vpop.f32.mrb[0].mxu0
      %v7452 = vadd.f32 %v7323, %v7451
      %v7453 = vpop.f32.mrb[0].mxu0
      %7454 = vmatprep.mubr.f32.mxu0 0.0
      %v7455 = vand.u32 %v249, 4294901760
      %7456 = vmatmul.mubr.f32.gmra.mrb[0].mxu0 %v7455
      %v7457 = vpop.f32.mrb[0].mxu0
      %v7458 = vadd.f32 %v7329, %v7457
      %v7459 = vpop.f32.mrb[0].mxu0
      %7460 = vmatprep.mubr.f32.mxu0 0.0
      %v7461 = vand.u32 %v250, 4294901760
      %7462 = vmatmul.mubr.f32.gmra.mrb[0].mxu0 %v7461
      %v7463 = vpop.f32.mrb[0].mxu0
      %v7464 = vadd.f32 %v7335, %v7463
      %v7465 = vpop.f32.mrb[0].mxu0
      %7466 = vdwg.mxu0
      %v7467 = vadd.f32 %v1936, %v1943
      %v7468 = vadd.f32 %v7467, %v1950
      %v7469 = vadd.f32 %v7468, %v1957
      %v7470 = vadd.f32 %v7469, %v1964
      %v7471 = vadd.f32 %v7470, %v1971
      %v7472 = vadd.f32 %v7471, %v1978
      %v7473 = vadd.f32 %v7472, %v1985
      %v7474 = vrot.slane %v7473, 4
      %v7475 = vadd.f32 %v7473, %v7474
      %v7476 = vrot.slane %v7475, 2
      %v7477 = vadd.f32 %v7475, %v7476
      %v7478 = vrot.slane %v7477, 1
      %v7479 = vadd.f32 %v7477, %v7478
      %v7480 = vadd.f32 %v1938, %v1945
      %v7481 = vadd.f32 %v7480, %v1952
      %v7482 = vadd.f32 %v7481, %v1959
      %v7483 = vadd.f32 %v7482, %v1966
      %v7484 = vadd.f32 %v7483, %v1973
      %v7485 = vadd.f32 %v7484, %v1980
      %v7486 = vadd.f32 %v7485, %v1987
      %v7487 = vrot.slane %v7486, 4
      %v7488 = vadd.f32 %v7486, %v7487
      %v7489 = vrot.slane %v7488, 2
      %v7490 = vadd.f32 %v7488, %v7489
      %v7491 = vrot.slane %v7490, 1
      %v7492 = vadd.f32 %v7490, %v7491
      %v7493 = vadd.f32 %v3134, %v3141
      %v7494 = vadd.f32 %v7493, %v3148
      %v7495 = vadd.f32 %v7494, %v3155
      %v7496 = vadd.f32 %v7495, %v3162
      %v7497 = vadd.f32 %v7496, %v3169
      %v7498 = vadd.f32 %v7497, %v3176
      %v7499 = vadd.f32 %v7498, %v3183
      %v7500 = vrot.slane %v7499, 4
      %v7501 = vadd.f32 %v7499, %v7500
      %v7502 = vrot.slane %v7501, 2
      %v7503 = vadd.f32 %v7501, %v7502
      %v7504 = vrot.slane %v7503, 1
      %v7505 = vadd.f32 %v7503, %v7504
      %v7506 = vadd.f32 %v3136, %v3143
      %v7507 = vadd.f32 %v7506, %v3150
      %v7508 = vadd.f32 %v7507, %v3157
      %v7509 = vadd.f32 %v7508, %v3164
      %v7510 = vadd.f32 %v7509, %v3171
      %v7511 = vadd.f32 %v7510, %v3178
      %v7512 = vadd.f32 %v7511, %v3185
      %v7513 = vrot.slane %v7512, 4
      %v7514 = vadd.f32 %v7512, %v7513
      %v7515 = vrot.slane %v7514, 2
      %v7516 = vadd.f32 %v7514, %v7515
      %v7517 = vrot.slane %v7516, 1
      %v7518 = vadd.f32 %v7516, %v7517
      %v7519 = vadd.f32 %v4084, %v4090
      %v7520 = vadd.f32 %v7519, %v4096
      %v7521 = vadd.f32 %v7520, %v4102
      %v7522 = vadd.f32 %v7521, %v4108
      %v7523 = vadd.f32 %v7522, %v4114
      %v7524 = vadd.f32 %v7523, %v4120
      %v7525 = vadd.f32 %v7524, %v4126
      %v7526 = vrot.slane %v7525, 4
      %v7527 = vadd.f32 %v7525, %v7526
      %v7528 = vrot.slane %v7527, 2
      %v7529 = vadd.f32 %v7527, %v7528
      %v7530 = vrot.slane %v7529, 1
      %v7531 = vadd.f32 %v7529, %v7530
      %v7532 = vadd.f32 %v5274, %v5281
      %v7533 = vadd.f32 %v7532, %v5288
      %v7534 = vadd.f32 %v7533, %v5295
      %v7535 = vadd.f32 %v7534, %v5302
      %v7536 = vadd.f32 %v7535, %v5309
      %v7537 = vadd.f32 %v7536, %v5316
      %v7538 = vadd.f32 %v7537, %v5323
      %v7539 = vrot.slane %v7538, 4
      %v7540 = vadd.f32 %v7538, %v7539
      %v7541 = vrot.slane %v7540, 2
      %v7542 = vadd.f32 %v7540, %v7541
      %v7543 = vrot.slane %v7542, 1
      %v7544 = vadd.f32 %v7542, %v7543
      %v7545 = vadd.f32 %v5276, %v5283
      %v7546 = vadd.f32 %v7545, %v5290
      %v7547 = vadd.f32 %v7546, %v5297
      %v7548 = vadd.f32 %v7547, %v5304
      %v7549 = vadd.f32 %v7548, %v5311
      %v7550 = vadd.f32 %v7549, %v5318
      %v7551 = vadd.f32 %v7550, %v5325
      %v7552 = vrot.slane %v7551, 4
      %v7553 = vadd.f32 %v7551, %v7552
      %v7554 = vrot.slane %v7553, 2
      %v7555 = vadd.f32 %v7553, %v7554
      %v7556 = vrot.slane %v7555, 1
      %v7557 = vadd.f32 %v7555, %v7556
      %v7558 = vadd.f32 %v6472, %v6479
      %v7559 = vadd.f32 %v7558, %v6486
      %v7560 = vadd.f32 %v7559, %v6493
      %v7561 = vadd.f32 %v7560, %v6500
      %v7562 = vadd.f32 %v7561, %v6507
      %v7563 = vadd.f32 %v7562, %v6514
      %v7564 = vadd.f32 %v7563, %v6521
      %v7565 = vrot.slane %v7564, 4
      %v7566 = vadd.f32 %v7564, %v7565
      %v7567 = vrot.slane %v7566, 2
      %v7568 = vadd.f32 %v7566, %v7567
      %v7569 = vrot.slane %v7568, 1
      %v7570 = vadd.f32 %v7568, %v7569
      %v7571 = vadd.f32 %v6474, %v6481
      %v7572 = vadd.f32 %v7571, %v6488
      %v7573 = vadd.f32 %v7572, %v6495
      %v7574 = vadd.f32 %v7573, %v6502
      %v7575 = vadd.f32 %v7574, %v6509
      %v7576 = vadd.f32 %v7575, %v6516
      %v7577 = vadd.f32 %v7576, %v6523
      %v7578 = vrot.slane %v7577, 4
      %v7579 = vadd.f32 %v7577, %v7578
      %v7580 = vrot.slane %v7579, 2
      %v7581 = vadd.f32 %v7579, %v7580
      %v7582 = vrot.slane %v7581, 1
      %v7583 = vadd.f32 %v7581, %v7582
      %v7584 = vadd.f32 %v7422, %v7428
      %v7585 = vadd.f32 %v7584, %v7434
      %v7586 = vadd.f32 %v7585, %v7440
      %v7587 = vadd.f32 %v7586, %v7446
      %v7588 = vadd.f32 %v7587, %v7452
      %v7589 = vadd.f32 %v7588, %v7458
      %v7590 = vadd.f32 %v7589, %v7464
      %v7591 = vrot.slane %v7590, 4
      %v7592 = vadd.f32 %v7590, %v7591
      %v7593 = vrot.slane %v7592, 2
      %v7594 = vadd.f32 %v7592, %v7593
      %v7595 = vrot.slane %v7594, 1
      %v7596 = vadd.f32 %v7594, %v7595
      %v7597 = vadd.f32 %v7479, %v7544
      %v7598 = vadd.f32 %v7492, %v7557
      %v7599 = vadd.f32 %v7505, %v7570
      %v7600 = vadd.f32 %v7518, %v7583
      %v7601 = vadd.f32 %v7531, %v7596
      %v7602 = vmul.f32 %v7597, 0.0078125
      %v7603 = vmul.f32 %v7598, 0.0078125
      %v7604 = vmul.f32 %v7599, 0.0078125
      %v7605 = vmul.f32 %v7600, 0.0078125
      %v7606 = vmul.f32 %v7601, 0.0078125
      %v7607 = vsub.f32 %v1936, %v7602
      %v7608 = vsub.f32 %v1938, %v7603
      %v7609 = vsub.f32 %v3134, %v7604
      %v7610 = vsub.f32 %v3136, %v7605
      %v7611 = vsub.f32 %v4084, %v7606
      %v7612 = vsub.f32 %v1943, %v7602
      %v7613 = vsub.f32 %v1945, %v7603
      %v7614 = vsub.f32 %v3141, %v7604
      %v7615 = vsub.f32 %v3143, %v7605
      %v7616 = vsub.f32 %v4090, %v7606
      %v7617 = vsub.f32 %v1950, %v7602
      %v7618 = vsub.f32 %v1952, %v7603
      %v7619 = vsub.f32 %v3148, %v7604
      %v7620 = vsub.f32 %v3150, %v7605
      %v7621 = vsub.f32 %v4096, %v7606
      %v7622 = vsub.f32 %v1957, %v7602
      %v7623 = vsub.f32 %v1959, %v7603
      %v7624 = vsub.f32 %v3155, %v7604
      %v7625 = vsub.f32 %v3157, %v7605
      %v7626 = vsub.f32 %v4102, %v7606
      %v7627 = vsub.f32 %v1964, %v7602
      %v7628 = vsub.f32 %v1966, %v7603
      %v7629 = vsub.f32 %v3162, %v7604
      %v7630 = vsub.f32 %v3164, %v7605
      %v7631 = vsub.f32 %v4108, %v7606
      %v7632 = vsub.f32 %v1971, %v7602
      %v7633 = vsub.f32 %v1973, %v7603
      %v7634 = vsub.f32 %v3169, %v7604
      %v7635 = vsub.f32 %v3171, %v7605
      %v7636 = vsub.f32 %v4114, %v7606
      %v7637 = vsub.f32 %v1978, %v7602
      %v7638 = vsub.f32 %v1980, %v7603
      %v7639 = vsub.f32 %v3176, %v7604
      %v7640 = vsub.f32 %v3178, %v7605
      %v7641 = vsub.f32 %v4120, %v7606
      %v7642 = vsub.f32 %v1985, %v7602
      %v7643 = vsub.f32 %v1987, %v7603
      %v7644 = vsub.f32 %v3183, %v7604
      %v7645 = vsub.f32 %v3185, %v7605
      %v7646 = vsub.f32 %v4126, %v7606
      %v7647 = vsub.f32 %v5274, %v7602
      %v7648 = vsub.f32 %v5276, %v7603
      %v7649 = vsub.f32 %v6472, %v7604
      %v7650 = vsub.f32 %v6474, %v7605
      %v7651 = vsub.f32 %v7422, %v7606
      %v7652 = vsub.f32 %v5281, %v7602
      %v7653 = vsub.f32 %v5283, %v7603
      %v7654 = vsub.f32 %v6479, %v7604
      %v7655 = vsub.f32 %v6481, %v7605
      %v7656 = vsub.f32 %v7428, %v7606
      %v7657 = vsub.f32 %v5288, %v7602
      %v7658 = vsub.f32 %v5290, %v7603
      %v7659 = vsub.f32 %v6486, %v7604
      %v7660 = vsub.f32 %v6488, %v7605
      %v7661 = vsub.f32 %v7434, %v7606
      %v7662 = vsub.f32 %v5295, %v7602
      %v7663 = vsub.f32 %v5297, %v7603
      %v7664 = vsub.f32 %v6493, %v7604
      %v7665 = vsub.f32 %v6495, %v7605
      %v7666 = vsub.f32 %v7440, %v7606
      %v7667 = vsub.f32 %v5302, %v7602
      %v7668 = vsub.f32 %v5304, %v7603
      %v7669 = vsub.f32 %v6500, %v7604
      %v7670 = vsub.f32 %v6502, %v7605
      %v7671 = vsub.f32 %v7446, %v7606
      %v7672 = vsub.f32 %v5309, %v7602
      %v7673 = vsub.f32 %v5311, %v7603
      %v7674 = vsub.f32 %v6507, %v7604
      %v7675 = vsub.f32 %v6509, %v7605
      %v7676 = vsub.f32 %v7452, %v7606
      %v7677 = vsub.f32 %v5316, %v7602
      %v7678 = vsub.f32 %v5318, %v7603
      %v7679 = vsub.f32 %v6514, %v7604
      %v7680 = vsub.f32 %v6516, %v7605
      %v7681 = vsub.f32 %v7458, %v7606
      %v7682 = vsub.f32 %v5323, %v7602
      %v7683 = vsub.f32 %v5325, %v7603
      %v7684 = vsub.f32 %v6521, %v7604
      %v7685 = vsub.f32 %v6523, %v7605
      %v7686 = vsub.f32 %v7464, %v7606
      %v7687 = vmul.f32 %v7607, %v7607
      %v7688 = vmul.f32 %v7608, %v7608
      %v7689 = vmul.f32 %v7609, %v7609
      %v7690 = vmul.f32 %v7610, %v7610
      %v7691 = vmul.f32 %v7611, %v7611
      %v7692 = vmul.f32 %v7612, %v7612
      %v7693 = vmul.f32 %v7613, %v7613
      %v7694 = vmul.f32 %v7614, %v7614
      %v7695 = vmul.f32 %v7615, %v7615
      %v7696 = vmul.f32 %v7616, %v7616
      %v7697 = vmul.f32 %v7617, %v7617
      %v7698 = vmul.f32 %v7618, %v7618
      %v7699 = vmul.f32 %v7619, %v7619
      %v7700 = vmul.f32 %v7620, %v7620
      %v7701 = vmul.f32 %v7621, %v7621
      %v7702 = vmul.f32 %v7622, %v7622
      %v7703 = vmul.f32 %v7623, %v7623
      %v7704 = vmul.f32 %v7624, %v7624
      %v7705 = vmul.f32 %v7625, %v7625
      %v7706 = vmul.f32 %v7626, %v7626
      %v7707 = vmul.f32 %v7627, %v7627
      %v7708 = vmul.f32 %v7628, %v7628
      %v7709 = vmul.f32 %v7629, %v7629
      %v7710 = vmul.f32 %v7630, %v7630
      %v7711 = vmul.f32 %v7631, %v7631
      %v7712 = vmul.f32 %v7632, %v7632
      %v7713 = vmul.f32 %v7633, %v7633
      %v7714 = vmul.f32 %v7634, %v7634
      %v7715 = vmul.f32 %v7635, %v7635
      %v7716 = vmul.f32 %v7636, %v7636
      %v7717 = vmul.f32 %v7637, %v7637
      %v7718 = vmul.f32 %v7638, %v7638
      %v7719 = vmul.f32 %v7639, %v7639
      %v7720 = vmul.f32 %v7640, %v7640
      %v7721 = vmul.f32 %v7641, %v7641
      %v7722 = vmul.f32 %v7642, %v7642
      %v7723 = vmul.f32 %v7643, %v7643
      %v7724 = vmul.f32 %v7644, %v7644
      %v7725 = vmul.f32 %v7645, %v7645
      %v7726 = vmul.f32 %v7646, %v7646
      %v7727 = vadd.f32 %v7687, %v7692
      %v7728 = vadd.f32 %v7727, %v7697
      %v7729 = vadd.f32 %v7728, %v7702
      %v7730 = vadd.f32 %v7729, %v7707
      %v7731 = vadd.f32 %v7730, %v7712
      %v7732 = vadd.f32 %v7731, %v7717
      %v7733 = vadd.f32 %v7732, %v7722
      %v7734 = vrot.slane %v7733, 4
      %v7735 = vadd.f32 %v7733, %v7734
      %v7736 = vrot.slane %v7735, 2
      %v7737 = vadd.f32 %v7735, %v7736
      %v7738 = vrot.slane %v7737, 1
      %v7739 = vadd.f32 %v7737, %v7738
      %v7740 = vadd.f32 %v7688, %v7693
      %v7741 = vadd.f32 %v7740, %v7698
      %v7742 = vadd.f32 %v7741, %v7703
      %v7743 = vadd.f32 %v7742, %v7708
      %v7744 = vadd.f32 %v7743, %v7713
      %v7745 = vadd.f32 %v7744, %v7718
      %v7746 = vadd.f32 %v7745, %v7723
      %v7747 = vrot.slane %v7746, 4
      %v7748 = vadd.f32 %v7746, %v7747
      %v7749 = vrot.slane %v7748, 2
      %v7750 = vadd.f32 %v7748, %v7749
      %v7751 = vrot.slane %v7750, 1
      %v7752 = vadd.f32 %v7750, %v7751
      %v7753 = vadd.f32 %v7689, %v7694
      %v7754 = vadd.f32 %v7753, %v7699
      %v7755 = vadd.f32 %v7754, %v7704
      %v7756 = vadd.f32 %v7755, %v7709
      %v7757 = vadd.f32 %v7756, %v7714
      %v7758 = vadd.f32 %v7757, %v7719
      %v7759 = vadd.f32 %v7758, %v7724
      %v7760 = vrot.slane %v7759, 4
      %v7761 = vadd.f32 %v7759, %v7760
      %v7762 = vrot.slane %v7761, 2
      %v7763 = vadd.f32 %v7761, %v7762
      %v7764 = vrot.slane %v7763, 1
      %v7765 = vadd.f32 %v7763, %v7764
      %v7766 = vadd.f32 %v7690, %v7695
      %v7767 = vadd.f32 %v7766, %v7700
      %v7768 = vadd.f32 %v7767, %v7705
      %v7769 = vadd.f32 %v7768, %v7710
      %v7770 = vadd.f32 %v7769, %v7715
      %v7771 = vadd.f32 %v7770, %v7720
      %v7772 = vadd.f32 %v7771, %v7725
      %v7773 = vrot.slane %v7772, 4
      %v7774 = vadd.f32 %v7772, %v7773
      %v7775 = vrot.slane %v7774, 2
      %v7776 = vadd.f32 %v7774, %v7775
      %v7777 = vrot.slane %v7776, 1
      %v7778 = vadd.f32 %v7776, %v7777
      %v7779 = vadd.f32 %v7691, %v7696
      %v7780 = vadd.f32 %v7779, %v7701
      %v7781 = vadd.f32 %v7780, %v7706
      %v7782 = vadd.f32 %v7781, %v7711
      %v7783 = vadd.f32 %v7782, %v7716
      %v7784 = vadd.f32 %v7783, %v7721
      %v7785 = vadd.f32 %v7784, %v7726
      %v7786 = vrot.slane %v7785, 4
      %v7787 = vadd.f32 %v7785, %v7786
      %v7788 = vrot.slane %v7787, 2
      %v7789 = vadd.f32 %v7787, %v7788
      %v7790 = vrot.slane %v7789, 1
      %v7791 = vadd.f32 %v7789, %v7790
      %v7792 = vmul.f32 %v7647, %v7647
      %v7793 = vmul.f32 %v7648, %v7648
      %v7794 = vmul.f32 %v7649, %v7649
      %v7795 = vmul.f32 %v7650, %v7650
      %v7796 = vmul.f32 %v7651, %v7651
      %v7797 = vmul.f32 %v7652, %v7652
      %v7798 = vmul.f32 %v7653, %v7653
      %v7799 = vmul.f32 %v7654, %v7654
      %v7800 = vmul.f32 %v7655, %v7655
      %v7801 = vmul.f32 %v7656, %v7656
      %v7802 = vmul.f32 %v7657, %v7657
      %v7803 = vmul.f32 %v7658, %v7658
      %v7804 = vmul.f32 %v7659, %v7659
      %v7805 = vmul.f32 %v7660, %v7660
      %v7806 = vmul.f32 %v7661, %v7661
      %v7807 = vmul.f32 %v7662, %v7662
      %v7808 = vmul.f32 %v7663, %v7663
      %v7809 = vmul.f32 %v7664, %v7664
      %v7810 = vmul.f32 %v7665, %v7665
      %v7811 = vmul.f32 %v7666, %v7666
      %v7812 = vmul.f32 %v7667, %v7667
      %v7813 = vmul.f32 %v7668, %v7668
      %v7814 = vmul.f32 %v7669, %v7669
      %v7815 = vmul.f32 %v7670, %v7670
      %v7816 = vmul.f32 %v7671, %v7671
      %v7817 = vmul.f32 %v7672, %v7672
      %v7818 = vmul.f32 %v7673, %v7673
      %v7819 = vmul.f32 %v7674, %v7674
      %v7820 = vmul.f32 %v7675, %v7675
      %v7821 = vmul.f32 %v7676, %v7676
      %v7822 = vmul.f32 %v7677, %v7677
      %v7823 = vmul.f32 %v7678, %v7678
      %v7824 = vmul.f32 %v7679, %v7679
      %v7825 = vmul.f32 %v7680, %v7680
      %v7826 = vmul.f32 %v7681, %v7681
      %v7827 = vmul.f32 %v7682, %v7682
      %v7828 = vmul.f32 %v7683, %v7683
      %v7829 = vmul.f32 %v7684, %v7684
      %v7830 = vmul.f32 %v7685, %v7685
      %v7831 = vmul.f32 %v7686, %v7686
      %v7832 = vadd.f32 %v7792, %v7797
      %v7833 = vadd.f32 %v7832, %v7802
      %v7834 = vadd.f32 %v7833, %v7807
      %v7835 = vadd.f32 %v7834, %v7812
      %v7836 = vadd.f32 %v7835, %v7817
      %v7837 = vadd.f32 %v7836, %v7822
      %v7838 = vadd.f32 %v7837, %v7827
      %v7839 = vrot.slane %v7838, 4
      %v7840 = vadd.f32 %v7838, %v7839
      %v7841 = vrot.slane %v7840, 2
      %v7842 = vadd.f32 %v7840, %v7841
      %v7843 = vrot.slane %v7842, 1
      %v7844 = vadd.f32 %v7842, %v7843
      %v7845 = vadd.f32 %v7793, %v7798
      %v7846 = vadd.f32 %v7845, %v7803
      %v7847 = vadd.f32 %v7846, %v7808
      %v7848 = vadd.f32 %v7847, %v7813
      %v7849 = vadd.f32 %v7848, %v7818
      %v7850 = vadd.f32 %v7849, %v7823
      %v7851 = vadd.f32 %v7850, %v7828
      %v7852 = vrot.slane %v7851, 4
      %v7853 = vadd.f32 %v7851, %v7852
      %v7854 = vrot.slane %v7853, 2
      %v7855 = vadd.f32 %v7853, %v7854
      %v7856 = vrot.slane %v7855, 1
      %v7857 = vadd.f32 %v7855, %v7856
      %v7858 = vadd.f32 %v7794, %v7799
      %v7859 = vadd.f32 %v7858, %v7804
      %v7860 = vadd.f32 %v7859, %v7809
      %v7861 = vadd.f32 %v7860, %v7814
      %v7862 = vadd.f32 %v7861, %v7819
      %v7863 = vadd.f32 %v7862, %v7824
      %v7864 = vadd.f32 %v7863, %v7829
      %v7865 = vrot.slane %v7864, 4
      %v7866 = vadd.f32 %v7864, %v7865
      %v7867 = vrot.slane %v7866, 2
      %v7868 = vadd.f32 %v7866, %v7867
      %v7869 = vrot.slane %v7868, 1
      %v7870 = vadd.f32 %v7868, %v7869
      %v7871 = vadd.f32 %v7795, %v7800
      %v7872 = vadd.f32 %v7871, %v7805
      %v7873 = vadd.f32 %v7872, %v7810
      %v7874 = vadd.f32 %v7873, %v7815
      %v7875 = vadd.f32 %v7874, %v7820
      %v7876 = vadd.f32 %v7875, %v7825
      %v7877 = vadd.f32 %v7876, %v7830
      %v7878 = vrot.slane %v7877, 4
      %v7879 = vadd.f32 %v7877, %v7878
      %v7880 = vrot.slane %v7879, 2
      %v7881 = vadd.f32 %v7879, %v7880
      %v7882 = vrot.slane %v7881, 1
      %v7883 = vadd.f32 %v7881, %v7882
      %v7884 = vadd.f32 %v7796, %v7801
      %v7885 = vadd.f32 %v7884, %v7806
      %v7886 = vadd.f32 %v7885, %v7811
      %v7887 = vadd.f32 %v7886, %v7816
      %v7888 = vadd.f32 %v7887, %v7821
      %v7889 = vadd.f32 %v7888, %v7826
      %v7890 = vadd.f32 %v7889, %v7831
      %v7891 = vrot.slane %v7890, 4
      %v7892 = vadd.f32 %v7890, %v7891
      %v7893 = vrot.slane %v7892, 2
      %v7894 = vadd.f32 %v7892, %v7893
      %v7895 = vrot.slane %v7894, 1
      %v7896 = vadd.f32 %v7894, %v7895
      %v7897 = vadd.f32 %v7739, %v7844
      %v7898 = vadd.f32 %v7752, %v7857
      %v7899 = vadd.f32 %v7765, %v7870
      %v7900 = vadd.f32 %v7778, %v7883
      %v7901 = vadd.f32 %v7791, %v7896
      %v7902 = vmul.f32 %v7897, 0.0078125
      %v7903 = vmul.f32 %v7898, 0.0078125
      %v7904 = vmul.f32 %v7899, 0.0078125
      %v7905 = vmul.f32 %v7900, 0.0078125
      %v7906 = vmul.f32 %v7901, 0.0078125
      %v7907 = vadd.f32 %v7902, 1e-05
      %v7908 = vadd.f32 %v7903, 1e-05
      %v7909 = vadd.f32 %v7904, 1e-05
      %v7910 = vadd.f32 %v7905, 1e-05
      %v7911 = vadd.f32 %v7906, 1e-05
      %v7912 = vrsqrt.pop %v7907
      %v7913 = vrsqrt.pop %v7908
      %v7914 = vrsqrt.pop %v7909
      %v7915 = vrsqrt.pop %v7910
      %v7916 = vrsqrt.pop %v7911
      %v7918 = vrot.slane %v251, 1
      %vm7919 = vcmask 523264
      %v7920 = vsel %vm7919, %v7918, 0
      %v7922 = vand.u32 %v7648, 4294901760
      %7923 = vmatprep.subr.mxu0 %v7922
      %v7924 = vand.u32 %v7647, 4294901760
      %7925 = vmatpush1.msra.mxu0 %v7924
      %v7926 = vand.u32 %v7653, 4294901760
      %7927 = vmatprep.subr.mxu0 %v7926
      %v7928 = vand.u32 %v7652, 4294901760
      %7929 = vmatpush1.msra.mxu0 %v7928
      %v7930 = vand.u32 %v7658, 4294901760
      %7931 = vmatprep.subr.mxu0 %v7930
      %v7932 = vand.u32 %v7657, 4294901760
      %7933 = vmatpush1.msra.mxu0 %v7932
      %v7934 = vand.u32 %v7663, 4294901760
      %7935 = vmatprep.subr.mxu0 %v7934
      %v7936 = vand.u32 %v7662, 4294901760
      %7937 = vmatpush1.msra.mxu0 %v7936
      %v7938 = vand.u32 %v7668, 4294901760
      %7939 = vmatprep.subr.mxu0 %v7938
      %v7940 = vand.u32 %v7667, 4294901760
      %7941 = vmatpush1.msra.mxu0 %v7940
      %v7942 = vand.u32 %v7673, 4294901760
      %7943 = vmatprep.subr.mxu0 %v7942
      %v7944 = vand.u32 %v7672, 4294901760
      %7945 = vmatpush1.msra.mxu0 %v7944
      %v7946 = vand.u32 %v7678, 4294901760
      %7947 = vmatprep.subr.mxu0 %v7946
      %v7948 = vand.u32 %v7677, 4294901760
      %7949 = vmatpush1.msra.mxu0 %v7948
      %v7950 = vand.u32 %v7683, 4294901760
      %7951 = vmatprep.subr.mxu0 %v7950
      %v7952 = vand.u32 %v7682, 4294901760
      %7953 = vmatpush1.msra.mxu0 %v7952
      %7954 = vmatprep.subr.mxu0 0.0
      %7955 = vmatpush1.msra.mxu0 0.0
      %7956 = vmatprep.subr.mxu0 0.0
      %7957 = vmatpush1.msra.mxu0 0.0
      %7958 = vmatprep.subr.mxu0 0.0
      %7959 = vmatpush1.msra.mxu0 0.0
      %7960 = vmatprep.subr.mxu0 0.0
      %7961 = vmatpush1.msra.mxu0 0.0
      %7962 = vmatprep.subr.mxu0 0.0
      %7963 = vmatpush1.msra.mxu0 0.0
      %7964 = vmatprep.subr.mxu0 0.0
      %7965 = vmatpush1.msra.mxu0 0.0
      %7966 = vmatprep.subr.mxu0 0.0
      %7967 = vmatpush1.msra.mxu0 0.0
      %7968 = vmatprep.subr.mxu0 0.0
      %7969 = vmatpush1.msra.mxu0 0.0
      %7970 = vmatprep.subr.mxu0 0.0
      %7971 = vmatpush1.msra.mxu0 0.0
      %7972 = vmatprep.subr.mxu0 0.0
      %7973 = vmatpush1.msra.mxu0 0.0
      %7974 = vmatprep.subr.mxu0 0.0
      %7975 = vmatpush1.msra.mxu0 0.0
      %7976 = vmatprep.subr.mxu0 0.0
      %7977 = vmatpush1.msra.mxu0 0.0
      %7978 = vmatprep.subr.mxu0 0.0
      %7979 = vmatpush1.msra.mxu0 0.0
      %7980 = vmatprep.subr.mxu0 0.0
      %7981 = vmatpush1.msra.mxu0 0.0
      %7982 = vmatprep.subr.mxu0 0.0
      %7983 = vmatpush1.msra.mxu0 0.0
      %7984 = vmatprep.subr.mxu0 0.0
      %7985 = vmatpush1.msra.mxu0 0.0
      %7986 = vmatprep.subr.mxu0 0.0
      %7987 = vmatpush1.msra.mxu0 0.0
      %7988 = vmatprep.subr.mxu0 0.0
      %7989 = vmatpush1.msra.mxu0 0.0
      %7990 = vmatprep.subr.mxu0 0.0
      %7991 = vmatpush1.msra.mxu0 0.0
      %7992 = vmatprep.subr.mxu0 0.0
      %7993 = vmatpush1.msra.mxu0 0.0
      %7994 = vmatprep.subr.mxu0 0.0
      %7995 = vmatpush1.msra.mxu0 0.0
      %7996 = vmatprep.subr.mxu0 0.0
      %7997 = vmatpush1.msra.mxu0 0.0
      %7998 = vmatprep.subr.mxu0 0.0
      %7999 = vmatpush1.msra.mxu0 0.0
      %8000 = vmatprep.subr.mxu0 0.0
      %8001 = vmatpush1.msra.mxu0 0.0
      %8002 = vmatprep.mubr.f32.mxu0 0.0
      %v8003 = vand.u32 %v7920, 4294901760
      %v8004 = vsub.f32 %v7920, %v8003
      %v8005 = vand.u32 %v8004, 4294901760
      %v8006 = vsub.f32 %v8004, %v8005
      %v8007 = vand.u32 %v8006, 4294901760
      %8008 = vmatmul.mubr.f32.gmra.mrb[0].mxu0 %v8007
      %v8009 = vpop.f32.mrb[0].mxu0
      %v8010 = vadd.f32 0.0, %v8009
      %v8011 = vpop.f32.mrb[0].mxu0
      %v8012 = vadd.f32 0.0, %v8011
      %8013 = vdwg.mxu0
      %v8014 = vand.u32 %v7648, 4294901760
      %v8015 = vsub.f32 %v7648, %v8014
      %v8016 = vand.u32 %v8015, 4294901760
      %v8017 = vsub.f32 %v8015, %v8016
      %v8018 = vand.u32 %v8017, 4294901760
      %8019 = vmatprep.subr.mxu0 %v8018
      %v8020 = vand.u32 %v7647, 4294901760
      %v8021 = vsub.f32 %v7647, %v8020
      %v8022 = vand.u32 %v8021, 4294901760
      %v8023 = vsub.f32 %v8021, %v8022
      %v8024 = vand.u32 %v8023, 4294901760
      %8025 = vmatpush1.msra.mxu0 %v8024
      %v8026 = vand.u32 %v7653, 4294901760
      %v8027 = vsub.f32 %v7653, %v8026
      %v8028 = vand.u32 %v8027, 4294901760
      %v8029 = vsub.f32 %v8027, %v8028
      %v8030 = vand.u32 %v8029, 4294901760
      %8031 = vmatprep.subr.mxu0 %v8030
      %v8032 = vand.u32 %v7652, 4294901760
      %v8033 = vsub.f32 %v7652, %v8032
      %v8034 = vand.u32 %v8033, 4294901760
      %v8035 = vsub.f32 %v8033, %v8034
      %v8036 = vand.u32 %v8035, 4294901760
      %8037 = vmatpush1.msra.mxu0 %v8036
      %v8038 = vand.u32 %v7658, 4294901760
      %v8039 = vsub.f32 %v7658, %v8038
      %v8040 = vand.u32 %v8039, 4294901760
      %v8041 = vsub.f32 %v8039, %v8040
      %v8042 = vand.u32 %v8041, 4294901760
      %8043 = vmatprep.subr.mxu0 %v8042
      %v8044 = vand.u32 %v7657, 4294901760
      %v8045 = vsub.f32 %v7657, %v8044
      %v8046 = vand.u32 %v8045, 4294901760
      %v8047 = vsub.f32 %v8045, %v8046
      %v8048 = vand.u32 %v8047, 4294901760
      %8049 = vmatpush1.msra.mxu0 %v8048
      %v8050 = vand.u32 %v7663, 4294901760
      %v8051 = vsub.f32 %v7663, %v8050
      %v8052 = vand.u32 %v8051, 4294901760
      %v8053 = vsub.f32 %v8051, %v8052
      %v8054 = vand.u32 %v8053, 4294901760
      %8055 = vmatprep.subr.mxu0 %v8054
      %v8056 = vand.u32 %v7662, 4294901760
      %v8057 = vsub.f32 %v7662, %v8056
      %v8058 = vand.u32 %v8057, 4294901760
      %v8059 = vsub.f32 %v8057, %v8058
      %v8060 = vand.u32 %v8059, 4294901760
      %8061 = vmatpush1.msra.mxu0 %v8060
      %v8062 = vand.u32 %v7668, 4294901760
      %v8063 = vsub.f32 %v7668, %v8062
      %v8064 = vand.u32 %v8063, 4294901760
      %v8065 = vsub.f32 %v8063, %v8064
      %v8066 = vand.u32 %v8065, 4294901760
      %8067 = vmatprep.subr.mxu0 %v8066
      %v8068 = vand.u32 %v7667, 4294901760
      %v8069 = vsub.f32 %v7667, %v8068
      %v8070 = vand.u32 %v8069, 4294901760
      %v8071 = vsub.f32 %v8069, %v8070
      %v8072 = vand.u32 %v8071, 4294901760
      %8073 = vmatpush1.msra.mxu0 %v8072
      %v8074 = vand.u32 %v7673, 4294901760
      %v8075 = vsub.f32 %v7673, %v8074
      %v8076 = vand.u32 %v8075, 4294901760
      %v8077 = vsub.f32 %v8075, %v8076
      %v8078 = vand.u32 %v8077, 4294901760
      %8079 = vmatprep.subr.mxu0 %v8078
      %v8080 = vand.u32 %v7672, 4294901760
      %v8081 = vsub.f32 %v7672, %v8080
      %v8082 = vand.u32 %v8081, 4294901760
      %v8083 = vsub.f32 %v8081, %v8082
      %v8084 = vand.u32 %v8083, 4294901760
      %8085 = vmatpush1.msra.mxu0 %v8084
      %v8086 = vand.u32 %v7678, 4294901760
      %v8087 = vsub.f32 %v7678, %v8086
      %v8088 = vand.u32 %v8087, 4294901760
      %v8089 = vsub.f32 %v8087, %v8088
      %v8090 = vand.u32 %v8089, 4294901760
      %8091 = vmatprep.subr.mxu0 %v8090
      %v8092 = vand.u32 %v7677, 4294901760
      %v8093 = vsub.f32 %v7677, %v8092
      %v8094 = vand.u32 %v8093, 4294901760
      %v8095 = vsub.f32 %v8093, %v8094
      %v8096 = vand.u32 %v8095, 4294901760
      %8097 = vmatpush1.msra.mxu0 %v8096
      %v8098 = vand.u32 %v7683, 4294901760
      %v8099 = vsub.f32 %v7683, %v8098
      %v8100 = vand.u32 %v8099, 4294901760
      %v8101 = vsub.f32 %v8099, %v8100
      %v8102 = vand.u32 %v8101, 4294901760
      %8103 = vmatprep.subr.mxu0 %v8102
      %v8104 = vand.u32 %v7682, 4294901760
      %v8105 = vsub.f32 %v7682, %v8104
      %v8106 = vand.u32 %v8105, 4294901760
      %v8107 = vsub.f32 %v8105, %v8106
      %v8108 = vand.u32 %v8107, 4294901760
      %8109 = vmatpush1.msra.mxu0 %v8108
      %8110 = vmatprep.subr.mxu0 0.0
      %8111 = vmatpush1.msra.mxu0 0.0
      %8112 = vmatprep.subr.mxu0 0.0
      %8113 = vmatpush1.msra.mxu0 0.0
      %8114 = vmatprep.subr.mxu0 0.0
      %8115 = vmatpush1.msra.mxu0 0.0
      %8116 = vmatprep.subr.mxu0 0.0
      %8117 = vmatpush1.msra.mxu0 0.0
      %8118 = vmatprep.subr.mxu0 0.0
      %8119 = vmatpush1.msra.mxu0 0.0
      %8120 = vmatprep.subr.mxu0 0.0
      %8121 = vmatpush1.msra.mxu0 0.0
      %8122 = vmatprep.subr.mxu0 0.0
      %8123 = vmatpush1.msra.mxu0 0.0
      %8124 = vmatprep.subr.mxu0 0.0
      %8125 = vmatpush1.msra.mxu0 0.0
      %8126 = vmatprep.subr.mxu0 0.0
      %8127 = vmatpush1.msra.mxu0 0.0
      %8128 = vmatprep.subr.mxu0 0.0
      %8129 = vmatpush1.msra.mxu0 0.0
      %8130 = vmatprep.subr.mxu0 0.0
      %8131 = vmatpush1.msra.mxu0 0.0
      %8132 = vmatprep.subr.mxu0 0.0
      %8133 = vmatpush1.msra.mxu0 0.0
      %8134 = vmatprep.subr.mxu0 0.0
      %8135 = vmatpush1.msra.mxu0 0.0
      %8136 = vmatprep.subr.mxu0 0.0
      %8137 = vmatpush1.msra.mxu0 0.0
      %8138 = vmatprep.subr.mxu0 0.0
      %8139 = vmatpush1.msra.mxu0 0.0
      %8140 = vmatprep.subr.mxu0 0.0
      %8141 = vmatpush1.msra.mxu0 0.0
      %8142 = vmatprep.subr.mxu0 0.0
      %8143 = vmatpush1.msra.mxu0 0.0
      %8144 = vmatprep.subr.mxu0 0.0
      %8145 = vmatpush1.msra.mxu0 0.0
      %8146 = vmatprep.subr.mxu0 0.0
      %8147 = vmatpush1.msra.mxu0 0.0
      %8148 = vmatprep.subr.mxu0 0.0
      %8149 = vmatpush1.msra.mxu0 0.0
      %8150 = vmatprep.subr.mxu0 0.0
      %8151 = vmatpush1.msra.mxu0 0.0
      %8152 = vmatprep.subr.mxu0 0.0
      %8153 = vmatpush1.msra.mxu0 0.0
      %8154 = vmatprep.subr.mxu0 0.0
      %8155 = vmatpush1.msra.mxu0 0.0
      %8156 = vmatprep.subr.mxu0 0.0
      %8157 = vmatpush1.msra.mxu0 0.0
      %8158 = vmatprep.mubr.f32.mxu0 0.0
      %v8159 = vand.u32 %v7920, 4294901760
      %8160 = vmatmul.mubr.f32.gmra.mrb[0].mxu0 %v8159
      %v8161 = vpop.f32.mrb[0].mxu0
      %v8162 = vadd.f32 %v8010, %v8161
      %v8163 = vpop.f32.mrb[0].mxu0
      %v8164 = vadd.f32 %v8012, %v8163
      %8165 = vdwg.mxu0
      %v8166 = vand.u32 %v7648, 4294901760
      %v8167 = vsub.f32 %v7648, %v8166
      %8168 = vmatprep.subr.mxu0 %v8167
      %v8169 = vand.u32 %v7647, 4294901760
      %v8170 = vsub.f32 %v7647, %v8169
      %8171 = vmatpush1.msra.mxu0 %v8170
      %v8172 = vand.u32 %v7653, 4294901760
      %v8173 = vsub.f32 %v7653, %v8172
      %8174 = vmatprep.subr.mxu0 %v8173
      %v8175 = vand.u32 %v7652, 4294901760
      %v8176 = vsub.f32 %v7652, %v8175
      %8177 = vmatpush1.msra.mxu0 %v8176
      %v8178 = vand.u32 %v7658, 4294901760
      %v8179 = vsub.f32 %v7658, %v8178
      %8180 = vmatprep.subr.mxu0 %v8179
      %v8181 = vand.u32 %v7657, 4294901760
      %v8182 = vsub.f32 %v7657, %v8181
      %8183 = vmatpush1.msra.mxu0 %v8182
      %v8184 = vand.u32 %v7663, 4294901760
      %v8185 = vsub.f32 %v7663, %v8184
      %8186 = vmatprep.subr.mxu0 %v8185
      %v8187 = vand.u32 %v7662, 4294901760
      %v8188 = vsub.f32 %v7662, %v8187
      %8189 = vmatpush1.msra.mxu0 %v8188
      %v8190 = vand.u32 %v7668, 4294901760
      %v8191 = vsub.f32 %v7668, %v8190
      %8192 = vmatprep.subr.mxu0 %v8191
      %v8193 = vand.u32 %v7667, 4294901760
      %v8194 = vsub.f32 %v7667, %v8193
      %8195 = vmatpush1.msra.mxu0 %v8194
      %v8196 = vand.u32 %v7673, 4294901760
      %v8197 = vsub.f32 %v7673, %v8196
      %8198 = vmatprep.subr.mxu0 %v8197
      %v8199 = vand.u32 %v7672, 4294901760
      %v8200 = vsub.f32 %v7672, %v8199
      %8201 = vmatpush1.msra.mxu0 %v8200
      %v8202 = vand.u32 %v7678, 4294901760
      %v8203 = vsub.f32 %v7678, %v8202
      %8204 = vmatprep.subr.mxu0 %v8203
      %v8205 = vand.u32 %v7677, 4294901760
      %v8206 = vsub.f32 %v7677, %v8205
      %8207 = vmatpush1.msra.mxu0 %v8206
      %v8208 = vand.u32 %v7683, 4294901760
      %v8209 = vsub.f32 %v7683, %v8208
      %8210 = vmatprep.subr.mxu0 %v8209
      %v8211 = vand.u32 %v7682, 4294901760
      %v8212 = vsub.f32 %v7682, %v8211
      %8213 = vmatpush1.msra.mxu0 %v8212
      %8214 = vmatprep.subr.mxu0 0.0
      %8215 = vmatpush1.msra.mxu0 0.0
      %8216 = vmatprep.subr.mxu0 0.0
      %8217 = vmatpush1.msra.mxu0 0.0
      %8218 = vmatprep.subr.mxu0 0.0
      %8219 = vmatpush1.msra.mxu0 0.0
      %8220 = vmatprep.subr.mxu0 0.0
      %8221 = vmatpush1.msra.mxu0 0.0
      %8222 = vmatprep.subr.mxu0 0.0
      %8223 = vmatpush1.msra.mxu0 0.0
      %8224 = vmatprep.subr.mxu0 0.0
      %8225 = vmatpush1.msra.mxu0 0.0
      %8226 = vmatprep.subr.mxu0 0.0
      %8227 = vmatpush1.msra.mxu0 0.0
      %8228 = vmatprep.subr.mxu0 0.0
      %8229 = vmatpush1.msra.mxu0 0.0
      %8230 = vmatprep.subr.mxu0 0.0
      %8231 = vmatpush1.msra.mxu0 0.0
      %8232 = vmatprep.subr.mxu0 0.0
      %8233 = vmatpush1.msra.mxu0 0.0
      %8234 = vmatprep.subr.mxu0 0.0
      %8235 = vmatpush1.msra.mxu0 0.0
      %8236 = vmatprep.subr.mxu0 0.0
      %8237 = vmatpush1.msra.mxu0 0.0
      %8238 = vmatprep.subr.mxu0 0.0
      %8239 = vmatpush1.msra.mxu0 0.0
      %8240 = vmatprep.subr.mxu0 0.0
      %8241 = vmatpush1.msra.mxu0 0.0
      %8242 = vmatprep.subr.mxu0 0.0
      %8243 = vmatpush1.msra.mxu0 0.0
      %8244 = vmatprep.subr.mxu0 0.0
      %8245 = vmatpush1.msra.mxu0 0.0
      %8246 = vmatprep.subr.mxu0 0.0
      %8247 = vmatpush1.msra.mxu0 0.0
      %8248 = vmatprep.subr.mxu0 0.0
      %8249 = vmatpush1.msra.mxu0 0.0
      %8250 = vmatprep.subr.mxu0 0.0
      %8251 = vmatpush1.msra.mxu0 0.0
      %8252 = vmatprep.subr.mxu0 0.0
      %8253 = vmatpush1.msra.mxu0 0.0
      %8254 = vmatprep.subr.mxu0 0.0
      %8255 = vmatpush1.msra.mxu0 0.0
      %8256 = vmatprep.subr.mxu0 0.0
      %8257 = vmatpush1.msra.mxu0 0.0
      %8258 = vmatprep.subr.mxu0 0.0
      %8259 = vmatpush1.msra.mxu0 0.0
      %8260 = vmatprep.subr.mxu0 0.0
      %8261 = vmatpush1.msra.mxu0 0.0
      %8262 = vmatprep.mubr.f32.mxu0 0.0
      %v8263 = vand.u32 %v7920, 4294901760
      %v8264 = vsub.f32 %v7920, %v8263
      %8265 = vmatmul.mubr.f32.gmra.mrb[0].mxu0 %v8264
      %v8266 = vpop.f32.mrb[0].mxu0
      %v8267 = vadd.f32 %v8162, %v8266
      %v8268 = vpop.f32.mrb[0].mxu0
      %v8269 = vadd.f32 %v8164, %v8268
      %8270 = vdwg.mxu0
      %v8271 = vand.u32 %v7648, 4294901760
      %8272 = vmatprep.subr.mxu0 %v8271
      %v8273 = vand.u32 %v7647, 4294901760
      %8274 = vmatpush1.msra.mxu0 %v8273
      %v8275 = vand.u32 %v7653, 4294901760
      %8276 = vmatprep.subr.mxu0 %v8275
      %v8277 = vand.u32 %v7652, 4294901760
      %8278 = vmatpush1.msra.mxu0 %v8277
      %v8279 = vand.u32 %v7658, 4294901760
      %8280 = vmatprep.subr.mxu0 %v8279
      %v8281 = vand.u32 %v7657, 4294901760
      %8282 = vmatpush1.msra.mxu0 %v8281
      %v8283 = vand.u32 %v7663, 4294901760
      %8284 = vmatprep.subr.mxu0 %v8283
      %v8285 = vand.u32 %v7662, 4294901760
      %8286 = vmatpush1.msra.mxu0 %v8285
      %v8287 = vand.u32 %v7668, 4294901760
      %8288 = vmatprep.subr.mxu0 %v8287
      %v8289 = vand.u32 %v7667, 4294901760
      %8290 = vmatpush1.msra.mxu0 %v8289
      %v8291 = vand.u32 %v7673, 4294901760
      %8292 = vmatprep.subr.mxu0 %v8291
      %v8293 = vand.u32 %v7672, 4294901760
      %8294 = vmatpush1.msra.mxu0 %v8293
      %v8295 = vand.u32 %v7678, 4294901760
      %8296 = vmatprep.subr.mxu0 %v8295
      %v8297 = vand.u32 %v7677, 4294901760
      %8298 = vmatpush1.msra.mxu0 %v8297
      %v8299 = vand.u32 %v7683, 4294901760
      %8300 = vmatprep.subr.mxu0 %v8299
      %v8301 = vand.u32 %v7682, 4294901760
      %8302 = vmatpush1.msra.mxu0 %v8301
      %8303 = vmatprep.subr.mxu0 0.0
      %8304 = vmatpush1.msra.mxu0 0.0
      %8305 = vmatprep.subr.mxu0 0.0
      %8306 = vmatpush1.msra.mxu0 0.0
      %8307 = vmatprep.subr.mxu0 0.0
      %8308 = vmatpush1.msra.mxu0 0.0
      %8309 = vmatprep.subr.mxu0 0.0
      %8310 = vmatpush1.msra.mxu0 0.0
      %8311 = vmatprep.subr.mxu0 0.0
      %8312 = vmatpush1.msra.mxu0 0.0
      %8313 = vmatprep.subr.mxu0 0.0
      %8314 = vmatpush1.msra.mxu0 0.0
      %8315 = vmatprep.subr.mxu0 0.0
      %8316 = vmatpush1.msra.mxu0 0.0
      %8317 = vmatprep.subr.mxu0 0.0
      %8318 = vmatpush1.msra.mxu0 0.0
      %8319 = vmatprep.subr.mxu0 0.0
      %8320 = vmatpush1.msra.mxu0 0.0
      %8321 = vmatprep.subr.mxu0 0.0
      %8322 = vmatpush1.msra.mxu0 0.0
      %8323 = vmatprep.subr.mxu0 0.0
      %8324 = vmatpush1.msra.mxu0 0.0
      %8325 = vmatprep.subr.mxu0 0.0
      %8326 = vmatpush1.msra.mxu0 0.0
      %8327 = vmatprep.subr.mxu0 0.0
      %8328 = vmatpush1.msra.mxu0 0.0
      %8329 = vmatprep.subr.mxu0 0.0
      %8330 = vmatpush1.msra.mxu0 0.0
      %8331 = vmatprep.subr.mxu0 0.0
      %8332 = vmatpush1.msra.mxu0 0.0
      %8333 = vmatprep.subr.mxu0 0.0
      %8334 = vmatpush1.msra.mxu0 0.0
      %8335 = vmatprep.subr.mxu0 0.0
      %8336 = vmatpush1.msra.mxu0 0.0
      %8337 = vmatprep.subr.mxu0 0.0
      %8338 = vmatpush1.msra.mxu0 0.0
      %8339 = vmatprep.subr.mxu0 0.0
      %8340 = vmatpush1.msra.mxu0 0.0
      %8341 = vmatprep.subr.mxu0 0.0
      %8342 = vmatpush1.msra.mxu0 0.0
      %8343 = vmatprep.subr.mxu0 0.0
      %8344 = vmatpush1.msra.mxu0 0.0
      %8345 = vmatprep.subr.mxu0 0.0
      %8346 = vmatpush1.msra.mxu0 0.0
      %8347 = vmatprep.subr.mxu0 0.0
      %8348 = vmatpush1.msra.mxu0 0.0
      %8349 = vmatprep.subr.mxu0 0.0
      %8350 = vmatpush1.msra.mxu0 0.0
      %8351 = vmatprep.mubr.f32.mxu0 0.0
      %v8352 = vand.u32 %v7920, 4294901760
      %v8353 = vsub.f32 %v7920, %v8352
      %v8354 = vand.u32 %v8353, 4294901760
      %8355 = vmatmul.mubr.f32.gmra.mrb[0].mxu0 %v8354
      %v8356 = vpop.f32.mrb[0].mxu0
      %v8357 = vadd.f32 %v8267, %v8356
      %v8358 = vpop.f32.mrb[0].mxu0
      %v8359 = vadd.f32 %v8269, %v8358
      %8360 = vdwg.mxu0
      %v8361 = vand.u32 %v7648, 4294901760
      %v8362 = vsub.f32 %v7648, %v8361
      %v8363 = vand.u32 %v8362, 4294901760
      %8364 = vmatprep.subr.mxu0 %v8363
      %v8365 = vand.u32 %v7647, 4294901760
      %v8366 = vsub.f32 %v7647, %v8365
      %v8367 = vand.u32 %v8366, 4294901760
      %8368 = vmatpush1.msra.mxu0 %v8367
      %v8369 = vand.u32 %v7653, 4294901760
      %v8370 = vsub.f32 %v7653, %v8369
      %v8371 = vand.u32 %v8370, 4294901760
      %8372 = vmatprep.subr.mxu0 %v8371
      %v8373 = vand.u32 %v7652, 4294901760
      %v8374 = vsub.f32 %v7652, %v8373
      %v8375 = vand.u32 %v8374, 4294901760
      %8376 = vmatpush1.msra.mxu0 %v8375
      %v8377 = vand.u32 %v7658, 4294901760
      %v8378 = vsub.f32 %v7658, %v8377
      %v8379 = vand.u32 %v8378, 4294901760
      %8380 = vmatprep.subr.mxu0 %v8379
      %v8381 = vand.u32 %v7657, 4294901760
      %v8382 = vsub.f32 %v7657, %v8381
      %v8383 = vand.u32 %v8382, 4294901760
      %8384 = vmatpush1.msra.mxu0 %v8383
      %v8385 = vand.u32 %v7663, 4294901760
      %v8386 = vsub.f32 %v7663, %v8385
      %v8387 = vand.u32 %v8386, 4294901760
      %8388 = vmatprep.subr.mxu0 %v8387
      %v8389 = vand.u32 %v7662, 4294901760
      %v8390 = vsub.f32 %v7662, %v8389
      %v8391 = vand.u32 %v8390, 4294901760
      %8392 = vmatpush1.msra.mxu0 %v8391
      %v8393 = vand.u32 %v7668, 4294901760
      %v8394 = vsub.f32 %v7668, %v8393
      %v8395 = vand.u32 %v8394, 4294901760
      %8396 = vmatprep.subr.mxu0 %v8395
      %v8397 = vand.u32 %v7667, 4294901760
      %v8398 = vsub.f32 %v7667, %v8397
      %v8399 = vand.u32 %v8398, 4294901760
      %8400 = vmatpush1.msra.mxu0 %v8399
      %v8401 = vand.u32 %v7673, 4294901760
      %v8402 = vsub.f32 %v7673, %v8401
      %v8403 = vand.u32 %v8402, 4294901760
      %8404 = vmatprep.subr.mxu0 %v8403
      %v8405 = vand.u32 %v7672, 4294901760
      %v8406 = vsub.f32 %v7672, %v8405
      %v8407 = vand.u32 %v8406, 4294901760
      %8408 = vmatpush1.msra.mxu0 %v8407
      %v8409 = vand.u32 %v7678, 4294901760
      %v8410 = vsub.f32 %v7678, %v8409
      %v8411 = vand.u32 %v8410, 4294901760
      %8412 = vmatprep.subr.mxu0 %v8411
      %v8413 = vand.u32 %v7677, 4294901760
      %v8414 = vsub.f32 %v7677, %v8413
      %v8415 = vand.u32 %v8414, 4294901760
      %8416 = vmatpush1.msra.mxu0 %v8415
      %v8417 = vand.u32 %v7683, 4294901760
      %v8418 = vsub.f32 %v7683, %v8417
      %v8419 = vand.u32 %v8418, 4294901760
      %8420 = vmatprep.subr.mxu0 %v8419
      %v8421 = vand.u32 %v7682, 4294901760
      %v8422 = vsub.f32 %v7682, %v8421
      %v8423 = vand.u32 %v8422, 4294901760
      %8424 = vmatpush1.msra.mxu0 %v8423
      %8425 = vmatprep.subr.mxu0 0.0
      %8426 = vmatpush1.msra.mxu0 0.0
      %8427 = vmatprep.subr.mxu0 0.0
      %8428 = vmatpush1.msra.mxu0 0.0
      %8429 = vmatprep.subr.mxu0 0.0
      %8430 = vmatpush1.msra.mxu0 0.0
      %8431 = vmatprep.subr.mxu0 0.0
      %8432 = vmatpush1.msra.mxu0 0.0
      %8433 = vmatprep.subr.mxu0 0.0
      %8434 = vmatpush1.msra.mxu0 0.0
      %8435 = vmatprep.subr.mxu0 0.0
      %8436 = vmatpush1.msra.mxu0 0.0
      %8437 = vmatprep.subr.mxu0 0.0
      %8438 = vmatpush1.msra.mxu0 0.0
      %8439 = vmatprep.subr.mxu0 0.0
      %8440 = vmatpush1.msra.mxu0 0.0
      %8441 = vmatprep.subr.mxu0 0.0
      %8442 = vmatpush1.msra.mxu0 0.0
      %8443 = vmatprep.subr.mxu0 0.0
      %8444 = vmatpush1.msra.mxu0 0.0
      %8445 = vmatprep.subr.mxu0 0.0
      %8446 = vmatpush1.msra.mxu0 0.0
      %8447 = vmatprep.subr.mxu0 0.0
      %8448 = vmatpush1.msra.mxu0 0.0
      %8449 = vmatprep.subr.mxu0 0.0
      %8450 = vmatpush1.msra.mxu0 0.0
      %8451 = vmatprep.subr.mxu0 0.0
      %8452 = vmatpush1.msra.mxu0 0.0
      %8453 = vmatprep.subr.mxu0 0.0
      %8454 = vmatpush1.msra.mxu0 0.0
      %8455 = vmatprep.subr.mxu0 0.0
      %8456 = vmatpush1.msra.mxu0 0.0
      %8457 = vmatprep.subr.mxu0 0.0
      %8458 = vmatpush1.msra.mxu0 0.0
      %8459 = vmatprep.subr.mxu0 0.0
      %8460 = vmatpush1.msra.mxu0 0.0
      %8461 = vmatprep.subr.mxu0 0.0
      %8462 = vmatpush1.msra.mxu0 0.0
      %8463 = vmatprep.subr.mxu0 0.0
      %8464 = vmatpush1.msra.mxu0 0.0
      %8465 = vmatprep.subr.mxu0 0.0
      %8466 = vmatpush1.msra.mxu0 0.0
      %8467 = vmatprep.subr.mxu0 0.0
      %8468 = vmatpush1.msra.mxu0 0.0
      %8469 = vmatprep.subr.mxu0 0.0
      %8470 = vmatpush1.msra.mxu0 0.0
      %8471 = vmatprep.subr.mxu0 0.0
      %8472 = vmatpush1.msra.mxu0 0.0
      %8473 = vmatprep.mubr.f32.mxu0 0.0
      %v8474 = vand.u32 %v7920, 4294901760
      %8475 = vmatmul.mubr.f32.gmra.mrb[0].mxu0 %v8474
      %v8476 = vpop.f32.mrb[0].mxu0
      %v8477 = vadd.f32 %v8357, %v8476
      %v8478 = vpop.f32.mrb[0].mxu0
      %v8479 = vadd.f32 %v8359, %v8478
      %8480 = vdwg.mxu0
      %v8481 = vand.u32 %v7648, 4294901760
      %8482 = vmatprep.subr.mxu0 %v8481
      %v8483 = vand.u32 %v7647, 4294901760
      %8484 = vmatpush1.msra.mxu0 %v8483
      %v8485 = vand.u32 %v7653, 4294901760
      %8486 = vmatprep.subr.mxu0 %v8485
      %v8487 = vand.u32 %v7652, 4294901760
      %8488 = vmatpush1.msra.mxu0 %v8487
      %v8489 = vand.u32 %v7658, 4294901760
      %8490 = vmatprep.subr.mxu0 %v8489
      %v8491 = vand.u32 %v7657, 4294901760
      %8492 = vmatpush1.msra.mxu0 %v8491
      %v8493 = vand.u32 %v7663, 4294901760
      %8494 = vmatprep.subr.mxu0 %v8493
      %v8495 = vand.u32 %v7662, 4294901760
      %8496 = vmatpush1.msra.mxu0 %v8495
      %v8497 = vand.u32 %v7668, 4294901760
      %8498 = vmatprep.subr.mxu0 %v8497
      %v8499 = vand.u32 %v7667, 4294901760
      %8500 = vmatpush1.msra.mxu0 %v8499
      %v8501 = vand.u32 %v7673, 4294901760
      %8502 = vmatprep.subr.mxu0 %v8501
      %v8503 = vand.u32 %v7672, 4294901760
      %8504 = vmatpush1.msra.mxu0 %v8503
      %v8505 = vand.u32 %v7678, 4294901760
      %8506 = vmatprep.subr.mxu0 %v8505
      %v8507 = vand.u32 %v7677, 4294901760
      %8508 = vmatpush1.msra.mxu0 %v8507
      %v8509 = vand.u32 %v7683, 4294901760
      %8510 = vmatprep.subr.mxu0 %v8509
      %v8511 = vand.u32 %v7682, 4294901760
      %8512 = vmatpush1.msra.mxu0 %v8511
      %8513 = vmatprep.subr.mxu0 0.0
      %8514 = vmatpush1.msra.mxu0 0.0
      %8515 = vmatprep.subr.mxu0 0.0
      %8516 = vmatpush1.msra.mxu0 0.0
      %8517 = vmatprep.subr.mxu0 0.0
      %8518 = vmatpush1.msra.mxu0 0.0
      %8519 = vmatprep.subr.mxu0 0.0
      %8520 = vmatpush1.msra.mxu0 0.0
      %8521 = vmatprep.subr.mxu0 0.0
      %8522 = vmatpush1.msra.mxu0 0.0
      %8523 = vmatprep.subr.mxu0 0.0
      %8524 = vmatpush1.msra.mxu0 0.0
      %8525 = vmatprep.subr.mxu0 0.0
      %8526 = vmatpush1.msra.mxu0 0.0
      %8527 = vmatprep.subr.mxu0 0.0
      %8528 = vmatpush1.msra.mxu0 0.0
      %8529 = vmatprep.subr.mxu0 0.0
      %8530 = vmatpush1.msra.mxu0 0.0
      %8531 = vmatprep.subr.mxu0 0.0
      %8532 = vmatpush1.msra.mxu0 0.0
      %8533 = vmatprep.subr.mxu0 0.0
      %8534 = vmatpush1.msra.mxu0 0.0
      %8535 = vmatprep.subr.mxu0 0.0
      %8536 = vmatpush1.msra.mxu0 0.0
      %8537 = vmatprep.subr.mxu0 0.0
      %8538 = vmatpush1.msra.mxu0 0.0
      %8539 = vmatprep.subr.mxu0 0.0
      %8540 = vmatpush1.msra.mxu0 0.0
      %8541 = vmatprep.subr.mxu0 0.0
      %8542 = vmatpush1.msra.mxu0 0.0
      %8543 = vmatprep.subr.mxu0 0.0
      %8544 = vmatpush1.msra.mxu0 0.0
      %8545 = vmatprep.subr.mxu0 0.0
      %8546 = vmatpush1.msra.mxu0 0.0
      %8547 = vmatprep.subr.mxu0 0.0
      %8548 = vmatpush1.msra.mxu0 0.0
      %8549 = vmatprep.subr.mxu0 0.0
      %8550 = vmatpush1.msra.mxu0 0.0
      %8551 = vmatprep.subr.mxu0 0.0
      %8552 = vmatpush1.msra.mxu0 0.0
      %8553 = vmatprep.subr.mxu0 0.0
      %8554 = vmatpush1.msra.mxu0 0.0
      %8555 = vmatprep.subr.mxu0 0.0
      %8556 = vmatpush1.msra.mxu0 0.0
      %8557 = vmatprep.subr.mxu0 0.0
      %8558 = vmatpush1.msra.mxu0 0.0
      %8559 = vmatprep.subr.mxu0 0.0
      %8560 = vmatpush1.msra.mxu0 0.0
      %8561 = vmatprep.mubr.f32.mxu0 0.0
      %v8562 = vand.u32 %v7920, 4294901760
      %8563 = vmatmul.mubr.f32.gmra.mrb[0].mxu0 %v8562
      %v8564 = vpop.f32.mrb[0].mxu0
      %v8565 = vadd.f32 %v8477, %v8564
      %v8566 = vpop.f32.mrb[0].mxu0
      %v8567 = vadd.f32 %v8479, %v8566
      %8568 = vdwg.mxu0
      %v8569 = vand.u32 %v7650, 4294901760
      %8570 = vmatprep.subr.mxu0 %v8569
      %v8571 = vand.u32 %v7649, 4294901760
      %8572 = vmatpush1.msra.mxu0 %v8571
      %v8573 = vand.u32 %v7655, 4294901760
      %8574 = vmatprep.subr.mxu0 %v8573
      %v8575 = vand.u32 %v7654, 4294901760
      %8576 = vmatpush1.msra.mxu0 %v8575
      %v8577 = vand.u32 %v7660, 4294901760
      %8578 = vmatprep.subr.mxu0 %v8577
      %v8579 = vand.u32 %v7659, 4294901760
      %8580 = vmatpush1.msra.mxu0 %v8579
      %v8581 = vand.u32 %v7665, 4294901760
      %8582 = vmatprep.subr.mxu0 %v8581
      %v8583 = vand.u32 %v7664, 4294901760
      %8584 = vmatpush1.msra.mxu0 %v8583
      %v8585 = vand.u32 %v7670, 4294901760
      %8586 = vmatprep.subr.mxu0 %v8585
      %v8587 = vand.u32 %v7669, 4294901760
      %8588 = vmatpush1.msra.mxu0 %v8587
      %v8589 = vand.u32 %v7675, 4294901760
      %8590 = vmatprep.subr.mxu0 %v8589
      %v8591 = vand.u32 %v7674, 4294901760
      %8592 = vmatpush1.msra.mxu0 %v8591
      %v8593 = vand.u32 %v7680, 4294901760
      %8594 = vmatprep.subr.mxu0 %v8593
      %v8595 = vand.u32 %v7679, 4294901760
      %8596 = vmatpush1.msra.mxu0 %v8595
      %v8597 = vand.u32 %v7685, 4294901760
      %8598 = vmatprep.subr.mxu0 %v8597
      %v8599 = vand.u32 %v7684, 4294901760
      %8600 = vmatpush1.msra.mxu0 %v8599
      %8601 = vmatprep.subr.mxu0 0.0
      %8602 = vmatpush1.msra.mxu0 0.0
      %8603 = vmatprep.subr.mxu0 0.0
      %8604 = vmatpush1.msra.mxu0 0.0
      %8605 = vmatprep.subr.mxu0 0.0
      %8606 = vmatpush1.msra.mxu0 0.0
      %8607 = vmatprep.subr.mxu0 0.0
      %8608 = vmatpush1.msra.mxu0 0.0
      %8609 = vmatprep.subr.mxu0 0.0
      %8610 = vmatpush1.msra.mxu0 0.0
      %8611 = vmatprep.subr.mxu0 0.0
      %8612 = vmatpush1.msra.mxu0 0.0
      %8613 = vmatprep.subr.mxu0 0.0
      %8614 = vmatpush1.msra.mxu0 0.0
      %8615 = vmatprep.subr.mxu0 0.0
      %8616 = vmatpush1.msra.mxu0 0.0
      %8617 = vmatprep.subr.mxu0 0.0
      %8618 = vmatpush1.msra.mxu0 0.0
      %8619 = vmatprep.subr.mxu0 0.0
      %8620 = vmatpush1.msra.mxu0 0.0
      %8621 = vmatprep.subr.mxu0 0.0
      %8622 = vmatpush1.msra.mxu0 0.0
      %8623 = vmatprep.subr.mxu0 0.0
      %8624 = vmatpush1.msra.mxu0 0.0
      %8625 = vmatprep.subr.mxu0 0.0
      %8626 = vmatpush1.msra.mxu0 0.0
      %8627 = vmatprep.subr.mxu0 0.0
      %8628 = vmatpush1.msra.mxu0 0.0
      %8629 = vmatprep.subr.mxu0 0.0
      %8630 = vmatpush1.msra.mxu0 0.0
      %8631 = vmatprep.subr.mxu0 0.0
      %8632 = vmatpush1.msra.mxu0 0.0
      %8633 = vmatprep.subr.mxu0 0.0
      %8634 = vmatpush1.msra.mxu0 0.0
      %8635 = vmatprep.subr.mxu0 0.0
      %8636 = vmatpush1.msra.mxu0 0.0
      %8637 = vmatprep.subr.mxu0 0.0
      %8638 = vmatpush1.msra.mxu0 0.0
      %8639 = vmatprep.subr.mxu0 0.0
      %8640 = vmatpush1.msra.mxu0 0.0
      %8641 = vmatprep.subr.mxu0 0.0
      %8642 = vmatpush1.msra.mxu0 0.0
      %8643 = vmatprep.subr.mxu0 0.0
      %8644 = vmatpush1.msra.mxu0 0.0
      %8645 = vmatprep.subr.mxu0 0.0
      %8646 = vmatpush1.msra.mxu0 0.0
      %8647 = vmatprep.subr.mxu0 0.0
      %8648 = vmatpush1.msra.mxu0 0.0
      %8649 = vmatprep.mubr.f32.mxu0 0.0
      %v8650 = vand.u32 %v7920, 4294901760
      %v8651 = vsub.f32 %v7920, %v8650
      %v8652 = vand.u32 %v8651, 4294901760
      %v8653 = vsub.f32 %v8651, %v8652
      %v8654 = vand.u32 %v8653, 4294901760
      %8655 = vmatmul.mubr.f32.gmra.mrb[0].mxu0 %v8654
      %v8656 = vpop.f32.mrb[0].mxu0
      %v8657 = vadd.f32 0.0, %v8656
      %v8658 = vpop.f32.mrb[0].mxu0
      %v8659 = vadd.f32 0.0, %v8658
      %8660 = vdwg.mxu0
      %v8661 = vand.u32 %v7650, 4294901760
      %v8662 = vsub.f32 %v7650, %v8661
      %v8663 = vand.u32 %v8662, 4294901760
      %v8664 = vsub.f32 %v8662, %v8663
      %v8665 = vand.u32 %v8664, 4294901760
      %8666 = vmatprep.subr.mxu0 %v8665
      %v8667 = vand.u32 %v7649, 4294901760
      %v8668 = vsub.f32 %v7649, %v8667
      %v8669 = vand.u32 %v8668, 4294901760
      %v8670 = vsub.f32 %v8668, %v8669
      %v8671 = vand.u32 %v8670, 4294901760
      %8672 = vmatpush1.msra.mxu0 %v8671
      %v8673 = vand.u32 %v7655, 4294901760
      %v8674 = vsub.f32 %v7655, %v8673
      %v8675 = vand.u32 %v8674, 4294901760
      %v8676 = vsub.f32 %v8674, %v8675
      %v8677 = vand.u32 %v8676, 4294901760
      %8678 = vmatprep.subr.mxu0 %v8677
      %v8679 = vand.u32 %v7654, 4294901760
      %v8680 = vsub.f32 %v7654, %v8679
      %v8681 = vand.u32 %v8680, 4294901760
      %v8682 = vsub.f32 %v8680, %v8681
      %v8683 = vand.u32 %v8682, 4294901760
      %8684 = vmatpush1.msra.mxu0 %v8683
      %v8685 = vand.u32 %v7660, 4294901760
      %v8686 = vsub.f32 %v7660, %v8685
      %v8687 = vand.u32 %v8686, 4294901760
      %v8688 = vsub.f32 %v8686, %v8687
      %v8689 = vand.u32 %v8688, 4294901760
      %8690 = vmatprep.subr.mxu0 %v8689
      %v8691 = vand.u32 %v7659, 4294901760
      %v8692 = vsub.f32 %v7659, %v8691
      %v8693 = vand.u32 %v8692, 4294901760
      %v8694 = vsub.f32 %v8692, %v8693
      %v8695 = vand.u32 %v8694, 4294901760
      %8696 = vmatpush1.msra.mxu0 %v8695
      %v8697 = vand.u32 %v7665, 4294901760
      %v8698 = vsub.f32 %v7665, %v8697
      %v8699 = vand.u32 %v8698, 4294901760
      %v8700 = vsub.f32 %v8698, %v8699
      %v8701 = vand.u32 %v8700, 4294901760
      %8702 = vmatprep.subr.mxu0 %v8701
      %v8703 = vand.u32 %v7664, 4294901760
      %v8704 = vsub.f32 %v7664, %v8703
      %v8705 = vand.u32 %v8704, 4294901760
      %v8706 = vsub.f32 %v8704, %v8705
      %v8707 = vand.u32 %v8706, 4294901760
      %8708 = vmatpush1.msra.mxu0 %v8707
      %v8709 = vand.u32 %v7670, 4294901760
      %v8710 = vsub.f32 %v7670, %v8709
      %v8711 = vand.u32 %v8710, 4294901760
      %v8712 = vsub.f32 %v8710, %v8711
      %v8713 = vand.u32 %v8712, 4294901760
      %8714 = vmatprep.subr.mxu0 %v8713
      %v8715 = vand.u32 %v7669, 4294901760
      %v8716 = vsub.f32 %v7669, %v8715
      %v8717 = vand.u32 %v8716, 4294901760
      %v8718 = vsub.f32 %v8716, %v8717
      %v8719 = vand.u32 %v8718, 4294901760
      %8720 = vmatpush1.msra.mxu0 %v8719
      %v8721 = vand.u32 %v7675, 4294901760
      %v8722 = vsub.f32 %v7675, %v8721
      %v8723 = vand.u32 %v8722, 4294901760
      %v8724 = vsub.f32 %v8722, %v8723
      %v8725 = vand.u32 %v8724, 4294901760
      %8726 = vmatprep.subr.mxu0 %v8725
      %v8727 = vand.u32 %v7674, 4294901760
      %v8728 = vsub.f32 %v7674, %v8727
      %v8729 = vand.u32 %v8728, 4294901760
      %v8730 = vsub.f32 %v8728, %v8729
      %v8731 = vand.u32 %v8730, 4294901760
      %8732 = vmatpush1.msra.mxu0 %v8731
      %v8733 = vand.u32 %v7680, 4294901760
      %v8734 = vsub.f32 %v7680, %v8733
      %v8735 = vand.u32 %v8734, 4294901760
      %v8736 = vsub.f32 %v8734, %v8735
      %v8737 = vand.u32 %v8736, 4294901760
      %8738 = vmatprep.subr.mxu0 %v8737
      %v8739 = vand.u32 %v7679, 4294901760
      %v8740 = vsub.f32 %v7679, %v8739
      %v8741 = vand.u32 %v8740, 4294901760
      %v8742 = vsub.f32 %v8740, %v8741
      %v8743 = vand.u32 %v8742, 4294901760
      %8744 = vmatpush1.msra.mxu0 %v8743
      %v8745 = vand.u32 %v7685, 4294901760
      %v8746 = vsub.f32 %v7685, %v8745
      %v8747 = vand.u32 %v8746, 4294901760
      %v8748 = vsub.f32 %v8746, %v8747
      %v8749 = vand.u32 %v8748, 4294901760
      %8750 = vmatprep.subr.mxu0 %v8749
      %v8751 = vand.u32 %v7684, 4294901760
      %v8752 = vsub.f32 %v7684, %v8751
      %v8753 = vand.u32 %v8752, 4294901760
      %v8754 = vsub.f32 %v8752, %v8753
      %v8755 = vand.u32 %v8754, 4294901760
      %8756 = vmatpush1.msra.mxu0 %v8755
      %8757 = vmatprep.subr.mxu0 0.0
      %8758 = vmatpush1.msra.mxu0 0.0
      %8759 = vmatprep.subr.mxu0 0.0
      %8760 = vmatpush1.msra.mxu0 0.0
      %8761 = vmatprep.subr.mxu0 0.0
      %8762 = vmatpush1.msra.mxu0 0.0
      %8763 = vmatprep.subr.mxu0 0.0
      %8764 = vmatpush1.msra.mxu0 0.0
      %8765 = vmatprep.subr.mxu0 0.0
      %8766 = vmatpush1.msra.mxu0 0.0
      %8767 = vmatprep.subr.mxu0 0.0
      %8768 = vmatpush1.msra.mxu0 0.0
      %8769 = vmatprep.subr.mxu0 0.0
      %8770 = vmatpush1.msra.mxu0 0.0
      %8771 = vmatprep.subr.mxu0 0.0
      %8772 = vmatpush1.msra.mxu0 0.0
      %8773 = vmatprep.subr.mxu0 0.0
      %8774 = vmatpush1.msra.mxu0 0.0
      %8775 = vmatprep.subr.mxu0 0.0
      %8776 = vmatpush1.msra.mxu0 0.0
      %8777 = vmatprep.subr.mxu0 0.0
      %8778 = vmatpush1.msra.mxu0 0.0
      %8779 = vmatprep.subr.mxu0 0.0
      %8780 = vmatpush1.msra.mxu0 0.0
      %8781 = vmatprep.subr.mxu0 0.0
      %8782 = vmatpush1.msra.mxu0 0.0
      %8783 = vmatprep.subr.mxu0 0.0
      %8784 = vmatpush1.msra.mxu0 0.0
      %8785 = vmatprep.subr.mxu0 0.0
      %8786 = vmatpush1.msra.mxu0 0.0
      %8787 = vmatprep.subr.mxu0 0.0
      %8788 = vmatpush1.msra.mxu0 0.0
      %8789 = vmatprep.subr.mxu0 0.0
      %8790 = vmatpush1.msra.mxu0 0.0
      %8791 = vmatprep.subr.mxu0 0.0
      %8792 = vmatpush1.msra.mxu0 0.0
      %8793 = vmatprep.subr.mxu0 0.0
      %8794 = vmatpush1.msra.mxu0 0.0
      %8795 = vmatprep.subr.mxu0 0.0
      %8796 = vmatpush1.msra.mxu0 0.0
      %8797 = vmatprep.subr.mxu0 0.0
      %8798 = vmatpush1.msra.mxu0 0.0
      %8799 = vmatprep.subr.mxu0 0.0
      %8800 = vmatpush1.msra.mxu0 0.0
      %8801 = vmatprep.subr.mxu0 0.0
      %8802 = vmatpush1.msra.mxu0 0.0
      %8803 = vmatprep.subr.mxu0 0.0
      %8804 = vmatpush1.msra.mxu0 0.0
      %8805 = vmatprep.mubr.f32.mxu0 0.0
      %v8806 = vand.u32 %v7920, 4294901760
      %8807 = vmatmul.mubr.f32.gmra.mrb[0].mxu0 %v8806
      %v8808 = vpop.f32.mrb[0].mxu0
      %v8809 = vadd.f32 %v8657, %v8808
      %v8810 = vpop.f32.mrb[0].mxu0
      %v8811 = vadd.f32 %v8659, %v8810
      %8812 = vdwg.mxu0
      %v8813 = vand.u32 %v7650, 4294901760
      %v8814 = vsub.f32 %v7650, %v8813
      %8815 = vmatprep.subr.mxu0 %v8814
      %v8816 = vand.u32 %v7649, 4294901760
      %v8817 = vsub.f32 %v7649, %v8816
      %8818 = vmatpush1.msra.mxu0 %v8817
      %v8819 = vand.u32 %v7655, 4294901760
      %v8820 = vsub.f32 %v7655, %v8819
      %8821 = vmatprep.subr.mxu0 %v8820
      %v8822 = vand.u32 %v7654, 4294901760
      %v8823 = vsub.f32 %v7654, %v8822
      %8824 = vmatpush1.msra.mxu0 %v8823
      %v8825 = vand.u32 %v7660, 4294901760
      %v8826 = vsub.f32 %v7660, %v8825
      %8827 = vmatprep.subr.mxu0 %v8826
      %v8828 = vand.u32 %v7659, 4294901760
      %v8829 = vsub.f32 %v7659, %v8828
      %8830 = vmatpush1.msra.mxu0 %v8829
      %v8831 = vand.u32 %v7665, 4294901760
      %v8832 = vsub.f32 %v7665, %v8831
      %8833 = vmatprep.subr.mxu0 %v8832
      %v8834 = vand.u32 %v7664, 4294901760
      %v8835 = vsub.f32 %v7664, %v8834
      %8836 = vmatpush1.msra.mxu0 %v8835
      %v8837 = vand.u32 %v7670, 4294901760
      %v8838 = vsub.f32 %v7670, %v8837
      %8839 = vmatprep.subr.mxu0 %v8838
      %v8840 = vand.u32 %v7669, 4294901760
      %v8841 = vsub.f32 %v7669, %v8840
      %8842 = vmatpush1.msra.mxu0 %v8841
      %v8843 = vand.u32 %v7675, 4294901760
      %v8844 = vsub.f32 %v7675, %v8843
      %8845 = vmatprep.subr.mxu0 %v8844
      %v8846 = vand.u32 %v7674, 4294901760
      %v8847 = vsub.f32 %v7674, %v8846
      %8848 = vmatpush1.msra.mxu0 %v8847
      %v8849 = vand.u32 %v7680, 4294901760
      %v8850 = vsub.f32 %v7680, %v8849
      %8851 = vmatprep.subr.mxu0 %v8850
      %v8852 = vand.u32 %v7679, 4294901760
      %v8853 = vsub.f32 %v7679, %v8852
      %8854 = vmatpush1.msra.mxu0 %v8853
      %v8855 = vand.u32 %v7685, 4294901760
      %v8856 = vsub.f32 %v7685, %v8855
      %8857 = vmatprep.subr.mxu0 %v8856
      %v8858 = vand.u32 %v7684, 4294901760
      %v8859 = vsub.f32 %v7684, %v8858
      %8860 = vmatpush1.msra.mxu0 %v8859
      %8861 = vmatprep.subr.mxu0 0.0
      %8862 = vmatpush1.msra.mxu0 0.0
      %8863 = vmatprep.subr.mxu0 0.0
      %8864 = vmatpush1.msra.mxu0 0.0
      %8865 = vmatprep.subr.mxu0 0.0
      %8866 = vmatpush1.msra.mxu0 0.0
      %8867 = vmatprep.subr.mxu0 0.0
      %8868 = vmatpush1.msra.mxu0 0.0
      %8869 = vmatprep.subr.mxu0 0.0
      %8870 = vmatpush1.msra.mxu0 0.0
      %8871 = vmatprep.subr.mxu0 0.0
      %8872 = vmatpush1.msra.mxu0 0.0
      %8873 = vmatprep.subr.mxu0 0.0
      %8874 = vmatpush1.msra.mxu0 0.0
      %8875 = vmatprep.subr.mxu0 0.0
      %8876 = vmatpush1.msra.mxu0 0.0
      %8877 = vmatprep.subr.mxu0 0.0
      %8878 = vmatpush1.msra.mxu0 0.0
      %8879 = vmatprep.subr.mxu0 0.0
      %8880 = vmatpush1.msra.mxu0 0.0
      %8881 = vmatprep.subr.mxu0 0.0
      %8882 = vmatpush1.msra.mxu0 0.0
      %8883 = vmatprep.subr.mxu0 0.0
      %8884 = vmatpush1.msra.mxu0 0.0
      %8885 = vmatprep.subr.mxu0 0.0
      %8886 = vmatpush1.msra.mxu0 0.0
      %8887 = vmatprep.subr.mxu0 0.0
      %8888 = vmatpush1.msra.mxu0 0.0
      %8889 = vmatprep.subr.mxu0 0.0
      %8890 = vmatpush1.msra.mxu0 0.0
      %8891 = vmatprep.subr.mxu0 0.0
      %8892 = vmatpush1.msra.mxu0 0.0
      %8893 = vmatprep.subr.mxu0 0.0
      %8894 = vmatpush1.msra.mxu0 0.0
      %8895 = vmatprep.subr.mxu0 0.0
      %8896 = vmatpush1.msra.mxu0 0.0
      %8897 = vmatprep.subr.mxu0 0.0
      %8898 = vmatpush1.msra.mxu0 0.0
      %8899 = vmatprep.subr.mxu0 0.0
      %8900 = vmatpush1.msra.mxu0 0.0
      %8901 = vmatprep.subr.mxu0 0.0
      %8902 = vmatpush1.msra.mxu0 0.0
      %8903 = vmatprep.subr.mxu0 0.0
      %8904 = vmatpush1.msra.mxu0 0.0
      %8905 = vmatprep.subr.mxu0 0.0
      %8906 = vmatpush1.msra.mxu0 0.0
      %8907 = vmatprep.subr.mxu0 0.0
      %8908 = vmatpush1.msra.mxu0 0.0
      %8909 = vmatprep.mubr.f32.mxu0 0.0
      %v8910 = vand.u32 %v7920, 4294901760
      %v8911 = vsub.f32 %v7920, %v8910
      %8912 = vmatmul.mubr.f32.gmra.mrb[0].mxu0 %v8911
      %v8913 = vpop.f32.mrb[0].mxu0
      %v8914 = vadd.f32 %v8809, %v8913
      %v8915 = vpop.f32.mrb[0].mxu0
      %v8916 = vadd.f32 %v8811, %v8915
      %8917 = vdwg.mxu0
      %v8918 = vand.u32 %v7650, 4294901760
      %8919 = vmatprep.subr.mxu0 %v8918
      %v8920 = vand.u32 %v7649, 4294901760
      %8921 = vmatpush1.msra.mxu0 %v8920
      %v8922 = vand.u32 %v7655, 4294901760
      %8923 = vmatprep.subr.mxu0 %v8922
      %v8924 = vand.u32 %v7654, 4294901760
      %8925 = vmatpush1.msra.mxu0 %v8924
      %v8926 = vand.u32 %v7660, 4294901760
      %8927 = vmatprep.subr.mxu0 %v8926
      %v8928 = vand.u32 %v7659, 4294901760
      %8929 = vmatpush1.msra.mxu0 %v8928
      %v8930 = vand.u32 %v7665, 4294901760
      %8931 = vmatprep.subr.mxu0 %v8930
      %v8932 = vand.u32 %v7664, 4294901760
      %8933 = vmatpush1.msra.mxu0 %v8932
      %v8934 = vand.u32 %v7670, 4294901760
      %8935 = vmatprep.subr.mxu0 %v8934
      %v8936 = vand.u32 %v7669, 4294901760
      %8937 = vmatpush1.msra.mxu0 %v8936
      %v8938 = vand.u32 %v7675, 4294901760
      %8939 = vmatprep.subr.mxu0 %v8938
      %v8940 = vand.u32 %v7674, 4294901760
      %8941 = vmatpush1.msra.mxu0 %v8940
      %v8942 = vand.u32 %v7680, 4294901760
      %8943 = vmatprep.subr.mxu0 %v8942
      %v8944 = vand.u32 %v7679, 4294901760
      %8945 = vmatpush1.msra.mxu0 %v8944
      %v8946 = vand.u32 %v7685, 4294901760
      %8947 = vmatprep.subr.mxu0 %v8946
      %v8948 = vand.u32 %v7684, 4294901760
      %8949 = vmatpush1.msra.mxu0 %v8948
      %8950 = vmatprep.subr.mxu0 0.0
      %8951 = vmatpush1.msra.mxu0 0.0
      %8952 = vmatprep.subr.mxu0 0.0
      %8953 = vmatpush1.msra.mxu0 0.0
      %8954 = vmatprep.subr.mxu0 0.0
      %8955 = vmatpush1.msra.mxu0 0.0
      %8956 = vmatprep.subr.mxu0 0.0
      %8957 = vmatpush1.msra.mxu0 0.0
      %8958 = vmatprep.subr.mxu0 0.0
      %8959 = vmatpush1.msra.mxu0 0.0
      %8960 = vmatprep.subr.mxu0 0.0
      %8961 = vmatpush1.msra.mxu0 0.0
      %8962 = vmatprep.subr.mxu0 0.0
      %8963 = vmatpush1.msra.mxu0 0.0
      %8964 = vmatprep.subr.mxu0 0.0
      %8965 = vmatpush1.msra.mxu0 0.0
      %8966 = vmatprep.subr.mxu0 0.0
      %8967 = vmatpush1.msra.mxu0 0.0
      %8968 = vmatprep.subr.mxu0 0.0
      %8969 = vmatpush1.msra.mxu0 0.0
      %8970 = vmatprep.subr.mxu0 0.0
      %8971 = vmatpush1.msra.mxu0 0.0
      %8972 = vmatprep.subr.mxu0 0.0
      %8973 = vmatpush1.msra.mxu0 0.0
      %8974 = vmatprep.subr.mxu0 0.0
      %8975 = vmatpush1.msra.mxu0 0.0
      %8976 = vmatprep.subr.mxu0 0.0
      %8977 = vmatpush1.msra.mxu0 0.0
      %8978 = vmatprep.subr.mxu0 0.0
      %8979 = vmatpush1.msra.mxu0 0.0
      %8980 = vmatprep.subr.mxu0 0.0
      %8981 = vmatpush1.msra.mxu0 0.0
      %8982 = vmatprep.subr.mxu0 0.0
      %8983 = vmatpush1.msra.mxu0 0.0
      %8984 = vmatprep.subr.mxu0 0.0
      %8985 = vmatpush1.msra.mxu0 0.0
      %8986 = vmatprep.subr.mxu0 0.0
      %8987 = vmatpush1.msra.mxu0 0.0
      %8988 = vmatprep.subr.mxu0 0.0
      %8989 = vmatpush1.msra.mxu0 0.0
      %8990 = vmatprep.subr.mxu0 0.0
      %8991 = vmatpush1.msra.mxu0 0.0
      %8992 = vmatprep.subr.mxu0 0.0
      %8993 = vmatpush1.msra.mxu0 0.0
      %8994 = vmatprep.subr.mxu0 0.0
      %8995 = vmatpush1.msra.mxu0 0.0
      %8996 = vmatprep.subr.mxu0 0.0
      %8997 = vmatpush1.msra.mxu0 0.0
      %8998 = vmatprep.mubr.f32.mxu0 0.0
      %v8999 = vand.u32 %v7920, 4294901760
      %v9000 = vsub.f32 %v7920, %v8999
      %v9001 = vand.u32 %v9000, 4294901760
      %9002 = vmatmul.mubr.f32.gmra.mrb[0].mxu0 %v9001
      %v9003 = vpop.f32.mrb[0].mxu0
      %v9004 = vadd.f32 %v8914, %v9003
      %v9005 = vpop.f32.mrb[0].mxu0
      %v9006 = vadd.f32 %v8916, %v9005
      %9007 = vdwg.mxu0
      %v9008 = vand.u32 %v7650, 4294901760
      %v9009 = vsub.f32 %v7650, %v9008
      %v9010 = vand.u32 %v9009, 4294901760
      %9011 = vmatprep.subr.mxu0 %v9010
      %v9012 = vand.u32 %v7649, 4294901760
      %v9013 = vsub.f32 %v7649, %v9012
      %v9014 = vand.u32 %v9013, 4294901760
      %9015 = vmatpush1.msra.mxu0 %v9014
      %v9016 = vand.u32 %v7655, 4294901760
      %v9017 = vsub.f32 %v7655, %v9016
      %v9018 = vand.u32 %v9017, 4294901760
      %9019 = vmatprep.subr.mxu0 %v9018
      %v9020 = vand.u32 %v7654, 4294901760
      %v9021 = vsub.f32 %v7654, %v9020
      %v9022 = vand.u32 %v9021, 4294901760
      %9023 = vmatpush1.msra.mxu0 %v9022
      %v9024 = vand.u32 %v7660, 4294901760
      %v9025 = vsub.f32 %v7660, %v9024
      %v9026 = vand.u32 %v9025, 4294901760
      %9027 = vmatprep.subr.mxu0 %v9026
      %v9028 = vand.u32 %v7659, 4294901760
      %v9029 = vsub.f32 %v7659, %v9028
      %v9030 = vand.u32 %v9029, 4294901760
      %9031 = vmatpush1.msra.mxu0 %v9030
      %v9032 = vand.u32 %v7665, 4294901760
      %v9033 = vsub.f32 %v7665, %v9032
      %v9034 = vand.u32 %v9033, 4294901760
      %9035 = vmatprep.subr.mxu0 %v9034
      %v9036 = vand.u32 %v7664, 4294901760
      %v9037 = vsub.f32 %v7664, %v9036
      %v9038 = vand.u32 %v9037, 4294901760
      %9039 = vmatpush1.msra.mxu0 %v9038
      %v9040 = vand.u32 %v7670, 4294901760
      %v9041 = vsub.f32 %v7670, %v9040
      %v9042 = vand.u32 %v9041, 4294901760
      %9043 = vmatprep.subr.mxu0 %v9042
      %v9044 = vand.u32 %v7669, 4294901760
      %v9045 = vsub.f32 %v7669, %v9044
      %v9046 = vand.u32 %v9045, 4294901760
      %9047 = vmatpush1.msra.mxu0 %v9046
      %v9048 = vand.u32 %v7675, 4294901760
      %v9049 = vsub.f32 %v7675, %v9048
      %v9050 = vand.u32 %v9049, 4294901760
      %9051 = vmatprep.subr.mxu0 %v9050
      %v9052 = vand.u32 %v7674, 4294901760
      %v9053 = vsub.f32 %v7674, %v9052
      %v9054 = vand.u32 %v9053, 4294901760
      %9055 = vmatpush1.msra.mxu0 %v9054
      %v9056 = vand.u32 %v7680, 4294901760
      %v9057 = vsub.f32 %v7680, %v9056
      %v9058 = vand.u32 %v9057, 4294901760
      %9059 = vmatprep.subr.mxu0 %v9058
      %v9060 = vand.u32 %v7679, 4294901760
      %v9061 = vsub.f32 %v7679, %v9060
      %v9062 = vand.u32 %v9061, 4294901760
      %9063 = vmatpush1.msra.mxu0 %v9062
      %v9064 = vand.u32 %v7685, 4294901760
      %v9065 = vsub.f32 %v7685, %v9064
      %v9066 = vand.u32 %v9065, 4294901760
      %9067 = vmatprep.subr.mxu0 %v9066
      %v9068 = vand.u32 %v7684, 4294901760
      %v9069 = vsub.f32 %v7684, %v9068
      %v9070 = vand.u32 %v9069, 4294901760
      %9071 = vmatpush1.msra.mxu0 %v9070
      %9072 = vmatprep.subr.mxu0 0.0
      %9073 = vmatpush1.msra.mxu0 0.0
      %9074 = vmatprep.subr.mxu0 0.0
      %9075 = vmatpush1.msra.mxu0 0.0
      %9076 = vmatprep.subr.mxu0 0.0
      %9077 = vmatpush1.msra.mxu0 0.0
      %9078 = vmatprep.subr.mxu0 0.0
      %9079 = vmatpush1.msra.mxu0 0.0
      %9080 = vmatprep.subr.mxu0 0.0
      %9081 = vmatpush1.msra.mxu0 0.0
      %9082 = vmatprep.subr.mxu0 0.0
      %9083 = vmatpush1.msra.mxu0 0.0
      %9084 = vmatprep.subr.mxu0 0.0
      %9085 = vmatpush1.msra.mxu0 0.0
      %9086 = vmatprep.subr.mxu0 0.0
      %9087 = vmatpush1.msra.mxu0 0.0
      %9088 = vmatprep.subr.mxu0 0.0
      %9089 = vmatpush1.msra.mxu0 0.0
      %9090 = vmatprep.subr.mxu0 0.0
      %9091 = vmatpush1.msra.mxu0 0.0
      %9092 = vmatprep.subr.mxu0 0.0
      %9093 = vmatpush1.msra.mxu0 0.0
      %9094 = vmatprep.subr.mxu0 0.0
      %9095 = vmatpush1.msra.mxu0 0.0
      %9096 = vmatprep.subr.mxu0 0.0
      %9097 = vmatpush1.msra.mxu0 0.0
      %9098 = vmatprep.subr.mxu0 0.0
      %9099 = vmatpush1.msra.mxu0 0.0
      %9100 = vmatprep.subr.mxu0 0.0
      %9101 = vmatpush1.msra.mxu0 0.0
      %9102 = vmatprep.subr.mxu0 0.0
      %9103 = vmatpush1.msra.mxu0 0.0
      %9104 = vmatprep.subr.mxu0 0.0
      %9105 = vmatpush1.msra.mxu0 0.0
      %9106 = vmatprep.subr.mxu0 0.0
      %9107 = vmatpush1.msra.mxu0 0.0
      %9108 = vmatprep.subr.mxu0 0.0
      %9109 = vmatpush1.msra.mxu0 0.0
      %9110 = vmatprep.subr.mxu0 0.0
      %9111 = vmatpush1.msra.mxu0 0.0
      %9112 = vmatprep.subr.mxu0 0.0
      %9113 = vmatpush1.msra.mxu0 0.0
      %9114 = vmatprep.subr.mxu0 0.0
      %9115 = vmatpush1.msra.mxu0 0.0
      %9116 = vmatprep.subr.mxu0 0.0
      %9117 = vmatpush1.msra.mxu0 0.0
      %9118 = vmatprep.subr.mxu0 0.0
      %9119 = vmatpush1.msra.mxu0 0.0
      %9120 = vmatprep.mubr.f32.mxu0 0.0
      %v9121 = vand.u32 %v7920, 4294901760
      %9122 = vmatmul.mubr.f32.gmra.mrb[0].mxu0 %v9121
      %v9123 = vpop.f32.mrb[0].mxu0
      %v9124 = vadd.f32 %v9004, %v9123
      %v9125 = vpop.f32.mrb[0].mxu0
      %v9126 = vadd.f32 %v9006, %v9125
      %9127 = vdwg.mxu0
      %v9128 = vand.u32 %v7650, 4294901760
      %9129 = vmatprep.subr.mxu0 %v9128
      %v9130 = vand.u32 %v7649, 4294901760
      %9131 = vmatpush1.msra.mxu0 %v9130
      %v9132 = vand.u32 %v7655, 4294901760
      %9133 = vmatprep.subr.mxu0 %v9132
      %v9134 = vand.u32 %v7654, 4294901760
      %9135 = vmatpush1.msra.mxu0 %v9134
      %v9136 = vand.u32 %v7660, 4294901760
      %9137 = vmatprep.subr.mxu0 %v9136
      %v9138 = vand.u32 %v7659, 4294901760
      %9139 = vmatpush1.msra.mxu0 %v9138
      %v9140 = vand.u32 %v7665, 4294901760
      %9141 = vmatprep.subr.mxu0 %v9140
      %v9142 = vand.u32 %v7664, 4294901760
      %9143 = vmatpush1.msra.mxu0 %v9142
      %v9144 = vand.u32 %v7670, 4294901760
      %9145 = vmatprep.subr.mxu0 %v9144
      %v9146 = vand.u32 %v7669, 4294901760
      %9147 = vmatpush1.msra.mxu0 %v9146
      %v9148 = vand.u32 %v7675, 4294901760
      %9149 = vmatprep.subr.mxu0 %v9148
      %v9150 = vand.u32 %v7674, 4294901760
      %9151 = vmatpush1.msra.mxu0 %v9150
      %v9152 = vand.u32 %v7680, 4294901760
      %9153 = vmatprep.subr.mxu0 %v9152
      %v9154 = vand.u32 %v7679, 4294901760
      %9155 = vmatpush1.msra.mxu0 %v9154
      %v9156 = vand.u32 %v7685, 4294901760
      %9157 = vmatprep.subr.mxu0 %v9156
      %v9158 = vand.u32 %v7684, 4294901760
      %9159 = vmatpush1.msra.mxu0 %v9158
      %9160 = vmatprep.subr.mxu0 0.0
      %9161 = vmatpush1.msra.mxu0 0.0
      %9162 = vmatprep.subr.mxu0 0.0
      %9163 = vmatpush1.msra.mxu0 0.0
      %9164 = vmatprep.subr.mxu0 0.0
      %9165 = vmatpush1.msra.mxu0 0.0
      %9166 = vmatprep.subr.mxu0 0.0
      %9167 = vmatpush1.msra.mxu0 0.0
      %9168 = vmatprep.subr.mxu0 0.0
      %9169 = vmatpush1.msra.mxu0 0.0
      %9170 = vmatprep.subr.mxu0 0.0
      %9171 = vmatpush1.msra.mxu0 0.0
      %9172 = vmatprep.subr.mxu0 0.0
      %9173 = vmatpush1.msra.mxu0 0.0
      %9174 = vmatprep.subr.mxu0 0.0
      %9175 = vmatpush1.msra.mxu0 0.0
      %9176 = vmatprep.subr.mxu0 0.0
      %9177 = vmatpush1.msra.mxu0 0.0
      %9178 = vmatprep.subr.mxu0 0.0
      %9179 = vmatpush1.msra.mxu0 0.0
      %9180 = vmatprep.subr.mxu0 0.0
      %9181 = vmatpush1.msra.mxu0 0.0
      %9182 = vmatprep.subr.mxu0 0.0
      %9183 = vmatpush1.msra.mxu0 0.0
      %9184 = vmatprep.subr.mxu0 0.0
      %9185 = vmatpush1.msra.mxu0 0.0
      %9186 = vmatprep.subr.mxu0 0.0
      %9187 = vmatpush1.msra.mxu0 0.0
      %9188 = vmatprep.subr.mxu0 0.0
      %9189 = vmatpush1.msra.mxu0 0.0
      %9190 = vmatprep.subr.mxu0 0.0
      %9191 = vmatpush1.msra.mxu0 0.0
      %9192 = vmatprep.subr.mxu0 0.0
      %9193 = vmatpush1.msra.mxu0 0.0
      %9194 = vmatprep.subr.mxu0 0.0
      %9195 = vmatpush1.msra.mxu0 0.0
      %9196 = vmatprep.subr.mxu0 0.0
      %9197 = vmatpush1.msra.mxu0 0.0
      %9198 = vmatprep.subr.mxu0 0.0
      %9199 = vmatpush1.msra.mxu0 0.0
      %9200 = vmatprep.subr.mxu0 0.0
      %9201 = vmatpush1.msra.mxu0 0.0
      %9202 = vmatprep.subr.mxu0 0.0
      %9203 = vmatpush1.msra.mxu0 0.0
      %9204 = vmatprep.subr.mxu0 0.0
      %9205 = vmatpush1.msra.mxu0 0.0
      %9206 = vmatprep.subr.mxu0 0.0
      %9207 = vmatpush1.msra.mxu0 0.0
      %9208 = vmatprep.mubr.f32.mxu0 0.0
      %v9209 = vand.u32 %v7920, 4294901760
      %9210 = vmatmul.mubr.f32.gmra.mrb[0].mxu0 %v9209
      %v9211 = vpop.f32.mrb[0].mxu0
      %v9212 = vadd.f32 %v9124, %v9211
      %v9213 = vpop.f32.mrb[0].mxu0
      %v9214 = vadd.f32 %v9126, %v9213
      %9215 = vdwg.mxu0
      %9216 = vmatprep.subr.mxu0 0.0
      %v9217 = vand.u32 %v7651, 4294901760
      %9218 = vmatpush1.msra.mxu0 %v9217
      %9219 = vmatprep.subr.mxu0 0.0
      %v9220 = vand.u32 %v7656, 4294901760
      %9221 = vmatpush1.msra.mxu0 %v9220
      %9222 = vmatprep.subr.mxu0 0.0
      %v9223 = vand.u32 %v7661, 4294901760
      %9224 = vmatpush1.msra.mxu0 %v9223
      %9225 = vmatprep.subr.mxu0 0.0
      %v9226 = vand.u32 %v7666, 4294901760
      %9227 = vmatpush1.msra.mxu0 %v9226
      %9228 = vmatprep.subr.mxu0 0.0
      %v9229 = vand.u32 %v7671, 4294901760
      %9230 = vmatpush1.msra.mxu0 %v9229
      %9231 = vmatprep.subr.mxu0 0.0
      %v9232 = vand.u32 %v7676, 4294901760
      %9233 = vmatpush1.msra.mxu0 %v9232
      %9234 = vmatprep.subr.mxu0 0.0
      %v9235 = vand.u32 %v7681, 4294901760
      %9236 = vmatpush1.msra.mxu0 %v9235
      %9237 = vmatprep.subr.mxu0 0.0
      %v9238 = vand.u32 %v7686, 4294901760
      %9239 = vmatpush1.msra.mxu0 %v9238
      %9240 = vmatprep.subr.mxu0 0.0
      %9241 = vmatpush1.msra.mxu0 0.0
      %9242 = vmatprep.subr.mxu0 0.0
      %9243 = vmatpush1.msra.mxu0 0.0
      %9244 = vmatprep.subr.mxu0 0.0
      %9245 = vmatpush1.msra.mxu0 0.0
      %9246 = vmatprep.subr.mxu0 0.0
      %9247 = vmatpush1.msra.mxu0 0.0
      %9248 = vmatprep.subr.mxu0 0.0
      %9249 = vmatpush1.msra.mxu0 0.0
      %9250 = vmatprep.subr.mxu0 0.0
      %9251 = vmatpush1.msra.mxu0 0.0
      %9252 = vmatprep.subr.mxu0 0.0
      %9253 = vmatpush1.msra.mxu0 0.0
      %9254 = vmatprep.subr.mxu0 0.0
      %9255 = vmatpush1.msra.mxu0 0.0
      %9256 = vmatprep.subr.mxu0 0.0
      %9257 = vmatpush1.msra.mxu0 0.0
      %9258 = vmatprep.subr.mxu0 0.0
      %9259 = vmatpush1.msra.mxu0 0.0
      %9260 = vmatprep.subr.mxu0 0.0
      %9261 = vmatpush1.msra.mxu0 0.0
      %9262 = vmatprep.subr.mxu0 0.0
      %9263 = vmatpush1.msra.mxu0 0.0
      %9264 = vmatprep.subr.mxu0 0.0
      %9265 = vmatpush1.msra.mxu0 0.0
      %9266 = vmatprep.subr.mxu0 0.0
      %9267 = vmatpush1.msra.mxu0 0.0
      %9268 = vmatprep.subr.mxu0 0.0
      %9269 = vmatpush1.msra.mxu0 0.0
      %9270 = vmatprep.subr.mxu0 0.0
      %9271 = vmatpush1.msra.mxu0 0.0
      %9272 = vmatprep.subr.mxu0 0.0
      %9273 = vmatpush1.msra.mxu0 0.0
      %9274 = vmatprep.subr.mxu0 0.0
      %9275 = vmatpush1.msra.mxu0 0.0
      %9276 = vmatprep.subr.mxu0 0.0
      %9277 = vmatpush1.msra.mxu0 0.0
      %9278 = vmatprep.subr.mxu0 0.0
      %9279 = vmatpush1.msra.mxu0 0.0
      %9280 = vmatprep.subr.mxu0 0.0
      %9281 = vmatpush1.msra.mxu0 0.0
      %9282 = vmatprep.subr.mxu0 0.0
      %9283 = vmatpush1.msra.mxu0 0.0
      %9284 = vmatprep.subr.mxu0 0.0
      %9285 = vmatpush1.msra.mxu0 0.0
      %9286 = vmatprep.subr.mxu0 0.0
      %9287 = vmatpush1.msra.mxu0 0.0
      %9288 = vmatprep.mubr.f32.mxu0 0.0
      %v9289 = vand.u32 %v7920, 4294901760
      %v9290 = vsub.f32 %v7920, %v9289
      %v9291 = vand.u32 %v9290, 4294901760
      %v9292 = vsub.f32 %v9290, %v9291
      %v9293 = vand.u32 %v9292, 4294901760
      %9294 = vmatmul.mubr.f32.gmra.mrb[0].mxu0 %v9293
      %v9295 = vpop.f32.mrb[0].mxu0
      %v9296 = vadd.f32 0.0, %v9295
      %v9297 = vpop.f32.mrb[0].mxu0
      %9298 = vdwg.mxu0
      %9299 = vmatprep.subr.mxu0 0.0
      %v9300 = vand.u32 %v7651, 4294901760
      %v9301 = vsub.f32 %v7651, %v9300
      %v9302 = vand.u32 %v9301, 4294901760
      %v9303 = vsub.f32 %v9301, %v9302
      %v9304 = vand.u32 %v9303, 4294901760
      %9305 = vmatpush1.msra.mxu0 %v9304
      %9306 = vmatprep.subr.mxu0 0.0
      %v9307 = vand.u32 %v7656, 4294901760
      %v9308 = vsub.f32 %v7656, %v9307
      %v9309 = vand.u32 %v9308, 4294901760
      %v9310 = vsub.f32 %v9308, %v9309
      %v9311 = vand.u32 %v9310, 4294901760
      %9312 = vmatpush1.msra.mxu0 %v9311
      %9313 = vmatprep.subr.mxu0 0.0
      %v9314 = vand.u32 %v7661, 4294901760
      %v9315 = vsub.f32 %v7661, %v9314
      %v9316 = vand.u32 %v9315, 4294901760
      %v9317 = vsub.f32 %v9315, %v9316
      %v9318 = vand.u32 %v9317, 4294901760
      %9319 = vmatpush1.msra.mxu0 %v9318
      %9320 = vmatprep.subr.mxu0 0.0
      %v9321 = vand.u32 %v7666, 4294901760
      %v9322 = vsub.f32 %v7666, %v9321
      %v9323 = vand.u32 %v9322, 4294901760
      %v9324 = vsub.f32 %v9322, %v9323
      %v9325 = vand.u32 %v9324, 4294901760
      %9326 = vmatpush1.msra.mxu0 %v9325
      %9327 = vmatprep.subr.mxu0 0.0
      %v9328 = vand.u32 %v7671, 4294901760
      %v9329 = vsub.f32 %v7671, %v9328
      %v9330 = vand.u32 %v9329, 4294901760
      %v9331 = vsub.f32 %v9329, %v9330
      %v9332 = vand.u32 %v9331, 4294901760
      %9333 = vmatpush1.msra.mxu0 %v9332
      %9334 = vmatprep.subr.mxu0 0.0
      %v9335 = vand.u32 %v7676, 4294901760
      %v9336 = vsub.f32 %v7676, %v9335
      %v9337 = vand.u32 %v9336, 4294901760
      %v9338 = vsub.f32 %v9336, %v9337
      %v9339 = vand.u32 %v9338, 4294901760
      %9340 = vmatpush1.msra.mxu0 %v9339
      %9341 = vmatprep.subr.mxu0 0.0
      %v9342 = vand.u32 %v7681, 4294901760
      %v9343 = vsub.f32 %v7681, %v9342
      %v9344 = vand.u32 %v9343, 4294901760
      %v9345 = vsub.f32 %v9343, %v9344
      %v9346 = vand.u32 %v9345, 4294901760
      %9347 = vmatpush1.msra.mxu0 %v9346
      %9348 = vmatprep.subr.mxu0 0.0
      %v9349 = vand.u32 %v7686, 4294901760
      %v9350 = vsub.f32 %v7686, %v9349
      %v9351 = vand.u32 %v9350, 4294901760
      %v9352 = vsub.f32 %v9350, %v9351
      %v9353 = vand.u32 %v9352, 4294901760
      %9354 = vmatpush1.msra.mxu0 %v9353
      %9355 = vmatprep.subr.mxu0 0.0
      %9356 = vmatpush1.msra.mxu0 0.0
      %9357 = vmatprep.subr.mxu0 0.0
      %9358 = vmatpush1.msra.mxu0 0.0
      %9359 = vmatprep.subr.mxu0 0.0
      %9360 = vmatpush1.msra.mxu0 0.0
      %9361 = vmatprep.subr.mxu0 0.0
      %9362 = vmatpush1.msra.mxu0 0.0
      %9363 = vmatprep.subr.mxu0 0.0
      %9364 = vmatpush1.msra.mxu0 0.0
      %9365 = vmatprep.subr.mxu0 0.0
      %9366 = vmatpush1.msra.mxu0 0.0
      %9367 = vmatprep.subr.mxu0 0.0
      %9368 = vmatpush1.msra.mxu0 0.0
      %9369 = vmatprep.subr.mxu0 0.0
      %9370 = vmatpush1.msra.mxu0 0.0
      %9371 = vmatprep.subr.mxu0 0.0
      %9372 = vmatpush1.msra.mxu0 0.0
      %9373 = vmatprep.subr.mxu0 0.0
      %9374 = vmatpush1.msra.mxu0 0.0
      %9375 = vmatprep.subr.mxu0 0.0
      %9376 = vmatpush1.msra.mxu0 0.0
      %9377 = vmatprep.subr.mxu0 0.0
      %9378 = vmatpush1.msra.mxu0 0.0
      %9379 = vmatprep.subr.mxu0 0.0
      %9380 = vmatpush1.msra.mxu0 0.0
      %9381 = vmatprep.subr.mxu0 0.0
      %9382 = vmatpush1.msra.mxu0 0.0
      %9383 = vmatprep.subr.mxu0 0.0
      %9384 = vmatpush1.msra.mxu0 0.0
      %9385 = vmatprep.subr.mxu0 0.0
      %9386 = vmatpush1.msra.mxu0 0.0
      %9387 = vmatprep.subr.mxu0 0.0
      %9388 = vmatpush1.msra.mxu0 0.0
      %9389 = vmatprep.subr.mxu0 0.0
      %9390 = vmatpush1.msra.mxu0 0.0
      %9391 = vmatprep.subr.mxu0 0.0
      %9392 = vmatpush1.msra.mxu0 0.0
      %9393 = vmatprep.subr.mxu0 0.0
      %9394 = vmatpush1.msra.mxu0 0.0
      %9395 = vmatprep.subr.mxu0 0.0
      %9396 = vmatpush1.msra.mxu0 0.0
      %9397 = vmatprep.subr.mxu0 0.0
      %9398 = vmatpush1.msra.mxu0 0.0
      %9399 = vmatprep.subr.mxu0 0.0
      %9400 = vmatpush1.msra.mxu0 0.0
      %9401 = vmatprep.subr.mxu0 0.0
      %9402 = vmatpush1.msra.mxu0 0.0
      %9403 = vmatprep.mubr.f32.mxu0 0.0
      %v9404 = vand.u32 %v7920, 4294901760
      %9405 = vmatmul.mubr.f32.gmra.mrb[0].mxu0 %v9404
      %v9406 = vpop.f32.mrb[0].mxu0
      %v9407 = vadd.f32 %v9296, %v9406
      %v9408 = vpop.f32.mrb[0].mxu0
      %9409 = vdwg.mxu0
      %9410 = vmatprep.subr.mxu0 0.0
      %v9411 = vand.u32 %v7651, 4294901760
      %v9412 = vsub.f32 %v7651, %v9411
      %9413 = vmatpush1.msra.mxu0 %v9412
      %9414 = vmatprep.subr.mxu0 0.0
      %v9415 = vand.u32 %v7656, 4294901760
      %v9416 = vsub.f32 %v7656, %v9415
      %9417 = vmatpush1.msra.mxu0 %v9416
      %9418 = vmatprep.subr.mxu0 0.0
      %v9419 = vand.u32 %v7661, 4294901760
      %v9420 = vsub.f32 %v7661, %v9419
      %9421 = vmatpush1.msra.mxu0 %v9420
      %9422 = vmatprep.subr.mxu0 0.0
      %v9423 = vand.u32 %v7666, 4294901760
      %v9424 = vsub.f32 %v7666, %v9423
      %9425 = vmatpush1.msra.mxu0 %v9424
      %9426 = vmatprep.subr.mxu0 0.0
      %v9427 = vand.u32 %v7671, 4294901760
      %v9428 = vsub.f32 %v7671, %v9427
      %9429 = vmatpush1.msra.mxu0 %v9428
      %9430 = vmatprep.subr.mxu0 0.0
      %v9431 = vand.u32 %v7676, 4294901760
      %v9432 = vsub.f32 %v7676, %v9431
      %9433 = vmatpush1.msra.mxu0 %v9432
      %9434 = vmatprep.subr.mxu0 0.0
      %v9435 = vand.u32 %v7681, 4294901760
      %v9436 = vsub.f32 %v7681, %v9435
      %9437 = vmatpush1.msra.mxu0 %v9436
      %9438 = vmatprep.subr.mxu0 0.0
      %v9439 = vand.u32 %v7686, 4294901760
      %v9440 = vsub.f32 %v7686, %v9439
      %9441 = vmatpush1.msra.mxu0 %v9440
      %9442 = vmatprep.subr.mxu0 0.0
      %9443 = vmatpush1.msra.mxu0 0.0
      %9444 = vmatprep.subr.mxu0 0.0
      %9445 = vmatpush1.msra.mxu0 0.0
      %9446 = vmatprep.subr.mxu0 0.0
      %9447 = vmatpush1.msra.mxu0 0.0
      %9448 = vmatprep.subr.mxu0 0.0
      %9449 = vmatpush1.msra.mxu0 0.0
      %9450 = vmatprep.subr.mxu0 0.0
      %9451 = vmatpush1.msra.mxu0 0.0
      %9452 = vmatprep.subr.mxu0 0.0
      %9453 = vmatpush1.msra.mxu0 0.0
      %9454 = vmatprep.subr.mxu0 0.0
      %9455 = vmatpush1.msra.mxu0 0.0
      %9456 = vmatprep.subr.mxu0 0.0
      %9457 = vmatpush1.msra.mxu0 0.0
      %9458 = vmatprep.subr.mxu0 0.0
      %9459 = vmatpush1.msra.mxu0 0.0
      %9460 = vmatprep.subr.mxu0 0.0
      %9461 = vmatpush1.msra.mxu0 0.0
      %9462 = vmatprep.subr.mxu0 0.0
      %9463 = vmatpush1.msra.mxu0 0.0
      %9464 = vmatprep.subr.mxu0 0.0
      %9465 = vmatpush1.msra.mxu0 0.0
      %9466 = vmatprep.subr.mxu0 0.0
      %9467 = vmatpush1.msra.mxu0 0.0
      %9468 = vmatprep.subr.mxu0 0.0
      %9469 = vmatpush1.msra.mxu0 0.0
      %9470 = vmatprep.subr.mxu0 0.0
      %9471 = vmatpush1.msra.mxu0 0.0
      %9472 = vmatprep.subr.mxu0 0.0
      %9473 = vmatpush1.msra.mxu0 0.0
      %9474 = vmatprep.subr.mxu0 0.0
      %9475 = vmatpush1.msra.mxu0 0.0
      %9476 = vmatprep.subr.mxu0 0.0
      %9477 = vmatpush1.msra.mxu0 0.0
      %9478 = vmatprep.subr.mxu0 0.0
      %9479 = vmatpush1.msra.mxu0 0.0
      %9480 = vmatprep.subr.mxu0 0.0
      %9481 = vmatpush1.msra.mxu0 0.0
      %9482 = vmatprep.subr.mxu0 0.0
      %9483 = vmatpush1.msra.mxu0 0.0
      %9484 = vmatprep.subr.mxu0 0.0
      %9485 = vmatpush1.msra.mxu0 0.0
      %9486 = vmatprep.subr.mxu0 0.0
      %9487 = vmatpush1.msra.mxu0 0.0
      %9488 = vmatprep.subr.mxu0 0.0
      %9489 = vmatpush1.msra.mxu0 0.0
      %9490 = vmatprep.mubr.f32.mxu0 0.0
      %v9491 = vand.u32 %v7920, 4294901760
      %v9492 = vsub.f32 %v7920, %v9491
      %9493 = vmatmul.mubr.f32.gmra.mrb[0].mxu0 %v9492
      %v9494 = vpop.f32.mrb[0].mxu0
      %v9495 = vadd.f32 %v9407, %v9494
      %v9496 = vpop.f32.mrb[0].mxu0
      %9497 = vdwg.mxu0
      %9498 = vmatprep.subr.mxu0 0.0
      %v9499 = vand.u32 %v7651, 4294901760
      %9500 = vmatpush1.msra.mxu0 %v9499
      %9501 = vmatprep.subr.mxu0 0.0
      %v9502 = vand.u32 %v7656, 4294901760
      %9503 = vmatpush1.msra.mxu0 %v9502
      %9504 = vmatprep.subr.mxu0 0.0
      %v9505 = vand.u32 %v7661, 4294901760
      %9506 = vmatpush1.msra.mxu0 %v9505
      %9507 = vmatprep.subr.mxu0 0.0
      %v9508 = vand.u32 %v7666, 4294901760
      %9509 = vmatpush1.msra.mxu0 %v9508
      %9510 = vmatprep.subr.mxu0 0.0
      %v9511 = vand.u32 %v7671, 4294901760
      %9512 = vmatpush1.msra.mxu0 %v9511
      %9513 = vmatprep.subr.mxu0 0.0
      %v9514 = vand.u32 %v7676, 4294901760
      %9515 = vmatpush1.msra.mxu0 %v9514
      %9516 = vmatprep.subr.mxu0 0.0
      %v9517 = vand.u32 %v7681, 4294901760
      %9518 = vmatpush1.msra.mxu0 %v9517
      %9519 = vmatprep.subr.mxu0 0.0
      %v9520 = vand.u32 %v7686, 4294901760
      %9521 = vmatpush1.msra.mxu0 %v9520
      %9522 = vmatprep.subr.mxu0 0.0
      %9523 = vmatpush1.msra.mxu0 0.0
      %9524 = vmatprep.subr.mxu0 0.0
      %9525 = vmatpush1.msra.mxu0 0.0
      %9526 = vmatprep.subr.mxu0 0.0
      %9527 = vmatpush1.msra.mxu0 0.0
      %9528 = vmatprep.subr.mxu0 0.0
      %9529 = vmatpush1.msra.mxu0 0.0
      %9530 = vmatprep.subr.mxu0 0.0
      %9531 = vmatpush1.msra.mxu0 0.0
      %9532 = vmatprep.subr.mxu0 0.0
      %9533 = vmatpush1.msra.mxu0 0.0
      %9534 = vmatprep.subr.mxu0 0.0
      %9535 = vmatpush1.msra.mxu0 0.0
      %9536 = vmatprep.subr.mxu0 0.0
      %9537 = vmatpush1.msra.mxu0 0.0
      %9538 = vmatprep.subr.mxu0 0.0
      %9539 = vmatpush1.msra.mxu0 0.0
      %9540 = vmatprep.subr.mxu0 0.0
      %9541 = vmatpush1.msra.mxu0 0.0
      %9542 = vmatprep.subr.mxu0 0.0
      %9543 = vmatpush1.msra.mxu0 0.0
      %9544 = vmatprep.subr.mxu0 0.0
      %9545 = vmatpush1.msra.mxu0 0.0
      %9546 = vmatprep.subr.mxu0 0.0
      %9547 = vmatpush1.msra.mxu0 0.0
      %9548 = vmatprep.subr.mxu0 0.0
      %9549 = vmatpush1.msra.mxu0 0.0
      %9550 = vmatprep.subr.mxu0 0.0
      %9551 = vmatpush1.msra.mxu0 0.0
      %9552 = vmatprep.subr.mxu0 0.0
      %9553 = vmatpush1.msra.mxu0 0.0
      %9554 = vmatprep.subr.mxu0 0.0
      %9555 = vmatpush1.msra.mxu0 0.0
      %9556 = vmatprep.subr.mxu0 0.0
      %9557 = vmatpush1.msra.mxu0 0.0
      %9558 = vmatprep.subr.mxu0 0.0
      %9559 = vmatpush1.msra.mxu0 0.0
      %9560 = vmatprep.subr.mxu0 0.0
      %9561 = vmatpush1.msra.mxu0 0.0
      %9562 = vmatprep.subr.mxu0 0.0
      %9563 = vmatpush1.msra.mxu0 0.0
      %9564 = vmatprep.subr.mxu0 0.0
      %9565 = vmatpush1.msra.mxu0 0.0
      %9566 = vmatprep.subr.mxu0 0.0
      %9567 = vmatpush1.msra.mxu0 0.0
      %9568 = vmatprep.subr.mxu0 0.0
      %9569 = vmatpush1.msra.mxu0 0.0
      %9570 = vmatprep.mubr.f32.mxu0 0.0
      %v9571 = vand.u32 %v7920, 4294901760
      %v9572 = vsub.f32 %v7920, %v9571
      %v9573 = vand.u32 %v9572, 4294901760
      %9574 = vmatmul.mubr.f32.gmra.mrb[0].mxu0 %v9573
      %v9575 = vpop.f32.mrb[0].mxu0
      %v9576 = vadd.f32 %v9495, %v9575
      %v9577 = vpop.f32.mrb[0].mxu0
      %9578 = vdwg.mxu0
      %9579 = vmatprep.subr.mxu0 0.0
      %v9580 = vand.u32 %v7651, 4294901760
      %v9581 = vsub.f32 %v7651, %v9580
      %v9582 = vand.u32 %v9581, 4294901760
      %9583 = vmatpush1.msra.mxu0 %v9582
      %9584 = vmatprep.subr.mxu0 0.0
      %v9585 = vand.u32 %v7656, 4294901760
      %v9586 = vsub.f32 %v7656, %v9585
      %v9587 = vand.u32 %v9586, 4294901760
      %9588 = vmatpush1.msra.mxu0 %v9587
      %9589 = vmatprep.subr.mxu0 0.0
      %v9590 = vand.u32 %v7661, 4294901760
      %v9591 = vsub.f32 %v7661, %v9590
      %v9592 = vand.u32 %v9591, 4294901760
      %9593 = vmatpush1.msra.mxu0 %v9592
      %9594 = vmatprep.subr.mxu0 0.0
      %v9595 = vand.u32 %v7666, 4294901760
      %v9596 = vsub.f32 %v7666, %v9595
      %v9597 = vand.u32 %v9596, 4294901760
      %9598 = vmatpush1.msra.mxu0 %v9597
      %9599 = vmatprep.subr.mxu0 0.0
      %v9600 = vand.u32 %v7671, 4294901760
      %v9601 = vsub.f32 %v7671, %v9600
      %v9602 = vand.u32 %v9601, 4294901760
      %9603 = vmatpush1.msra.mxu0 %v9602
      %9604 = vmatprep.subr.mxu0 0.0
      %v9605 = vand.u32 %v7676, 4294901760
      %v9606 = vsub.f32 %v7676, %v9605
      %v9607 = vand.u32 %v9606, 4294901760
      %9608 = vmatpush1.msra.mxu0 %v9607
      %9609 = vmatprep.subr.mxu0 0.0
      %v9610 = vand.u32 %v7681, 4294901760
      %v9611 = vsub.f32 %v7681, %v9610
      %v9612 = vand.u32 %v9611, 4294901760
      %9613 = vmatpush1.msra.mxu0 %v9612
      %9614 = vmatprep.subr.mxu0 0.0
      %v9615 = vand.u32 %v7686, 4294901760
      %v9616 = vsub.f32 %v7686, %v9615
      %v9617 = vand.u32 %v9616, 4294901760
      %9618 = vmatpush1.msra.mxu0 %v9617
      %9619 = vmatprep.subr.mxu0 0.0
      %9620 = vmatpush1.msra.mxu0 0.0
      %9621 = vmatprep.subr.mxu0 0.0
      %9622 = vmatpush1.msra.mxu0 0.0
      %9623 = vmatprep.subr.mxu0 0.0
      %9624 = vmatpush1.msra.mxu0 0.0
      %9625 = vmatprep.subr.mxu0 0.0
      %9626 = vmatpush1.msra.mxu0 0.0
      %9627 = vmatprep.subr.mxu0 0.0
      %9628 = vmatpush1.msra.mxu0 0.0
      %9629 = vmatprep.subr.mxu0 0.0
      %9630 = vmatpush1.msra.mxu0 0.0
      %9631 = vmatprep.subr.mxu0 0.0
      %9632 = vmatpush1.msra.mxu0 0.0
      %9633 = vmatprep.subr.mxu0 0.0
      %9634 = vmatpush1.msra.mxu0 0.0
      %9635 = vmatprep.subr.mxu0 0.0
      %9636 = vmatpush1.msra.mxu0 0.0
      %9637 = vmatprep.subr.mxu0 0.0
      %9638 = vmatpush1.msra.mxu0 0.0
      %9639 = vmatprep.subr.mxu0 0.0
      %9640 = vmatpush1.msra.mxu0 0.0
      %9641 = vmatprep.subr.mxu0 0.0
      %9642 = vmatpush1.msra.mxu0 0.0
      %9643 = vmatprep.subr.mxu0 0.0
      %9644 = vmatpush1.msra.mxu0 0.0
      %9645 = vmatprep.subr.mxu0 0.0
      %9646 = vmatpush1.msra.mxu0 0.0
      %9647 = vmatprep.subr.mxu0 0.0
      %9648 = vmatpush1.msra.mxu0 0.0
      %9649 = vmatprep.subr.mxu0 0.0
      %9650 = vmatpush1.msra.mxu0 0.0
      %9651 = vmatprep.subr.mxu0 0.0
      %9652 = vmatpush1.msra.mxu0 0.0
      %9653 = vmatprep.subr.mxu0 0.0
      %9654 = vmatpush1.msra.mxu0 0.0
      %9655 = vmatprep.subr.mxu0 0.0
      %9656 = vmatpush1.msra.mxu0 0.0
      %9657 = vmatprep.subr.mxu0 0.0
      %9658 = vmatpush1.msra.mxu0 0.0
      %9659 = vmatprep.subr.mxu0 0.0
      %9660 = vmatpush1.msra.mxu0 0.0
      %9661 = vmatprep.subr.mxu0 0.0
      %9662 = vmatpush1.msra.mxu0 0.0
      %9663 = vmatprep.subr.mxu0 0.0
      %9664 = vmatpush1.msra.mxu0 0.0
      %9665 = vmatprep.subr.mxu0 0.0
      %9666 = vmatpush1.msra.mxu0 0.0
      %9667 = vmatprep.mubr.f32.mxu0 0.0
      %v9668 = vand.u32 %v7920, 4294901760
      %9669 = vmatmul.mubr.f32.gmra.mrb[0].mxu0 %v9668
      %v9670 = vpop.f32.mrb[0].mxu0
      %v9671 = vadd.f32 %v9576, %v9670
      %v9672 = vpop.f32.mrb[0].mxu0
      %9673 = vdwg.mxu0
      %9674 = vmatprep.subr.mxu0 0.0
      %v9675 = vand.u32 %v7651, 4294901760
      %9676 = vmatpush1.msra.mxu0 %v9675
      %9677 = vmatprep.subr.mxu0 0.0
      %v9678 = vand.u32 %v7656, 4294901760
      %9679 = vmatpush1.msra.mxu0 %v9678
      %9680 = vmatprep.subr.mxu0 0.0
      %v9681 = vand.u32 %v7661, 4294901760
      %9682 = vmatpush1.msra.mxu0 %v9681
      %9683 = vmatprep.subr.mxu0 0.0
      %v9684 = vand.u32 %v7666, 4294901760
      %9685 = vmatpush1.msra.mxu0 %v9684
      %9686 = vmatprep.subr.mxu0 0.0
      %v9687 = vand.u32 %v7671, 4294901760
      %9688 = vmatpush1.msra.mxu0 %v9687
      %9689 = vmatprep.subr.mxu0 0.0
      %v9690 = vand.u32 %v7676, 4294901760
      %9691 = vmatpush1.msra.mxu0 %v9690
      %9692 = vmatprep.subr.mxu0 0.0
      %v9693 = vand.u32 %v7681, 4294901760
      %9694 = vmatpush1.msra.mxu0 %v9693
      %9695 = vmatprep.subr.mxu0 0.0
      %v9696 = vand.u32 %v7686, 4294901760
      %9697 = vmatpush1.msra.mxu0 %v9696
      %9698 = vmatprep.subr.mxu0 0.0
      %9699 = vmatpush1.msra.mxu0 0.0
      %9700 = vmatprep.subr.mxu0 0.0
      %9701 = vmatpush1.msra.mxu0 0.0
      %9702 = vmatprep.subr.mxu0 0.0
      %9703 = vmatpush1.msra.mxu0 0.0
      %9704 = vmatprep.subr.mxu0 0.0
      %9705 = vmatpush1.msra.mxu0 0.0
      %9706 = vmatprep.subr.mxu0 0.0
      %9707 = vmatpush1.msra.mxu0 0.0
      %9708 = vmatprep.subr.mxu0 0.0
      %9709 = vmatpush1.msra.mxu0 0.0
      %9710 = vmatprep.subr.mxu0 0.0
      %9711 = vmatpush1.msra.mxu0 0.0
      %9712 = vmatprep.subr.mxu0 0.0
      %9713 = vmatpush1.msra.mxu0 0.0
      %9714 = vmatprep.subr.mxu0 0.0
      %9715 = vmatpush1.msra.mxu0 0.0
      %9716 = vmatprep.subr.mxu0 0.0
      %9717 = vmatpush1.msra.mxu0 0.0
      %9718 = vmatprep.subr.mxu0 0.0
      %9719 = vmatpush1.msra.mxu0 0.0
      %9720 = vmatprep.subr.mxu0 0.0
      %9721 = vmatpush1.msra.mxu0 0.0
      %9722 = vmatprep.subr.mxu0 0.0
      %9723 = vmatpush1.msra.mxu0 0.0
      %9724 = vmatprep.subr.mxu0 0.0
      %9725 = vmatpush1.msra.mxu0 0.0
      %9726 = vmatprep.subr.mxu0 0.0
      %9727 = vmatpush1.msra.mxu0 0.0
      %9728 = vmatprep.subr.mxu0 0.0
      %9729 = vmatpush1.msra.mxu0 0.0
      %9730 = vmatprep.subr.mxu0 0.0
      %9731 = vmatpush1.msra.mxu0 0.0
      %9732 = vmatprep.subr.mxu0 0.0
      %9733 = vmatpush1.msra.mxu0 0.0
      %9734 = vmatprep.subr.mxu0 0.0
      %9735 = vmatpush1.msra.mxu0 0.0
      %9736 = vmatprep.subr.mxu0 0.0
      %9737 = vmatpush1.msra.mxu0 0.0
      %9738 = vmatprep.subr.mxu0 0.0
      %9739 = vmatpush1.msra.mxu0 0.0
      %9740 = vmatprep.subr.mxu0 0.0
      %9741 = vmatpush1.msra.mxu0 0.0
      %9742 = vmatprep.subr.mxu0 0.0
      %9743 = vmatpush1.msra.mxu0 0.0
      %9744 = vmatprep.subr.mxu0 0.0
      %9745 = vmatpush1.msra.mxu0 0.0
      %9746 = vmatprep.mubr.f32.mxu0 0.0
      %v9747 = vand.u32 %v7920, 4294901760
      %9748 = vmatmul.mubr.f32.gmra.mrb[0].mxu0 %v9747
      %v9749 = vpop.f32.mrb[0].mxu0
      %v9750 = vadd.f32 %v9671, %v9749
      %v9751 = vpop.f32.mrb[0].mxu0
      %9752 = vdwg.mxu0
      %v9753 = vsel %vm7919, %v251, 0
      %v9755 = vand.u32 %v7608, 4294901760
      %9756 = vmatprep.subr.mxu0 %v9755
      %v9757 = vand.u32 %v7607, 4294901760
      %9758 = vmatpush1.msra.mxu0 %v9757
      %v9759 = vand.u32 %v7613, 4294901760
      %9760 = vmatprep.subr.mxu0 %v9759
      %v9761 = vand.u32 %v7612, 4294901760
      %9762 = vmatpush1.msra.mxu0 %v9761
      %v9763 = vand.u32 %v7618, 4294901760
      %9764 = vmatprep.subr.mxu0 %v9763
      %v9765 = vand.u32 %v7617, 4294901760
      %9766 = vmatpush1.msra.mxu0 %v9765
      %v9767 = vand.u32 %v7623, 4294901760
      %9768 = vmatprep.subr.mxu0 %v9767
      %v9769 = vand.u32 %v7622, 4294901760
      %9770 = vmatpush1.msra.mxu0 %v9769
      %v9771 = vand.u32 %v7628, 4294901760
      %9772 = vmatprep.subr.mxu0 %v9771
      %v9773 = vand.u32 %v7627, 4294901760
      %9774 = vmatpush1.msra.mxu0 %v9773
      %v9775 = vand.u32 %v7633, 4294901760
      %9776 = vmatprep.subr.mxu0 %v9775
      %v9777 = vand.u32 %v7632, 4294901760
      %9778 = vmatpush1.msra.mxu0 %v9777
      %v9779 = vand.u32 %v7638, 4294901760
      %9780 = vmatprep.subr.mxu0 %v9779
      %v9781 = vand.u32 %v7637, 4294901760
      %9782 = vmatpush1.msra.mxu0 %v9781
      %v9783 = vand.u32 %v7643, 4294901760
      %9784 = vmatprep.subr.mxu0 %v9783
      %v9785 = vand.u32 %v7642, 4294901760
      %9786 = vmatpush1.msra.mxu0 %v9785
      %9787 = vmatprep.subr.mxu0 0.0
      %9788 = vmatpush1.msra.mxu0 0.0
      %9789 = vmatprep.subr.mxu0 0.0
      %9790 = vmatpush1.msra.mxu0 0.0
      %9791 = vmatprep.subr.mxu0 0.0
      %9792 = vmatpush1.msra.mxu0 0.0
      %9793 = vmatprep.subr.mxu0 0.0
      %9794 = vmatpush1.msra.mxu0 0.0
      %9795 = vmatprep.subr.mxu0 0.0
      %9796 = vmatpush1.msra.mxu0 0.0
      %9797 = vmatprep.subr.mxu0 0.0
      %9798 = vmatpush1.msra.mxu0 0.0
      %9799 = vmatprep.subr.mxu0 0.0
      %9800 = vmatpush1.msra.mxu0 0.0
      %9801 = vmatprep.subr.mxu0 0.0
      %9802 = vmatpush1.msra.mxu0 0.0
      %9803 = vmatprep.subr.mxu0 0.0
      %9804 = vmatpush1.msra.mxu0 0.0
      %9805 = vmatprep.subr.mxu0 0.0
      %9806 = vmatpush1.msra.mxu0 0.0
      %9807 = vmatprep.subr.mxu0 0.0
      %9808 = vmatpush1.msra.mxu0 0.0
      %9809 = vmatprep.subr.mxu0 0.0
      %9810 = vmatpush1.msra.mxu0 0.0
      %9811 = vmatprep.subr.mxu0 0.0
      %9812 = vmatpush1.msra.mxu0 0.0
      %9813 = vmatprep.subr.mxu0 0.0
      %9814 = vmatpush1.msra.mxu0 0.0
      %9815 = vmatprep.subr.mxu0 0.0
      %9816 = vmatpush1.msra.mxu0 0.0
      %9817 = vmatprep.subr.mxu0 0.0
      %9818 = vmatpush1.msra.mxu0 0.0
      %9819 = vmatprep.subr.mxu0 0.0
      %9820 = vmatpush1.msra.mxu0 0.0
      %9821 = vmatprep.subr.mxu0 0.0
      %9822 = vmatpush1.msra.mxu0 0.0
      %9823 = vmatprep.subr.mxu0 0.0
      %9824 = vmatpush1.msra.mxu0 0.0
      %9825 = vmatprep.subr.mxu0 0.0
      %9826 = vmatpush1.msra.mxu0 0.0
      %9827 = vmatprep.subr.mxu0 0.0
      %9828 = vmatpush1.msra.mxu0 0.0
      %9829 = vmatprep.subr.mxu0 0.0
      %9830 = vmatpush1.msra.mxu0 0.0
      %9831 = vmatprep.subr.mxu0 0.0
      %9832 = vmatpush1.msra.mxu0 0.0
      %9833 = vmatprep.subr.mxu0 0.0
      %9834 = vmatpush1.msra.mxu0 0.0
      %9835 = vmatprep.mubr.f32.mxu0 0.0
      %v9836 = vand.u32 %v9753, 4294901760
      %v9837 = vsub.f32 %v9753, %v9836
      %v9838 = vand.u32 %v9837, 4294901760
      %v9839 = vsub.f32 %v9837, %v9838
      %v9840 = vand.u32 %v9839, 4294901760
      %9841 = vmatmul.mubr.f32.gmra.mrb[0].mxu0 %v9840
      %v9842 = vpop.f32.mrb[0].mxu0
      %v9843 = vadd.f32 %v8565, %v9842
      %v9844 = vpop.f32.mrb[0].mxu0
      %v9845 = vadd.f32 %v8567, %v9844
      %9846 = vdwg.mxu0
      %v9847 = vand.u32 %v7608, 4294901760
      %v9848 = vsub.f32 %v7608, %v9847
      %v9849 = vand.u32 %v9848, 4294901760
      %v9850 = vsub.f32 %v9848, %v9849
      %v9851 = vand.u32 %v9850, 4294901760
      %9852 = vmatprep.subr.mxu0 %v9851
      %v9853 = vand.u32 %v7607, 4294901760
      %v9854 = vsub.f32 %v7607, %v9853
      %v9855 = vand.u32 %v9854, 4294901760
      %v9856 = vsub.f32 %v9854, %v9855
      %v9857 = vand.u32 %v9856, 4294901760
      %9858 = vmatpush1.msra.mxu0 %v9857
      %v9859 = vand.u32 %v7613, 4294901760
      %v9860 = vsub.f32 %v7613, %v9859
      %v9861 = vand.u32 %v9860, 4294901760
      %v9862 = vsub.f32 %v9860, %v9861
      %v9863 = vand.u32 %v9862, 4294901760
      %9864 = vmatprep.subr.mxu0 %v9863
      %v9865 = vand.u32 %v7612, 4294901760
      %v9866 = vsub.f32 %v7612, %v9865
      %v9867 = vand.u32 %v9866, 4294901760
      %v9868 = vsub.f32 %v9866, %v9867
      %v9869 = vand.u32 %v9868, 4294901760
      %9870 = vmatpush1.msra.mxu0 %v9869
      %v9871 = vand.u32 %v7618, 4294901760
      %v9872 = vsub.f32 %v7618, %v9871
      %v9873 = vand.u32 %v9872, 4294901760
      %v9874 = vsub.f32 %v9872, %v9873
      %v9875 = vand.u32 %v9874, 4294901760
      %9876 = vmatprep.subr.mxu0 %v9875
      %v9877 = vand.u32 %v7617, 4294901760
      %v9878 = vsub.f32 %v7617, %v9877
      %v9879 = vand.u32 %v9878, 4294901760
      %v9880 = vsub.f32 %v9878, %v9879
      %v9881 = vand.u32 %v9880, 4294901760
      %9882 = vmatpush1.msra.mxu0 %v9881
      %v9883 = vand.u32 %v7623, 4294901760
      %v9884 = vsub.f32 %v7623, %v9883
      %v9885 = vand.u32 %v9884, 4294901760
      %v9886 = vsub.f32 %v9884, %v9885
      %v9887 = vand.u32 %v9886, 4294901760
      %9888 = vmatprep.subr.mxu0 %v9887
      %v9889 = vand.u32 %v7622, 4294901760
      %v9890 = vsub.f32 %v7622, %v9889
      %v9891 = vand.u32 %v9890, 4294901760
      %v9892 = vsub.f32 %v9890, %v9891
      %v9893 = vand.u32 %v9892, 4294901760
      %9894 = vmatpush1.msra.mxu0 %v9893
      %v9895 = vand.u32 %v7628, 4294901760
      %v9896 = vsub.f32 %v7628, %v9895
      %v9897 = vand.u32 %v9896, 4294901760
      %v9898 = vsub.f32 %v9896, %v9897
      %v9899 = vand.u32 %v9898, 4294901760
      %9900 = vmatprep.subr.mxu0 %v9899
      %v9901 = vand.u32 %v7627, 4294901760
      %v9902 = vsub.f32 %v7627, %v9901
      %v9903 = vand.u32 %v9902, 4294901760
      %v9904 = vsub.f32 %v9902, %v9903
      %v9905 = vand.u32 %v9904, 4294901760
      %9906 = vmatpush1.msra.mxu0 %v9905
      %v9907 = vand.u32 %v7633, 4294901760
      %v9908 = vsub.f32 %v7633, %v9907
      %v9909 = vand.u32 %v9908, 4294901760
      %v9910 = vsub.f32 %v9908, %v9909
      %v9911 = vand.u32 %v9910, 4294901760
      %9912 = vmatprep.subr.mxu0 %v9911
      %v9913 = vand.u32 %v7632, 4294901760
      %v9914 = vsub.f32 %v7632, %v9913
      %v9915 = vand.u32 %v9914, 4294901760
      %v9916 = vsub.f32 %v9914, %v9915
      %v9917 = vand.u32 %v9916, 4294901760
      %9918 = vmatpush1.msra.mxu0 %v9917
      %v9919 = vand.u32 %v7638, 4294901760
      %v9920 = vsub.f32 %v7638, %v9919
      %v9921 = vand.u32 %v9920, 4294901760
      %v9922 = vsub.f32 %v9920, %v9921
      %v9923 = vand.u32 %v9922, 4294901760
      %9924 = vmatprep.subr.mxu0 %v9923
      %v9925 = vand.u32 %v7637, 4294901760
      %v9926 = vsub.f32 %v7637, %v9925
      %v9927 = vand.u32 %v9926, 4294901760
      %v9928 = vsub.f32 %v9926, %v9927
      %v9929 = vand.u32 %v9928, 4294901760
      %9930 = vmatpush1.msra.mxu0 %v9929
      %v9931 = vand.u32 %v7643, 4294901760
      %v9932 = vsub.f32 %v7643, %v9931
      %v9933 = vand.u32 %v9932, 4294901760
      %v9934 = vsub.f32 %v9932, %v9933
      %v9935 = vand.u32 %v9934, 4294901760
      %9936 = vmatprep.subr.mxu0 %v9935
      %v9937 = vand.u32 %v7642, 4294901760
      %v9938 = vsub.f32 %v7642, %v9937
      %v9939 = vand.u32 %v9938, 4294901760
      %v9940 = vsub.f32 %v9938, %v9939
      %v9941 = vand.u32 %v9940, 4294901760
      %9942 = vmatpush1.msra.mxu0 %v9941
      %9943 = vmatprep.subr.mxu0 0.0
      %9944 = vmatpush1.msra.mxu0 0.0
      %9945 = vmatprep.subr.mxu0 0.0
      %9946 = vmatpush1.msra.mxu0 0.0
      %9947 = vmatprep.subr.mxu0 0.0
      %9948 = vmatpush1.msra.mxu0 0.0
      %9949 = vmatprep.subr.mxu0 0.0
      %9950 = vmatpush1.msra.mxu0 0.0
      %9951 = vmatprep.subr.mxu0 0.0
      %9952 = vmatpush1.msra.mxu0 0.0
      %9953 = vmatprep.subr.mxu0 0.0
      %9954 = vmatpush1.msra.mxu0 0.0
      %9955 = vmatprep.subr.mxu0 0.0
      %9956 = vmatpush1.msra.mxu0 0.0
      %9957 = vmatprep.subr.mxu0 0.0
      %9958 = vmatpush1.msra.mxu0 0.0
      %9959 = vmatprep.subr.mxu0 0.0
      %9960 = vmatpush1.msra.mxu0 0.0
      %9961 = vmatprep.subr.mxu0 0.0
      %9962 = vmatpush1.msra.mxu0 0.0
      %9963 = vmatprep.subr.mxu0 0.0
      %9964 = vmatpush1.msra.mxu0 0.0
      %9965 = vmatprep.subr.mxu0 0.0
      %9966 = vmatpush1.msra.mxu0 0.0
      %9967 = vmatprep.subr.mxu0 0.0
      %9968 = vmatpush1.msra.mxu0 0.0
      %9969 = vmatprep.subr.mxu0 0.0
      %9970 = vmatpush1.msra.mxu0 0.0
      %9971 = vmatprep.subr.mxu0 0.0
      %9972 = vmatpush1.msra.mxu0 0.0
      %9973 = vmatprep.subr.mxu0 0.0
      %9974 = vmatpush1.msra.mxu0 0.0
      %9975 = vmatprep.subr.mxu0 0.0
      %9976 = vmatpush1.msra.mxu0 0.0
      %9977 = vmatprep.subr.mxu0 0.0
      %9978 = vmatpush1.msra.mxu0 0.0
      %9979 = vmatprep.subr.mxu0 0.0
      %9980 = vmatpush1.msra.mxu0 0.0
      %9981 = vmatprep.subr.mxu0 0.0
      %9982 = vmatpush1.msra.mxu0 0.0
      %9983 = vmatprep.subr.mxu0 0.0
      %9984 = vmatpush1.msra.mxu0 0.0
      %9985 = vmatprep.subr.mxu0 0.0
      %9986 = vmatpush1.msra.mxu0 0.0
      %9987 = vmatprep.subr.mxu0 0.0
      %9988 = vmatpush1.msra.mxu0 0.0
      %9989 = vmatprep.subr.mxu0 0.0
      %9990 = vmatpush1.msra.mxu0 0.0
      %9991 = vmatprep.mubr.f32.mxu0 0.0
      %v9992 = vand.u32 %v9753, 4294901760
      %9993 = vmatmul.mubr.f32.gmra.mrb[0].mxu0 %v9992
      %v9994 = vpop.f32.mrb[0].mxu0
      %v9995 = vadd.f32 %v9843, %v9994
      %v9996 = vpop.f32.mrb[0].mxu0
      %v9997 = vadd.f32 %v9845, %v9996
      %9998 = vdwg.mxu0
      %v9999 = vand.u32 %v7608, 4294901760
      %v10000 = vsub.f32 %v7608, %v9999
      %10001 = vmatprep.subr.mxu0 %v10000
      %v10002 = vand.u32 %v7607, 4294901760
      %v10003 = vsub.f32 %v7607, %v10002
      %10004 = vmatpush1.msra.mxu0 %v10003
      %v10005 = vand.u32 %v7613, 4294901760
      %v10006 = vsub.f32 %v7613, %v10005
      %10007 = vmatprep.subr.mxu0 %v10006
      %v10008 = vand.u32 %v7612, 4294901760
      %v10009 = vsub.f32 %v7612, %v10008
      %10010 = vmatpush1.msra.mxu0 %v10009
      %v10011 = vand.u32 %v7618, 4294901760
      %v10012 = vsub.f32 %v7618, %v10011
      %10013 = vmatprep.subr.mxu0 %v10012
      %v10014 = vand.u32 %v7617, 4294901760
      %v10015 = vsub.f32 %v7617, %v10014
      %10016 = vmatpush1.msra.mxu0 %v10015
      %v10017 = vand.u32 %v7623, 4294901760
      %v10018 = vsub.f32 %v7623, %v10017
      %10019 = vmatprep.subr.mxu0 %v10018
      %v10020 = vand.u32 %v7622, 4294901760
      %v10021 = vsub.f32 %v7622, %v10020
      %10022 = vmatpush1.msra.mxu0 %v10021
      %v10023 = vand.u32 %v7628, 4294901760
      %v10024 = vsub.f32 %v7628, %v10023
      %10025 = vmatprep.subr.mxu0 %v10024
      %v10026 = vand.u32 %v7627, 4294901760
      %v10027 = vsub.f32 %v7627, %v10026
      %10028 = vmatpush1.msra.mxu0 %v10027
      %v10029 = vand.u32 %v7633, 4294901760
      %v10030 = vsub.f32 %v7633, %v10029
      %10031 = vmatprep.subr.mxu0 %v10030
      %v10032 = vand.u32 %v7632, 4294901760
      %v10033 = vsub.f32 %v7632, %v10032
      %10034 = vmatpush1.msra.mxu0 %v10033
      %v10035 = vand.u32 %v7638, 4294901760
      %v10036 = vsub.f32 %v7638, %v10035
      %10037 = vmatprep.subr.mxu0 %v10036
      %v10038 = vand.u32 %v7637, 4294901760
      %v10039 = vsub.f32 %v7637, %v10038
      %10040 = vmatpush1.msra.mxu0 %v10039
      %v10041 = vand.u32 %v7643, 4294901760
      %v10042 = vsub.f32 %v7643, %v10041
      %10043 = vmatprep.subr.mxu0 %v10042
      %v10044 = vand.u32 %v7642, 4294901760
      %v10045 = vsub.f32 %v7642, %v10044
      %10046 = vmatpush1.msra.mxu0 %v10045
      %10047 = vmatprep.subr.mxu0 0.0
      %10048 = vmatpush1.msra.mxu0 0.0
      %10049 = vmatprep.subr.mxu0 0.0
      %10050 = vmatpush1.msra.mxu0 0.0
      %10051 = vmatprep.subr.mxu0 0.0
      %10052 = vmatpush1.msra.mxu0 0.0
      %10053 = vmatprep.subr.mxu0 0.0
      %10054 = vmatpush1.msra.mxu0 0.0
      %10055 = vmatprep.subr.mxu0 0.0
      %10056 = vmatpush1.msra.mxu0 0.0
      %10057 = vmatprep.subr.mxu0 0.0
      %10058 = vmatpush1.msra.mxu0 0.0
      %10059 = vmatprep.subr.mxu0 0.0
      %10060 = vmatpush1.msra.mxu0 0.0
      %10061 = vmatprep.subr.mxu0 0.0
      %10062 = vmatpush1.msra.mxu0 0.0
      %10063 = vmatprep.subr.mxu0 0.0
      %10064 = vmatpush1.msra.mxu0 0.0
      %10065 = vmatprep.subr.mxu0 0.0
      %10066 = vmatpush1.msra.mxu0 0.0
      %10067 = vmatprep.subr.mxu0 0.0
      %10068 = vmatpush1.msra.mxu0 0.0
      %10069 = vmatprep.subr.mxu0 0.0
      %10070 = vmatpush1.msra.mxu0 0.0
      %10071 = vmatprep.subr.mxu0 0.0
      %10072 = vmatpush1.msra.mxu0 0.0
      %10073 = vmatprep.subr.mxu0 0.0
      %10074 = vmatpush1.msra.mxu0 0.0
      %10075 = vmatprep.subr.mxu0 0.0
      %10076 = vmatpush1.msra.mxu0 0.0
      %10077 = vmatprep.subr.mxu0 0.0
      %10078 = vmatpush1.msra.mxu0 0.0
      %10079 = vmatprep.subr.mxu0 0.0
      %10080 = vmatpush1.msra.mxu0 0.0
      %10081 = vmatprep.subr.mxu0 0.0
      %10082 = vmatpush1.msra.mxu0 0.0
      %10083 = vmatprep.subr.mxu0 0.0
      %10084 = vmatpush1.msra.mxu0 0.0
      %10085 = vmatprep.subr.mxu0 0.0
      %10086 = vmatpush1.msra.mxu0 0.0
      %10087 = vmatprep.subr.mxu0 0.0
      %10088 = vmatpush1.msra.mxu0 0.0
      %10089 = vmatprep.subr.mxu0 0.0
      %10090 = vmatpush1.msra.mxu0 0.0
      %10091 = vmatprep.subr.mxu0 0.0
      %10092 = vmatpush1.msra.mxu0 0.0
      %10093 = vmatprep.subr.mxu0 0.0
      %10094 = vmatpush1.msra.mxu0 0.0
      %10095 = vmatprep.mubr.f32.mxu0 0.0
      %v10096 = vand.u32 %v9753, 4294901760
      %v10097 = vsub.f32 %v9753, %v10096
      %10098 = vmatmul.mubr.f32.gmra.mrb[0].mxu0 %v10097
      %v10099 = vpop.f32.mrb[0].mxu0
      %v10100 = vadd.f32 %v9995, %v10099
      %v10101 = vpop.f32.mrb[0].mxu0
      %v10102 = vadd.f32 %v9997, %v10101
      %10103 = vdwg.mxu0
      %v10104 = vand.u32 %v7608, 4294901760
      %10105 = vmatprep.subr.mxu0 %v10104
      %v10106 = vand.u32 %v7607, 4294901760
      %10107 = vmatpush1.msra.mxu0 %v10106
      %v10108 = vand.u32 %v7613, 4294901760
      %10109 = vmatprep.subr.mxu0 %v10108
      %v10110 = vand.u32 %v7612, 4294901760
      %10111 = vmatpush1.msra.mxu0 %v10110
      %v10112 = vand.u32 %v7618, 4294901760
      %10113 = vmatprep.subr.mxu0 %v10112
      %v10114 = vand.u32 %v7617, 4294901760
      %10115 = vmatpush1.msra.mxu0 %v10114
      %v10116 = vand.u32 %v7623, 4294901760
      %10117 = vmatprep.subr.mxu0 %v10116
      %v10118 = vand.u32 %v7622, 4294901760
      %10119 = vmatpush1.msra.mxu0 %v10118
      %v10120 = vand.u32 %v7628, 4294901760
      %10121 = vmatprep.subr.mxu0 %v10120
      %v10122 = vand.u32 %v7627, 4294901760
      %10123 = vmatpush1.msra.mxu0 %v10122
      %v10124 = vand.u32 %v7633, 4294901760
      %10125 = vmatprep.subr.mxu0 %v10124
      %v10126 = vand.u32 %v7632, 4294901760
      %10127 = vmatpush1.msra.mxu0 %v10126
      %v10128 = vand.u32 %v7638, 4294901760
      %10129 = vmatprep.subr.mxu0 %v10128
      %v10130 = vand.u32 %v7637, 4294901760
      %10131 = vmatpush1.msra.mxu0 %v10130
      %v10132 = vand.u32 %v7643, 4294901760
      %10133 = vmatprep.subr.mxu0 %v10132
      %v10134 = vand.u32 %v7642, 4294901760
      %10135 = vmatpush1.msra.mxu0 %v10134
      %10136 = vmatprep.subr.mxu0 0.0
      %10137 = vmatpush1.msra.mxu0 0.0
      %10138 = vmatprep.subr.mxu0 0.0
      %10139 = vmatpush1.msra.mxu0 0.0
      %10140 = vmatprep.subr.mxu0 0.0
      %10141 = vmatpush1.msra.mxu0 0.0
      %10142 = vmatprep.subr.mxu0 0.0
      %10143 = vmatpush1.msra.mxu0 0.0
      %10144 = vmatprep.subr.mxu0 0.0
      %10145 = vmatpush1.msra.mxu0 0.0
      %10146 = vmatprep.subr.mxu0 0.0
      %10147 = vmatpush1.msra.mxu0 0.0
      %10148 = vmatprep.subr.mxu0 0.0
      %10149 = vmatpush1.msra.mxu0 0.0
      %10150 = vmatprep.subr.mxu0 0.0
      %10151 = vmatpush1.msra.mxu0 0.0
      %10152 = vmatprep.subr.mxu0 0.0
      %10153 = vmatpush1.msra.mxu0 0.0
      %10154 = vmatprep.subr.mxu0 0.0
      %10155 = vmatpush1.msra.mxu0 0.0
      %10156 = vmatprep.subr.mxu0 0.0
      %10157 = vmatpush1.msra.mxu0 0.0
      %10158 = vmatprep.subr.mxu0 0.0
      %10159 = vmatpush1.msra.mxu0 0.0
      %10160 = vmatprep.subr.mxu0 0.0
      %10161 = vmatpush1.msra.mxu0 0.0
      %10162 = vmatprep.subr.mxu0 0.0
      %10163 = vmatpush1.msra.mxu0 0.0
      %10164 = vmatprep.subr.mxu0 0.0
      %10165 = vmatpush1.msra.mxu0 0.0
      %10166 = vmatprep.subr.mxu0 0.0
      %10167 = vmatpush1.msra.mxu0 0.0
      %10168 = vmatprep.subr.mxu0 0.0
      %10169 = vmatpush1.msra.mxu0 0.0
      %10170 = vmatprep.subr.mxu0 0.0
      %10171 = vmatpush1.msra.mxu0 0.0
      %10172 = vmatprep.subr.mxu0 0.0
      %10173 = vmatpush1.msra.mxu0 0.0
      %10174 = vmatprep.subr.mxu0 0.0
      %10175 = vmatpush1.msra.mxu0 0.0
      %10176 = vmatprep.subr.mxu0 0.0
      %10177 = vmatpush1.msra.mxu0 0.0
      %10178 = vmatprep.subr.mxu0 0.0
      %10179 = vmatpush1.msra.mxu0 0.0
      %10180 = vmatprep.subr.mxu0 0.0
      %10181 = vmatpush1.msra.mxu0 0.0
      %10182 = vmatprep.subr.mxu0 0.0
      %10183 = vmatpush1.msra.mxu0 0.0
      %10184 = vmatprep.mubr.f32.mxu0 0.0
      %v10185 = vand.u32 %v9753, 4294901760
      %v10186 = vsub.f32 %v9753, %v10185
      %v10187 = vand.u32 %v10186, 4294901760
      %10188 = vmatmul.mubr.f32.gmra.mrb[0].mxu0 %v10187
      %v10189 = vpop.f32.mrb[0].mxu0
      %v10190 = vadd.f32 %v10100, %v10189
      %v10191 = vpop.f32.mrb[0].mxu0
      %v10192 = vadd.f32 %v10102, %v10191
      %10193 = vdwg.mxu0
      %v10194 = vand.u32 %v7608, 4294901760
      %v10195 = vsub.f32 %v7608, %v10194
      %v10196 = vand.u32 %v10195, 4294901760
      %10197 = vmatprep.subr.mxu0 %v10196
      %v10198 = vand.u32 %v7607, 4294901760
      %v10199 = vsub.f32 %v7607, %v10198
      %v10200 = vand.u32 %v10199, 4294901760
      %10201 = vmatpush1.msra.mxu0 %v10200
      %v10202 = vand.u32 %v7613, 4294901760
      %v10203 = vsub.f32 %v7613, %v10202
      %v10204 = vand.u32 %v10203, 4294901760
      %10205 = vmatprep.subr.mxu0 %v10204
      %v10206 = vand.u32 %v7612, 4294901760
      %v10207 = vsub.f32 %v7612, %v10206
      %v10208 = vand.u32 %v10207, 4294901760
      %10209 = vmatpush1.msra.mxu0 %v10208
      %v10210 = vand.u32 %v7618, 4294901760
      %v10211 = vsub.f32 %v7618, %v10210
      %v10212 = vand.u32 %v10211, 4294901760
      %10213 = vmatprep.subr.mxu0 %v10212
      %v10214 = vand.u32 %v7617, 4294901760
      %v10215 = vsub.f32 %v7617, %v10214
      %v10216 = vand.u32 %v10215, 4294901760
      %10217 = vmatpush1.msra.mxu0 %v10216
      %v10218 = vand.u32 %v7623, 4294901760
      %v10219 = vsub.f32 %v7623, %v10218
      %v10220 = vand.u32 %v10219, 4294901760
      %10221 = vmatprep.subr.mxu0 %v10220
      %v10222 = vand.u32 %v7622, 4294901760
      %v10223 = vsub.f32 %v7622, %v10222
      %v10224 = vand.u32 %v10223, 4294901760
      %10225 = vmatpush1.msra.mxu0 %v10224
      %v10226 = vand.u32 %v7628, 4294901760
      %v10227 = vsub.f32 %v7628, %v10226
      %v10228 = vand.u32 %v10227, 4294901760
      %10229 = vmatprep.subr.mxu0 %v10228
      %v10230 = vand.u32 %v7627, 4294901760
      %v10231 = vsub.f32 %v7627, %v10230
      %v10232 = vand.u32 %v10231, 4294901760
      %10233 = vmatpush1.msra.mxu0 %v10232
      %v10234 = vand.u32 %v7633, 4294901760
      %v10235 = vsub.f32 %v7633, %v10234
      %v10236 = vand.u32 %v10235, 4294901760
      %10237 = vmatprep.subr.mxu0 %v10236
      %v10238 = vand.u32 %v7632, 4294901760
      %v10239 = vsub.f32 %v7632, %v10238
      %v10240 = vand.u32 %v10239, 4294901760
      %10241 = vmatpush1.msra.mxu0 %v10240
      %v10242 = vand.u32 %v7638, 4294901760
      %v10243 = vsub.f32 %v7638, %v10242
      %v10244 = vand.u32 %v10243, 4294901760
      %10245 = vmatprep.subr.mxu0 %v10244
      %v10246 = vand.u32 %v7637, 4294901760
      %v10247 = vsub.f32 %v7637, %v10246
      %v10248 = vand.u32 %v10247, 4294901760
      %10249 = vmatpush1.msra.mxu0 %v10248
      %v10250 = vand.u32 %v7643, 4294901760
      %v10251 = vsub.f32 %v7643, %v10250
      %v10252 = vand.u32 %v10251, 4294901760
      %10253 = vmatprep.subr.mxu0 %v10252
      %v10254 = vand.u32 %v7642, 4294901760
      %v10255 = vsub.f32 %v7642, %v10254
      %v10256 = vand.u32 %v10255, 4294901760
      %10257 = vmatpush1.msra.mxu0 %v10256
      %10258 = vmatprep.subr.mxu0 0.0
      %10259 = vmatpush1.msra.mxu0 0.0
      %10260 = vmatprep.subr.mxu0 0.0
      %10261 = vmatpush1.msra.mxu0 0.0
      %10262 = vmatprep.subr.mxu0 0.0
      %10263 = vmatpush1.msra.mxu0 0.0
      %10264 = vmatprep.subr.mxu0 0.0
      %10265 = vmatpush1.msra.mxu0 0.0
      %10266 = vmatprep.subr.mxu0 0.0
      %10267 = vmatpush1.msra.mxu0 0.0
      %10268 = vmatprep.subr.mxu0 0.0
      %10269 = vmatpush1.msra.mxu0 0.0
      %10270 = vmatprep.subr.mxu0 0.0
      %10271 = vmatpush1.msra.mxu0 0.0
      %10272 = vmatprep.subr.mxu0 0.0
      %10273 = vmatpush1.msra.mxu0 0.0
      %10274 = vmatprep.subr.mxu0 0.0
      %10275 = vmatpush1.msra.mxu0 0.0
      %10276 = vmatprep.subr.mxu0 0.0
      %10277 = vmatpush1.msra.mxu0 0.0
      %10278 = vmatprep.subr.mxu0 0.0
      %10279 = vmatpush1.msra.mxu0 0.0
      %10280 = vmatprep.subr.mxu0 0.0
      %10281 = vmatpush1.msra.mxu0 0.0
      %10282 = vmatprep.subr.mxu0 0.0
      %10283 = vmatpush1.msra.mxu0 0.0
      %10284 = vmatprep.subr.mxu0 0.0
      %10285 = vmatpush1.msra.mxu0 0.0
      %10286 = vmatprep.subr.mxu0 0.0
      %10287 = vmatpush1.msra.mxu0 0.0
      %10288 = vmatprep.subr.mxu0 0.0
      %10289 = vmatpush1.msra.mxu0 0.0
      %10290 = vmatprep.subr.mxu0 0.0
      %10291 = vmatpush1.msra.mxu0 0.0
      %10292 = vmatprep.subr.mxu0 0.0
      %10293 = vmatpush1.msra.mxu0 0.0
      %10294 = vmatprep.subr.mxu0 0.0
      %10295 = vmatpush1.msra.mxu0 0.0
      %10296 = vmatprep.subr.mxu0 0.0
      %10297 = vmatpush1.msra.mxu0 0.0
      %10298 = vmatprep.subr.mxu0 0.0
      %10299 = vmatpush1.msra.mxu0 0.0
      %10300 = vmatprep.subr.mxu0 0.0
      %10301 = vmatpush1.msra.mxu0 0.0
      %10302 = vmatprep.subr.mxu0 0.0
      %10303 = vmatpush1.msra.mxu0 0.0
      %10304 = vmatprep.subr.mxu0 0.0
      %10305 = vmatpush1.msra.mxu0 0.0
      %10306 = vmatprep.mubr.f32.mxu0 0.0
      %v10307 = vand.u32 %v9753, 4294901760
      %10308 = vmatmul.mubr.f32.gmra.mrb[0].mxu0 %v10307
      %v10309 = vpop.f32.mrb[0].mxu0
      %v10310 = vadd.f32 %v10190, %v10309
      %v10311 = vpop.f32.mrb[0].mxu0
      %v10312 = vadd.f32 %v10192, %v10311
      %10313 = vdwg.mxu0
      %v10314 = vand.u32 %v7608, 4294901760
      %10315 = vmatprep.subr.mxu0 %v10314
      %v10316 = vand.u32 %v7607, 4294901760
      %10317 = vmatpush1.msra.mxu0 %v10316
      %v10318 = vand.u32 %v7613, 4294901760
      %10319 = vmatprep.subr.mxu0 %v10318
      %v10320 = vand.u32 %v7612, 4294901760
      %10321 = vmatpush1.msra.mxu0 %v10320
      %v10322 = vand.u32 %v7618, 4294901760
      %10323 = vmatprep.subr.mxu0 %v10322
      %v10324 = vand.u32 %v7617, 4294901760
      %10325 = vmatpush1.msra.mxu0 %v10324
      %v10326 = vand.u32 %v7623, 4294901760
      %10327 = vmatprep.subr.mxu0 %v10326
      %v10328 = vand.u32 %v7622, 4294901760
      %10329 = vmatpush1.msra.mxu0 %v10328
      %v10330 = vand.u32 %v7628, 4294901760
      %10331 = vmatprep.subr.mxu0 %v10330
      %v10332 = vand.u32 %v7627, 4294901760
      %10333 = vmatpush1.msra.mxu0 %v10332
      %v10334 = vand.u32 %v7633, 4294901760
      %10335 = vmatprep.subr.mxu0 %v10334
      %v10336 = vand.u32 %v7632, 4294901760
      %10337 = vmatpush1.msra.mxu0 %v10336
      %v10338 = vand.u32 %v7638, 4294901760
      %10339 = vmatprep.subr.mxu0 %v10338
      %v10340 = vand.u32 %v7637, 4294901760
      %10341 = vmatpush1.msra.mxu0 %v10340
      %v10342 = vand.u32 %v7643, 4294901760
      %10343 = vmatprep.subr.mxu0 %v10342
      %v10344 = vand.u32 %v7642, 4294901760
      %10345 = vmatpush1.msra.mxu0 %v10344
      %10346 = vmatprep.subr.mxu0 0.0
      %10347 = vmatpush1.msra.mxu0 0.0
      %10348 = vmatprep.subr.mxu0 0.0
      %10349 = vmatpush1.msra.mxu0 0.0
      %10350 = vmatprep.subr.mxu0 0.0
      %10351 = vmatpush1.msra.mxu0 0.0
      %10352 = vmatprep.subr.mxu0 0.0
      %10353 = vmatpush1.msra.mxu0 0.0
      %10354 = vmatprep.subr.mxu0 0.0
      %10355 = vmatpush1.msra.mxu0 0.0
      %10356 = vmatprep.subr.mxu0 0.0
      %10357 = vmatpush1.msra.mxu0 0.0
      %10358 = vmatprep.subr.mxu0 0.0
      %10359 = vmatpush1.msra.mxu0 0.0
      %10360 = vmatprep.subr.mxu0 0.0
      %10361 = vmatpush1.msra.mxu0 0.0
      %10362 = vmatprep.subr.mxu0 0.0
      %10363 = vmatpush1.msra.mxu0 0.0
      %10364 = vmatprep.subr.mxu0 0.0
      %10365 = vmatpush1.msra.mxu0 0.0
      %10366 = vmatprep.subr.mxu0 0.0
      %10367 = vmatpush1.msra.mxu0 0.0
      %10368 = vmatprep.subr.mxu0 0.0
      %10369 = vmatpush1.msra.mxu0 0.0
      %10370 = vmatprep.subr.mxu0 0.0
      %10371 = vmatpush1.msra.mxu0 0.0
      %10372 = vmatprep.subr.mxu0 0.0
      %10373 = vmatpush1.msra.mxu0 0.0
      %10374 = vmatprep.subr.mxu0 0.0
      %10375 = vmatpush1.msra.mxu0 0.0
      %10376 = vmatprep.subr.mxu0 0.0
      %10377 = vmatpush1.msra.mxu0 0.0
      %10378 = vmatprep.subr.mxu0 0.0
      %10379 = vmatpush1.msra.mxu0 0.0
      %10380 = vmatprep.subr.mxu0 0.0
      %10381 = vmatpush1.msra.mxu0 0.0
      %10382 = vmatprep.subr.mxu0 0.0
      %10383 = vmatpush1.msra.mxu0 0.0
      %10384 = vmatprep.subr.mxu0 0.0
      %10385 = vmatpush1.msra.mxu0 0.0
      %10386 = vmatprep.subr.mxu0 0.0
      %10387 = vmatpush1.msra.mxu0 0.0
      %10388 = vmatprep.subr.mxu0 0.0
      %10389 = vmatpush1.msra.mxu0 0.0
      %10390 = vmatprep.subr.mxu0 0.0
      %10391 = vmatpush1.msra.mxu0 0.0
      %10392 = vmatprep.subr.mxu0 0.0
      %10393 = vmatpush1.msra.mxu0 0.0
      %10394 = vmatprep.mubr.f32.mxu0 0.0
      %v10395 = vand.u32 %v9753, 4294901760
      %10396 = vmatmul.mubr.f32.gmra.mrb[0].mxu0 %v10395
      %v10397 = vpop.f32.mrb[0].mxu0
      %v10398 = vadd.f32 %v10310, %v10397
      %v10399 = vpop.f32.mrb[0].mxu0
      %v10400 = vadd.f32 %v10312, %v10399
      %10401 = vdwg.mxu0
      %v10402 = vand.u32 %v7610, 4294901760
      %10403 = vmatprep.subr.mxu0 %v10402
      %v10404 = vand.u32 %v7609, 4294901760
      %10405 = vmatpush1.msra.mxu0 %v10404
      %v10406 = vand.u32 %v7615, 4294901760
      %10407 = vmatprep.subr.mxu0 %v10406
      %v10408 = vand.u32 %v7614, 4294901760
      %10409 = vmatpush1.msra.mxu0 %v10408
      %v10410 = vand.u32 %v7620, 4294901760
      %10411 = vmatprep.subr.mxu0 %v10410
      %v10412 = vand.u32 %v7619, 4294901760
      %10413 = vmatpush1.msra.mxu0 %v10412
      %v10414 = vand.u32 %v7625, 4294901760
      %10415 = vmatprep.subr.mxu0 %v10414
      %v10416 = vand.u32 %v7624, 4294901760
      %10417 = vmatpush1.msra.mxu0 %v10416
      %v10418 = vand.u32 %v7630, 4294901760
      %10419 = vmatprep.subr.mxu0 %v10418
      %v10420 = vand.u32 %v7629, 4294901760
      %10421 = vmatpush1.msra.mxu0 %v10420
      %v10422 = vand.u32 %v7635, 4294901760
      %10423 = vmatprep.subr.mxu0 %v10422
      %v10424 = vand.u32 %v7634, 4294901760
      %10425 = vmatpush1.msra.mxu0 %v10424
      %v10426 = vand.u32 %v7640, 4294901760
      %10427 = vmatprep.subr.mxu0 %v10426
      %v10428 = vand.u32 %v7639, 4294901760
      %10429 = vmatpush1.msra.mxu0 %v10428
      %v10430 = vand.u32 %v7645, 4294901760
      %10431 = vmatprep.subr.mxu0 %v10430
      %v10432 = vand.u32 %v7644, 4294901760
      %10433 = vmatpush1.msra.mxu0 %v10432
      %10434 = vmatprep.subr.mxu0 0.0
      %10435 = vmatpush1.msra.mxu0 0.0
      %10436 = vmatprep.subr.mxu0 0.0
      %10437 = vmatpush1.msra.mxu0 0.0
      %10438 = vmatprep.subr.mxu0 0.0
      %10439 = vmatpush1.msra.mxu0 0.0
      %10440 = vmatprep.subr.mxu0 0.0
      %10441 = vmatpush1.msra.mxu0 0.0
      %10442 = vmatprep.subr.mxu0 0.0
      %10443 = vmatpush1.msra.mxu0 0.0
      %10444 = vmatprep.subr.mxu0 0.0
      %10445 = vmatpush1.msra.mxu0 0.0
      %10446 = vmatprep.subr.mxu0 0.0
      %10447 = vmatpush1.msra.mxu0 0.0
      %10448 = vmatprep.subr.mxu0 0.0
      %10449 = vmatpush1.msra.mxu0 0.0
      %10450 = vmatprep.subr.mxu0 0.0
      %10451 = vmatpush1.msra.mxu0 0.0
      %10452 = vmatprep.subr.mxu0 0.0
      %10453 = vmatpush1.msra.mxu0 0.0
      %10454 = vmatprep.subr.mxu0 0.0
      %10455 = vmatpush1.msra.mxu0 0.0
      %10456 = vmatprep.subr.mxu0 0.0
      %10457 = vmatpush1.msra.mxu0 0.0
      %10458 = vmatprep.subr.mxu0 0.0
      %10459 = vmatpush1.msra.mxu0 0.0
      %10460 = vmatprep.subr.mxu0 0.0
      %10461 = vmatpush1.msra.mxu0 0.0
      %10462 = vmatprep.subr.mxu0 0.0
      %10463 = vmatpush1.msra.mxu0 0.0
      %10464 = vmatprep.subr.mxu0 0.0
      %10465 = vmatpush1.msra.mxu0 0.0
      %10466 = vmatprep.subr.mxu0 0.0
      %10467 = vmatpush1.msra.mxu0 0.0
      %10468 = vmatprep.subr.mxu0 0.0
      %10469 = vmatpush1.msra.mxu0 0.0
      %10470 = vmatprep.subr.mxu0 0.0
      %10471 = vmatpush1.msra.mxu0 0.0
      %10472 = vmatprep.subr.mxu0 0.0
      %10473 = vmatpush1.msra.mxu0 0.0
      %10474 = vmatprep.subr.mxu0 0.0
      %10475 = vmatpush1.msra.mxu0 0.0
      %10476 = vmatprep.subr.mxu0 0.0
      %10477 = vmatpush1.msra.mxu0 0.0
      %10478 = vmatprep.subr.mxu0 0.0
      %10479 = vmatpush1.msra.mxu0 0.0
      %10480 = vmatprep.subr.mxu0 0.0
      %10481 = vmatpush1.msra.mxu0 0.0
      %10482 = vmatprep.mubr.f32.mxu0 0.0
      %v10483 = vand.u32 %v9753, 4294901760
      %v10484 = vsub.f32 %v9753, %v10483
      %v10485 = vand.u32 %v10484, 4294901760
      %v10486 = vsub.f32 %v10484, %v10485
      %v10487 = vand.u32 %v10486, 4294901760
      %10488 = vmatmul.mubr.f32.gmra.mrb[0].mxu0 %v10487
      %v10489 = vpop.f32.mrb[0].mxu0
      %v10490 = vadd.f32 %v9212, %v10489
      %v10491 = vpop.f32.mrb[0].mxu0
      %v10492 = vadd.f32 %v9214, %v10491
      %10493 = vdwg.mxu0
      %v10494 = vand.u32 %v7610, 4294901760
      %v10495 = vsub.f32 %v7610, %v10494
      %v10496 = vand.u32 %v10495, 4294901760
      %v10497 = vsub.f32 %v10495, %v10496
      %v10498 = vand.u32 %v10497, 4294901760
      %10499 = vmatprep.subr.mxu0 %v10498
      %v10500 = vand.u32 %v7609, 4294901760
      %v10501 = vsub.f32 %v7609, %v10500
      %v10502 = vand.u32 %v10501, 4294901760
      %v10503 = vsub.f32 %v10501, %v10502
      %v10504 = vand.u32 %v10503, 4294901760
      %10505 = vmatpush1.msra.mxu0 %v10504
      %v10506 = vand.u32 %v7615, 4294901760
      %v10507 = vsub.f32 %v7615, %v10506
      %v10508 = vand.u32 %v10507, 4294901760
      %v10509 = vsub.f32 %v10507, %v10508
      %v10510 = vand.u32 %v10509, 4294901760
      %10511 = vmatprep.subr.mxu0 %v10510
      %v10512 = vand.u32 %v7614, 4294901760
      %v10513 = vsub.f32 %v7614, %v10512
      %v10514 = vand.u32 %v10513, 4294901760
      %v10515 = vsub.f32 %v10513, %v10514
      %v10516 = vand.u32 %v10515, 4294901760
      %10517 = vmatpush1.msra.mxu0 %v10516
      %v10518 = vand.u32 %v7620, 4294901760
      %v10519 = vsub.f32 %v7620, %v10518
      %v10520 = vand.u32 %v10519, 4294901760
      %v10521 = vsub.f32 %v10519, %v10520
      %v10522 = vand.u32 %v10521, 4294901760
      %10523 = vmatprep.subr.mxu0 %v10522
      %v10524 = vand.u32 %v7619, 4294901760
      %v10525 = vsub.f32 %v7619, %v10524
      %v10526 = vand.u32 %v10525, 4294901760
      %v10527 = vsub.f32 %v10525, %v10526
      %v10528 = vand.u32 %v10527, 4294901760
      %10529 = vmatpush1.msra.mxu0 %v10528
      %v10530 = vand.u32 %v7625, 4294901760
      %v10531 = vsub.f32 %v7625, %v10530
      %v10532 = vand.u32 %v10531, 4294901760
      %v10533 = vsub.f32 %v10531, %v10532
      %v10534 = vand.u32 %v10533, 4294901760
      %10535 = vmatprep.subr.mxu0 %v10534
      %v10536 = vand.u32 %v7624, 4294901760
      %v10537 = vsub.f32 %v7624, %v10536
      %v10538 = vand.u32 %v10537, 4294901760
      %v10539 = vsub.f32 %v10537, %v10538
      %v10540 = vand.u32 %v10539, 4294901760
      %10541 = vmatpush1.msra.mxu0 %v10540
      %v10542 = vand.u32 %v7630, 4294901760
      %v10543 = vsub.f32 %v7630, %v10542
      %v10544 = vand.u32 %v10543, 4294901760
      %v10545 = vsub.f32 %v10543, %v10544
      %v10546 = vand.u32 %v10545, 4294901760
      %10547 = vmatprep.subr.mxu0 %v10546
      %v10548 = vand.u32 %v7629, 4294901760
      %v10549 = vsub.f32 %v7629, %v10548
      %v10550 = vand.u32 %v10549, 4294901760
      %v10551 = vsub.f32 %v10549, %v10550
      %v10552 = vand.u32 %v10551, 4294901760
      %10553 = vmatpush1.msra.mxu0 %v10552
      %v10554 = vand.u32 %v7635, 4294901760
      %v10555 = vsub.f32 %v7635, %v10554
      %v10556 = vand.u32 %v10555, 4294901760
      %v10557 = vsub.f32 %v10555, %v10556
      %v10558 = vand.u32 %v10557, 4294901760
      %10559 = vmatprep.subr.mxu0 %v10558
      %v10560 = vand.u32 %v7634, 4294901760
      %v10561 = vsub.f32 %v7634, %v10560
      %v10562 = vand.u32 %v10561, 4294901760
      %v10563 = vsub.f32 %v10561, %v10562
      %v10564 = vand.u32 %v10563, 4294901760
      %10565 = vmatpush1.msra.mxu0 %v10564
      %v10566 = vand.u32 %v7640, 4294901760
      %v10567 = vsub.f32 %v7640, %v10566
      %v10568 = vand.u32 %v10567, 4294901760
      %v10569 = vsub.f32 %v10567, %v10568
      %v10570 = vand.u32 %v10569, 4294901760
      %10571 = vmatprep.subr.mxu0 %v10570
      %v10572 = vand.u32 %v7639, 4294901760
      %v10573 = vsub.f32 %v7639, %v10572
      %v10574 = vand.u32 %v10573, 4294901760
      %v10575 = vsub.f32 %v10573, %v10574
      %v10576 = vand.u32 %v10575, 4294901760
      %10577 = vmatpush1.msra.mxu0 %v10576
      %v10578 = vand.u32 %v7645, 4294901760
      %v10579 = vsub.f32 %v7645, %v10578
      %v10580 = vand.u32 %v10579, 4294901760
      %v10581 = vsub.f32 %v10579, %v10580
      %v10582 = vand.u32 %v10581, 4294901760
      %10583 = vmatprep.subr.mxu0 %v10582
      %v10584 = vand.u32 %v7644, 4294901760
      %v10585 = vsub.f32 %v7644, %v10584
      %v10586 = vand.u32 %v10585, 4294901760
      %v10587 = vsub.f32 %v10585, %v10586
      %v10588 = vand.u32 %v10587, 4294901760
      %10589 = vmatpush1.msra.mxu0 %v10588
      %10590 = vmatprep.subr.mxu0 0.0
      %10591 = vmatpush1.msra.mxu0 0.0
      %10592 = vmatprep.subr.mxu0 0.0
      %10593 = vmatpush1.msra.mxu0 0.0
      %10594 = vmatprep.subr.mxu0 0.0
      %10595 = vmatpush1.msra.mxu0 0.0
      %10596 = vmatprep.subr.mxu0 0.0
      %10597 = vmatpush1.msra.mxu0 0.0
      %10598 = vmatprep.subr.mxu0 0.0
      %10599 = vmatpush1.msra.mxu0 0.0
      %10600 = vmatprep.subr.mxu0 0.0
      %10601 = vmatpush1.msra.mxu0 0.0
      %10602 = vmatprep.subr.mxu0 0.0
      %10603 = vmatpush1.msra.mxu0 0.0
      %10604 = vmatprep.subr.mxu0 0.0
      %10605 = vmatpush1.msra.mxu0 0.0
      %10606 = vmatprep.subr.mxu0 0.0
      %10607 = vmatpush1.msra.mxu0 0.0
      %10608 = vmatprep.subr.mxu0 0.0
      %10609 = vmatpush1.msra.mxu0 0.0
      %10610 = vmatprep.subr.mxu0 0.0
      %10611 = vmatpush1.msra.mxu0 0.0
      %10612 = vmatprep.subr.mxu0 0.0
      %10613 = vmatpush1.msra.mxu0 0.0
      %10614 = vmatprep.subr.mxu0 0.0
      %10615 = vmatpush1.msra.mxu0 0.0
      %10616 = vmatprep.subr.mxu0 0.0
      %10617 = vmatpush1.msra.mxu0 0.0
      %10618 = vmatprep.subr.mxu0 0.0
      %10619 = vmatpush1.msra.mxu0 0.0
      %10620 = vmatprep.subr.mxu0 0.0
      %10621 = vmatpush1.msra.mxu0 0.0
      %10622 = vmatprep.subr.mxu0 0.0
      %10623 = vmatpush1.msra.mxu0 0.0
      %10624 = vmatprep.subr.mxu0 0.0
      %10625 = vmatpush1.msra.mxu0 0.0
      %10626 = vmatprep.subr.mxu0 0.0
      %10627 = vmatpush1.msra.mxu0 0.0
      %10628 = vmatprep.subr.mxu0 0.0
      %10629 = vmatpush1.msra.mxu0 0.0
      %10630 = vmatprep.subr.mxu0 0.0
      %10631 = vmatpush1.msra.mxu0 0.0
      %10632 = vmatprep.subr.mxu0 0.0
      %10633 = vmatpush1.msra.mxu0 0.0
      %10634 = vmatprep.subr.mxu0 0.0
      %10635 = vmatpush1.msra.mxu0 0.0
      %10636 = vmatprep.subr.mxu0 0.0
      %10637 = vmatpush1.msra.mxu0 0.0
      %10638 = vmatprep.mubr.f32.mxu0 0.0
      %v10639 = vand.u32 %v9753, 4294901760
      %10640 = vmatmul.mubr.f32.gmra.mrb[0].mxu0 %v10639
      %v10641 = vpop.f32.mrb[0].mxu0
      %v10642 = vadd.f32 %v10490, %v10641
      %v10643 = vpop.f32.mrb[0].mxu0
      %v10644 = vadd.f32 %v10492, %v10643
      %10645 = vdwg.mxu0
      %v10646 = vand.u32 %v7610, 4294901760
      %v10647 = vsub.f32 %v7610, %v10646
      %10648 = vmatprep.subr.mxu0 %v10647
      %v10649 = vand.u32 %v7609, 4294901760
      %v10650 = vsub.f32 %v7609, %v10649
      %10651 = vmatpush1.msra.mxu0 %v10650
      %v10652 = vand.u32 %v7615, 4294901760
      %v10653 = vsub.f32 %v7615, %v10652
      %10654 = vmatprep.subr.mxu0 %v10653
      %v10655 = vand.u32 %v7614, 4294901760
      %v10656 = vsub.f32 %v7614, %v10655
      %10657 = vmatpush1.msra.mxu0 %v10656
      %v10658 = vand.u32 %v7620, 4294901760
      %v10659 = vsub.f32 %v7620, %v10658
      %10660 = vmatprep.subr.mxu0 %v10659
      %v10661 = vand.u32 %v7619, 4294901760
      %v10662 = vsub.f32 %v7619, %v10661
      %10663 = vmatpush1.msra.mxu0 %v10662
      %v10664 = vand.u32 %v7625, 4294901760
      %v10665 = vsub.f32 %v7625, %v10664
      %10666 = vmatprep.subr.mxu0 %v10665
      %v10667 = vand.u32 %v7624, 4294901760
      %v10668 = vsub.f32 %v7624, %v10667
      %10669 = vmatpush1.msra.mxu0 %v10668
      %v10670 = vand.u32 %v7630, 4294901760
      %v10671 = vsub.f32 %v7630, %v10670
      %10672 = vmatprep.subr.mxu0 %v10671
      %v10673 = vand.u32 %v7629, 4294901760
      %v10674 = vsub.f32 %v7629, %v10673
      %10675 = vmatpush1.msra.mxu0 %v10674
      %v10676 = vand.u32 %v7635, 4294901760
      %v10677 = vsub.f32 %v7635, %v10676
      %10678 = vmatprep.subr.mxu0 %v10677
      %v10679 = vand.u32 %v7634, 4294901760
      %v10680 = vsub.f32 %v7634, %v10679
      %10681 = vmatpush1.msra.mxu0 %v10680
      %v10682 = vand.u32 %v7640, 4294901760
      %v10683 = vsub.f32 %v7640, %v10682
      %10684 = vmatprep.subr.mxu0 %v10683
      %v10685 = vand.u32 %v7639, 4294901760
      %v10686 = vsub.f32 %v7639, %v10685
      %10687 = vmatpush1.msra.mxu0 %v10686
      %v10688 = vand.u32 %v7645, 4294901760
      %v10689 = vsub.f32 %v7645, %v10688
      %10690 = vmatprep.subr.mxu0 %v10689
      %v10691 = vand.u32 %v7644, 4294901760
      %v10692 = vsub.f32 %v7644, %v10691
      %10693 = vmatpush1.msra.mxu0 %v10692
      %10694 = vmatprep.subr.mxu0 0.0
      %10695 = vmatpush1.msra.mxu0 0.0
      %10696 = vmatprep.subr.mxu0 0.0
      %10697 = vmatpush1.msra.mxu0 0.0
      %10698 = vmatprep.subr.mxu0 0.0
      %10699 = vmatpush1.msra.mxu0 0.0
      %10700 = vmatprep.subr.mxu0 0.0
      %10701 = vmatpush1.msra.mxu0 0.0
      %10702 = vmatprep.subr.mxu0 0.0
      %10703 = vmatpush1.msra.mxu0 0.0
      %10704 = vmatprep.subr.mxu0 0.0
      %10705 = vmatpush1.msra.mxu0 0.0
      %10706 = vmatprep.subr.mxu0 0.0
      %10707 = vmatpush1.msra.mxu0 0.0
      %10708 = vmatprep.subr.mxu0 0.0
      %10709 = vmatpush1.msra.mxu0 0.0
      %10710 = vmatprep.subr.mxu0 0.0
      %10711 = vmatpush1.msra.mxu0 0.0
      %10712 = vmatprep.subr.mxu0 0.0
      %10713 = vmatpush1.msra.mxu0 0.0
      %10714 = vmatprep.subr.mxu0 0.0
      %10715 = vmatpush1.msra.mxu0 0.0
      %10716 = vmatprep.subr.mxu0 0.0
      %10717 = vmatpush1.msra.mxu0 0.0
      %10718 = vmatprep.subr.mxu0 0.0
      %10719 = vmatpush1.msra.mxu0 0.0
      %10720 = vmatprep.subr.mxu0 0.0
      %10721 = vmatpush1.msra.mxu0 0.0
      %10722 = vmatprep.subr.mxu0 0.0
      %10723 = vmatpush1.msra.mxu0 0.0
      %10724 = vmatprep.subr.mxu0 0.0
      %10725 = vmatpush1.msra.mxu0 0.0
      %10726 = vmatprep.subr.mxu0 0.0
      %10727 = vmatpush1.msra.mxu0 0.0
      %10728 = vmatprep.subr.mxu0 0.0
      %10729 = vmatpush1.msra.mxu0 0.0
      %10730 = vmatprep.subr.mxu0 0.0
      %10731 = vmatpush1.msra.mxu0 0.0
      %10732 = vmatprep.subr.mxu0 0.0
      %10733 = vmatpush1.msra.mxu0 0.0
      %10734 = vmatprep.subr.mxu0 0.0
      %10735 = vmatpush1.msra.mxu0 0.0
      %10736 = vmatprep.subr.mxu0 0.0
      %10737 = vmatpush1.msra.mxu0 0.0
      %10738 = vmatprep.subr.mxu0 0.0
      %10739 = vmatpush1.msra.mxu0 0.0
      %10740 = vmatprep.subr.mxu0 0.0
      %10741 = vmatpush1.msra.mxu0 0.0
      %10742 = vmatprep.mubr.f32.mxu0 0.0
      %v10743 = vand.u32 %v9753, 4294901760
      %v10744 = vsub.f32 %v9753, %v10743
      %10745 = vmatmul.mubr.f32.gmra.mrb[0].mxu0 %v10744
      %v10746 = vpop.f32.mrb[0].mxu0
      %v10747 = vadd.f32 %v10642, %v10746
      %v10748 = vpop.f32.mrb[0].mxu0
      %v10749 = vadd.f32 %v10644, %v10748
      %10750 = vdwg.mxu0
      %v10751 = vand.u32 %v7610, 4294901760
      %10752 = vmatprep.subr.mxu0 %v10751
      %v10753 = vand.u32 %v7609, 4294901760
      %10754 = vmatpush1.msra.mxu0 %v10753
      %v10755 = vand.u32 %v7615, 4294901760
      %10756 = vmatprep.subr.mxu0 %v10755
      %v10757 = vand.u32 %v7614, 4294901760
      %10758 = vmatpush1.msra.mxu0 %v10757
      %v10759 = vand.u32 %v7620, 4294901760
      %10760 = vmatprep.subr.mxu0 %v10759
      %v10761 = vand.u32 %v7619, 4294901760
      %10762 = vmatpush1.msra.mxu0 %v10761
      %v10763 = vand.u32 %v7625, 4294901760
      %10764 = vmatprep.subr.mxu0 %v10763
      %v10765 = vand.u32 %v7624, 4294901760
      %10766 = vmatpush1.msra.mxu0 %v10765
      %v10767 = vand.u32 %v7630, 4294901760
      %10768 = vmatprep.subr.mxu0 %v10767
      %v10769 = vand.u32 %v7629, 4294901760
      %10770 = vmatpush1.msra.mxu0 %v10769
      %v10771 = vand.u32 %v7635, 4294901760
      %10772 = vmatprep.subr.mxu0 %v10771
      %v10773 = vand.u32 %v7634, 4294901760
      %10774 = vmatpush1.msra.mxu0 %v10773
      %v10775 = vand.u32 %v7640, 4294901760
      %10776 = vmatprep.subr.mxu0 %v10775
      %v10777 = vand.u32 %v7639, 4294901760
      %10778 = vmatpush1.msra.mxu0 %v10777
      %v10779 = vand.u32 %v7645, 4294901760
      %10780 = vmatprep.subr.mxu0 %v10779
      %v10781 = vand.u32 %v7644, 4294901760
      %10782 = vmatpush1.msra.mxu0 %v10781
      %10783 = vmatprep.subr.mxu0 0.0
      %10784 = vmatpush1.msra.mxu0 0.0
      %10785 = vmatprep.subr.mxu0 0.0
      %10786 = vmatpush1.msra.mxu0 0.0
      %10787 = vmatprep.subr.mxu0 0.0
      %10788 = vmatpush1.msra.mxu0 0.0
      %10789 = vmatprep.subr.mxu0 0.0
      %10790 = vmatpush1.msra.mxu0 0.0
      %10791 = vmatprep.subr.mxu0 0.0
      %10792 = vmatpush1.msra.mxu0 0.0
      %10793 = vmatprep.subr.mxu0 0.0
      %10794 = vmatpush1.msra.mxu0 0.0
      %10795 = vmatprep.subr.mxu0 0.0
      %10796 = vmatpush1.msra.mxu0 0.0
      %10797 = vmatprep.subr.mxu0 0.0
      %10798 = vmatpush1.msra.mxu0 0.0
      %10799 = vmatprep.subr.mxu0 0.0
      %10800 = vmatpush1.msra.mxu0 0.0
      %10801 = vmatprep.subr.mxu0 0.0
      %10802 = vmatpush1.msra.mxu0 0.0
      %10803 = vmatprep.subr.mxu0 0.0
      %10804 = vmatpush1.msra.mxu0 0.0
      %10805 = vmatprep.subr.mxu0 0.0
      %10806 = vmatpush1.msra.mxu0 0.0
      %10807 = vmatprep.subr.mxu0 0.0
      %10808 = vmatpush1.msra.mxu0 0.0
      %10809 = vmatprep.subr.mxu0 0.0
      %10810 = vmatpush1.msra.mxu0 0.0
      %10811 = vmatprep.subr.mxu0 0.0
      %10812 = vmatpush1.msra.mxu0 0.0
      %10813 = vmatprep.subr.mxu0 0.0
      %10814 = vmatpush1.msra.mxu0 0.0
      %10815 = vmatprep.subr.mxu0 0.0
      %10816 = vmatpush1.msra.mxu0 0.0
      %10817 = vmatprep.subr.mxu0 0.0
      %10818 = vmatpush1.msra.mxu0 0.0
      %10819 = vmatprep.subr.mxu0 0.0
      %10820 = vmatpush1.msra.mxu0 0.0
      %10821 = vmatprep.subr.mxu0 0.0
      %10822 = vmatpush1.msra.mxu0 0.0
      %10823 = vmatprep.subr.mxu0 0.0
      %10824 = vmatpush1.msra.mxu0 0.0
      %10825 = vmatprep.subr.mxu0 0.0
      %10826 = vmatpush1.msra.mxu0 0.0
      %10827 = vmatprep.subr.mxu0 0.0
      %10828 = vmatpush1.msra.mxu0 0.0
      %10829 = vmatprep.subr.mxu0 0.0
      %10830 = vmatpush1.msra.mxu0 0.0
      %10831 = vmatprep.mubr.f32.mxu0 0.0
      %v10832 = vand.u32 %v9753, 4294901760
      %v10833 = vsub.f32 %v9753, %v10832
      %v10834 = vand.u32 %v10833, 4294901760
      %10835 = vmatmul.mubr.f32.gmra.mrb[0].mxu0 %v10834
      %v10836 = vpop.f32.mrb[0].mxu0
      %v10837 = vadd.f32 %v10747, %v10836
      %v10838 = vpop.f32.mrb[0].mxu0
      %v10839 = vadd.f32 %v10749, %v10838
      %10840 = vdwg.mxu0
      %v10841 = vand.u32 %v7610, 4294901760
      %v10842 = vsub.f32 %v7610, %v10841
      %v10843 = vand.u32 %v10842, 4294901760
      %10844 = vmatprep.subr.mxu0 %v10843
      %v10845 = vand.u32 %v7609, 4294901760
      %v10846 = vsub.f32 %v7609, %v10845
      %v10847 = vand.u32 %v10846, 4294901760
      %10848 = vmatpush1.msra.mxu0 %v10847
      %v10849 = vand.u32 %v7615, 4294901760
      %v10850 = vsub.f32 %v7615, %v10849
      %v10851 = vand.u32 %v10850, 4294901760
      %10852 = vmatprep.subr.mxu0 %v10851
      %v10853 = vand.u32 %v7614, 4294901760
      %v10854 = vsub.f32 %v7614, %v10853
      %v10855 = vand.u32 %v10854, 4294901760
      %10856 = vmatpush1.msra.mxu0 %v10855
      %v10857 = vand.u32 %v7620, 4294901760
      %v10858 = vsub.f32 %v7620, %v10857
      %v10859 = vand.u32 %v10858, 4294901760
      %10860 = vmatprep.subr.mxu0 %v10859
      %v10861 = vand.u32 %v7619, 4294901760
      %v10862 = vsub.f32 %v7619, %v10861
      %v10863 = vand.u32 %v10862, 4294901760
      %10864 = vmatpush1.msra.mxu0 %v10863
      %v10865 = vand.u32 %v7625, 4294901760
      %v10866 = vsub.f32 %v7625, %v10865
      %v10867 = vand.u32 %v10866, 4294901760
      %10868 = vmatprep.subr.mxu0 %v10867
      %v10869 = vand.u32 %v7624, 4294901760
      %v10870 = vsub.f32 %v7624, %v10869
      %v10871 = vand.u32 %v10870, 4294901760
      %10872 = vmatpush1.msra.mxu0 %v10871
      %v10873 = vand.u32 %v7630, 4294901760
      %v10874 = vsub.f32 %v7630, %v10873
      %v10875 = vand.u32 %v10874, 4294901760
      %10876 = vmatprep.subr.mxu0 %v10875
      %v10877 = vand.u32 %v7629, 4294901760
      %v10878 = vsub.f32 %v7629, %v10877
      %v10879 = vand.u32 %v10878, 4294901760
      %10880 = vmatpush1.msra.mxu0 %v10879
      %v10881 = vand.u32 %v7635, 4294901760
      %v10882 = vsub.f32 %v7635, %v10881
      %v10883 = vand.u32 %v10882, 4294901760
      %10884 = vmatprep.subr.mxu0 %v10883
      %v10885 = vand.u32 %v7634, 4294901760
      %v10886 = vsub.f32 %v7634, %v10885
      %v10887 = vand.u32 %v10886, 4294901760
      %10888 = vmatpush1.msra.mxu0 %v10887
      %v10889 = vand.u32 %v7640, 4294901760
      %v10890 = vsub.f32 %v7640, %v10889
      %v10891 = vand.u32 %v10890, 4294901760
      %10892 = vmatprep.subr.mxu0 %v10891
      %v10893 = vand.u32 %v7639, 4294901760
      %v10894 = vsub.f32 %v7639, %v10893
      %v10895 = vand.u32 %v10894, 4294901760
      %10896 = vmatpush1.msra.mxu0 %v10895
      %v10897 = vand.u32 %v7645, 4294901760
      %v10898 = vsub.f32 %v7645, %v10897
      %v10899 = vand.u32 %v10898, 4294901760
      %10900 = vmatprep.subr.mxu0 %v10899
      %v10901 = vand.u32 %v7644, 4294901760
      %v10902 = vsub.f32 %v7644, %v10901
      %v10903 = vand.u32 %v10902, 4294901760
      %10904 = vmatpush1.msra.mxu0 %v10903
      %10905 = vmatprep.subr.mxu0 0.0
      %10906 = vmatpush1.msra.mxu0 0.0
      %10907 = vmatprep.subr.mxu0 0.0
      %10908 = vmatpush1.msra.mxu0 0.0
      %10909 = vmatprep.subr.mxu0 0.0
      %10910 = vmatpush1.msra.mxu0 0.0
      %10911 = vmatprep.subr.mxu0 0.0
      %10912 = vmatpush1.msra.mxu0 0.0
      %10913 = vmatprep.subr.mxu0 0.0
      %10914 = vmatpush1.msra.mxu0 0.0
      %10915 = vmatprep.subr.mxu0 0.0
      %10916 = vmatpush1.msra.mxu0 0.0
      %10917 = vmatprep.subr.mxu0 0.0
      %10918 = vmatpush1.msra.mxu0 0.0
      %10919 = vmatprep.subr.mxu0 0.0
      %10920 = vmatpush1.msra.mxu0 0.0
      %10921 = vmatprep.subr.mxu0 0.0
      %10922 = vmatpush1.msra.mxu0 0.0
      %10923 = vmatprep.subr.mxu0 0.0
      %10924 = vmatpush1.msra.mxu0 0.0
      %10925 = vmatprep.subr.mxu0 0.0
      %10926 = vmatpush1.msra.mxu0 0.0
      %10927 = vmatprep.subr.mxu0 0.0
      %10928 = vmatpush1.msra.mxu0 0.0
      %10929 = vmatprep.subr.mxu0 0.0
      %10930 = vmatpush1.msra.mxu0 0.0
      %10931 = vmatprep.subr.mxu0 0.0
      %10932 = vmatpush1.msra.mxu0 0.0
      %10933 = vmatprep.subr.mxu0 0.0
      %10934 = vmatpush1.msra.mxu0 0.0
      %10935 = vmatprep.subr.mxu0 0.0
      %10936 = vmatpush1.msra.mxu0 0.0
      %10937 = vmatprep.subr.mxu0 0.0
      %10938 = vmatpush1.msra.mxu0 0.0
      %10939 = vmatprep.subr.mxu0 0.0
      %10940 = vmatpush1.msra.mxu0 0.0
      %10941 = vmatprep.subr.mxu0 0.0
      %10942 = vmatpush1.msra.mxu0 0.0
      %10943 = vmatprep.subr.mxu0 0.0
      %10944 = vmatpush1.msra.mxu0 0.0
      %10945 = vmatprep.subr.mxu0 0.0
      %10946 = vmatpush1.msra.mxu0 0.0
      %10947 = vmatprep.subr.mxu0 0.0
      %10948 = vmatpush1.msra.mxu0 0.0
      %10949 = vmatprep.subr.mxu0 0.0
      %10950 = vmatpush1.msra.mxu0 0.0
      %10951 = vmatprep.subr.mxu0 0.0
      %10952 = vmatpush1.msra.mxu0 0.0
      %10953 = vmatprep.mubr.f32.mxu0 0.0
      %v10954 = vand.u32 %v9753, 4294901760
      %10955 = vmatmul.mubr.f32.gmra.mrb[0].mxu0 %v10954
      %v10956 = vpop.f32.mrb[0].mxu0
      %v10957 = vadd.f32 %v10837, %v10956
      %v10958 = vpop.f32.mrb[0].mxu0
      %v10959 = vadd.f32 %v10839, %v10958
      %10960 = vdwg.mxu0
      %v10961 = vand.u32 %v7610, 4294901760
      %10962 = vmatprep.subr.mxu0 %v10961
      %v10963 = vand.u32 %v7609, 4294901760
      %10964 = vmatpush1.msra.mxu0 %v10963
      %v10965 = vand.u32 %v7615, 4294901760
      %10966 = vmatprep.subr.mxu0 %v10965
      %v10967 = vand.u32 %v7614, 4294901760
      %10968 = vmatpush1.msra.mxu0 %v10967
      %v10969 = vand.u32 %v7620, 4294901760
      %10970 = vmatprep.subr.mxu0 %v10969
      %v10971 = vand.u32 %v7619, 4294901760
      %10972 = vmatpush1.msra.mxu0 %v10971
      %v10973 = vand.u32 %v7625, 4294901760
      %10974 = vmatprep.subr.mxu0 %v10973
      %v10975 = vand.u32 %v7624, 4294901760
      %10976 = vmatpush1.msra.mxu0 %v10975
      %v10977 = vand.u32 %v7630, 4294901760
      %10978 = vmatprep.subr.mxu0 %v10977
      %v10979 = vand.u32 %v7629, 4294901760
      %10980 = vmatpush1.msra.mxu0 %v10979
      %v10981 = vand.u32 %v7635, 4294901760
      %10982 = vmatprep.subr.mxu0 %v10981
      %v10983 = vand.u32 %v7634, 4294901760
      %10984 = vmatpush1.msra.mxu0 %v10983
      %v10985 = vand.u32 %v7640, 4294901760
      %10986 = vmatprep.subr.mxu0 %v10985
      %v10987 = vand.u32 %v7639, 4294901760
      %10988 = vmatpush1.msra.mxu0 %v10987
      %v10989 = vand.u32 %v7645, 4294901760
      %10990 = vmatprep.subr.mxu0 %v10989
      %v10991 = vand.u32 %v7644, 4294901760
      %10992 = vmatpush1.msra.mxu0 %v10991
      %10993 = vmatprep.subr.mxu0 0.0
      %10994 = vmatpush1.msra.mxu0 0.0
      %10995 = vmatprep.subr.mxu0 0.0
      %10996 = vmatpush1.msra.mxu0 0.0
      %10997 = vmatprep.subr.mxu0 0.0
      %10998 = vmatpush1.msra.mxu0 0.0
      %10999 = vmatprep.subr.mxu0 0.0
      %11000 = vmatpush1.msra.mxu0 0.0
      %11001 = vmatprep.subr.mxu0 0.0
      %11002 = vmatpush1.msra.mxu0 0.0
      %11003 = vmatprep.subr.mxu0 0.0
      %11004 = vmatpush1.msra.mxu0 0.0
      %11005 = vmatprep.subr.mxu0 0.0
      %11006 = vmatpush1.msra.mxu0 0.0
      %11007 = vmatprep.subr.mxu0 0.0
      %11008 = vmatpush1.msra.mxu0 0.0
      %11009 = vmatprep.subr.mxu0 0.0
      %11010 = vmatpush1.msra.mxu0 0.0
      %11011 = vmatprep.subr.mxu0 0.0
      %11012 = vmatpush1.msra.mxu0 0.0
      %11013 = vmatprep.subr.mxu0 0.0
      %11014 = vmatpush1.msra.mxu0 0.0
      %11015 = vmatprep.subr.mxu0 0.0
      %11016 = vmatpush1.msra.mxu0 0.0
      %11017 = vmatprep.subr.mxu0 0.0
      %11018 = vmatpush1.msra.mxu0 0.0
      %11019 = vmatprep.subr.mxu0 0.0
      %11020 = vmatpush1.msra.mxu0 0.0
      %11021 = vmatprep.subr.mxu0 0.0
      %11022 = vmatpush1.msra.mxu0 0.0
      %11023 = vmatprep.subr.mxu0 0.0
      %11024 = vmatpush1.msra.mxu0 0.0
      %11025 = vmatprep.subr.mxu0 0.0
      %11026 = vmatpush1.msra.mxu0 0.0
      %11027 = vmatprep.subr.mxu0 0.0
      %11028 = vmatpush1.msra.mxu0 0.0
      %11029 = vmatprep.subr.mxu0 0.0
      %11030 = vmatpush1.msra.mxu0 0.0
      %11031 = vmatprep.subr.mxu0 0.0
      %11032 = vmatpush1.msra.mxu0 0.0
      %11033 = vmatprep.subr.mxu0 0.0
      %11034 = vmatpush1.msra.mxu0 0.0
      %11035 = vmatprep.subr.mxu0 0.0
      %11036 = vmatpush1.msra.mxu0 0.0
      %11037 = vmatprep.subr.mxu0 0.0
      %11038 = vmatpush1.msra.mxu0 0.0
      %11039 = vmatprep.subr.mxu0 0.0
      %11040 = vmatpush1.msra.mxu0 0.0
      %11041 = vmatprep.mubr.f32.mxu0 0.0
      %v11042 = vand.u32 %v9753, 4294901760
      %11043 = vmatmul.mubr.f32.gmra.mrb[0].mxu0 %v11042
      %v11044 = vpop.f32.mrb[0].mxu0
      %v11045 = vadd.f32 %v10957, %v11044
      %v11046 = vpop.f32.mrb[0].mxu0
      %v11047 = vadd.f32 %v10959, %v11046
      %11048 = vdwg.mxu0
      %11049 = vmatprep.subr.mxu0 0.0
      %v11050 = vand.u32 %v7611, 4294901760
      %11051 = vmatpush1.msra.mxu0 %v11050
      %11052 = vmatprep.subr.mxu0 0.0
      %v11053 = vand.u32 %v7616, 4294901760
      %11054 = vmatpush1.msra.mxu0 %v11053
      %11055 = vmatprep.subr.mxu0 0.0
      %v11056 = vand.u32 %v7621, 4294901760
      %11057 = vmatpush1.msra.mxu0 %v11056
      %11058 = vmatprep.subr.mxu0 0.0
      %v11059 = vand.u32 %v7626, 4294901760
      %11060 = vmatpush1.msra.mxu0 %v11059
      %11061 = vmatprep.subr.mxu0 0.0
      %v11062 = vand.u32 %v7631, 4294901760
      %11063 = vmatpush1.msra.mxu0 %v11062
      %11064 = vmatprep.subr.mxu0 0.0
      %v11065 = vand.u32 %v7636, 4294901760
      %11066 = vmatpush1.msra.mxu0 %v11065
      %11067 = vmatprep.subr.mxu0 0.0
      %v11068 = vand.u32 %v7641, 4294901760
      %11069 = vmatpush1.msra.mxu0 %v11068
      %11070 = vmatprep.subr.mxu0 0.0
      %v11071 = vand.u32 %v7646, 4294901760
      %11072 = vmatpush1.msra.mxu0 %v11071
      %11073 = vmatprep.subr.mxu0 0.0
      %11074 = vmatpush1.msra.mxu0 0.0
      %11075 = vmatprep.subr.mxu0 0.0
      %11076 = vmatpush1.msra.mxu0 0.0
      %11077 = vmatprep.subr.mxu0 0.0
      %11078 = vmatpush1.msra.mxu0 0.0
      %11079 = vmatprep.subr.mxu0 0.0
      %11080 = vmatpush1.msra.mxu0 0.0
      %11081 = vmatprep.subr.mxu0 0.0
      %11082 = vmatpush1.msra.mxu0 0.0
      %11083 = vmatprep.subr.mxu0 0.0
      %11084 = vmatpush1.msra.mxu0 0.0
      %11085 = vmatprep.subr.mxu0 0.0
      %11086 = vmatpush1.msra.mxu0 0.0
      %11087 = vmatprep.subr.mxu0 0.0
      %11088 = vmatpush1.msra.mxu0 0.0
      %11089 = vmatprep.subr.mxu0 0.0
      %11090 = vmatpush1.msra.mxu0 0.0
      %11091 = vmatprep.subr.mxu0 0.0
      %11092 = vmatpush1.msra.mxu0 0.0
      %11093 = vmatprep.subr.mxu0 0.0
      %11094 = vmatpush1.msra.mxu0 0.0
      %11095 = vmatprep.subr.mxu0 0.0
      %11096 = vmatpush1.msra.mxu0 0.0
      %11097 = vmatprep.subr.mxu0 0.0
      %11098 = vmatpush1.msra.mxu0 0.0
      %11099 = vmatprep.subr.mxu0 0.0
      %11100 = vmatpush1.msra.mxu0 0.0
      %11101 = vmatprep.subr.mxu0 0.0
      %11102 = vmatpush1.msra.mxu0 0.0
      %11103 = vmatprep.subr.mxu0 0.0
      %11104 = vmatpush1.msra.mxu0 0.0
      %11105 = vmatprep.subr.mxu0 0.0
      %11106 = vmatpush1.msra.mxu0 0.0
      %11107 = vmatprep.subr.mxu0 0.0
      %11108 = vmatpush1.msra.mxu0 0.0
      %11109 = vmatprep.subr.mxu0 0.0
      %11110 = vmatpush1.msra.mxu0 0.0
      %11111 = vmatprep.subr.mxu0 0.0
      %11112 = vmatpush1.msra.mxu0 0.0
      %11113 = vmatprep.subr.mxu0 0.0
      %11114 = vmatpush1.msra.mxu0 0.0
      %11115 = vmatprep.subr.mxu0 0.0
      %11116 = vmatpush1.msra.mxu0 0.0
      %11117 = vmatprep.subr.mxu0 0.0
      %11118 = vmatpush1.msra.mxu0 0.0
      %11119 = vmatprep.subr.mxu0 0.0
      %11120 = vmatpush1.msra.mxu0 0.0
      %11121 = vmatprep.mubr.f32.mxu0 0.0
      %v11122 = vand.u32 %v9753, 4294901760
      %v11123 = vsub.f32 %v9753, %v11122
      %v11124 = vand.u32 %v11123, 4294901760
      %v11125 = vsub.f32 %v11123, %v11124
      %v11126 = vand.u32 %v11125, 4294901760
      %11127 = vmatmul.mubr.f32.gmra.mrb[0].mxu0 %v11126
      %v11128 = vpop.f32.mrb[0].mxu0
      %v11129 = vadd.f32 %v9750, %v11128
      %v11130 = vpop.f32.mrb[0].mxu0
      %11131 = vdwg.mxu0
      %11132 = vmatprep.subr.mxu0 0.0
      %v11133 = vand.u32 %v7611, 4294901760
      %v11134 = vsub.f32 %v7611, %v11133
      %v11135 = vand.u32 %v11134, 4294901760
      %v11136 = vsub.f32 %v11134, %v11135
      %v11137 = vand.u32 %v11136, 4294901760
      %11138 = vmatpush1.msra.mxu0 %v11137
      %11139 = vmatprep.subr.mxu0 0.0
      %v11140 = vand.u32 %v7616, 4294901760
      %v11141 = vsub.f32 %v7616, %v11140
      %v11142 = vand.u32 %v11141, 4294901760
      %v11143 = vsub.f32 %v11141, %v11142
      %v11144 = vand.u32 %v11143, 4294901760
      %11145 = vmatpush1.msra.mxu0 %v11144
      %11146 = vmatprep.subr.mxu0 0.0
      %v11147 = vand.u32 %v7621, 4294901760
      %v11148 = vsub.f32 %v7621, %v11147
      %v11149 = vand.u32 %v11148, 4294901760
      %v11150 = vsub.f32 %v11148, %v11149
      %v11151 = vand.u32 %v11150, 4294901760
      %11152 = vmatpush1.msra.mxu0 %v11151
      %11153 = vmatprep.subr.mxu0 0.0
      %v11154 = vand.u32 %v7626, 4294901760
      %v11155 = vsub.f32 %v7626, %v11154
      %v11156 = vand.u32 %v11155, 4294901760
      %v11157 = vsub.f32 %v11155, %v11156
      %v11158 = vand.u32 %v11157, 4294901760
      %11159 = vmatpush1.msra.mxu0 %v11158
      %11160 = vmatprep.subr.mxu0 0.0
      %v11161 = vand.u32 %v7631, 4294901760
      %v11162 = vsub.f32 %v7631, %v11161
      %v11163 = vand.u32 %v11162, 4294901760
      %v11164 = vsub.f32 %v11162, %v11163
      %v11165 = vand.u32 %v11164, 4294901760
      %11166 = vmatpush1.msra.mxu0 %v11165
      %11167 = vmatprep.subr.mxu0 0.0
      %v11168 = vand.u32 %v7636, 4294901760
      %v11169 = vsub.f32 %v7636, %v11168
      %v11170 = vand.u32 %v11169, 4294901760
      %v11171 = vsub.f32 %v11169, %v11170
      %v11172 = vand.u32 %v11171, 4294901760
      %11173 = vmatpush1.msra.mxu0 %v11172
      %11174 = vmatprep.subr.mxu0 0.0
      %v11175 = vand.u32 %v7641, 4294901760
      %v11176 = vsub.f32 %v7641, %v11175
      %v11177 = vand.u32 %v11176, 4294901760
      %v11178 = vsub.f32 %v11176, %v11177
      %v11179 = vand.u32 %v11178, 4294901760
      %11180 = vmatpush1.msra.mxu0 %v11179
      %11181 = vmatprep.subr.mxu0 0.0
      %v11182 = vand.u32 %v7646, 4294901760
      %v11183 = vsub.f32 %v7646, %v11182
      %v11184 = vand.u32 %v11183, 4294901760
      %v11185 = vsub.f32 %v11183, %v11184
      %v11186 = vand.u32 %v11185, 4294901760
      %11187 = vmatpush1.msra.mxu0 %v11186
      %11188 = vmatprep.subr.mxu0 0.0
      %11189 = vmatpush1.msra.mxu0 0.0
      %11190 = vmatprep.subr.mxu0 0.0
      %11191 = vmatpush1.msra.mxu0 0.0
      %11192 = vmatprep.subr.mxu0 0.0
      %11193 = vmatpush1.msra.mxu0 0.0
      %11194 = vmatprep.subr.mxu0 0.0
      %11195 = vmatpush1.msra.mxu0 0.0
      %11196 = vmatprep.subr.mxu0 0.0
      %11197 = vmatpush1.msra.mxu0 0.0
      %11198 = vmatprep.subr.mxu0 0.0
      %11199 = vmatpush1.msra.mxu0 0.0
      %11200 = vmatprep.subr.mxu0 0.0
      %11201 = vmatpush1.msra.mxu0 0.0
      %11202 = vmatprep.subr.mxu0 0.0
      %11203 = vmatpush1.msra.mxu0 0.0
      %11204 = vmatprep.subr.mxu0 0.0
      %11205 = vmatpush1.msra.mxu0 0.0
      %11206 = vmatprep.subr.mxu0 0.0
      %11207 = vmatpush1.msra.mxu0 0.0
      %11208 = vmatprep.subr.mxu0 0.0
      %11209 = vmatpush1.msra.mxu0 0.0
      %11210 = vmatprep.subr.mxu0 0.0
      %11211 = vmatpush1.msra.mxu0 0.0
      %11212 = vmatprep.subr.mxu0 0.0
      %11213 = vmatpush1.msra.mxu0 0.0
      %11214 = vmatprep.subr.mxu0 0.0
      %11215 = vmatpush1.msra.mxu0 0.0
      %11216 = vmatprep.subr.mxu0 0.0
      %11217 = vmatpush1.msra.mxu0 0.0
      %11218 = vmatprep.subr.mxu0 0.0
      %11219 = vmatpush1.msra.mxu0 0.0
      %11220 = vmatprep.subr.mxu0 0.0
      %11221 = vmatpush1.msra.mxu0 0.0
      %11222 = vmatprep.subr.mxu0 0.0
      %11223 = vmatpush1.msra.mxu0 0.0
      %11224 = vmatprep.subr.mxu0 0.0
      %11225 = vmatpush1.msra.mxu0 0.0
      %11226 = vmatprep.subr.mxu0 0.0
      %11227 = vmatpush1.msra.mxu0 0.0
      %11228 = vmatprep.subr.mxu0 0.0
      %11229 = vmatpush1.msra.mxu0 0.0
      %11230 = vmatprep.subr.mxu0 0.0
      %11231 = vmatpush1.msra.mxu0 0.0
      %11232 = vmatprep.subr.mxu0 0.0
      %11233 = vmatpush1.msra.mxu0 0.0
      %11234 = vmatprep.subr.mxu0 0.0
      %11235 = vmatpush1.msra.mxu0 0.0
      %11236 = vmatprep.mubr.f32.mxu0 0.0
      %v11237 = vand.u32 %v9753, 4294901760
      %11238 = vmatmul.mubr.f32.gmra.mrb[0].mxu0 %v11237
      %v11239 = vpop.f32.mrb[0].mxu0
      %v11240 = vadd.f32 %v11129, %v11239
      %v11241 = vpop.f32.mrb[0].mxu0
      %11242 = vdwg.mxu0
      %11243 = vmatprep.subr.mxu0 0.0
      %v11244 = vand.u32 %v7611, 4294901760
      %v11245 = vsub.f32 %v7611, %v11244
      %11246 = vmatpush1.msra.mxu0 %v11245
      %11247 = vmatprep.subr.mxu0 0.0
      %v11248 = vand.u32 %v7616, 4294901760
      %v11249 = vsub.f32 %v7616, %v11248
      %11250 = vmatpush1.msra.mxu0 %v11249
      %11251 = vmatprep.subr.mxu0 0.0
      %v11252 = vand.u32 %v7621, 4294901760
      %v11253 = vsub.f32 %v7621, %v11252
      %11254 = vmatpush1.msra.mxu0 %v11253
      %11255 = vmatprep.subr.mxu0 0.0
      %v11256 = vand.u32 %v7626, 4294901760
      %v11257 = vsub.f32 %v7626, %v11256
      %11258 = vmatpush1.msra.mxu0 %v11257
      %11259 = vmatprep.subr.mxu0 0.0
      %v11260 = vand.u32 %v7631, 4294901760
      %v11261 = vsub.f32 %v7631, %v11260
      %11262 = vmatpush1.msra.mxu0 %v11261
      %11263 = vmatprep.subr.mxu0 0.0
      %v11264 = vand.u32 %v7636, 4294901760
      %v11265 = vsub.f32 %v7636, %v11264
      %11266 = vmatpush1.msra.mxu0 %v11265
      %11267 = vmatprep.subr.mxu0 0.0
      %v11268 = vand.u32 %v7641, 4294901760
      %v11269 = vsub.f32 %v7641, %v11268
      %11270 = vmatpush1.msra.mxu0 %v11269
      %11271 = vmatprep.subr.mxu0 0.0
      %v11272 = vand.u32 %v7646, 4294901760
      %v11273 = vsub.f32 %v7646, %v11272
      %11274 = vmatpush1.msra.mxu0 %v11273
      %11275 = vmatprep.subr.mxu0 0.0
      %11276 = vmatpush1.msra.mxu0 0.0
      %11277 = vmatprep.subr.mxu0 0.0
      %11278 = vmatpush1.msra.mxu0 0.0
      %11279 = vmatprep.subr.mxu0 0.0
      %11280 = vmatpush1.msra.mxu0 0.0
      %11281 = vmatprep.subr.mxu0 0.0
      %11282 = vmatpush1.msra.mxu0 0.0
      %11283 = vmatprep.subr.mxu0 0.0
      %11284 = vmatpush1.msra.mxu0 0.0
      %11285 = vmatprep.subr.mxu0 0.0
      %11286 = vmatpush1.msra.mxu0 0.0
      %11287 = vmatprep.subr.mxu0 0.0
      %11288 = vmatpush1.msra.mxu0 0.0
      %11289 = vmatprep.subr.mxu0 0.0
      %11290 = vmatpush1.msra.mxu0 0.0
      %11291 = vmatprep.subr.mxu0 0.0
      %11292 = vmatpush1.msra.mxu0 0.0
      %11293 = vmatprep.subr.mxu0 0.0
      %11294 = vmatpush1.msra.mxu0 0.0
      %11295 = vmatprep.subr.mxu0 0.0
      %11296 = vmatpush1.msra.mxu0 0.0
      %11297 = vmatprep.subr.mxu0 0.0
      %11298 = vmatpush1.msra.mxu0 0.0
      %11299 = vmatprep.subr.mxu0 0.0
      %11300 = vmatpush1.msra.mxu0 0.0
      %11301 = vmatprep.subr.mxu0 0.0
      %11302 = vmatpush1.msra.mxu0 0.0
      %11303 = vmatprep.subr.mxu0 0.0
      %11304 = vmatpush1.msra.mxu0 0.0
      %11305 = vmatprep.subr.mxu0 0.0
      %11306 = vmatpush1.msra.mxu0 0.0
      %11307 = vmatprep.subr.mxu0 0.0
      %11308 = vmatpush1.msra.mxu0 0.0
      %11309 = vmatprep.subr.mxu0 0.0
      %11310 = vmatpush1.msra.mxu0 0.0
      %11311 = vmatprep.subr.mxu0 0.0
      %11312 = vmatpush1.msra.mxu0 0.0
      %11313 = vmatprep.subr.mxu0 0.0
      %11314 = vmatpush1.msra.mxu0 0.0
      %11315 = vmatprep.subr.mxu0 0.0
      %11316 = vmatpush1.msra.mxu0 0.0
      %11317 = vmatprep.subr.mxu0 0.0
      %11318 = vmatpush1.msra.mxu0 0.0
      %11319 = vmatprep.subr.mxu0 0.0
      %11320 = vmatpush1.msra.mxu0 0.0
      %11321 = vmatprep.subr.mxu0 0.0
      %11322 = vmatpush1.msra.mxu0 0.0
      %11323 = vmatprep.mubr.f32.mxu0 0.0
      %v11324 = vand.u32 %v9753, 4294901760
      %v11325 = vsub.f32 %v9753, %v11324
      %11326 = vmatmul.mubr.f32.gmra.mrb[0].mxu0 %v11325
      %v11327 = vpop.f32.mrb[0].mxu0
      %v11328 = vadd.f32 %v11240, %v11327
      %v11329 = vpop.f32.mrb[0].mxu0
      %11330 = vdwg.mxu0
      %11331 = vmatprep.subr.mxu0 0.0
      %v11332 = vand.u32 %v7611, 4294901760
      %11333 = vmatpush1.msra.mxu0 %v11332
      %11334 = vmatprep.subr.mxu0 0.0
      %v11335 = vand.u32 %v7616, 4294901760
      %11336 = vmatpush1.msra.mxu0 %v11335
      %11337 = vmatprep.subr.mxu0 0.0
      %v11338 = vand.u32 %v7621, 4294901760
      %11339 = vmatpush1.msra.mxu0 %v11338
      %11340 = vmatprep.subr.mxu0 0.0
      %v11341 = vand.u32 %v7626, 4294901760
      %11342 = vmatpush1.msra.mxu0 %v11341
      %11343 = vmatprep.subr.mxu0 0.0
      %v11344 = vand.u32 %v7631, 4294901760
      %11345 = vmatpush1.msra.mxu0 %v11344
      %11346 = vmatprep.subr.mxu0 0.0
      %v11347 = vand.u32 %v7636, 4294901760
      %11348 = vmatpush1.msra.mxu0 %v11347
      %11349 = vmatprep.subr.mxu0 0.0
      %v11350 = vand.u32 %v7641, 4294901760
      %11351 = vmatpush1.msra.mxu0 %v11350
      %11352 = vmatprep.subr.mxu0 0.0
      %v11353 = vand.u32 %v7646, 4294901760
      %11354 = vmatpush1.msra.mxu0 %v11353
      %11355 = vmatprep.subr.mxu0 0.0
      %11356 = vmatpush1.msra.mxu0 0.0
      %11357 = vmatprep.subr.mxu0 0.0
      %11358 = vmatpush1.msra.mxu0 0.0
      %11359 = vmatprep.subr.mxu0 0.0
      %11360 = vmatpush1.msra.mxu0 0.0
      %11361 = vmatprep.subr.mxu0 0.0
      %11362 = vmatpush1.msra.mxu0 0.0
      %11363 = vmatprep.subr.mxu0 0.0
      %11364 = vmatpush1.msra.mxu0 0.0
      %11365 = vmatprep.subr.mxu0 0.0
      %11366 = vmatpush1.msra.mxu0 0.0
      %11367 = vmatprep.subr.mxu0 0.0
      %11368 = vmatpush1.msra.mxu0 0.0
      %11369 = vmatprep.subr.mxu0 0.0
      %11370 = vmatpush1.msra.mxu0 0.0
      %11371 = vmatprep.subr.mxu0 0.0
      %11372 = vmatpush1.msra.mxu0 0.0
      %11373 = vmatprep.subr.mxu0 0.0
      %11374 = vmatpush1.msra.mxu0 0.0
      %11375 = vmatprep.subr.mxu0 0.0
      %11376 = vmatpush1.msra.mxu0 0.0
      %11377 = vmatprep.subr.mxu0 0.0
      %11378 = vmatpush1.msra.mxu0 0.0
      %11379 = vmatprep.subr.mxu0 0.0
      %11380 = vmatpush1.msra.mxu0 0.0
      %11381 = vmatprep.subr.mxu0 0.0
      %11382 = vmatpush1.msra.mxu0 0.0
      %11383 = vmatprep.subr.mxu0 0.0
      %11384 = vmatpush1.msra.mxu0 0.0
      %11385 = vmatprep.subr.mxu0 0.0
      %11386 = vmatpush1.msra.mxu0 0.0
      %11387 = vmatprep.subr.mxu0 0.0
      %11388 = vmatpush1.msra.mxu0 0.0
      %11389 = vmatprep.subr.mxu0 0.0
      %11390 = vmatpush1.msra.mxu0 0.0
      %11391 = vmatprep.subr.mxu0 0.0
      %11392 = vmatpush1.msra.mxu0 0.0
      %11393 = vmatprep.subr.mxu0 0.0
      %11394 = vmatpush1.msra.mxu0 0.0
      %11395 = vmatprep.subr.mxu0 0.0
      %11396 = vmatpush1.msra.mxu0 0.0
      %11397 = vmatprep.subr.mxu0 0.0
      %11398 = vmatpush1.msra.mxu0 0.0
      %11399 = vmatprep.subr.mxu0 0.0
      %11400 = vmatpush1.msra.mxu0 0.0
      %11401 = vmatprep.subr.mxu0 0.0
      %11402 = vmatpush1.msra.mxu0 0.0
      %11403 = vmatprep.mubr.f32.mxu0 0.0
      %v11404 = vand.u32 %v9753, 4294901760
      %v11405 = vsub.f32 %v9753, %v11404
      %v11406 = vand.u32 %v11405, 4294901760
      %11407 = vmatmul.mubr.f32.gmra.mrb[0].mxu0 %v11406
      %v11408 = vpop.f32.mrb[0].mxu0
      %v11409 = vadd.f32 %v11328, %v11408
      %v11410 = vpop.f32.mrb[0].mxu0
      %11411 = vdwg.mxu0
      %11412 = vmatprep.subr.mxu0 0.0
      %v11413 = vand.u32 %v7611, 4294901760
      %v11414 = vsub.f32 %v7611, %v11413
      %v11415 = vand.u32 %v11414, 4294901760
      %11416 = vmatpush1.msra.mxu0 %v11415
      %11417 = vmatprep.subr.mxu0 0.0
      %v11418 = vand.u32 %v7616, 4294901760
      %v11419 = vsub.f32 %v7616, %v11418
      %v11420 = vand.u32 %v11419, 4294901760
      %11421 = vmatpush1.msra.mxu0 %v11420
      %11422 = vmatprep.subr.mxu0 0.0
      %v11423 = vand.u32 %v7621, 4294901760
      %v11424 = vsub.f32 %v7621, %v11423
      %v11425 = vand.u32 %v11424, 4294901760
      %11426 = vmatpush1.msra.mxu0 %v11425
      %11427 = vmatprep.subr.mxu0 0.0
      %v11428 = vand.u32 %v7626, 4294901760
      %v11429 = vsub.f32 %v7626, %v11428
      %v11430 = vand.u32 %v11429, 4294901760
      %11431 = vmatpush1.msra.mxu0 %v11430
      %11432 = vmatprep.subr.mxu0 0.0
      %v11433 = vand.u32 %v7631, 4294901760
      %v11434 = vsub.f32 %v7631, %v11433
      %v11435 = vand.u32 %v11434, 4294901760
      %11436 = vmatpush1.msra.mxu0 %v11435
      %11437 = vmatprep.subr.mxu0 0.0
      %v11438 = vand.u32 %v7636, 4294901760
      %v11439 = vsub.f32 %v7636, %v11438
      %v11440 = vand.u32 %v11439, 4294901760
      %11441 = vmatpush1.msra.mxu0 %v11440
      %11442 = vmatprep.subr.mxu0 0.0
      %v11443 = vand.u32 %v7641, 4294901760
      %v11444 = vsub.f32 %v7641, %v11443
      %v11445 = vand.u32 %v11444, 4294901760
      %11446 = vmatpush1.msra.mxu0 %v11445
      %11447 = vmatprep.subr.mxu0 0.0
      %v11448 = vand.u32 %v7646, 4294901760
      %v11449 = vsub.f32 %v7646, %v11448
      %v11450 = vand.u32 %v11449, 4294901760
      %11451 = vmatpush1.msra.mxu0 %v11450
      %11452 = vmatprep.subr.mxu0 0.0
      %11453 = vmatpush1.msra.mxu0 0.0
      %11454 = vmatprep.subr.mxu0 0.0
      %11455 = vmatpush1.msra.mxu0 0.0
      %11456 = vmatprep.subr.mxu0 0.0
      %11457 = vmatpush1.msra.mxu0 0.0
      %11458 = vmatprep.subr.mxu0 0.0
      %11459 = vmatpush1.msra.mxu0 0.0
      %11460 = vmatprep.subr.mxu0 0.0
      %11461 = vmatpush1.msra.mxu0 0.0
      %11462 = vmatprep.subr.mxu0 0.0
      %11463 = vmatpush1.msra.mxu0 0.0
      %11464 = vmatprep.subr.mxu0 0.0
      %11465 = vmatpush1.msra.mxu0 0.0
      %11466 = vmatprep.subr.mxu0 0.0
      %11467 = vmatpush1.msra.mxu0 0.0
      %11468 = vmatprep.subr.mxu0 0.0
      %11469 = vmatpush1.msra.mxu0 0.0
      %11470 = vmatprep.subr.mxu0 0.0
      %11471 = vmatpush1.msra.mxu0 0.0
      %11472 = vmatprep.subr.mxu0 0.0
      %11473 = vmatpush1.msra.mxu0 0.0
      %11474 = vmatprep.subr.mxu0 0.0
      %11475 = vmatpush1.msra.mxu0 0.0
      %11476 = vmatprep.subr.mxu0 0.0
      %11477 = vmatpush1.msra.mxu0 0.0
      %11478 = vmatprep.subr.mxu0 0.0
      %11479 = vmatpush1.msra.mxu0 0.0
      %11480 = vmatprep.subr.mxu0 0.0
      %11481 = vmatpush1.msra.mxu0 0.0
      %11482 = vmatprep.subr.mxu0 0.0
      %11483 = vmatpush1.msra.mxu0 0.0
      %11484 = vmatprep.subr.mxu0 0.0
      %11485 = vmatpush1.msra.mxu0 0.0
      %11486 = vmatprep.subr.mxu0 0.0
      %11487 = vmatpush1.msra.mxu0 0.0
      %11488 = vmatprep.subr.mxu0 0.0
      %11489 = vmatpush1.msra.mxu0 0.0
      %11490 = vmatprep.subr.mxu0 0.0
      %11491 = vmatpush1.msra.mxu0 0.0
      %11492 = vmatprep.subr.mxu0 0.0
      %11493 = vmatpush1.msra.mxu0 0.0
      %11494 = vmatprep.subr.mxu0 0.0
      %11495 = vmatpush1.msra.mxu0 0.0
      %11496 = vmatprep.subr.mxu0 0.0
      %11497 = vmatpush1.msra.mxu0 0.0
      %11498 = vmatprep.subr.mxu0 0.0
      %11499 = vmatpush1.msra.mxu0 0.0
      %11500 = vmatprep.mubr.f32.mxu0 0.0
      %v11501 = vand.u32 %v9753, 4294901760
      %11502 = vmatmul.mubr.f32.gmra.mrb[0].mxu0 %v11501
      %v11503 = vpop.f32.mrb[0].mxu0
      %v11504 = vadd.f32 %v11409, %v11503
      %v11505 = vpop.f32.mrb[0].mxu0
      %11506 = vdwg.mxu0
      %11507 = vmatprep.subr.mxu0 0.0
      %v11508 = vand.u32 %v7611, 4294901760
      %11509 = vmatpush1.msra.mxu0 %v11508
      %11510 = vmatprep.subr.mxu0 0.0
      %v11511 = vand.u32 %v7616, 4294901760
      %11512 = vmatpush1.msra.mxu0 %v11511
      %11513 = vmatprep.subr.mxu0 0.0
      %v11514 = vand.u32 %v7621, 4294901760
      %11515 = vmatpush1.msra.mxu0 %v11514
      %11516 = vmatprep.subr.mxu0 0.0
      %v11517 = vand.u32 %v7626, 4294901760
      %11518 = vmatpush1.msra.mxu0 %v11517
      %11519 = vmatprep.subr.mxu0 0.0
      %v11520 = vand.u32 %v7631, 4294901760
      %11521 = vmatpush1.msra.mxu0 %v11520
      %11522 = vmatprep.subr.mxu0 0.0
      %v11523 = vand.u32 %v7636, 4294901760
      %11524 = vmatpush1.msra.mxu0 %v11523
      %11525 = vmatprep.subr.mxu0 0.0
      %v11526 = vand.u32 %v7641, 4294901760
      %11527 = vmatpush1.msra.mxu0 %v11526
      %11528 = vmatprep.subr.mxu0 0.0
      %v11529 = vand.u32 %v7646, 4294901760
      %11530 = vmatpush1.msra.mxu0 %v11529
      %11531 = vmatprep.subr.mxu0 0.0
      %11532 = vmatpush1.msra.mxu0 0.0
      %11533 = vmatprep.subr.mxu0 0.0
      %11534 = vmatpush1.msra.mxu0 0.0
      %11535 = vmatprep.subr.mxu0 0.0
      %11536 = vmatpush1.msra.mxu0 0.0
      %11537 = vmatprep.subr.mxu0 0.0
      %11538 = vmatpush1.msra.mxu0 0.0
      %11539 = vmatprep.subr.mxu0 0.0
      %11540 = vmatpush1.msra.mxu0 0.0
      %11541 = vmatprep.subr.mxu0 0.0
      %11542 = vmatpush1.msra.mxu0 0.0
      %11543 = vmatprep.subr.mxu0 0.0
      %11544 = vmatpush1.msra.mxu0 0.0
      %11545 = vmatprep.subr.mxu0 0.0
      %11546 = vmatpush1.msra.mxu0 0.0
      %11547 = vmatprep.subr.mxu0 0.0
      %11548 = vmatpush1.msra.mxu0 0.0
      %11549 = vmatprep.subr.mxu0 0.0
      %11550 = vmatpush1.msra.mxu0 0.0
      %11551 = vmatprep.subr.mxu0 0.0
      %11552 = vmatpush1.msra.mxu0 0.0
      %11553 = vmatprep.subr.mxu0 0.0
      %11554 = vmatpush1.msra.mxu0 0.0
      %11555 = vmatprep.subr.mxu0 0.0
      %11556 = vmatpush1.msra.mxu0 0.0
      %11557 = vmatprep.subr.mxu0 0.0
      %11558 = vmatpush1.msra.mxu0 0.0
      %11559 = vmatprep.subr.mxu0 0.0
      %11560 = vmatpush1.msra.mxu0 0.0
      %11561 = vmatprep.subr.mxu0 0.0
      %11562 = vmatpush1.msra.mxu0 0.0
      %11563 = vmatprep.subr.mxu0 0.0
      %11564 = vmatpush1.msra.mxu0 0.0
      %11565 = vmatprep.subr.mxu0 0.0
      %11566 = vmatpush1.msra.mxu0 0.0
      %11567 = vmatprep.subr.mxu0 0.0
      %11568 = vmatpush1.msra.mxu0 0.0
      %11569 = vmatprep.subr.mxu0 0.0
      %11570 = vmatpush1.msra.mxu0 0.0
      %11571 = vmatprep.subr.mxu0 0.0
      %11572 = vmatpush1.msra.mxu0 0.0
      %11573 = vmatprep.subr.mxu0 0.0
      %11574 = vmatpush1.msra.mxu0 0.0
      %11575 = vmatprep.subr.mxu0 0.0
      %11576 = vmatpush1.msra.mxu0 0.0
      %11577 = vmatprep.subr.mxu0 0.0
      %11578 = vmatpush1.msra.mxu0 0.0
      %11579 = vmatprep.mubr.f32.mxu0 0.0
      %v11580 = vand.u32 %v9753, 4294901760
      %11581 = vmatmul.mubr.f32.gmra.mrb[0].mxu0 %v11580
      %v11582 = vpop.f32.mrb[0].mxu0
      %v11583 = vadd.f32 %v11504, %v11582
      %v11584 = vpop.f32.mrb[0].mxu0
      %11585 = vdwg.mxu0
      %v11586 = vmul.f32 %v10398, %v7912
      %v11587 = vmul.f32 %v10400, %v7913
      %v11588 = vmul.f32 %v11045, %v7914
      %v11589 = vmul.f32 %v11047, %v7915
      %v11590 = vmul.f32 %v11583, %v7916
      %s11591 = sld [smem:[#allocation2]]
      %v11592 = vstv %s11591
      %v11593 = vadd.f32 %v11586, %v11592
      %v11594 = vadd.f32 %v11587, %v11592
      %v11595 = vadd.f32 %v11588, %v11592
      %v11596 = vadd.f32 %v11589, %v11592
      %v11597 = vadd.f32 %v11590, %v11592
      %v11603 = vcombine.low %v11593, %v11594
      %v11604 = vcombine.low %v11595, %v11596
      %v11606 = vunpack.c.l.s4 1966171168
      %v11607 = vunpack.c.0.s8 %v11606
      %v11608 = vlaneseq
      %v11609 = vshrl.u32 %v11608, 7
      %v11610 = vsub.s32 %v11607, %v11609
      %v11611 = vrot.slane %v11603, %v11610
      %v11613 = vunpack.c.l.s4 1966171168
      %v11614 = vunpack.c.0.s8 %v11613
      %v11615 = vlaneseq
      %v11616 = vshrl.u32 %v11615, 7
      %v11617 = vsub.s32 %v11614, %v11616
      %v11618 = vrot.slane %v11604, %v11617
      %v11620 = vunpack.c.l.s4 1966171168
      %v11621 = vunpack.c.0.s8 %v11620
      %v11622 = vlaneseq
      %v11623 = vshrl.u32 %v11622, 7
      %v11624 = vsub.s32 %v11621, %v11623
      %v11625 = vrot.slane %v11597, %v11624
      %v11626 = vcombine.low %v11611, %v11618
      %v11628 = vunpack.c.l.s4 1966171168
      %v11629 = vunpack.c.0.s8 %v11628
      %v11630 = vlaneseq
      %v11631 = vshrl.u32 %v11630, 7
      %v11632 = vsub.s32 %v11629, %v11631
      %v11633 = vrot.slane %v11626, %v11632
      %v11635 = vunpack.c.l.s4 1966171168
      %v11636 = vunpack.c.0.s8 %v11635
      %v11637 = vlaneseq
      %v11638 = vshrl.u32 %v11637, 7
      %v11639 = vsub.s32 %v11636, %v11638
      %v11640 = vrot.slane %v11625, %v11639
      %v11641 = vcombine.low %v11633, %v11640
      %v11643 = vlaneseq
      %vm11644 = vcmp.ge.s32.totalorder %v11643, 0
      %vm11645 = vcmp.lt.s32.totalorder %v11643, 640
      %vm11646 = vmand %vm11644, %vm11645
      %11647 = vst.msk [vmem:[%s241] sm:$0x1f] %vm11646, %v11641
      %s11648 = smul.u32 5, %s17
      %p11649 = scmp.lt.s32.totalorder %s11648, 9
      %s11650 = scalar_select %p11649, %s11648, 9
      %s11651 = scalar_lea.vmem %s5, %s11650
      // Predicated region
      $region41: #{linear_predictor.1} parent=39 // pred_check
        %p11652 = pneg %p150
      $region42: #{linear_predictor.1} parent=39 // pred_check_branch
        %11654 = sbr.rel (%p11652) target = $region44
      $region43: #{linear_predictor.1} parent=39 // pred_region
        %s11655 = smul.u32 5, %s17
      $region44: #{linear_predictor.1} parent=39 // pred_fallthru
        _
    $region40: #{linear_predictor.1} parent=5 // pred_fallthru
      _
    %p11656 = scmp.le.s32.totalorder 2, %s12
    // Predicated region
    $region45: #{linear_predictor.1} parent=5 // pred_check
      %p11657 = pneg %p11656
    $region46: #{linear_predictor.1} parent=5 // pred_check_branch
      %11659 = sbr.rel (%p11657) target = $region48
    $region47: #{linear_predictor.1} parent=5 // pred_region
      %s11660 = ssub.s32 %s12, 2
      // Predicated region
      $region49: #{linear_predictor.1} parent=47 // pred_check
        %p11661 = pneg %p156
      $region50: #{linear_predictor.1} parent=47 // pred_check_branch
        %11663 = sbr.rel (%p11661) target = $region52
      $region51: #{linear_predictor.1} parent=47 // pred_region
        %s11664 = smul.u32 5, %s18
        %p11665 = scmp.lt.s32.totalorder %s11664, 9
        %s11666 = scalar_select %p11665, %s11664, 9
        %s11667 = scalar_lea.vmem %s5, %s11666
      $region52: #{linear_predictor.1} parent=47 // pred_fallthru
        _
    $region48: #{linear_predictor.1} parent=5 // pred_fallthru
      _
  $region6: #{linear_predictor.1} parent=0 // loop_footer
    %s16 = sadd.s32 1, %s12
  $region7: #{linear_predictor.1} parent=0 // loop_footer_branch
    %11 = sbr.rel target = $region3
  $region8: #{linear_predictor.1} parent=0 // loop_exit
    _

</llo_original>
